<compile_context>
chip_gen: v7x
topology: tpu7x:2x2x1
jax: 0.10.0
libtpu: 0.0.40
codegen_flags: <defaults>
</compile_context>

<pallas_src>
import functools

import jax
import jax.numpy as jnp
from jax.experimental import pallas as pl
from jax.experimental.pallas import tpu as pltpu

OUT_CH = 96
KSIZE = 3
CP = 128          # padded (lane-dense) channel width


# ----------------------------- fused Pallas kernel -------------------------- #

def fused_forward_kernel(tok_ref, emb_ref, w0_ref, b0_ref, ws_ref, bs_ref,
                         lw_ref, lb_ref, o_ref, *, block_num):
    # tok_ref: (bt, L, 1) int32         token ids (padding_idx = 0)
    # emb_ref: (VP, CP)   bf16          embedding table, rows/cols zero padded
    # w0_ref : (K, CP, block_num*CP) bf16   fused layer-0 weights of all blocks
    # b0_ref : (1, block_num*CP) f32        fused layer-0 biases
    # ws_ref : (n_sub*K, CP, CP) bf16       per-tap weights of the deeper layers
    # bs_ref : (n_sub, 1, CP) f32           their biases
    # lw_ref : (block_num, CP, CP) bf16     per-block slice of the final Linear
    # lb_ref : (1, CP) f32                  final Linear bias
    # o_ref  : (bt, CP) f32
    bt, L, _ = tok_ref.shape
    vp = emb_ref.shape[0]

    # ---- in-kernel embedding gather: one-hot bf16 matmul (tiny vocab) ------ #
    tok = tok_ref[...]                                        # (bt, L, 1) int32
    vocab_iota = jax.lax.broadcasted_iota(jnp.int32, (bt, L, vp), 2)
    onehot = jnp.where(vocab_iota == tok, 1.0, 0.0).astype(jnp.bfloat16)
    x = jnp.einsum("blv,vc->blc", onehot, emb_ref[...],
                   preferred_element_type=jnp.float32)        # (bt, L, CP) f32

    def conv_taps(h_f32, w_tap):
        # per-tap conv matmul: sum_k h[:, k:k+lout, :] @ w_k  (bf16 in, f32 acc)
        lout = h_f32.shape[1] - (KSIZE - 1)
        hb = h_f32.astype(jnp.bfloat16)
        y = None
        for k in range(KSIZE):
            t = jnp.einsum("blc,co->blo", hb[:, k:k + lout, :], w_tap(k),
                           preferred_element_type=jnp.float32)
            y = t if y is None else y + t
        return y
    # TODO(synk): verify via pl.lower_as_mlir that the "blc,co->blo" einsum
    # lowers to a single (bt*lout) x K x N matmul rather than bt small ones.

    # ---- fused first conv of every block: one N = block_num*CP matmul ------ #
    y0 = conv_taps(x, lambda k: w0_ref[k])                    # (bt, L-2, bn*CP)
    h0 = jnp.maximum(y0 + b0_ref[...], 0.0)                   # ReLU, f32

    sub = 0
    acc = None
    for blk in range(block_num):                              # static unroll
        h = h0[:, :, blk * CP:(blk + 1) * CP]                 # lane-aligned slice
        for _ in range(blk):                                  # remaining convs
            y = conv_taps(h, lambda k, s=sub: ws_ref[s * KSIZE + k])
            h = jnp.maximum(y + bs_ref[sub], 0.0)
            sub += 1
        feat = jnp.max(h, axis=1)                             # AdaptiveMaxPool1d(1)
        # fused final Linear: concat(feats) @ W == sum_b feat_b @ W_b
        term = jnp.dot(feat.astype(jnp.bfloat16), lw_ref[blk],
                       preferred_element_type=jnp.float32)
        acc = term if acc is None else acc + term
    o_ref[...] = (acc + lb_ref[...]).astype(o_ref.dtype)


# --------------------------------- wrapper ----------------------------------- #

def _choose_bt(B):
    # Real batch tile (never bt = B):
    #  * target M = bt*(L-2) >= ~256 matmul rows (bt = 32 at L = 16),
    #  * shrink for tiny batches so B=2 isn't padded to 32,
    #  * per-tile live set at bt<=32 is ~3 MiB -> far under the v7x 32 MiB
    #    scoped-VMEM default, so no vmem_limit_bytes override is needed.
    bt = 32
    while bt > 8 and B <= bt // 2:
        bt //= 2
    return bt


def target_representation(params, tokens, *, bt=None):
    B, L = tokens.shape
    block_num = len(params["blocks"])
    assert L - 2 * block_num >= 1, "sequence too short for the deepest block"

    if bt is None:
        bt = _choose_bt(B)
    B_pad = ((B + bt - 1) // bt) * bt
    if B_pad != B:
        # pad with token 0 (padding_idx); extra rows are sliced off below.
        tokens = jnp.pad(tokens, ((0, B_pad - B), (0, 0)))
    tok3 = tokens.astype(jnp.int32)[:, :, None]               # (B_pad, L, 1)
    grid = (B_pad // bt,)        # >= 2 steps whenever B > bt (v7x dual-TC)

    emb = params["embed_pad"]
    w0, b0 = params["w0_all"], params["b0_all"]
    ws, bs = params["ws_all"], params["bs_all"]
    lw, lb = params["lw_all"], params["lb_pad"]
    VP, NSK, NSB = emb.shape[0], ws.shape[0], bs.shape[0]

    # advisory cost estimate (helps XLA schedule around the custom call)
    lout0 = L - (KSIZE - 1)
    flops = 2 * B_pad * L * VP * CP                              # one-hot embed
    flops += 2 * B_pad * lout0 * (KSIZE * CP) * (block_num * CP)  # fused layer 0
    for blk in range(block_num):
        ll = lout0
        for _ in range(blk):
            ll -= (KSIZE - 1)
            flops += 2 * B_pad * ll * (KSIZE * CP) * CP
    flops += 2 * B_pad * CP * CP * block_num                     # final Linear
    bytes_accessed = (tok3.size * 4 + emb.size * 2 + w0.size * 2 + b0.size * 4
                      + ws.size * 2 + bs.size * 4 + lw.size * 2 + lb.size * 4
                      + B_pad * CP * 4)

    out = pl.pallas_call(
        functools.partial(fused_forward_kernel, block_num=block_num),
        out_shape=jax.ShapeDtypeStruct((B_pad, CP), jnp.float32),
        grid=grid,
        in_specs=[
            pl.BlockSpec((bt, L, 1), lambda i: (i, 0, 0)),
            pl.BlockSpec((VP, CP), lambda i: (0, 0)),
            pl.BlockSpec((KSIZE, CP, block_num * CP), lambda i: (0, 0, 0)),
            pl.BlockSpec((1, block_num * CP), lambda i: (0, 0)),
            pl.BlockSpec((NSK, CP, CP), lambda i: (0, 0, 0)),
            pl.BlockSpec((NSB, 1, CP), lambda i: (0, 0, 0)),
            pl.BlockSpec((block_num, CP, CP), lambda i: (0, 0, 0)),
            pl.BlockSpec((1, CP), lambda i: (0, 0)),
        ],
        out_specs=pl.BlockSpec((bt, CP), lambda i: (i, 0)),
        compiler_params=pltpu.CompilerParams(
            dimension_semantics=("parallel",),    # batch tiles across TCs / megacore
        ),
        cost_estimate=pl.CostEstimate(flops=int(flops), transcendentals=0,
                                      bytes_accessed=int(bytes_accessed)),
    )(tok3, emb, w0, b0, ws, bs, lw, lb)
    return out[:B, :OUT_CH]                                   # drop padded rows/lanes


# --------------------------- parameter creation ------------------------------ #

def init_params(key, block_num, vocab_size, embedding_num):
    params = {}
    key, k_emb = jax.random.split(key)
    emb = jax.random.normal(k_emb, (vocab_size, embedding_num), jnp.float32)
    emb = emb.at[0].set(0.0)                          # padding_idx = 0
    params["embed"] = emb

    params["blocks"] = []
    for block_idx in range(block_num):
        layers = []
        cin = embedding_num
        for _ in range(block_idx + 1):                # StackCNN(layer_num=block_idx+1)
            key, kw, kb = jax.random.split(key, 3)
            fan_in = cin * KSIZE
            w = jax.random.normal(kw, (KSIZE, cin, OUT_CH), jnp.float32) / jnp.sqrt(
                jnp.float32(fan_in))
            b = jax.random.normal(kb, (OUT_CH,), jnp.float32) * 0.01
            layers.append((w, b))
            cin = OUT_CH
        params["blocks"].append(layers)

    key, kw, kb = jax.random.split(key, 3)
    fin = block_num * OUT_CH
    params["linear_w"] = jax.random.normal(kw, (fin, OUT_CH), jnp.float32) / jnp.sqrt(
        jnp.float32(fin))
    params["linear_b"] = jax.random.normal(kb, (OUT_CH,), jnp.float32) * 0.01

    # ------ packed / lane-padded / bf16 views consumed by the fused kernel ------ #
    VP = max(CP, ((vocab_size + CP - 1) // CP) * CP)
    params["embed_pad"] = jnp.pad(
        emb, ((0, VP - vocab_size), (0, CP - embedding_num))).astype(jnp.bfloat16)

    # fused first-layer weights of all blocks: (K, CP, block_num*CP)
    w0_cols, b0_cols = [], []
    for layers in params["blocks"]:
        w, b = layers[0]
        w0_cols.append(jnp.pad(w, ((0, 0), (0, CP - embedding_num), (0, CP - OUT_CH))))
        b0_cols.append(jnp.pad(b, (0, CP - OUT_CH)))
    params["w0_all"] = jnp.concatenate(w0_cols, axis=-1).astype(jnp.bfloat16)
    params["b0_all"] = jnp.concatenate(b0_cols).reshape(1, block_num * CP)   # f32

    # per-tap weights for the deeper conv layers of each block
    ws_rows, bs_rows = [], []
    for layers in params["blocks"]:
        for (w, b) in layers[1:]:
            wp = jnp.pad(w, ((0, 0), (0, CP - OUT_CH), (0, CP - OUT_CH)))    # (K, CP, CP)
            ws_rows.extend([wp[k] for k in range(KSIZE)])
            bs_rows.append(jnp.pad(b, (0, CP - OUT_CH)).reshape(1, CP))
    if ws_rows:
        params["ws_all"] = jnp.stack(ws_rows).astype(jnp.bfloat16)   # (n_sub*K, CP, CP)
        params["bs_all"] = jnp.stack(bs_rows)                        # (n_sub, 1, CP) f32
    else:  # block_num == 1: dummy, never indexed by the kernel
        params["ws_all"] = jnp.zeros((KSIZE, CP, CP), jnp.bfloat16)
        params["bs_all"] = jnp.zeros((1, 1, CP), jnp.float32)

    lw_blocks = []
    for blk in range(block_num):
        wb = params["linear_w"][blk * OUT_CH:(blk + 1) * OUT_CH, :]          # (96, 96)
        lw_blocks.append(jnp.pad(wb, ((0, CP - OUT_CH), (0, CP - OUT_CH))))
    params["lw_all"] = jnp.stack(lw_blocks).astype(jnp.bfloat16)     # (block_num, CP, CP)
    params["lb_pad"] = jnp.pad(params["linear_b"], (0, CP - OUT_CH)).reshape(1, CP)
    return params


# ------------------------------ pure-JAX reference --------------------------- #

def reference_forward(params, tokens):
    x = params["embed"][tokens]                       # (B, L, E) f32
    feats = []
    for layers in params["blocks"]:
        h = x
        for (w, b) in layers:
            K = w.shape[0]
            Lout = h.shape[1] - K + 1
            acc = sum(
                jnp.einsum("bli,io->blo", h[:, k:k + Lout, :], w[k]) for k in range(K)
            ) + b[None, None, :]
            h = jnp.maximum(acc, 0.0)
        feats.append(jnp.max(h, axis=1))
    f = jnp.concatenate(feats, axis=-1)
    return f @ params["linear_w"] + params["linear_b"][None, :]


# ----------------------------------- main ------------------------------------ #

if __name__ == "__main__":
    block_num, vocab_size, embedding_num = 3, 20, 32
    B, L = 2, 16

    key = jax.random.PRNGKey(0)
    key, k_tok, k_par = jax.random.split(key, 3)
    tokens = jax.random.randint(k_tok, (B, L), 0, vocab_size, dtype=jnp.int32)
    params = init_params(k_par, block_num, vocab_size, embedding_num)

    out = jax.block_until_ready(target_representation(params, tokens))
    ref = reference_forward(params, tokens)

    assert out.shape == (B, OUT_CH), out.shape
    # Tolerance covers the recommended bf16 MXU inputs (weights + activations
    # rounded to bf16, f32 accumulation) versus the all-f32 XLA reference.
    assert jnp.allclose(out, ref, atol=3e-2, rtol=3e-2), float(
        jnp.max(jnp.abs(out - ref)))

    print("KERNEL_OK")
</pallas_src>

<mosaic_0001>
module attributes {stable_mosaic.version = 11 : i64} {
  func.func @fused_forward_kernel(%arg0: i32, %arg1: memref<8x16x1xi32, #tpu.memory_space<vmem>>, %arg2: memref<128x128xbf16, #tpu.memory_space<vmem>>, %arg3: memref<3x128x384xbf16, #tpu.memory_space<vmem>>, %arg4: memref<1x384xf32, #tpu.memory_space<vmem>>, %arg5: memref<9x128x128xbf16, #tpu.memory_space<vmem>>, %arg6: memref<3x1x128xf32, #tpu.memory_space<vmem>>, %arg7: memref<3x128x128xbf16, #tpu.memory_space<vmem>>, %arg8: memref<1x128xf32, #tpu.memory_space<vmem>>, %arg9: memref<8x128xf32, #tpu.memory_space<vmem>>) attributes {dimension_semantics = [#tpu.dimension_semantics<parallel>], iteration_bounds = array<i64: 1>, scalar_prefetch = 0 : i64, scratch_operands = 0 : i64, tpu.core_type = #tpu.core_type<tc>, window_params = [{transform_indices = @transform_0, window_bounds = array<i64: 8, 16, 1>}, {pipeline_mode = #tpu.pipeline_mode<synchronous>, transform_indices = @transform_1, window_bounds = array<i64: 128, 128>}, {pipeline_mode = #tpu.pipeline_mode<synchronous>, transform_indices = @transform_2, window_bounds = array<i64: 3, 128, 384>}, {pipeline_mode = #tpu.pipeline_mode<synchronous>, transform_indices = @transform_3, window_bounds = array<i64: 1, 384>}, {pipeline_mode = #tpu.pipeline_mode<synchronous>, transform_indices = @transform_4, window_bounds = array<i64: 9, 128, 128>}, {pipeline_mode = #tpu.pipeline_mode<synchronous>, transform_indices = @transform_5, window_bounds = array<i64: 3, 1, 128>}, {pipeline_mode = #tpu.pipeline_mode<synchronous>, transform_indices = @transform_6, window_bounds = array<i64: 3, 128, 128>}, {pipeline_mode = #tpu.pipeline_mode<synchronous>, transform_indices = @transform_7, window_bounds = array<i64: 1, 128>}, {transform_indices = @transform_8, window_bounds = array<i64: 8, 128>}]} {
    %c0 = arith.constant 0 : index
    %c0_0 = arith.constant 0 : index
    %c0_1 = arith.constant 0 : index
    %0 = vector.load %arg1[%c0, %c0_0, %c0_1] : memref<8x16x1xi32, #tpu.memory_space<vmem>>, vector<8x16x1xi32>
    %1 = tpu.iota {dimensions = array<i32: 2>} : vector<8x16x128xi32>
    %2 = vector.broadcast %0 : vector<8x16x1xi32> to vector<8x16x128xi32>
    %3 = arith.cmpi eq, %1, %2 : vector<8x16x128xi32>
    %cst = arith.constant 1.000000e+00 : f32
    %cst_2 = arith.constant 0.000000e+00 : f32
    %4 = vector.broadcast %cst : f32 to vector<8x16x128xf32>
    %5 = vector.broadcast %cst_2 : f32 to vector<8x16x128xf32>
    %6 = arith.select %3, %4, %5 : vector<8x16x128xi1>, vector<8x16x128xf32>
    %7 = arith.truncf %6 : vector<8x16x128xf32> to vector<8x16x128xbf16>
    %c0_3 = arith.constant 0 : index
    %c0_4 = arith.constant 0 : index
    %8 = vector.load %arg2[%c0_3, %c0_4] : memref<128x128xbf16, #tpu.memory_space<vmem>>, vector<128x128xbf16>
    "tpu.trace_start"() <{level = 10 : i32, message = "blv,vc->blc"}> : () -> ()
    %cst_5 = arith.constant dense<0.000000e+00> : vector<8x16x128xf32>
    %9 = tpu.matmul %7, %8, %cst_5 {dimension_numbers = #tpu.dot_dimension_numbers<[2], [0], [0, 1], [1], [0, 0, 0, 1, 1, 1], [], []>} : vector<8x16x128xbf16>, vector<128x128xbf16>, vector<8x16x128xf32> -> vector<8x16x128xf32>
    "tpu.trace_stop"() : () -> ()
    %10 = arith.truncf %9 : vector<8x16x128xf32> to vector<8x16x128xbf16>
    %11 = vector.extract_strided_slice %10 {offsets = [0, 0, 0], sizes = [8, 14, 128], strides = [1, 1, 1]} : vector<8x16x128xbf16> to vector<8x14x128xbf16>
    %c0_6 = arith.constant 0 : index
    %c0_7 = arith.constant 0 : index
    %c0_8 = arith.constant 0 : index
    %12 = vector.load %arg3[%c0_6, %c0_7, %c0_8] : memref<3x128x384xbf16, #tpu.memory_space<vmem>>, vector<1x128x384xbf16>
    %13 = vector.shape_cast %12 : vector<1x128x384xbf16> to vector<128x384xbf16>
    "tpu.trace_start"() <{level = 10 : i32, message = "blc,co->blo"}> : () -> ()
    %cst_9 = arith.constant dense<0.000000e+00> : vector<8x14x384xf32>
    %14 = tpu.matmul %11, %13, %cst_9 {dimension_numbers = #tpu.dot_dimension_numbers<[2], [0], [0, 1], [1], [0, 0, 0, 1, 1, 1], [], []>} : vector<8x14x128xbf16>, vector<128x384xbf16>, vector<8x14x384xf32> -> vector<8x14x384xf32>
    "tpu.trace_stop"() : () -> ()
    %15 = vector.extract_strided_slice %10 {offsets = [0, 1, 0], sizes = [8, 14, 128], strides = [1, 1, 1]} : vector<8x16x128xbf16> to vector<8x14x128xbf16>
    %c1 = arith.constant 1 : index
    %c0_10 = arith.constant 0 : index
    %c0_11 = arith.constant 0 : index
    %16 = vector.load %arg3[%c1, %c0_10, %c0_11] : memref<3x128x384xbf16, #tpu.memory_space<vmem>>, vector<1x128x384xbf16>
    %17 = vector.shape_cast %16 : vector<1x128x384xbf16> to vector<128x384xbf16>
    "tpu.trace_start"() <{level = 10 : i32, message = "blc,co->blo"}> : () -> ()
    %cst_12 = arith.constant dense<0.000000e+00> : vector<8x14x384xf32>
    %18 = tpu.matmul %15, %17, %cst_12 {dimension_numbers = #tpu.dot_dimension_numbers<[2], [0], [0, 1], [1], [0, 0, 0, 1, 1, 1], [], []>} : vector<8x14x128xbf16>, vector<128x384xbf16>, vector<8x14x384xf32> -> vector<8x14x384xf32>
    "tpu.trace_stop"() : () -> ()
    %19 = arith.addf %14, %18 : vector<8x14x384xf32>
    %20 = vector.extract_strided_slice %10 {offsets = [0, 2, 0], sizes = [8, 14, 128], strides = [1, 1, 1]} : vector<8x16x128xbf16> to vector<8x14x128xbf16>
    %c2 = arith.constant 2 : index
    %c0_13 = arith.constant 0 : index
    %c0_14 = arith.constant 0 : index
    %21 = vector.load %arg3[%c2, %c0_13, %c0_14] : memref<3x128x384xbf16, #tpu.memory_space<vmem>>, vector<1x128x384xbf16>
    %22 = vector.shape_cast %21 : vector<1x128x384xbf16> to vector<128x384xbf16>
    "tpu.trace_start"() <{level = 10 : i32, message = "blc,co->blo"}> : () -> ()
    %cst_15 = arith.constant dense<0.000000e+00> : vector<8x14x384xf32>
    %23 = tpu.matmul %20, %22, %cst_15 {dimension_numbers = #tpu.dot_dimension_numbers<[2], [0], [0, 1], [1], [0, 0, 0, 1, 1, 1], [], []>} : vector<8x14x128xbf16>, vector<128x384xbf16>, vector<8x14x384xf32> -> vector<8x14x384xf32>
    "tpu.trace_stop"() : () -> ()
    %24 = arith.addf %19, %23 : vector<8x14x384xf32>
    %c0_16 = arith.constant 0 : index
    %c0_17 = arith.constant 0 : index
    %25 = vector.load %arg4[%c0_16, %c0_17] : memref<1x384xf32, #tpu.memory_space<vmem>>, vector<1x384xf32>
    %26 = vector.shape_cast %25 : vector<1x384xf32> to vector<1x1x384xf32>
    %27 = vector.broadcast %26 : vector<1x1x384xf32> to vector<8x14x384xf32>
    %28 = arith.addf %24, %27 : vector<8x14x384xf32>
    %cst_18 = arith.constant 0.000000e+00 : f32
    %29 = vector.broadcast %cst_18 : f32 to vector<8x14x384xf32>
    %30 = arith.maximumf %28, %29 : vector<8x14x384xf32>
    %31 = vector.extract_strided_slice %30 {offsets = [0, 0, 0], sizes = [8, 14, 128], strides = [1, 1, 1]} : vector<8x14x384xf32> to vector<8x14x128xf32>
    %cst_19 = arith.constant dense<0xFF800000> : vector<8x128xf32>
    %32 = vector.multi_reduction <maximumf>, %31, %cst_19 [1] : vector<8x14x128xf32> to vector<8x128xf32>
    %33 = arith.truncf %32 : vector<8x128xf32> to vector<8x128xbf16>
    %c0_20 = arith.constant 0 : index
    %c0_21 = arith.constant 0 : index
    %c0_22 = arith.constant 0 : index
    %34 = vector.load %arg7[%c0_20, %c0_21, %c0_22] : memref<3x128x128xbf16, #tpu.memory_space<vmem>>, vector<1x128x128xbf16>
    %35 = vector.shape_cast %34 : vector<1x128x128xbf16> to vector<128x128xbf16>
    %cst_23 = arith.constant dense<0.000000e+00> : vector<8x128xf32>
    %36 = tpu.matmul %33, %35, %cst_23 {dimension_numbers = #tpu.dot_dimension_numbers<[1], [0], [0], [1], [0, 0, 1, 1], [], []>} : vector<8x128xbf16>, vector<128x128xbf16>, vector<8x128xf32> -> vector<8x128xf32>
    %37 = vector.extract_strided_slice %30 {offsets = [0, 0, 128], sizes = [8, 14, 128], strides = [1, 1, 1]} : vector<8x14x384xf32> to vector<8x14x128xf32>
    %38 = arith.truncf %37 : vector<8x14x128xf32> to vector<8x14x128xbf16>
    %39 = vector.extract_strided_slice %38 {offsets = [0, 0, 0], sizes = [8, 12, 128], strides = [1, 1, 1]} : vector<8x14x128xbf16> to vector<8x12x128xbf16>
    %c0_24 = arith.constant 0 : index
    %c0_25 = arith.constant 0 : index
    %c0_26 = arith.constant 0 : index
    %40 = vector.load %arg5[%c0_24, %c0_25, %c0_26] : memref<9x128x128xbf16, #tpu.memory_space<vmem>>, vector<1x128x128xbf16>
    %41 = vector.shape_cast %40 : vector<1x128x128xbf16> to vector<128x128xbf16>
    "tpu.trace_start"() <{level = 10 : i32, message = "blc,co->blo"}> : () -> ()
    %cst_27 = arith.constant dense<0.000000e+00> : vector<8x12x128xf32>
    %42 = tpu.matmul %39, %41, %cst_27 {dimension_numbers = #tpu.dot_dimension_numbers<[2], [0], [0, 1], [1], [0, 0, 0, 1, 1, 1], [], []>} : vector<8x12x128xbf16>, vector<128x128xbf16>, vector<8x12x128xf32> -> vector<8x12x128xf32>
    "tpu.trace_stop"() : () -> ()
    %43 = vector.extract_strided_slice %38 {offsets = [0, 1, 0], sizes = [8, 12, 128], strides = [1, 1, 1]} : vector<8x14x128xbf16> to vector<8x12x128xbf16>
    %c1_28 = arith.constant 1 : index
    %c0_29 = arith.constant 0 : index
    %c0_30 = arith.constant 0 : index
    %44 = vector.load %arg5[%c1_28, %c0_29, %c0_30] : memref<9x128x128xbf16, #tpu.memory_space<vmem>>, vector<1x128x128xbf16>
    %45 = vector.shape_cast %44 : vector<1x128x128xbf16> to vector<128x128xbf16>
    "tpu.trace_start"() <{level = 10 : i32, message = "blc,co->blo"}> : () -> ()
    %cst_31 = arith.constant dense<0.000000e+00> : vector<8x12x128xf32>
    %46 = tpu.matmul %43, %45, %cst_31 {dimension_numbers = #tpu.dot_dimension_numbers<[2], [0], [0, 1], [1], [0, 0, 0, 1, 1, 1], [], []>} : vector<8x12x128xbf16>, vector<128x128xbf16>, vector<8x12x128xf32> -> vector<8x12x128xf32>
    "tpu.trace_stop"() : () -> ()
    %47 = arith.addf %42, %46 : vector<8x12x128xf32>
    %48 = vector.extract_strided_slice %38 {offsets = [0, 2, 0], sizes = [8, 12, 128], strides = [1, 1, 1]} : vector<8x14x128xbf16> to vector<8x12x128xbf16>
    %c2_32 = arith.constant 2 : index
    %c0_33 = arith.constant 0 : index
    %c0_34 = arith.constant 0 : index
    %49 = vector.load %arg5[%c2_32, %c0_33, %c0_34] : memref<9x128x128xbf16, #tpu.memory_space<vmem>>, vector<1x128x128xbf16>
    %50 = vector.shape_cast %49 : vector<1x128x128xbf16> to vector<128x128xbf16>
    "tpu.trace_start"() <{level = 10 : i32, message = "blc,co->blo"}> : () -> ()
    %cst_35 = arith.constant dense<0.000000e+00> : vector<8x12x128xf32>
    %51 = tpu.matmul %48, %50, %cst_35 {dimension_numbers = #tpu.dot_dimension_numbers<[2], [0], [0, 1], [1], [0, 0, 0, 1, 1, 1], [], []>} : vector<8x12x128xbf16>, vector<128x128xbf16>, vector<8x12x128xf32> -> vector<8x12x128xf32>
    "tpu.trace_stop"() : () -> ()
    %52 = arith.addf %47, %51 : vector<8x12x128xf32>
    %c0_36 = arith.constant 0 : index
    %c0_37 = arith.constant 0 : index
    %c0_38 = arith.constant 0 : index
    %53 = vector.load %arg6[%c0_36, %c0_37, %c0_38] : memref<3x1x128xf32, #tpu.memory_space<vmem>>, vector<1x1x128xf32>
    %54 = vector.shape_cast %53 : vector<1x1x128xf32> to vector<1x128xf32>
    %55 = vector.shape_cast %54 : vector<1x128xf32> to vector<1x1x128xf32>
    %56 = vector.broadcast %55 : vector<1x1x128xf32> to vector<8x12x128xf32>
    %57 = arith.addf %52, %56 : vector<8x12x128xf32>
    %cst_39 = arith.constant 0.000000e+00 : f32
    %58 = vector.broadcast %cst_39 : f32 to vector<8x12x128xf32>
    %59 = arith.maximumf %57, %58 : vector<8x12x128xf32>
    %cst_40 = arith.constant dense<0xFF800000> : vector<8x128xf32>
    %60 = vector.multi_reduction <maximumf>, %59, %cst_40 [1] : vector<8x12x128xf32> to vector<8x128xf32>
    %61 = arith.truncf %60 : vector<8x128xf32> to vector<8x128xbf16>
    %c1_41 = arith.constant 1 : index
    %c0_42 = arith.constant 0 : index
    %c0_43 = arith.constant 0 : index
    %62 = vector.load %arg7[%c1_41, %c0_42, %c0_43] : memref<3x128x128xbf16, #tpu.memory_space<vmem>>, vector<1x128x128xbf16>
    %63 = vector.shape_cast %62 : vector<1x128x128xbf16> to vector<128x128xbf16>
    %cst_44 = arith.constant dense<0.000000e+00> : vector<8x128xf32>
    %64 = tpu.matmul %61, %63, %cst_44 {dimension_numbers = #tpu.dot_dimension_numbers<[1], [0], [0], [1], [0, 0, 1, 1], [], []>} : vector<8x128xbf16>, vector<128x128xbf16>, vector<8x128xf32> -> vector<8x128xf32>
    %65 = arith.addf %36, %64 : vector<8x128xf32>
    %66 = vector.extract_strided_slice %30 {offsets = [0, 0, 256], sizes = [8, 14, 128], strides = [1, 1, 1]} : vector<8x14x384xf32> to vector<8x14x128xf32>
    %67 = arith.truncf %66 : vector<8x14x128xf32> to vector<8x14x128xbf16>
    %68 = vector.extract_strided_slice %67 {offsets = [0, 0, 0], sizes = [8, 12, 128], strides = [1, 1, 1]} : vector<8x14x128xbf16> to vector<8x12x128xbf16>
    %c3 = arith.constant 3 : index
    %c0_45 = arith.constant 0 : index
    %c0_46 = arith.constant 0 : index
    %69 = vector.load %arg5[%c3, %c0_45, %c0_46] : memref<9x128x128xbf16, #tpu.memory_space<vmem>>, vector<1x128x128xbf16>
    %70 = vector.shape_cast %69 : vector<1x128x128xbf16> to vector<128x128xbf16>
    "tpu.trace_start"() <{level = 10 : i32, message = "blc,co->blo"}> : () -> ()
    %cst_47 = arith.constant dense<0.000000e+00> : vector<8x12x128xf32>
    %71 = tpu.matmul %68, %70, %cst_47 {dimension_numbers = #tpu.dot_dimension_numbers<[2], [0], [0, 1], [1], [0, 0, 0, 1, 1, 1], [], []>} : vector<8x12x128xbf16>, vector<128x128xbf16>, vector<8x12x128xf32> -> vector<8x12x128xf32>
    "tpu.trace_stop"() : () -> ()
    %72 = vector.extract_strided_slice %67 {offsets = [0, 1, 0], sizes = [8, 12, 128], strides = [1, 1, 1]} : vector<8x14x128xbf16> to vector<8x12x128xbf16>
    %c4 = arith.constant 4 : index
    %c0_48 = arith.constant 0 : index
    %c0_49 = arith.constant 0 : index
    %73 = vector.load %arg5[%c4, %c0_48, %c0_49] : memref<9x128x128xbf16, #tpu.memory_space<vmem>>, vector<1x128x128xbf16>
    %74 = vector.shape_cast %73 : vector<1x128x128xbf16> to vector<128x128xbf16>
    "tpu.trace_start"() <{level = 10 : i32, message = "blc,co->blo"}> : () -> ()
    %cst_50 = arith.constant dense<0.000000e+00> : vector<8x12x128xf32>
    %75 = tpu.matmul %72, %74, %cst_50 {dimension_numbers = #tpu.dot_dimension_numbers<[2], [0], [0, 1], [1], [0, 0, 0, 1, 1, 1], [], []>} : vector<8x12x128xbf16>, vector<128x128xbf16>, vector<8x12x128xf32> -> vector<8x12x128xf32>
    "tpu.trace_stop"() : () -> ()
    %76 = arith.addf %71, %75 : vector<8x12x128xf32>
    %77 = vector.extract_strided_slice %67 {offsets = [0, 2, 0], sizes = [8, 12, 128], strides = [1, 1, 1]} : vector<8x14x128xbf16> to vector<8x12x128xbf16>
    %c5 = arith.constant 5 : index
    %c0_51 = arith.constant 0 : index
    %c0_52 = arith.constant 0 : index
    %78 = vector.load %arg5[%c5, %c0_51, %c0_52] : memref<9x128x128xbf16, #tpu.memory_space<vmem>>, vector<1x128x128xbf16>
    %79 = vector.shape_cast %78 : vector<1x128x128xbf16> to vector<128x128xbf16>
    "tpu.trace_start"() <{level = 10 : i32, message = "blc,co->blo"}> : () -> ()
    %cst_53 = arith.constant dense<0.000000e+00> : vector<8x12x128xf32>
    %80 = tpu.matmul %77, %79, %cst_53 {dimension_numbers = #tpu.dot_dimension_numbers<[2], [0], [0, 1], [1], [0, 0, 0, 1, 1, 1], [], []>} : vector<8x12x128xbf16>, vector<128x128xbf16>, vector<8x12x128xf32> -> vector<8x12x128xf32>
    "tpu.trace_stop"() : () -> ()
    %81 = arith.addf %76, %80 : vector<8x12x128xf32>
    %c1_54 = arith.constant 1 : index
    %c0_55 = arith.constant 0 : index
    %c0_56 = arith.constant 0 : index
    %82 = vector.load %arg6[%c1_54, %c0_55, %c0_56] : memref<3x1x128xf32, #tpu.memory_space<vmem>>, vector<1x1x128xf32>
    %83 = vector.shape_cast %82 : vector<1x1x128xf32> to vector<1x128xf32>
    %84 = vector.shape_cast %83 : vector<1x128xf32> to vector<1x1x128xf32>
    %85 = vector.broadcast %84 : vector<1x1x128xf32> to vector<8x12x128xf32>
    %86 = arith.addf %81, %85 : vector<8x12x128xf32>
    %cst_57 = arith.constant 0.000000e+00 : f32
    %87 = vector.broadcast %cst_57 : f32 to vector<8x12x128xf32>
    %88 = arith.maximumf %86, %87 : vector<8x12x128xf32>
    %89 = arith.truncf %88 : vector<8x12x128xf32> to vector<8x12x128xbf16>
    %90 = vector.extract_strided_slice %89 {offsets = [0, 0, 0], sizes = [8, 10, 128], strides = [1, 1, 1]} : vector<8x12x128xbf16> to vector<8x10x128xbf16>
    %c6 = arith.constant 6 : index
    %c0_58 = arith.constant 0 : index
    %c0_59 = arith.constant 0 : index
    %91 = vector.load %arg5[%c6, %c0_58, %c0_59] : memref<9x128x128xbf16, #tpu.memory_space<vmem>>, vector<1x128x128xbf16>
    %92 = vector.shape_cast %91 : vector<1x128x128xbf16> to vector<128x128xbf16>
    "tpu.trace_start"() <{level = 10 : i32, message = "blc,co->blo"}> : () -> ()
    %cst_60 = arith.constant dense<0.000000e+00> : vector<8x10x128xf32>
    %93 = tpu.matmul %90, %92, %cst_60 {dimension_numbers = #tpu.dot_dimension_numbers<[2], [0], [0, 1], [1], [0, 0, 0, 1, 1, 1], [], []>} : vector<8x10x128xbf16>, vector<128x128xbf16>, vector<8x10x128xf32> -> vector<8x10x128xf32>
    "tpu.trace_stop"() : () -> ()
    %94 = vector.extract_strided_slice %89 {offsets = [0, 1, 0], sizes = [8, 10, 128], strides = [1, 1, 1]} : vector<8x12x128xbf16> to vector<8x10x128xbf16>
    %c7 = arith.constant 7 : index
    %c0_61 = arith.constant 0 : index
    %c0_62 = arith.constant 0 : index
    %95 = vector.load %arg5[%c7, %c0_61, %c0_62] : memref<9x128x128xbf16, #tpu.memory_space<vmem>>, vector<1x128x128xbf16>
    %96 = vector.shape_cast %95 : vector<1x128x128xbf16> to vector<128x128xbf16>
    "tpu.trace_start"() <{level = 10 : i32, message = "blc,co->blo"}> : () -> ()
    %cst_63 = arith.constant dense<0.000000e+00> : vector<8x10x128xf32>
    %97 = tpu.matmul %94, %96, %cst_63 {dimension_numbers = #tpu.dot_dimension_numbers<[2], [0], [0, 1], [1], [0, 0, 0, 1, 1, 1], [], []>} : vector<8x10x128xbf16>, vector<128x128xbf16>, vector<8x10x128xf32> -> vector<8x10x128xf32>
    "tpu.trace_stop"() : () -> ()
    %98 = arith.addf %93, %97 : vector<8x10x128xf32>
    %99 = vector.extract_strided_slice %89 {offsets = [0, 2, 0], sizes = [8, 10, 128], strides = [1, 1, 1]} : vector<8x12x128xbf16> to vector<8x10x128xbf16>
    %c8 = arith.constant 8 : index
    %c0_64 = arith.constant 0 : index
    %c0_65 = arith.constant 0 : index
    %100 = vector.load %arg5[%c8, %c0_64, %c0_65] : memref<9x128x128xbf16, #tpu.memory_space<vmem>>, vector<1x128x128xbf16>
    %101 = vector.shape_cast %100 : vector<1x128x128xbf16> to vector<128x128xbf16>
    "tpu.trace_start"() <{level = 10 : i32, message = "blc,co->blo"}> : () -> ()
    %cst_66 = arith.constant dense<0.000000e+00> : vector<8x10x128xf32>
    %102 = tpu.matmul %99, %101, %cst_66 {dimension_numbers = #tpu.dot_dimension_numbers<[2], [0], [0, 1], [1], [0, 0, 0, 1, 1, 1], [], []>} : vector<8x10x128xbf16>, vector<128x128xbf16>, vector<8x10x128xf32> -> vector<8x10x128xf32>
    "tpu.trace_stop"() : () -> ()
    %103 = arith.addf %98, %102 : vector<8x10x128xf32>
    %c2_67 = arith.constant 2 : index
    %c0_68 = arith.constant 0 : index
    %c0_69 = arith.constant 0 : index
    %104 = vector.load %arg6[%c2_67, %c0_68, %c0_69] : memref<3x1x128xf32, #tpu.memory_space<vmem>>, vector<1x1x128xf32>
    %105 = vector.shape_cast %104 : vector<1x1x128xf32> to vector<1x128xf32>
    %106 = vector.shape_cast %105 : vector<1x128xf32> to vector<1x1x128xf32>
    %107 = vector.broadcast %106 : vector<1x1x128xf32> to vector<8x10x128xf32>
    %108 = arith.addf %103, %107 : vector<8x10x128xf32>
    %cst_70 = arith.constant 0.000000e+00 : f32
    %109 = vector.broadcast %cst_70 : f32 to vector<8x10x128xf32>
    %110 = arith.maximumf %108, %109 : vector<8x10x128xf32>
    %cst_71 = arith.constant dense<0xFF800000> : vector<8x128xf32>
    %111 = vector.multi_reduction <maximumf>, %110, %cst_71 [1] : vector<8x10x128xf32> to vector<8x128xf32>
    %112 = arith.truncf %111 : vector<8x128xf32> to vector<8x128xbf16>
    %c2_72 = arith.constant 2 : index
    %c0_73 = arith.constant 0 : index
    %c0_74 = arith.constant 0 : index
    %113 = vector.load %arg7[%c2_72, %c0_73, %c0_74] : memref<3x128x128xbf16, #tpu.memory_space<vmem>>, vector<1x128x128xbf16>
    %114 = vector.shape_cast %113 : vector<1x128x128xbf16> to vector<128x128xbf16>
    %cst_75 = arith.constant dense<0.000000e+00> : vector<8x128xf32>
    %115 = tpu.matmul %112, %114, %cst_75 {dimension_numbers = #tpu.dot_dimension_numbers<[1], [0], [0], [1], [0, 0, 1, 1], [], []>} : vector<8x128xbf16>, vector<128x128xbf16>, vector<8x128xf32> -> vector<8x128xf32>
    %116 = arith.addf %65, %115 : vector<8x128xf32>
    %c0_76 = arith.constant 0 : index
    %c0_77 = arith.constant 0 : index
    %117 = vector.load %arg8[%c0_76, %c0_77] : memref<1x128xf32, #tpu.memory_space<vmem>>, vector<1x128xf32>
    %118 = vector.broadcast %117 : vector<1x128xf32> to vector<8x128xf32>
    %119 = arith.addf %116, %118 : vector<8x128xf32>
    %c0_78 = arith.constant 0 : index
    %c0_79 = arith.constant 0 : index
    %120 = vector.load %arg9[%c0_78, %c0_79] : memref<8x128xf32, #tpu.memory_space<vmem>>, vector<8x128xf32>
    tpu.vector_store %arg9[%c0_78, %c0_79], %119 {strides = array<i32>} : memref<8x128xf32, #tpu.memory_space<vmem>>, vector<8x128xf32>,
    return
  }
  func.func @transform_0(%arg0: i32) -> (i32, i32, i32) {
    %c0_i32 = arith.constant 0 : i32
    %c0_i32_0 = arith.constant 0 : i32
    %c0_i32_1 = arith.constant 0 : i32
    return %arg0, %c0_i32, %c0_i32_0 : i32, i32, i32
  }
  func.func @transform_1(%arg0: i32) -> (i32, i32) {
    %c0_i32 = arith.constant 0 : i32
    %c0_i32_0 = arith.constant 0 : i32
    %c0_i32_1 = arith.constant 0 : i32
    return %c0_i32, %c0_i32_0 : i32, i32
  }
  func.func @transform_2(%arg0: i32) -> (i32, i32, i32) {
    %c0_i32 = arith.constant 0 : i32
    %c0_i32_0 = arith.constant 0 : i32
    %c0_i32_1 = arith.constant 0 : i32
    %c0_i32_2 = arith.constant 0 : i32
    return %c0_i32, %c0_i32_0, %c0_i32_1 : i32, i32, i32
  }
  func.func @transform_3(%arg0: i32) -> (i32, i32) {
    %c0_i32 = arith.constant 0 : i32
    %c0_i32_0 = arith.constant 0 : i32
    %c0_i32_1 = arith.constant 0 : i32
    return %c0_i32, %c0_i32_0 : i32, i32
  }
  func.func @transform_4(%arg0: i32) -> (i32, i32, i32) {
    %c0_i32 = arith.constant 0 : i32
    %c0_i32_0 = arith.constant 0 : i32
    %c0_i32_1 = arith.constant 0 : i32
    %c0_i32_2 = arith.constant 0 : i32
    return %c0_i32, %c0_i32_0, %c0_i32_1 : i32, i32, i32
  }
  func.func @transform_5(%arg0: i32) -> (i32, i32, i32) {
    %c0_i32 = arith.constant 0 : i32
    %c0_i32_0 = arith.constant 0 : i32
    %c0_i32_1 = arith.constant 0 : i32
    %c0_i32_2 = arith.constant 0 : i32
    return %c0_i32, %c0_i32_0, %c0_i32_1 : i32, i32, i32
  }
  func.func @transform_6(%arg0: i32) -> (i32, i32, i32) {
    %c0_i32 = arith.constant 0 : i32
    %c0_i32_0 = arith.constant 0 : i32
    %c0_i32_1 = arith.constant 0 : i32
    %c0_i32_2 = arith.constant 0 : i32
    return %c0_i32, %c0_i32_0, %c0_i32_1 : i32, i32, i32
  }
  func.func @transform_7(%arg0: i32) -> (i32, i32) {
    %c0_i32 = arith.constant 0 : i32
    %c0_i32_0 = arith.constant 0 : i32
    %c0_i32_1 = arith.constant 0 : i32
    return %c0_i32, %c0_i32_0 : i32, i32
  }
  func.func @transform_8(%arg0: i32) -> (i32, i32) {
    %c0_i32 = arith.constant 0 : i32
    %c0_i32_0 = arith.constant 0 : i32
    return %arg0, %c0_i32 : i32, i32
  }
}

</mosaic_0001>

<llo_original>
// kernel: tpu_custom_call.1
$region0: #{tpu_custom_call.1}
  #allocation0 [shape = 'u32[]', space=smem, size = 0x4, offset = 0x4, fixed_abs, tag = 'smem constant byte address 0x4 - core index']
  #allocation1 [shape = 'u32[144,128]{1,0:T(1,128)}', space=vmem, size = 0x12000, scoped, tag = 'internal scratch']
  %s0 = inlined_call_operand.vmem [shape: s32[8,16,1], index: 0, kind: input, shape index: {}]
  %s1 = inlined_call_operand.vmem [shape: bf16[128,128], index: 1, kind: input, shape index: {}]
  %s2 = inlined_call_operand.hbm [shape: bf16[3,128,384], index: 2, kind: input, shape index: {}]
  %s3 = inlined_call_operand.vmem [shape: f32[1,384], index: 3, kind: input, shape index: {}]
  %s4 = inlined_call_operand.hbm [shape: bf16[9,128,128], index: 4, kind: input, shape index: {}]
  %s5 = inlined_call_operand.vmem [shape: f32[3,1,128], index: 5, kind: input, shape index: {}]
  %s6 = inlined_call_operand.hbm [shape: bf16[3,128,128], index: 6, kind: input, shape index: {}]
  %s7 = inlined_call_operand.vmem [shape: f32[1,128], index: 7, kind: input, shape index: {}]
  %s8 = inlined_call_operand.hbm [shape: f32[8,128], index: 8, kind: output, shape index: {}]
  %s9 = sld [smem:[#allocation0]]
  $region54: #{tpu_custom_call.1} parent=0
    _
  %s11 = ssub.s32 1, %s9
  %s12 = scalar_select 0, %s11, %s9
  $region1: #{tpu_custom_call.1} parent=0
    #allocation2 [shape = 'u8[294912]{0}', space=vmem, size = 0x48000, scoped, tag = 'input window, operand 2, single buffered']
    #allocation3 [shape = 's32[1]{0}', space=sflag, size = 0x4, scoped, tag = 'scoped memory for tpu_custom_call.1']
    #allocation4 [shape = 's32[1]{0}', space=sflag, size = 0x4, scoped, tag = 'scoped memory for tpu_custom_call.1']
    #allocation5 [shape = 'u8[294912]{0}', space=vmem, size = 0x48000, scoped, tag = 'input window, operand 4, single buffered']
    #allocation6 [shape = 's32[1]{0}', space=sflag, size = 0x4, scoped, tag = 'scoped memory for tpu_custom_call.1']
    #allocation7 [shape = 'u8[98304]{0}', space=vmem, size = 0x18000, scoped, tag = 'input window, operand 6, single buffered']
    #allocation8 [shape = 'u8[4096]{0}', space=vmem, size = 0x1000, scoped, tag = 'output window, operand 0, single buffered']
    %13 = vsyncpa [#allocation3], 0
    %14 = vsyncpa [#allocation6], 0
    %15 = vsyncpa [#allocation4], 0
    // Predicated region
    $region2: #{tpu_custom_call.1} parent=1 // pred_check
      _
    $region3: #{tpu_custom_call.1} parent=1 // pred_check_branch
      %17 = sbr.rel (0) target = $region5
    $region4: #{tpu_custom_call.1} parent=1 // pred_region
      _
    $region5: #{tpu_custom_call.1} parent=1 // pred_fallthru
      _
    // Predicated region
    $region6: #{tpu_custom_call.1} parent=1 // pred_check
      _
    $region7: #{tpu_custom_call.1} parent=1 // pred_check_branch
      %19 = sbr.rel (0) target = $region9
    $region8: #{tpu_custom_call.1} parent=1 // pred_region
      _
    $region9: #{tpu_custom_call.1} parent=1 // pred_fallthru
      _
    // Predicated region
    $region10: #{tpu_custom_call.1} parent=1 // pred_check
      _
    $region11: #{tpu_custom_call.1} parent=1 // pred_check_branch
      %21 = sbr.rel (0) target = $region13
    $region12: #{tpu_custom_call.1} parent=1 // pred_region
      %s23 = ssub.s32 9216, 9216
      %24 = vsyncadd [#allocation3], %s23
      %s25 = sshll.u32 [#allocation2], 4
      %s26 = int_to_ptr.vmem [resolvable:$true] %s25
      %31 = dma.hbm_to_vmem [thread:$0]  %s2, 9216, %s26, [#allocation3], 192, 192, 12
    $region13: #{tpu_custom_call.1} parent=1 // pred_fallthru
      _
    // Predicated region
    $region14: #{tpu_custom_call.1} parent=1 // pred_check
      _
    $region15: #{tpu_custom_call.1} parent=1 // pred_check_branch
      %33 = sbr.rel (0) target = $region17
    $region16: #{tpu_custom_call.1} parent=1 // pred_region
      _
    $region17: #{tpu_custom_call.1} parent=1 // pred_fallthru
      _
    // Predicated region
    $region18: #{tpu_custom_call.1} parent=1 // pred_check
      _
    $region19: #{tpu_custom_call.1} parent=1 // pred_check_branch
      %35 = sbr.rel (0) target = $region21
    $region20: #{tpu_custom_call.1} parent=1 // pred_region
      %s37 = ssub.s32 9216, 9216
      %38 = vsyncadd [#allocation6], %s37
      %s39 = sshll.u32 [#allocation5], 4
      %s40 = int_to_ptr.vmem [resolvable:$true] %s39
      %45 = dma.hbm_to_vmem [thread:$0]  %s4, 9216, %s40, [#allocation6], 64, 64, 4
    $region21: #{tpu_custom_call.1} parent=1 // pred_fallthru
      _
    // Predicated region
    $region22: #{tpu_custom_call.1} parent=1 // pred_check
      _
    $region23: #{tpu_custom_call.1} parent=1 // pred_check_branch
      %47 = sbr.rel (0) target = $region25
    $region24: #{tpu_custom_call.1} parent=1 // pred_region
      _
    $region25: #{tpu_custom_call.1} parent=1 // pred_fallthru
      _
    // Predicated region
    $region26: #{tpu_custom_call.1} parent=1 // pred_check
      _
    $region27: #{tpu_custom_call.1} parent=1 // pred_check_branch
      %49 = sbr.rel (0) target = $region29
    $region28: #{tpu_custom_call.1} parent=1 // pred_region
      %s51 = ssub.s32 3072, 3072
      %52 = vsyncadd [#allocation6], %s51
      %s53 = sshll.u32 [#allocation7], 4
      %s54 = int_to_ptr.vmem [resolvable:$true] %s53
      %59 = dma.hbm_to_vmem [thread:$0]  %s6, 3072, %s54, [#allocation6], 64, 64, 4
    $region29: #{tpu_custom_call.1} parent=1 // pred_fallthru
      _
    // Predicated region
    $region30: #{tpu_custom_call.1} parent=1 // pred_check
      _
    $region31: #{tpu_custom_call.1} parent=1 // pred_check_branch
      %61 = sbr.rel (0) target = $region33
    $region32: #{tpu_custom_call.1} parent=1 // pred_region
      _
    $region33: #{tpu_custom_call.1} parent=1 // pred_fallthru
      _
    // Predicated region
    $region34: #{tpu_custom_call.1} parent=1 // pred_check
      _
    $region35: #{tpu_custom_call.1} parent=1 // pred_check_branch
      %63 = sbr.rel (0) target = $region37
    $region36: #{tpu_custom_call.1} parent=1 // pred_region
      %64 = dma.done [#allocation3], 9216
    $region37: #{tpu_custom_call.1} parent=1 // pred_fallthru
      _
    // Predicated region
    $region38: #{tpu_custom_call.1} parent=1 // pred_check
      _
    $region39: #{tpu_custom_call.1} parent=1 // pred_check_branch
      %66 = sbr.rel (0) target = $region41
    $region40: #{tpu_custom_call.1} parent=1 // pred_region
      %67 = dma.done [#allocation6], 9216
    $region41: #{tpu_custom_call.1} parent=1 // pred_fallthru
      _
    // Predicated region
    $region42: #{tpu_custom_call.1} parent=1 // pred_check
      _
    $region43: #{tpu_custom_call.1} parent=1 // pred_check_branch
      %69 = sbr.rel (0) target = $region45
    $region44: #{tpu_custom_call.1} parent=1 // pred_region
      %70 = dma.done [#allocation6], 3072
    $region45: #{tpu_custom_call.1} parent=1 // pred_fallthru
      _
    %v72 = vld [vmem:[%s0] sm:$0xff]
    %v73 = vld [vmem:[%s0 + $0x8] sm:$0xff]
    %v74 = vld [vmem:[%s0 + $0x10] sm:$0xff]
    %v75 = vld [vmem:[%s0 + $0x18] sm:$0xff]
    %v76 = vld [vmem:[%s0 + $0x20] sm:$0xff]
    %v77 = vld [vmem:[%s0 + $0x28] sm:$0xff]
    %v78 = vld [vmem:[%s0 + $0x30] sm:$0xff]
    %v79 = vld [vmem:[%s0 + $0x38] sm:$0xff]
    %v80 = vld [vmem:[%s0 + $0x40] sm:$0xff]
    %v81 = vld [vmem:[%s0 + $0x48] sm:$0xff]
    %v82 = vld [vmem:[%s0 + $0x50] sm:$0xff]
    %v83 = vld [vmem:[%s0 + $0x58] sm:$0xff]
    %v84 = vld [vmem:[%s0 + $0x60] sm:$0xff]
    %v85 = vld [vmem:[%s0 + $0x68] sm:$0xff]
    %v86 = vld [vmem:[%s0 + $0x70] sm:$0xff]
    %v87 = vld [vmem:[%s0 + $0x78] sm:$0xff]
    %v88 = vlaneseq
    %v89 = vand.u32 %v88, 127
    %90 = vset.pattern.permute.xlu0 0
    %91 = vperm.xlu0 %90, %v72
    %v92 = vpop.permute.xlu0 %91
    %93 = vset.pattern.permute.xlu0 0
    %94 = vperm.xlu0 %93, %v73
    %v95 = vpop.permute.xlu0 %94
    %96 = vset.pattern.permute.xlu0 0
    %97 = vperm.xlu0 %96, %v74
    %v98 = vpop.permute.xlu0 %97
    %99 = vset.pattern.permute.xlu0 0
    %100 = vperm.xlu0 %99, %v75
    %v101 = vpop.permute.xlu0 %100
    %102 = vset.pattern.permute.xlu0 0
    %103 = vperm.xlu0 %102, %v76
    %v104 = vpop.permute.xlu0 %103
    %105 = vset.pattern.permute.xlu0 0
    %106 = vperm.xlu0 %105, %v77
    %v107 = vpop.permute.xlu0 %106
    %108 = vset.pattern.permute.xlu0 0
    %109 = vperm.xlu0 %108, %v78
    %v110 = vpop.permute.xlu0 %109
    %111 = vset.pattern.permute.xlu0 0
    %112 = vperm.xlu0 %111, %v79
    %v113 = vpop.permute.xlu0 %112
    %114 = vset.pattern.permute.xlu0 0
    %115 = vperm.xlu0 %114, %v80
    %v116 = vpop.permute.xlu0 %115
    %117 = vset.pattern.permute.xlu0 0
    %118 = vperm.xlu0 %117, %v81
    %v119 = vpop.permute.xlu0 %118
    %120 = vset.pattern.permute.xlu0 0
    %121 = vperm.xlu0 %120, %v82
    %v122 = vpop.permute.xlu0 %121
    %123 = vset.pattern.permute.xlu0 0
    %124 = vperm.xlu0 %123, %v83
    %v125 = vpop.permute.xlu0 %124
    %126 = vset.pattern.permute.xlu0 0
    %127 = vperm.xlu0 %126, %v84
    %v128 = vpop.permute.xlu0 %127
    %129 = vset.pattern.permute.xlu0 0
    %130 = vperm.xlu0 %129, %v85
    %v131 = vpop.permute.xlu0 %130
    %132 = vset.pattern.permute.xlu0 0
    %133 = vperm.xlu0 %132, %v86
    %v134 = vpop.permute.xlu0 %133
    %135 = vset.pattern.permute.xlu0 0
    %136 = vperm.xlu0 %135, %v87
    %v137 = vpop.permute.xlu0 %136
    %vm138 = vcmp.eq.s32.totalorder %v89, %v92
    %vm139 = vcmp.eq.s32.totalorder %v89, %v95
    %vm140 = vcmp.eq.s32.totalorder %v89, %v98
    %vm141 = vcmp.eq.s32.totalorder %v89, %v101
    %vm142 = vcmp.eq.s32.totalorder %v89, %v104
    %vm143 = vcmp.eq.s32.totalorder %v89, %v107
    %vm144 = vcmp.eq.s32.totalorder %v89, %v110
    %vm145 = vcmp.eq.s32.totalorder %v89, %v113
    %vm146 = vcmp.eq.s32.totalorder %v89, %v116
    %vm147 = vcmp.eq.s32.totalorder %v89, %v119
    %vm148 = vcmp.eq.s32.totalorder %v89, %v122
    %vm149 = vcmp.eq.s32.totalorder %v89, %v125
    %vm150 = vcmp.eq.s32.totalorder %v89, %v128
    %vm151 = vcmp.eq.s32.totalorder %v89, %v131
    %vm152 = vcmp.eq.s32.totalorder %v89, %v134
    %vm153 = vcmp.eq.s32.totalorder %v89, %v137
    %v154 = vsel %vm138, 1.0, 0.0
    %v155 = vsel %vm139, 1.0, 0.0
    %v156 = vsel %vm140, 1.0, 0.0
    %v157 = vsel %vm141, 1.0, 0.0
    %v158 = vsel %vm142, 1.0, 0.0
    %v159 = vsel %vm143, 1.0, 0.0
    %v160 = vsel %vm144, 1.0, 0.0
    %v161 = vsel %vm145, 1.0, 0.0
    %v162 = vsel %vm146, 1.0, 0.0
    %v163 = vsel %vm147, 1.0, 0.0
    %v164 = vsel %vm148, 1.0, 0.0
    %v165 = vsel %vm149, 1.0, 0.0
    %v166 = vsel %vm150, 1.0, 0.0
    %v167 = vsel %vm151, 1.0, 0.0
    %v168 = vsel %vm152, 1.0, 0.0
    %v169 = vsel %vm153, 1.0, 0.0
    %v170 = vpack.c.bf16 %v155, %v154
    %v171 = vpack.c.bf16 %v157, %v156
    %v172 = vpack.c.bf16 %v159, %v158
    %v173 = vpack.c.bf16 %v161, %v160
    %v174 = vpack.c.bf16 %v163, %v162
    %v175 = vpack.c.bf16 %v165, %v164
    %v176 = vpack.c.bf16 %v167, %v166
    %v177 = vpack.c.bf16 %v169, %v168
    %v178 = vld [vmem:[%s1] sm:$0xf]
    %v179 = vld [vmem:[%s1 + $0x4] sm:$0xf]
    %v180 = vld [vmem:[%s1 + $0x8] sm:$0xf]
    %v181 = vld [vmem:[%s1 + $0xc] sm:$0xf]
    %v182 = vld [vmem:[%s1 + $0x10] sm:$0xf]
    %v183 = vld [vmem:[%s1 + $0x14] sm:$0xf]
    %v184 = vld [vmem:[%s1 + $0x18] sm:$0xf]
    %v185 = vld [vmem:[%s1 + $0x1c] sm:$0xf]
    %v186 = vld [vmem:[%s1 + $0x20] sm:$0xf]
    %v187 = vld [vmem:[%s1 + $0x24] sm:$0xf]
    %v188 = vld [vmem:[%s1 + $0x28] sm:$0xf]
    %v189 = vld [vmem:[%s1 + $0x2c] sm:$0xf]
    %v190 = vld [vmem:[%s1 + $0x30] sm:$0xf]
    %v191 = vld [vmem:[%s1 + $0x34] sm:$0xf]
    %v192 = vld [vmem:[%s1 + $0x38] sm:$0xf]
    %v193 = vld [vmem:[%s1 + $0x3c] sm:$0xf]
    %v210 = vunpack.c.l.b16 %v178
    %v211 = vunpack.c.l.b16 %v179
    %v212 = vunpack.c.l.b16 %v180
    %v213 = vunpack.c.l.b16 %v181
    %v214 = vunpack.c.l.b16 %v182
    %v215 = vunpack.c.l.b16 %v183
    %v216 = vunpack.c.l.b16 %v184
    %v217 = vunpack.c.l.b16 %v185
    %v218 = vunpack.c.l.b16 %v186
    %v219 = vunpack.c.l.b16 %v187
    %v220 = vunpack.c.l.b16 %v188
    %v221 = vunpack.c.l.b16 %v189
    %v222 = vunpack.c.l.b16 %v190
    %v223 = vunpack.c.l.b16 %v191
    %v224 = vunpack.c.l.b16 %v192
    %v225 = vunpack.c.l.b16 %v193
    %v226 = vpack.c.b16 %v211, %v210
    %v227 = vpack.c.b16 %v213, %v212
    %v228 = vpack.c.b16 %v215, %v214
    %v229 = vpack.c.b16 %v217, %v216
    %v230 = vpack.c.b16 %v219, %v218
    %v231 = vpack.c.b16 %v221, %v220
    %v232 = vpack.c.b16 %v223, %v222
    %v233 = vpack.c.b16 %v225, %v224
    %242 = vmatprep.subr.bf16.mxu0 0
    %243 = vmatpush1.bf16.msra.mxu0 %v226
    %244 = vmatprep.subr.bf16.mxu0 0
    %245 = vmatpush1.bf16.msra.mxu0 %v227
    %246 = vmatprep.subr.bf16.mxu0 0
    %247 = vmatpush1.bf16.msra.mxu0 %v228
    %248 = vmatprep.subr.bf16.mxu0 0
    %249 = vmatpush1.bf16.msra.mxu0 %v229
    %250 = vmatprep.subr.bf16.mxu0 0
    %251 = vmatpush1.bf16.msra.mxu0 %v230
    %252 = vmatprep.subr.bf16.mxu0 0
    %253 = vmatpush1.bf16.msra.mxu0 %v231
    %254 = vmatprep.subr.bf16.mxu0 0
    %255 = vmatpush1.bf16.msra.mxu0 %v232
    %256 = vmatprep.subr.bf16.mxu0 0
    %257 = vmatpush1.bf16.msra.mxu0 %v233
    %258 = vmatprep.subr.bf16.mxu0 0
    %259 = vmatpush1.bf16.msra.mxu0 0
    %260 = vmatprep.subr.bf16.mxu0 0
    %261 = vmatpush1.bf16.msra.mxu0 0
    %262 = vmatprep.subr.bf16.mxu0 0
    %263 = vmatpush1.bf16.msra.mxu0 0
    %264 = vmatprep.subr.bf16.mxu0 0
    %265 = vmatpush1.bf16.msra.mxu0 0
    %266 = vmatprep.subr.bf16.mxu0 0
    %267 = vmatpush1.bf16.msra.mxu0 0
    %268 = vmatprep.subr.bf16.mxu0 0
    %269 = vmatpush1.bf16.msra.mxu0 0
    %270 = vmatprep.subr.bf16.mxu0 0
    %271 = vmatpush1.bf16.msra.mxu0 0
    %272 = vmatprep.subr.bf16.mxu0 0
    %273 = vmatpush1.bf16.msra.mxu0 0
    %274 = vmatprep.mubr.bf16.mxu0 0
    %275 = vmatmul.mubr.bf16.gmra.mrb[0].mxu0 %v170
    %v276 = vpop.f32.mrb[0].mxu0
    %v277 = vadd.f32 0.0, %v276
    %v278 = vpop.f32.mrb[0].mxu0
    %v279 = vpop.f32.mrb[0].mxu0
    %v280 = vadd.f32 0.0, %v279
    %v281 = vpop.f32.mrb[0].mxu0
    %282 = vmatprep.mubr.bf16.mxu0 0
    %283 = vmatmul.mubr.bf16.gmra.mrb[0].mxu0 %v171
    %v284 = vpop.f32.mrb[0].mxu0
    %v285 = vadd.f32 0.0, %v284
    %v286 = vpop.f32.mrb[0].mxu0
    %v287 = vpop.f32.mrb[0].mxu0
    %v288 = vadd.f32 0.0, %v287
    %v289 = vpop.f32.mrb[0].mxu0
    %290 = vmatprep.mubr.bf16.mxu0 0
    %291 = vmatmul.mubr.bf16.gmra.mrb[0].mxu0 %v172
    %v292 = vpop.f32.mrb[0].mxu0
    %v293 = vadd.f32 0.0, %v292
    %v294 = vpop.f32.mrb[0].mxu0
    %v295 = vpop.f32.mrb[0].mxu0
    %v296 = vadd.f32 0.0, %v295
    %v297 = vpop.f32.mrb[0].mxu0
    %298 = vmatprep.mubr.bf16.mxu0 0
    %299 = vmatmul.mubr.bf16.gmra.mrb[0].mxu0 %v173
    %v300 = vpop.f32.mrb[0].mxu0
    %v301 = vadd.f32 0.0, %v300
    %v302 = vpop.f32.mrb[0].mxu0
    %v303 = vpop.f32.mrb[0].mxu0
    %v304 = vadd.f32 0.0, %v303
    %v305 = vpop.f32.mrb[0].mxu0
    %306 = vmatprep.mubr.bf16.mxu0 0
    %307 = vmatmul.mubr.bf16.gmra.mrb[0].mxu0 %v174
    %v308 = vpop.f32.mrb[0].mxu0
    %v309 = vadd.f32 0.0, %v308
    %v310 = vpop.f32.mrb[0].mxu0
    %v311 = vpop.f32.mrb[0].mxu0
    %v312 = vadd.f32 0.0, %v311
    %v313 = vpop.f32.mrb[0].mxu0
    %314 = vmatprep.mubr.bf16.mxu0 0
    %315 = vmatmul.mubr.bf16.gmra.mrb[0].mxu0 %v175
    %v316 = vpop.f32.mrb[0].mxu0
    %v317 = vadd.f32 0.0, %v316
    %v318 = vpop.f32.mrb[0].mxu0
    %v319 = vpop.f32.mrb[0].mxu0
    %v320 = vadd.f32 0.0, %v319
    %v321 = vpop.f32.mrb[0].mxu0
    %322 = vmatprep.mubr.bf16.mxu0 0
    %323 = vmatmul.mubr.bf16.gmra.mrb[0].mxu0 %v176
    %v324 = vpop.f32.mrb[0].mxu0
    %v325 = vadd.f32 0.0, %v324
    %v326 = vpop.f32.mrb[0].mxu0
    %v327 = vpop.f32.mrb[0].mxu0
    %v328 = vadd.f32 0.0, %v327
    %v329 = vpop.f32.mrb[0].mxu0
    %330 = vmatprep.mubr.bf16.mxu0 0
    %331 = vmatmul.mubr.bf16.gmra.mrb[0].mxu0 %v177
    %v332 = vpop.f32.mrb[0].mxu0
    %v333 = vadd.f32 0.0, %v332
    %v334 = vpop.f32.mrb[0].mxu0
    %v335 = vpop.f32.mrb[0].mxu0
    %v336 = vadd.f32 0.0, %v335
    %v337 = vpop.f32.mrb[0].mxu0
    %338 = vdwg.mxu0
    %v339 = vpack.c.bf16 %v280, %v277
    %v340 = vpack.c.bf16 %v288, %v285
    %v341 = vpack.c.bf16 %v296, %v293
    %v342 = vpack.c.bf16 %v304, %v301
    %v343 = vpack.c.bf16 %v312, %v309
    %v344 = vpack.c.bf16 %v320, %v317
    %v345 = vpack.c.bf16 %v328, %v325
    %v346 = vpack.c.bf16 %v336, %v333
    %v347 = vld [vmem:[#allocation2] sm:$0xff]
    %v348 = vld [vmem:[#allocation2 + $0x8] sm:$0xf]
    %v349 = vld [vmem:[#allocation2 + $0xc] sm:$0xff]
    %v350 = vld [vmem:[#allocation2 + $0x14] sm:$0xf]
    %v351 = vld [vmem:[#allocation2 + $0x18] sm:$0xff]
    %v352 = vld [vmem:[#allocation2 + $0x20] sm:$0xf]
    %v353 = vld [vmem:[#allocation2 + $0x24] sm:$0xff]
    %v354 = vld [vmem:[#allocation2 + $0x2c] sm:$0xf]
    %v355 = vld [vmem:[#allocation2 + $0x30] sm:$0xff]
    %v356 = vld [vmem:[#allocation2 + $0x38] sm:$0xf]
    %v357 = vld [vmem:[#allocation2 + $0x3c] sm:$0xff]
    %v358 = vld [vmem:[#allocation2 + $0x44] sm:$0xf]
    %v359 = vld [vmem:[#allocation2 + $0x48] sm:$0xff]
    %v360 = vld [vmem:[#allocation2 + $0x50] sm:$0xf]
    %v361 = vld [vmem:[#allocation2 + $0x54] sm:$0xff]
    %v362 = vld [vmem:[#allocation2 + $0x5c] sm:$0xf]
    %v363 = vld [vmem:[#allocation2 + $0x60] sm:$0xff]
    %v364 = vld [vmem:[#allocation2 + $0x68] sm:$0xf]
    %v365 = vld [vmem:[#allocation2 + $0x6c] sm:$0xff]
    %v366 = vld [vmem:[#allocation2 + $0x74] sm:$0xf]
    %v367 = vld [vmem:[#allocation2 + $0x78] sm:$0xff]
    %v368 = vld [vmem:[#allocation2 + $0x80] sm:$0xf]
    %v369 = vld [vmem:[#allocation2 + $0x84] sm:$0xff]
    %v370 = vld [vmem:[#allocation2 + $0x8c] sm:$0xf]
    %v371 = vld [vmem:[#allocation2 + $0x90] sm:$0xff]
    %v372 = vld [vmem:[#allocation2 + $0x98] sm:$0xf]
    %v373 = vld [vmem:[#allocation2 + $0x9c] sm:$0xff]
    %v374 = vld [vmem:[#allocation2 + $0xa4] sm:$0xf]
    %v375 = vld [vmem:[#allocation2 + $0xa8] sm:$0xff]
    %v376 = vld [vmem:[#allocation2 + $0xb0] sm:$0xf]
    %v377 = vld [vmem:[#allocation2 + $0xb4] sm:$0xff]
    %v378 = vld [vmem:[#allocation2 + $0xbc] sm:$0xf]
    %s379 = scalar_lea.vmem [#allocation2], 192
    %v380 = vld [vmem:[%s379] sm:$0xff]
    %v381 = vld [vmem:[%s379 + $0x8] sm:$0xf]
    %v382 = vld [vmem:[%s379 + $0xc] sm:$0xff]
    %v383 = vld [vmem:[%s379 + $0x14] sm:$0xf]
    %v384 = vld [vmem:[%s379 + $0x18] sm:$0xff]
    %v385 = vld [vmem:[%s379 + $0x20] sm:$0xf]
    %v386 = vld [vmem:[%s379 + $0x24] sm:$0xff]
    %v387 = vld [vmem:[%s379 + $0x2c] sm:$0xf]
    %v388 = vld [vmem:[%s379 + $0x30] sm:$0xff]
    %v389 = vld [vmem:[%s379 + $0x38] sm:$0xf]
    %v390 = vld [vmem:[%s379 + $0x3c] sm:$0xff]
    %v391 = vld [vmem:[%s379 + $0x44] sm:$0xf]
    %v392 = vld [vmem:[%s379 + $0x48] sm:$0xff]
    %v393 = vld [vmem:[%s379 + $0x50] sm:$0xf]
    %v394 = vld [vmem:[%s379 + $0x54] sm:$0xff]
    %v395 = vld [vmem:[%s379 + $0x5c] sm:$0xf]
    %v396 = vld [vmem:[%s379 + $0x60] sm:$0xff]
    %v397 = vld [vmem:[%s379 + $0x68] sm:$0xf]
    %v398 = vld [vmem:[%s379 + $0x6c] sm:$0xff]
    %v399 = vld [vmem:[%s379 + $0x74] sm:$0xf]
    %v400 = vld [vmem:[%s379 + $0x78] sm:$0xff]
    %v401 = vld [vmem:[%s379 + $0x80] sm:$0xf]
    %v402 = vld [vmem:[%s379 + $0x84] sm:$0xff]
    %v403 = vld [vmem:[%s379 + $0x8c] sm:$0xf]
    %v404 = vld [vmem:[%s379 + $0x90] sm:$0xff]
    %v405 = vld [vmem:[%s379 + $0x98] sm:$0xf]
    %v406 = vld [vmem:[%s379 + $0x9c] sm:$0xff]
    %v407 = vld [vmem:[%s379 + $0xa4] sm:$0xf]
    %v408 = vld [vmem:[%s379 + $0xa8] sm:$0xff]
    %v409 = vld [vmem:[%s379 + $0xb0] sm:$0xf]
    %v410 = vld [vmem:[%s379 + $0xb4] sm:$0xff]
    %v411 = vld [vmem:[%s379 + $0xbc] sm:$0xf]
    %v420 = vcombine.high %v339, %v339
    %v422 = vunpack.c.l.s4 1966171168
    %v423 = vunpack.c.0.s8 %v422
    %v424 = vlaneseq
    %v425 = vshrl.u32 %v424, 7
    %v426 = vsub.s32 %v423, %v425
    %v427 = vrot.slane %v339, %v426
    %v429 = vunpack.c.l.s4 1966171168
    %v430 = vunpack.c.0.s8 %v429
    %v431 = vlaneseq
    %v432 = vshrl.u32 %v431, 7
    %v433 = vsub.s32 %v430, %v432
    %v434 = vrot.slane %v420, %v433
    %v435 = vcombine.high %v427, %v427
    %v436 = vcombine.high %v434, %v434
    %v438 = vunpack.c.l.s4 1966171168
    %v439 = vunpack.c.0.s8 %v438
    %v440 = vlaneseq
    %v441 = vshrl.u32 %v440, 7
    %v442 = vsub.s32 %v439, %v441
    %v443 = vrot.slane %v427, %v442
    %v445 = vunpack.c.l.s4 1966171168
    %v446 = vunpack.c.0.s8 %v445
    %v447 = vlaneseq
    %v448 = vshrl.u32 %v447, 7
    %v449 = vsub.s32 %v446, %v448
    %v450 = vrot.slane %v434, %v449
    %v452 = vunpack.c.l.s4 1966171168
    %v453 = vunpack.c.0.s8 %v452
    %v454 = vlaneseq
    %v455 = vshrl.u32 %v454, 7
    %v456 = vsub.s32 %v453, %v455
    %v457 = vrot.slane %v435, %v456
    %v459 = vunpack.c.l.s4 1966171168
    %v460 = vunpack.c.0.s8 %v459
    %v461 = vlaneseq
    %v462 = vshrl.u32 %v461, 7
    %v463 = vsub.s32 %v460, %v462
    %v464 = vrot.slane %v436, %v463
    %v465 = vcombine.high %v443, %v443
    %v466 = vcombine.high %v450, %v450
    %v467 = vcombine.high %v457, %v457
    %v468 = vcombine.high %v464, %v464
    %v469 = vcombine.high %v340, %v340
    %v471 = vunpack.c.l.s4 1966171168
    %v472 = vunpack.c.0.s8 %v471
    %v473 = vlaneseq
    %v474 = vshrl.u32 %v473, 7
    %v475 = vsub.s32 %v472, %v474
    %v476 = vrot.slane %v340, %v475
    %v478 = vunpack.c.l.s4 1966171168
    %v479 = vunpack.c.0.s8 %v478
    %v480 = vlaneseq
    %v481 = vshrl.u32 %v480, 7
    %v482 = vsub.s32 %v479, %v481
    %v483 = vrot.slane %v469, %v482
    %v484 = vcombine.high %v476, %v476
    %v485 = vcombine.high %v483, %v483
    %v487 = vunpack.c.l.s4 1966171168
    %v488 = vunpack.c.0.s8 %v487
    %v489 = vlaneseq
    %v490 = vshrl.u32 %v489, 7
    %v491 = vsub.s32 %v488, %v490
    %v492 = vrot.slane %v476, %v491
    %v494 = vunpack.c.l.s4 1966171168
    %v495 = vunpack.c.0.s8 %v494
    %v496 = vlaneseq
    %v497 = vshrl.u32 %v496, 7
    %v498 = vsub.s32 %v495, %v497
    %v499 = vrot.slane %v483, %v498
    %v501 = vunpack.c.l.s4 1966171168
    %v502 = vunpack.c.0.s8 %v501
    %v503 = vlaneseq
    %v504 = vshrl.u32 %v503, 7
    %v505 = vsub.s32 %v502, %v504
    %v506 = vrot.slane %v484, %v505
    %v508 = vunpack.c.l.s4 1966171168
    %v509 = vunpack.c.0.s8 %v508
    %v510 = vlaneseq
    %v511 = vshrl.u32 %v510, 7
    %v512 = vsub.s32 %v509, %v511
    %v513 = vrot.slane %v485, %v512
    %v514 = vcombine.high %v492, %v492
    %v515 = vcombine.high %v499, %v499
    %v516 = vcombine.high %v506, %v506
    %v517 = vcombine.high %v513, %v513
    %v518 = vcombine.high %v341, %v341
    %v520 = vunpack.c.l.s4 1966171168
    %v521 = vunpack.c.0.s8 %v520
    %v522 = vlaneseq
    %v523 = vshrl.u32 %v522, 7
    %v524 = vsub.s32 %v521, %v523
    %v525 = vrot.slane %v341, %v524
    %v527 = vunpack.c.l.s4 1966171168
    %v528 = vunpack.c.0.s8 %v527
    %v529 = vlaneseq
    %v530 = vshrl.u32 %v529, 7
    %v531 = vsub.s32 %v528, %v530
    %v532 = vrot.slane %v518, %v531
    %v533 = vcombine.high %v525, %v525
    %v534 = vcombine.high %v532, %v532
    %v536 = vunpack.c.l.s4 1966171168
    %v537 = vunpack.c.0.s8 %v536
    %v538 = vlaneseq
    %v539 = vshrl.u32 %v538, 7
    %v540 = vsub.s32 %v537, %v539
    %v541 = vrot.slane %v525, %v540
    %v543 = vunpack.c.l.s4 1966171168
    %v544 = vunpack.c.0.s8 %v543
    %v545 = vlaneseq
    %v546 = vshrl.u32 %v545, 7
    %v547 = vsub.s32 %v544, %v546
    %v548 = vrot.slane %v532, %v547
    %v550 = vunpack.c.l.s4 1966171168
    %v551 = vunpack.c.0.s8 %v550
    %v552 = vlaneseq
    %v553 = vshrl.u32 %v552, 7
    %v554 = vsub.s32 %v551, %v553
    %v555 = vrot.slane %v533, %v554
    %v557 = vunpack.c.l.s4 1966171168
    %v558 = vunpack.c.0.s8 %v557
    %v559 = vlaneseq
    %v560 = vshrl.u32 %v559, 7
    %v561 = vsub.s32 %v558, %v560
    %v562 = vrot.slane %v534, %v561
    %v563 = vcombine.high %v541, %v541
    %v564 = vcombine.high %v548, %v548
    %v565 = vcombine.high %v555, %v555
    %v566 = vcombine.high %v562, %v562
    %v567 = vcombine.high %v342, %v342
    %v569 = vunpack.c.l.s4 1966171168
    %v570 = vunpack.c.0.s8 %v569
    %v571 = vlaneseq
    %v572 = vshrl.u32 %v571, 7
    %v573 = vsub.s32 %v570, %v572
    %v574 = vrot.slane %v342, %v573
    %v576 = vunpack.c.l.s4 1966171168
    %v577 = vunpack.c.0.s8 %v576
    %v578 = vlaneseq
    %v579 = vshrl.u32 %v578, 7
    %v580 = vsub.s32 %v577, %v579
    %v581 = vrot.slane %v567, %v580
    %v582 = vcombine.high %v574, %v574
    %v583 = vcombine.high %v581, %v581
    %v585 = vunpack.c.l.s4 1966171168
    %v586 = vunpack.c.0.s8 %v585
    %v587 = vlaneseq
    %v588 = vshrl.u32 %v587, 7
    %v589 = vsub.s32 %v586, %v588
    %v590 = vrot.slane %v574, %v589
    %v592 = vunpack.c.l.s4 1966171168
    %v593 = vunpack.c.0.s8 %v592
    %v594 = vlaneseq
    %v595 = vshrl.u32 %v594, 7
    %v596 = vsub.s32 %v593, %v595
    %v597 = vrot.slane %v581, %v596
    %v599 = vunpack.c.l.s4 1966171168
    %v600 = vunpack.c.0.s8 %v599
    %v601 = vlaneseq
    %v602 = vshrl.u32 %v601, 7
    %v603 = vsub.s32 %v600, %v602
    %v604 = vrot.slane %v582, %v603
    %v606 = vunpack.c.l.s4 1966171168
    %v607 = vunpack.c.0.s8 %v606
    %v608 = vlaneseq
    %v609 = vshrl.u32 %v608, 7
    %v610 = vsub.s32 %v607, %v609
    %v611 = vrot.slane %v583, %v610
    %v612 = vcombine.high %v590, %v590
    %v613 = vcombine.high %v597, %v597
    %v614 = vcombine.high %v604, %v604
    %v615 = vcombine.high %v611, %v611
    %v616 = vcombine.high %v343, %v343
    %v618 = vunpack.c.l.s4 1966171168
    %v619 = vunpack.c.0.s8 %v618
    %v620 = vlaneseq
    %v621 = vshrl.u32 %v620, 7
    %v622 = vsub.s32 %v619, %v621
    %v623 = vrot.slane %v343, %v622
    %v625 = vunpack.c.l.s4 1966171168
    %v626 = vunpack.c.0.s8 %v625
    %v627 = vlaneseq
    %v628 = vshrl.u32 %v627, 7
    %v629 = vsub.s32 %v626, %v628
    %v630 = vrot.slane %v616, %v629
    %v631 = vcombine.high %v623, %v623
    %v632 = vcombine.high %v630, %v630
    %v634 = vunpack.c.l.s4 1966171168
    %v635 = vunpack.c.0.s8 %v634
    %v636 = vlaneseq
    %v637 = vshrl.u32 %v636, 7
    %v638 = vsub.s32 %v635, %v637
    %v639 = vrot.slane %v623, %v638
    %v641 = vunpack.c.l.s4 1966171168
    %v642 = vunpack.c.0.s8 %v641
    %v643 = vlaneseq
    %v644 = vshrl.u32 %v643, 7
    %v645 = vsub.s32 %v642, %v644
    %v646 = vrot.slane %v630, %v645
    %v648 = vunpack.c.l.s4 1966171168
    %v649 = vunpack.c.0.s8 %v648
    %v650 = vlaneseq
    %v651 = vshrl.u32 %v650, 7
    %v652 = vsub.s32 %v649, %v651
    %v653 = vrot.slane %v631, %v652
    %v655 = vunpack.c.l.s4 1966171168
    %v656 = vunpack.c.0.s8 %v655
    %v657 = vlaneseq
    %v658 = vshrl.u32 %v657, 7
    %v659 = vsub.s32 %v656, %v658
    %v660 = vrot.slane %v632, %v659
    %v661 = vcombine.high %v639, %v639
    %v662 = vcombine.high %v646, %v646
    %v663 = vcombine.high %v653, %v653
    %v664 = vcombine.high %v660, %v660
    %v665 = vcombine.high %v344, %v344
    %v667 = vunpack.c.l.s4 1966171168
    %v668 = vunpack.c.0.s8 %v667
    %v669 = vlaneseq
    %v670 = vshrl.u32 %v669, 7
    %v671 = vsub.s32 %v668, %v670
    %v672 = vrot.slane %v344, %v671
    %v674 = vunpack.c.l.s4 1966171168
    %v675 = vunpack.c.0.s8 %v674
    %v676 = vlaneseq
    %v677 = vshrl.u32 %v676, 7
    %v678 = vsub.s32 %v675, %v677
    %v679 = vrot.slane %v665, %v678
    %v680 = vcombine.high %v672, %v672
    %v681 = vcombine.high %v679, %v679
    %v683 = vunpack.c.l.s4 1966171168
    %v684 = vunpack.c.0.s8 %v683
    %v685 = vlaneseq
    %v686 = vshrl.u32 %v685, 7
    %v687 = vsub.s32 %v684, %v686
    %v688 = vrot.slane %v672, %v687
    %v690 = vunpack.c.l.s4 1966171168
    %v691 = vunpack.c.0.s8 %v690
    %v692 = vlaneseq
    %v693 = vshrl.u32 %v692, 7
    %v694 = vsub.s32 %v691, %v693
    %v695 = vrot.slane %v679, %v694
    %v697 = vunpack.c.l.s4 1966171168
    %v698 = vunpack.c.0.s8 %v697
    %v699 = vlaneseq
    %v700 = vshrl.u32 %v699, 7
    %v701 = vsub.s32 %v698, %v700
    %v702 = vrot.slane %v680, %v701
    %v704 = vunpack.c.l.s4 1966171168
    %v705 = vunpack.c.0.s8 %v704
    %v706 = vlaneseq
    %v707 = vshrl.u32 %v706, 7
    %v708 = vsub.s32 %v705, %v707
    %v709 = vrot.slane %v681, %v708
    %v710 = vcombine.high %v688, %v688
    %v711 = vcombine.high %v695, %v695
    %v712 = vcombine.high %v702, %v702
    %v713 = vcombine.high %v709, %v709
    %v714 = vcombine.high %v345, %v345
    %v716 = vunpack.c.l.s4 1966171168
    %v717 = vunpack.c.0.s8 %v716
    %v718 = vlaneseq
    %v719 = vshrl.u32 %v718, 7
    %v720 = vsub.s32 %v717, %v719
    %v721 = vrot.slane %v345, %v720
    %v723 = vunpack.c.l.s4 1966171168
    %v724 = vunpack.c.0.s8 %v723
    %v725 = vlaneseq
    %v726 = vshrl.u32 %v725, 7
    %v727 = vsub.s32 %v724, %v726
    %v728 = vrot.slane %v714, %v727
    %v729 = vcombine.high %v721, %v721
    %v730 = vcombine.high %v728, %v728
    %v732 = vunpack.c.l.s4 1966171168
    %v733 = vunpack.c.0.s8 %v732
    %v734 = vlaneseq
    %v735 = vshrl.u32 %v734, 7
    %v736 = vsub.s32 %v733, %v735
    %v737 = vrot.slane %v721, %v736
    %v739 = vunpack.c.l.s4 1966171168
    %v740 = vunpack.c.0.s8 %v739
    %v741 = vlaneseq
    %v742 = vshrl.u32 %v741, 7
    %v743 = vsub.s32 %v740, %v742
    %v744 = vrot.slane %v728, %v743
    %v746 = vunpack.c.l.s4 1966171168
    %v747 = vunpack.c.0.s8 %v746
    %v748 = vlaneseq
    %v749 = vshrl.u32 %v748, 7
    %v750 = vsub.s32 %v747, %v749
    %v751 = vrot.slane %v729, %v750
    %v753 = vunpack.c.l.s4 1966171168
    %v754 = vunpack.c.0.s8 %v753
    %v755 = vlaneseq
    %v756 = vshrl.u32 %v755, 7
    %v757 = vsub.s32 %v754, %v756
    %v758 = vrot.slane %v730, %v757
    %v759 = vcombine.high %v737, %v737
    %v760 = vcombine.high %v744, %v744
    %v761 = vcombine.high %v751, %v751
    %v762 = vcombine.high %v758, %v758
    %v763 = vcombine.high %v346, %v346
    %v765 = vunpack.c.l.s4 1966171168
    %v766 = vunpack.c.0.s8 %v765
    %v767 = vlaneseq
    %v768 = vshrl.u32 %v767, 7
    %v769 = vsub.s32 %v766, %v768
    %v770 = vrot.slane %v346, %v769
    %v772 = vunpack.c.l.s4 1966171168
    %v773 = vunpack.c.0.s8 %v772
    %v774 = vlaneseq
    %v775 = vshrl.u32 %v774, 7
    %v776 = vsub.s32 %v773, %v775
    %v777 = vrot.slane %v763, %v776
    %v778 = vcombine.high %v770, %v770
    %v779 = vcombine.high %v777, %v777
    %v781 = vunpack.c.l.s4 1966171168
    %v782 = vunpack.c.0.s8 %v781
    %v783 = vlaneseq
    %v784 = vshrl.u32 %v783, 7
    %v785 = vsub.s32 %v782, %v784
    %v786 = vrot.slane %v770, %v785
    %v788 = vunpack.c.l.s4 1966171168
    %v789 = vunpack.c.0.s8 %v788
    %v790 = vlaneseq
    %v791 = vshrl.u32 %v790, 7
    %v792 = vsub.s32 %v789, %v791
    %v793 = vrot.slane %v777, %v792
    %v795 = vunpack.c.l.s4 1966171168
    %v796 = vunpack.c.0.s8 %v795
    %v797 = vlaneseq
    %v798 = vshrl.u32 %v797, 7
    %v799 = vsub.s32 %v796, %v798
    %v800 = vrot.slane %v778, %v799
    %v802 = vunpack.c.l.s4 1966171168
    %v803 = vunpack.c.0.s8 %v802
    %v804 = vlaneseq
    %v805 = vshrl.u32 %v804, 7
    %v806 = vsub.s32 %v803, %v805
    %v807 = vrot.slane %v779, %v806
    %v808 = vcombine.high %v786, %v786
    %v809 = vcombine.high %v793, %v793
    %v810 = vcombine.high %v800, %v800
    %v811 = vcombine.high %v807, %v807
    %vm812 = vsmask.f32 256
    %vm813 = vsmask.f32 1284
    %vm814 = vmor %vm812, %vm813
    %vm815 = vsmask.f32 2312
    %vm816 = vmor %vm814, %vm815
    %vm817 = vsmask.f32 3340
    %vm818 = vmor %vm816, %vm817
    %vm819 = vsmask.f32 4368
    %vm820 = vmor %vm818, %vm819
    %vm821 = vsmask.f32 5396
    %vm822 = vmor %vm820, %vm821
    %vm823 = vsmask.f32 6424
    %vm824 = vmor %vm822, %vm823
    %vm825 = vsmask.f32 7452
    %vm826 = vmor %vm824, %vm825
    %v828 = vshrl.u32 %v443, 16
    %v830 = vrot.slane %v828, 7
    %v831 = vrot.slane %v830, 1
    %v833 = vshll.u32 %v457, 16
    %v835 = vsel %vm826, %v831, %v833
    %v836 = vshrl.u32 %v457, 16
    %v838 = vrot.slane %v836, 7
    %v839 = vrot.slane %v838, 1
    %v841 = vshll.u32 %v465, 16
    %v843 = vsel %vm826, %v839, %v841
    %v844 = vshrl.u32 %v465, 16
    %v846 = vrot.slane %v844, 7
    %v847 = vrot.slane %v846, 1
    %v849 = vshll.u32 %v467, 16
    %v851 = vsel %vm826, %v847, %v849
    %v852 = vshrl.u32 %v467, 16
    %v854 = vrot.slane %v852, 7
    %v855 = vrot.slane %v854, 1
    %v857 = vshll.u32 %v450, 16
    %v859 = vsel %vm826, %v855, %v857
    %v860 = vshrl.u32 %v450, 16
    %v862 = vrot.slane %v860, 7
    %v863 = vrot.slane %v862, 1
    %v865 = vshll.u32 %v464, 16
    %v867 = vsel %vm826, %v863, %v865
    %v868 = vshrl.u32 %v464, 16
    %v870 = vrot.slane %v868, 7
    %v871 = vrot.slane %v870, 1
    %v873 = vshll.u32 %v466, 16
    %v875 = vsel %vm826, %v871, %v873
    %v876 = vshrl.u32 %v466, 16
    %v878 = vrot.slane %v876, 7
    %v879 = vrot.slane %v878, 1
    %v881 = vshll.u32 %v468, 16
    %v883 = vsel %vm826, %v879, %v881
    %v885 = vshrl.u32 %v492, 16
    %v887 = vrot.slane %v885, 7
    %v888 = vrot.slane %v887, 1
    %v890 = vshll.u32 %v506, 16
    %v892 = vsel %vm826, %v888, %v890
    %v893 = vshrl.u32 %v506, 16
    %v895 = vrot.slane %v893, 7
    %v896 = vrot.slane %v895, 1
    %v898 = vshll.u32 %v514, 16
    %v900 = vsel %vm826, %v896, %v898
    %v901 = vshrl.u32 %v514, 16
    %v903 = vrot.slane %v901, 7
    %v904 = vrot.slane %v903, 1
    %v906 = vshll.u32 %v516, 16
    %v908 = vsel %vm826, %v904, %v906
    %v909 = vshrl.u32 %v516, 16
    %v911 = vrot.slane %v909, 7
    %v912 = vrot.slane %v911, 1
    %v914 = vshll.u32 %v499, 16
    %v916 = vsel %vm826, %v912, %v914
    %v917 = vshrl.u32 %v499, 16
    %v919 = vrot.slane %v917, 7
    %v920 = vrot.slane %v919, 1
    %v922 = vshll.u32 %v513, 16
    %v924 = vsel %vm826, %v920, %v922
    %v925 = vshrl.u32 %v513, 16
    %v927 = vrot.slane %v925, 7
    %v928 = vrot.slane %v927, 1
    %v930 = vshll.u32 %v515, 16
    %v932 = vsel %vm826, %v928, %v930
    %v933 = vshrl.u32 %v515, 16
    %v935 = vrot.slane %v933, 7
    %v936 = vrot.slane %v935, 1
    %v938 = vshll.u32 %v517, 16
    %v940 = vsel %vm826, %v936, %v938
    %v942 = vshrl.u32 %v541, 16
    %v944 = vrot.slane %v942, 7
    %v945 = vrot.slane %v944, 1
    %v947 = vshll.u32 %v555, 16
    %v949 = vsel %vm826, %v945, %v947
    %v950 = vshrl.u32 %v555, 16
    %v952 = vrot.slane %v950, 7
    %v953 = vrot.slane %v952, 1
    %v955 = vshll.u32 %v563, 16
    %v957 = vsel %vm826, %v953, %v955
    %v958 = vshrl.u32 %v563, 16
    %v960 = vrot.slane %v958, 7
    %v961 = vrot.slane %v960, 1
    %v963 = vshll.u32 %v565, 16
    %v965 = vsel %vm826, %v961, %v963
    %v966 = vshrl.u32 %v565, 16
    %v968 = vrot.slane %v966, 7
    %v969 = vrot.slane %v968, 1
    %v971 = vshll.u32 %v548, 16
    %v973 = vsel %vm826, %v969, %v971
    %v974 = vshrl.u32 %v548, 16
    %v976 = vrot.slane %v974, 7
    %v977 = vrot.slane %v976, 1
    %v979 = vshll.u32 %v562, 16
    %v981 = vsel %vm826, %v977, %v979
    %v982 = vshrl.u32 %v562, 16
    %v984 = vrot.slane %v982, 7
    %v985 = vrot.slane %v984, 1
    %v987 = vshll.u32 %v564, 16
    %v989 = vsel %vm826, %v985, %v987
    %v990 = vshrl.u32 %v564, 16
    %v992 = vrot.slane %v990, 7
    %v993 = vrot.slane %v992, 1
    %v995 = vshll.u32 %v566, 16
    %v997 = vsel %vm826, %v993, %v995
    %v999 = vshrl.u32 %v590, 16
    %v1001 = vrot.slane %v999, 7
    %v1002 = vrot.slane %v1001, 1
    %v1004 = vshll.u32 %v604, 16
    %v1006 = vsel %vm826, %v1002, %v1004
    %v1007 = vshrl.u32 %v604, 16
    %v1009 = vrot.slane %v1007, 7
    %v1010 = vrot.slane %v1009, 1
    %v1012 = vshll.u32 %v612, 16
    %v1014 = vsel %vm826, %v1010, %v1012
    %v1015 = vshrl.u32 %v612, 16
    %v1017 = vrot.slane %v1015, 7
    %v1018 = vrot.slane %v1017, 1
    %v1020 = vshll.u32 %v614, 16
    %v1022 = vsel %vm826, %v1018, %v1020
    %v1023 = vshrl.u32 %v614, 16
    %v1025 = vrot.slane %v1023, 7
    %v1026 = vrot.slane %v1025, 1
    %v1028 = vshll.u32 %v597, 16
    %v1030 = vsel %vm826, %v1026, %v1028
    %v1031 = vshrl.u32 %v597, 16
    %v1033 = vrot.slane %v1031, 7
    %v1034 = vrot.slane %v1033, 1
    %v1036 = vshll.u32 %v611, 16
    %v1038 = vsel %vm826, %v1034, %v1036
    %v1039 = vshrl.u32 %v611, 16
    %v1041 = vrot.slane %v1039, 7
    %v1042 = vrot.slane %v1041, 1
    %v1044 = vshll.u32 %v613, 16
    %v1046 = vsel %vm826, %v1042, %v1044
    %v1047 = vshrl.u32 %v613, 16
    %v1049 = vrot.slane %v1047, 7
    %v1050 = vrot.slane %v1049, 1
    %v1052 = vshll.u32 %v615, 16
    %v1054 = vsel %vm826, %v1050, %v1052
    %v1056 = vshrl.u32 %v639, 16
    %v1058 = vrot.slane %v1056, 7
    %v1059 = vrot.slane %v1058, 1
    %v1061 = vshll.u32 %v653, 16
    %v1063 = vsel %vm826, %v1059, %v1061
    %v1064 = vshrl.u32 %v653, 16
    %v1066 = vrot.slane %v1064, 7
    %v1067 = vrot.slane %v1066, 1
    %v1069 = vshll.u32 %v661, 16
    %v1071 = vsel %vm826, %v1067, %v1069
    %v1072 = vshrl.u32 %v661, 16
    %v1074 = vrot.slane %v1072, 7
    %v1075 = vrot.slane %v1074, 1
    %v1077 = vshll.u32 %v663, 16
    %v1079 = vsel %vm826, %v1075, %v1077
    %v1080 = vshrl.u32 %v663, 16
    %v1082 = vrot.slane %v1080, 7
    %v1083 = vrot.slane %v1082, 1
    %v1085 = vshll.u32 %v646, 16
    %v1087 = vsel %vm826, %v1083, %v1085
    %v1088 = vshrl.u32 %v646, 16
    %v1090 = vrot.slane %v1088, 7
    %v1091 = vrot.slane %v1090, 1
    %v1093 = vshll.u32 %v660, 16
    %v1095 = vsel %vm826, %v1091, %v1093
    %v1096 = vshrl.u32 %v660, 16
    %v1098 = vrot.slane %v1096, 7
    %v1099 = vrot.slane %v1098, 1
    %v1101 = vshll.u32 %v662, 16
    %v1103 = vsel %vm826, %v1099, %v1101
    %v1104 = vshrl.u32 %v662, 16
    %v1106 = vrot.slane %v1104, 7
    %v1107 = vrot.slane %v1106, 1
    %v1109 = vshll.u32 %v664, 16
    %v1111 = vsel %vm826, %v1107, %v1109
    %v1113 = vshrl.u32 %v688, 16
    %v1115 = vrot.slane %v1113, 7
    %v1116 = vrot.slane %v1115, 1
    %v1118 = vshll.u32 %v702, 16
    %v1120 = vsel %vm826, %v1116, %v1118
    %v1121 = vshrl.u32 %v702, 16
    %v1123 = vrot.slane %v1121, 7
    %v1124 = vrot.slane %v1123, 1
    %v1126 = vshll.u32 %v710, 16
    %v1128 = vsel %vm826, %v1124, %v1126
    %v1129 = vshrl.u32 %v710, 16
    %v1131 = vrot.slane %v1129, 7
    %v1132 = vrot.slane %v1131, 1
    %v1134 = vshll.u32 %v712, 16
    %v1136 = vsel %vm826, %v1132, %v1134
    %v1137 = vshrl.u32 %v712, 16
    %v1139 = vrot.slane %v1137, 7
    %v1140 = vrot.slane %v1139, 1
    %v1142 = vshll.u32 %v695, 16
    %v1144 = vsel %vm826, %v1140, %v1142
    %v1145 = vshrl.u32 %v695, 16
    %v1147 = vrot.slane %v1145, 7
    %v1148 = vrot.slane %v1147, 1
    %v1150 = vshll.u32 %v709, 16
    %v1152 = vsel %vm826, %v1148, %v1150
    %v1153 = vshrl.u32 %v709, 16
    %v1155 = vrot.slane %v1153, 7
    %v1156 = vrot.slane %v1155, 1
    %v1158 = vshll.u32 %v711, 16
    %v1160 = vsel %vm826, %v1156, %v1158
    %v1161 = vshrl.u32 %v711, 16
    %v1163 = vrot.slane %v1161, 7
    %v1164 = vrot.slane %v1163, 1
    %v1166 = vshll.u32 %v713, 16
    %v1168 = vsel %vm826, %v1164, %v1166
    %v1170 = vshrl.u32 %v737, 16
    %v1172 = vrot.slane %v1170, 7
    %v1173 = vrot.slane %v1172, 1
    %v1175 = vshll.u32 %v751, 16
    %v1177 = vsel %vm826, %v1173, %v1175
    %v1178 = vshrl.u32 %v751, 16
    %v1180 = vrot.slane %v1178, 7
    %v1181 = vrot.slane %v1180, 1
    %v1183 = vshll.u32 %v759, 16
    %v1185 = vsel %vm826, %v1181, %v1183
    %v1186 = vshrl.u32 %v759, 16
    %v1188 = vrot.slane %v1186, 7
    %v1189 = vrot.slane %v1188, 1
    %v1191 = vshll.u32 %v761, 16
    %v1193 = vsel %vm826, %v1189, %v1191
    %v1194 = vshrl.u32 %v761, 16
    %v1196 = vrot.slane %v1194, 7
    %v1197 = vrot.slane %v1196, 1
    %v1199 = vshll.u32 %v744, 16
    %v1201 = vsel %vm826, %v1197, %v1199
    %v1202 = vshrl.u32 %v744, 16
    %v1204 = vrot.slane %v1202, 7
    %v1205 = vrot.slane %v1204, 1
    %v1207 = vshll.u32 %v758, 16
    %v1209 = vsel %vm826, %v1205, %v1207
    %v1210 = vshrl.u32 %v758, 16
    %v1212 = vrot.slane %v1210, 7
    %v1213 = vrot.slane %v1212, 1
    %v1215 = vshll.u32 %v760, 16
    %v1217 = vsel %vm826, %v1213, %v1215
    %v1218 = vshrl.u32 %v760, 16
    %v1220 = vrot.slane %v1218, 7
    %v1221 = vrot.slane %v1220, 1
    %v1223 = vshll.u32 %v762, 16
    %v1225 = vsel %vm826, %v1221, %v1223
    %v1227 = vshrl.u32 %v786, 16
    %v1229 = vrot.slane %v1227, 7
    %v1230 = vrot.slane %v1229, 1
    %v1232 = vshll.u32 %v800, 16
    %v1234 = vsel %vm826, %v1230, %v1232
    %v1235 = vshrl.u32 %v800, 16
    %v1237 = vrot.slane %v1235, 7
    %v1238 = vrot.slane %v1237, 1
    %v1240 = vshll.u32 %v808, 16
    %v1242 = vsel %vm826, %v1238, %v1240
    %v1243 = vshrl.u32 %v808, 16
    %v1245 = vrot.slane %v1243, 7
    %v1246 = vrot.slane %v1245, 1
    %v1248 = vshll.u32 %v810, 16
    %v1250 = vsel %vm826, %v1246, %v1248
    %v1251 = vshrl.u32 %v810, 16
    %v1253 = vrot.slane %v1251, 7
    %v1254 = vrot.slane %v1253, 1
    %v1256 = vshll.u32 %v793, 16
    %v1258 = vsel %vm826, %v1254, %v1256
    %v1259 = vshrl.u32 %v793, 16
    %v1261 = vrot.slane %v1259, 7
    %v1262 = vrot.slane %v1261, 1
    %v1264 = vshll.u32 %v807, 16
    %v1266 = vsel %vm826, %v1262, %v1264
    %v1267 = vshrl.u32 %v807, 16
    %v1269 = vrot.slane %v1267, 7
    %v1270 = vrot.slane %v1269, 1
    %v1272 = vshll.u32 %v809, 16
    %v1274 = vsel %vm826, %v1270, %v1272
    %v1275 = vshrl.u32 %v809, 16
    %v1277 = vrot.slane %v1275, 7
    %v1278 = vrot.slane %v1277, 1
    %v1280 = vshll.u32 %v811, 16
    %v1282 = vsel %vm826, %v1278, %v1280
    %v1283 = vcombine.low %v835, %v843
    %v1284 = vcombine.low %v851, %v859
    %v1285 = vcombine.low %v867, %v875
    %v1286 = vcombine.low %v883, %v892
    %v1288 = vunpack.c.l.s4 1966171168
    %v1289 = vunpack.c.0.s8 %v1288
    %v1290 = vlaneseq
    %v1291 = vshrl.u32 %v1290, 7
    %v1292 = vsub.s32 %v1289, %v1291
    %v1293 = vrot.slane %v1283, %v1292
    %v1295 = vunpack.c.l.s4 1966171168
    %v1296 = vunpack.c.0.s8 %v1295
    %v1297 = vlaneseq
    %v1298 = vshrl.u32 %v1297, 7
    %v1299 = vsub.s32 %v1296, %v1298
    %v1300 = vrot.slane %v1284, %v1299
    %v1302 = vunpack.c.l.s4 1966171168
    %v1303 = vunpack.c.0.s8 %v1302
    %v1304 = vlaneseq
    %v1305 = vshrl.u32 %v1304, 7
    %v1306 = vsub.s32 %v1303, %v1305
    %v1307 = vrot.slane %v1285, %v1306
    %v1309 = vunpack.c.l.s4 1966171168
    %v1310 = vunpack.c.0.s8 %v1309
    %v1311 = vlaneseq
    %v1312 = vshrl.u32 %v1311, 7
    %v1313 = vsub.s32 %v1310, %v1312
    %v1314 = vrot.slane %v1286, %v1313
    %v1315 = vcombine.low %v1293, %v1300
    %v1316 = vcombine.low %v1307, %v1314
    %v1318 = vunpack.c.l.s4 1966171168
    %v1319 = vunpack.c.0.s8 %v1318
    %v1320 = vlaneseq
    %v1321 = vshrl.u32 %v1320, 7
    %v1322 = vsub.s32 %v1319, %v1321
    %v1323 = vrot.slane %v1315, %v1322
    %v1325 = vunpack.c.l.s4 1966171168
    %v1326 = vunpack.c.0.s8 %v1325
    %v1327 = vlaneseq
    %v1328 = vshrl.u32 %v1327, 7
    %v1329 = vsub.s32 %v1326, %v1328
    %v1330 = vrot.slane %v1316, %v1329
    %v1331 = vcombine.low %v1323, %v1330
    %v1332 = vcombine.low %v900, %v908
    %v1333 = vcombine.low %v916, %v924
    %v1334 = vcombine.low %v932, %v940
    %v1335 = vcombine.low %v949, %v957
    %v1337 = vunpack.c.l.s4 1966171168
    %v1338 = vunpack.c.0.s8 %v1337
    %v1339 = vlaneseq
    %v1340 = vshrl.u32 %v1339, 7
    %v1341 = vsub.s32 %v1338, %v1340
    %v1342 = vrot.slane %v1332, %v1341
    %v1344 = vunpack.c.l.s4 1966171168
    %v1345 = vunpack.c.0.s8 %v1344
    %v1346 = vlaneseq
    %v1347 = vshrl.u32 %v1346, 7
    %v1348 = vsub.s32 %v1345, %v1347
    %v1349 = vrot.slane %v1333, %v1348
    %v1351 = vunpack.c.l.s4 1966171168
    %v1352 = vunpack.c.0.s8 %v1351
    %v1353 = vlaneseq
    %v1354 = vshrl.u32 %v1353, 7
    %v1355 = vsub.s32 %v1352, %v1354
    %v1356 = vrot.slane %v1334, %v1355
    %v1358 = vunpack.c.l.s4 1966171168
    %v1359 = vunpack.c.0.s8 %v1358
    %v1360 = vlaneseq
    %v1361 = vshrl.u32 %v1360, 7
    %v1362 = vsub.s32 %v1359, %v1361
    %v1363 = vrot.slane %v1335, %v1362
    %v1364 = vcombine.low %v1342, %v1349
    %v1365 = vcombine.low %v1356, %v1363
    %v1367 = vunpack.c.l.s4 1966171168
    %v1368 = vunpack.c.0.s8 %v1367
    %v1369 = vlaneseq
    %v1370 = vshrl.u32 %v1369, 7
    %v1371 = vsub.s32 %v1368, %v1370
    %v1372 = vrot.slane %v1364, %v1371
    %v1374 = vunpack.c.l.s4 1966171168
    %v1375 = vunpack.c.0.s8 %v1374
    %v1376 = vlaneseq
    %v1377 = vshrl.u32 %v1376, 7
    %v1378 = vsub.s32 %v1375, %v1377
    %v1379 = vrot.slane %v1365, %v1378
    %v1380 = vcombine.low %v1372, %v1379
    %v1381 = vcombine.low %v965, %v973
    %v1382 = vcombine.low %v981, %v989
    %v1383 = vcombine.low %v997, %v1006
    %v1384 = vcombine.low %v1014, %v1022
    %v1386 = vunpack.c.l.s4 1966171168
    %v1387 = vunpack.c.0.s8 %v1386
    %v1388 = vlaneseq
    %v1389 = vshrl.u32 %v1388, 7
    %v1390 = vsub.s32 %v1387, %v1389
    %v1391 = vrot.slane %v1381, %v1390
    %v1393 = vunpack.c.l.s4 1966171168
    %v1394 = vunpack.c.0.s8 %v1393
    %v1395 = vlaneseq
    %v1396 = vshrl.u32 %v1395, 7
    %v1397 = vsub.s32 %v1394, %v1396
    %v1398 = vrot.slane %v1382, %v1397
    %v1400 = vunpack.c.l.s4 1966171168
    %v1401 = vunpack.c.0.s8 %v1400
    %v1402 = vlaneseq
    %v1403 = vshrl.u32 %v1402, 7
    %v1404 = vsub.s32 %v1401, %v1403
    %v1405 = vrot.slane %v1383, %v1404
    %v1407 = vunpack.c.l.s4 1966171168
    %v1408 = vunpack.c.0.s8 %v1407
    %v1409 = vlaneseq
    %v1410 = vshrl.u32 %v1409, 7
    %v1411 = vsub.s32 %v1408, %v1410
    %v1412 = vrot.slane %v1384, %v1411
    %v1413 = vcombine.low %v1391, %v1398
    %v1414 = vcombine.low %v1405, %v1412
    %v1416 = vunpack.c.l.s4 1966171168
    %v1417 = vunpack.c.0.s8 %v1416
    %v1418 = vlaneseq
    %v1419 = vshrl.u32 %v1418, 7
    %v1420 = vsub.s32 %v1417, %v1419
    %v1421 = vrot.slane %v1413, %v1420
    %v1423 = vunpack.c.l.s4 1966171168
    %v1424 = vunpack.c.0.s8 %v1423
    %v1425 = vlaneseq
    %v1426 = vshrl.u32 %v1425, 7
    %v1427 = vsub.s32 %v1424, %v1426
    %v1428 = vrot.slane %v1414, %v1427
    %v1429 = vcombine.low %v1421, %v1428
    %v1430 = vcombine.low %v1030, %v1038
    %v1431 = vcombine.low %v1046, %v1054
    %v1432 = vcombine.low %v1063, %v1071
    %v1433 = vcombine.low %v1079, %v1087
    %v1435 = vunpack.c.l.s4 1966171168
    %v1436 = vunpack.c.0.s8 %v1435
    %v1437 = vlaneseq
    %v1438 = vshrl.u32 %v1437, 7
    %v1439 = vsub.s32 %v1436, %v1438
    %v1440 = vrot.slane %v1430, %v1439
    %v1442 = vunpack.c.l.s4 1966171168
    %v1443 = vunpack.c.0.s8 %v1442
    %v1444 = vlaneseq
    %v1445 = vshrl.u32 %v1444, 7
    %v1446 = vsub.s32 %v1443, %v1445
    %v1447 = vrot.slane %v1431, %v1446
    %v1449 = vunpack.c.l.s4 1966171168
    %v1450 = vunpack.c.0.s8 %v1449
    %v1451 = vlaneseq
    %v1452 = vshrl.u32 %v1451, 7
    %v1453 = vsub.s32 %v1450, %v1452
    %v1454 = vrot.slane %v1432, %v1453
    %v1456 = vunpack.c.l.s4 1966171168
    %v1457 = vunpack.c.0.s8 %v1456
    %v1458 = vlaneseq
    %v1459 = vshrl.u32 %v1458, 7
    %v1460 = vsub.s32 %v1457, %v1459
    %v1461 = vrot.slane %v1433, %v1460
    %v1462 = vcombine.low %v1440, %v1447
    %v1463 = vcombine.low %v1454, %v1461
    %v1465 = vunpack.c.l.s4 1966171168
    %v1466 = vunpack.c.0.s8 %v1465
    %v1467 = vlaneseq
    %v1468 = vshrl.u32 %v1467, 7
    %v1469 = vsub.s32 %v1466, %v1468
    %v1470 = vrot.slane %v1462, %v1469
    %v1472 = vunpack.c.l.s4 1966171168
    %v1473 = vunpack.c.0.s8 %v1472
    %v1474 = vlaneseq
    %v1475 = vshrl.u32 %v1474, 7
    %v1476 = vsub.s32 %v1473, %v1475
    %v1477 = vrot.slane %v1463, %v1476
    %v1478 = vcombine.low %v1470, %v1477
    %v1479 = vcombine.low %v1095, %v1103
    %v1480 = vcombine.low %v1111, %v1120
    %v1481 = vcombine.low %v1128, %v1136
    %v1482 = vcombine.low %v1144, %v1152
    %v1484 = vunpack.c.l.s4 1966171168
    %v1485 = vunpack.c.0.s8 %v1484
    %v1486 = vlaneseq
    %v1487 = vshrl.u32 %v1486, 7
    %v1488 = vsub.s32 %v1485, %v1487
    %v1489 = vrot.slane %v1479, %v1488
    %v1491 = vunpack.c.l.s4 1966171168
    %v1492 = vunpack.c.0.s8 %v1491
    %v1493 = vlaneseq
    %v1494 = vshrl.u32 %v1493, 7
    %v1495 = vsub.s32 %v1492, %v1494
    %v1496 = vrot.slane %v1480, %v1495
    %v1498 = vunpack.c.l.s4 1966171168
    %v1499 = vunpack.c.0.s8 %v1498
    %v1500 = vlaneseq
    %v1501 = vshrl.u32 %v1500, 7
    %v1502 = vsub.s32 %v1499, %v1501
    %v1503 = vrot.slane %v1481, %v1502
    %v1505 = vunpack.c.l.s4 1966171168
    %v1506 = vunpack.c.0.s8 %v1505
    %v1507 = vlaneseq
    %v1508 = vshrl.u32 %v1507, 7
    %v1509 = vsub.s32 %v1506, %v1508
    %v1510 = vrot.slane %v1482, %v1509
    %v1511 = vcombine.low %v1489, %v1496
    %v1512 = vcombine.low %v1503, %v1510
    %v1514 = vunpack.c.l.s4 1966171168
    %v1515 = vunpack.c.0.s8 %v1514
    %v1516 = vlaneseq
    %v1517 = vshrl.u32 %v1516, 7
    %v1518 = vsub.s32 %v1515, %v1517
    %v1519 = vrot.slane %v1511, %v1518
    %v1521 = vunpack.c.l.s4 1966171168
    %v1522 = vunpack.c.0.s8 %v1521
    %v1523 = vlaneseq
    %v1524 = vshrl.u32 %v1523, 7
    %v1525 = vsub.s32 %v1522, %v1524
    %v1526 = vrot.slane %v1512, %v1525
    %v1527 = vcombine.low %v1519, %v1526
    %v1528 = vcombine.low %v1160, %v1168
    %v1529 = vcombine.low %v1177, %v1185
    %v1530 = vcombine.low %v1193, %v1201
    %v1531 = vcombine.low %v1209, %v1217
    %v1533 = vunpack.c.l.s4 1966171168
    %v1534 = vunpack.c.0.s8 %v1533
    %v1535 = vlaneseq
    %v1536 = vshrl.u32 %v1535, 7
    %v1537 = vsub.s32 %v1534, %v1536
    %v1538 = vrot.slane %v1528, %v1537
    %v1540 = vunpack.c.l.s4 1966171168
    %v1541 = vunpack.c.0.s8 %v1540
    %v1542 = vlaneseq
    %v1543 = vshrl.u32 %v1542, 7
    %v1544 = vsub.s32 %v1541, %v1543
    %v1545 = vrot.slane %v1529, %v1544
    %v1547 = vunpack.c.l.s4 1966171168
    %v1548 = vunpack.c.0.s8 %v1547
    %v1549 = vlaneseq
    %v1550 = vshrl.u32 %v1549, 7
    %v1551 = vsub.s32 %v1548, %v1550
    %v1552 = vrot.slane %v1530, %v1551
    %v1554 = vunpack.c.l.s4 1966171168
    %v1555 = vunpack.c.0.s8 %v1554
    %v1556 = vlaneseq
    %v1557 = vshrl.u32 %v1556, 7
    %v1558 = vsub.s32 %v1555, %v1557
    %v1559 = vrot.slane %v1531, %v1558
    %v1560 = vcombine.low %v1538, %v1545
    %v1561 = vcombine.low %v1552, %v1559
    %v1563 = vunpack.c.l.s4 1966171168
    %v1564 = vunpack.c.0.s8 %v1563
    %v1565 = vlaneseq
    %v1566 = vshrl.u32 %v1565, 7
    %v1567 = vsub.s32 %v1564, %v1566
    %v1568 = vrot.slane %v1560, %v1567
    %v1570 = vunpack.c.l.s4 1966171168
    %v1571 = vunpack.c.0.s8 %v1570
    %v1572 = vlaneseq
    %v1573 = vshrl.u32 %v1572, 7
    %v1574 = vsub.s32 %v1571, %v1573
    %v1575 = vrot.slane %v1561, %v1574
    %v1576 = vcombine.low %v1568, %v1575
    %v1577 = vcombine.low %v1225, %v1234
    %v1578 = vcombine.low %v1242, %v1250
    %v1579 = vcombine.low %v1258, %v1266
    %v1580 = vcombine.low %v1274, %v1282
    %v1582 = vunpack.c.l.s4 1966171168
    %v1583 = vunpack.c.0.s8 %v1582
    %v1584 = vlaneseq
    %v1585 = vshrl.u32 %v1584, 7
    %v1586 = vsub.s32 %v1583, %v1585
    %v1587 = vrot.slane %v1577, %v1586
    %v1589 = vunpack.c.l.s4 1966171168
    %v1590 = vunpack.c.0.s8 %v1589
    %v1591 = vlaneseq
    %v1592 = vshrl.u32 %v1591, 7
    %v1593 = vsub.s32 %v1590, %v1592
    %v1594 = vrot.slane %v1578, %v1593
    %v1596 = vunpack.c.l.s4 1966171168
    %v1597 = vunpack.c.0.s8 %v1596
    %v1598 = vlaneseq
    %v1599 = vshrl.u32 %v1598, 7
    %v1600 = vsub.s32 %v1597, %v1599
    %v1601 = vrot.slane %v1579, %v1600
    %v1603 = vunpack.c.l.s4 1966171168
    %v1604 = vunpack.c.0.s8 %v1603
    %v1605 = vlaneseq
    %v1606 = vshrl.u32 %v1605, 7
    %v1607 = vsub.s32 %v1604, %v1606
    %v1608 = vrot.slane %v1580, %v1607
    %v1609 = vcombine.low %v1587, %v1594
    %v1610 = vcombine.low %v1601, %v1608
    %v1612 = vunpack.c.l.s4 1966171168
    %v1613 = vunpack.c.0.s8 %v1612
    %v1614 = vlaneseq
    %v1615 = vshrl.u32 %v1614, 7
    %v1616 = vsub.s32 %v1613, %v1615
    %v1617 = vrot.slane %v1609, %v1616
    %v1619 = vunpack.c.l.s4 1966171168
    %v1620 = vunpack.c.0.s8 %v1619
    %v1621 = vlaneseq
    %v1622 = vshrl.u32 %v1621, 7
    %v1623 = vsub.s32 %v1620, %v1622
    %v1624 = vrot.slane %v1610, %v1623
    %v1625 = vcombine.low %v1617, %v1624
    %v1665 = vunpack.c.l.b16 %v380
    %v1666 = vunpack.c.h.b16 %v380
    %v1667 = vunpack.c.l.b16 %v381
    %v1668 = vunpack.c.l.b16 %v382
    %v1669 = vunpack.c.h.b16 %v382
    %v1670 = vunpack.c.l.b16 %v383
    %v1671 = vunpack.c.l.b16 %v384
    %v1672 = vunpack.c.h.b16 %v384
    %v1673 = vunpack.c.l.b16 %v385
    %v1674 = vunpack.c.l.b16 %v386
    %v1675 = vunpack.c.h.b16 %v386
    %v1676 = vunpack.c.l.b16 %v387
    %v1677 = vunpack.c.l.b16 %v388
    %v1678 = vunpack.c.h.b16 %v388
    %v1679 = vunpack.c.l.b16 %v389
    %v1680 = vunpack.c.l.b16 %v390
    %v1681 = vunpack.c.h.b16 %v390
    %v1682 = vunpack.c.l.b16 %v391
    %v1683 = vunpack.c.l.b16 %v392
    %v1684 = vunpack.c.h.b16 %v392
    %v1685 = vunpack.c.l.b16 %v393
    %v1686 = vunpack.c.l.b16 %v394
    %v1687 = vunpack.c.h.b16 %v394
    %v1688 = vunpack.c.l.b16 %v395
    %v1689 = vunpack.c.l.b16 %v396
    %v1690 = vunpack.c.h.b16 %v396
    %v1691 = vunpack.c.l.b16 %v397
    %v1692 = vunpack.c.l.b16 %v398
    %v1693 = vunpack.c.h.b16 %v398
    %v1694 = vunpack.c.l.b16 %v399
    %v1695 = vunpack.c.l.b16 %v400
    %v1696 = vunpack.c.h.b16 %v400
    %v1697 = vunpack.c.l.b16 %v401
    %v1698 = vunpack.c.l.b16 %v402
    %v1699 = vunpack.c.h.b16 %v402
    %v1700 = vunpack.c.l.b16 %v403
    %v1701 = vunpack.c.l.b16 %v404
    %v1702 = vunpack.c.h.b16 %v404
    %v1703 = vunpack.c.l.b16 %v405
    %v1704 = vunpack.c.l.b16 %v406
    %v1705 = vunpack.c.h.b16 %v406
    %v1706 = vunpack.c.l.b16 %v407
    %v1707 = vunpack.c.l.b16 %v408
    %v1708 = vunpack.c.h.b16 %v408
    %v1709 = vunpack.c.l.b16 %v409
    %v1710 = vunpack.c.l.b16 %v410
    %v1711 = vunpack.c.h.b16 %v410
    %v1712 = vunpack.c.l.b16 %v411
    %v1713 = vpack.c.b16 %v1668, %v1665
    %v1714 = vpack.c.b16 %v1669, %v1666
    %v1715 = vpack.c.b16 %v1670, %v1667
    %v1716 = vpack.c.b16 %v1674, %v1671
    %v1717 = vpack.c.b16 %v1675, %v1672
    %v1718 = vpack.c.b16 %v1676, %v1673
    %v1719 = vpack.c.b16 %v1680, %v1677
    %v1720 = vpack.c.b16 %v1681, %v1678
    %v1721 = vpack.c.b16 %v1682, %v1679
    %v1722 = vpack.c.b16 %v1686, %v1683
    %v1723 = vpack.c.b16 %v1687, %v1684
    %v1724 = vpack.c.b16 %v1688, %v1685
    %v1725 = vpack.c.b16 %v1692, %v1689
    %v1726 = vpack.c.b16 %v1693, %v1690
    %v1727 = vpack.c.b16 %v1694, %v1691
    %v1728 = vpack.c.b16 %v1698, %v1695
    %v1729 = vpack.c.b16 %v1699, %v1696
    %v1730 = vpack.c.b16 %v1700, %v1697
    %v1731 = vpack.c.b16 %v1704, %v1701
    %v1732 = vpack.c.b16 %v1705, %v1702
    %v1733 = vpack.c.b16 %v1706, %v1703
    %v1734 = vpack.c.b16 %v1710, %v1707
    %v1735 = vpack.c.b16 %v1711, %v1708
    %v1736 = vpack.c.b16 %v1712, %v1709
    %1761 = vmatprep.subr.bf16.mxu0 %v1714
    %1762 = vmatpush1.bf16.msra.mxu0 %v1713
    %1763 = vmatprep.subr.bf16.mxu0 %v1717
    %1764 = vmatpush1.bf16.msra.mxu0 %v1716
    %1765 = vmatprep.subr.bf16.mxu0 %v1720
    %1766 = vmatpush1.bf16.msra.mxu0 %v1719
    %1767 = vmatprep.subr.bf16.mxu0 %v1723
    %1768 = vmatpush1.bf16.msra.mxu0 %v1722
    %1769 = vmatprep.subr.bf16.mxu0 %v1726
    %1770 = vmatpush1.bf16.msra.mxu0 %v1725
    %1771 = vmatprep.subr.bf16.mxu0 %v1729
    %1772 = vmatpush1.bf16.msra.mxu0 %v1728
    %1773 = vmatprep.subr.bf16.mxu0 %v1732
    %1774 = vmatpush1.bf16.msra.mxu0 %v1731
    %1775 = vmatprep.subr.bf16.mxu0 %v1735
    %1776 = vmatpush1.bf16.msra.mxu0 %v1734
    %1777 = vmatprep.subr.bf16.mxu0 0
    %1778 = vmatpush1.bf16.msra.mxu0 0
    %1779 = vmatprep.subr.bf16.mxu0 0
    %1780 = vmatpush1.bf16.msra.mxu0 0
    %1781 = vmatprep.subr.bf16.mxu0 0
    %1782 = vmatpush1.bf16.msra.mxu0 0
    %1783 = vmatprep.subr.bf16.mxu0 0
    %1784 = vmatpush1.bf16.msra.mxu0 0
    %1785 = vmatprep.subr.bf16.mxu0 0
    %1786 = vmatpush1.bf16.msra.mxu0 0
    %1787 = vmatprep.subr.bf16.mxu0 0
    %1788 = vmatpush1.bf16.msra.mxu0 0
    %1789 = vmatprep.subr.bf16.mxu0 0
    %1790 = vmatpush1.bf16.msra.mxu0 0
    %1791 = vmatprep.subr.bf16.mxu0 0
    %1792 = vmatpush1.bf16.msra.mxu0 0
    %1793 = vmatprep.mubr.bf16.mxu0 0
    %1794 = vmatmul.mubr.bf16.gmra.mrb[0].mxu0 %v1331
    %v1795 = vpop.f32.mrb[0].mxu0
    %v1796 = vadd.f32 0.0, %v1795
    %v1797 = vpop.f32.mrb[0].mxu0
    %v1798 = vadd.f32 0.0, %v1797
    %v1799 = vpop.f32.mrb[0].mxu0
    %v1800 = vadd.f32 0.0, %v1799
    %v1801 = vpop.f32.mrb[0].mxu0
    %v1802 = vadd.f32 0.0, %v1801
    %1803 = vmatprep.mubr.bf16.mxu0 0
    %1804 = vmatmul.mubr.bf16.gmra.mrb[0].mxu0 %v1380
    %v1805 = vpop.f32.mrb[0].mxu0
    %v1806 = vadd.f32 0.0, %v1805
    %v1807 = vpop.f32.mrb[0].mxu0
    %v1808 = vadd.f32 0.0, %v1807
    %v1809 = vpop.f32.mrb[0].mxu0
    %v1810 = vadd.f32 0.0, %v1809
    %v1811 = vpop.f32.mrb[0].mxu0
    %v1812 = vadd.f32 0.0, %v1811
    %1813 = vmatprep.mubr.bf16.mxu0 0
    %1814 = vmatmul.mubr.bf16.gmra.mrb[0].mxu0 %v1429
    %v1815 = vpop.f32.mrb[0].mxu0
    %v1816 = vadd.f32 0.0, %v1815
    %v1817 = vpop.f32.mrb[0].mxu0
    %v1818 = vadd.f32 0.0, %v1817
    %v1819 = vpop.f32.mrb[0].mxu0
    %v1820 = vadd.f32 0.0, %v1819
    %v1821 = vpop.f32.mrb[0].mxu0
    %v1822 = vadd.f32 0.0, %v1821
    %1823 = vmatprep.mubr.bf16.mxu0 0
    %1824 = vmatmul.mubr.bf16.gmra.mrb[0].mxu0 %v1478
    %v1825 = vpop.f32.mrb[0].mxu0
    %v1826 = vadd.f32 0.0, %v1825
    %v1827 = vpop.f32.mrb[0].mxu0
    %v1828 = vadd.f32 0.0, %v1827
    %v1829 = vpop.f32.mrb[0].mxu0
    %v1830 = vadd.f32 0.0, %v1829
    %v1831 = vpop.f32.mrb[0].mxu0
    %v1832 = vadd.f32 0.0, %v1831
    %1833 = vmatprep.mubr.bf16.mxu0 0
    %1834 = vmatmul.mubr.bf16.gmra.mrb[0].mxu0 %v1527
    %v1835 = vpop.f32.mrb[0].mxu0
    %v1836 = vadd.f32 0.0, %v1835
    %v1837 = vpop.f32.mrb[0].mxu0
    %v1838 = vadd.f32 0.0, %v1837
    %v1839 = vpop.f32.mrb[0].mxu0
    %v1840 = vadd.f32 0.0, %v1839
    %v1841 = vpop.f32.mrb[0].mxu0
    %v1842 = vadd.f32 0.0, %v1841
    %1843 = vmatprep.mubr.bf16.mxu0 0
    %1844 = vmatmul.mubr.bf16.gmra.mrb[0].mxu0 %v1576
    %v1845 = vpop.f32.mrb[0].mxu0
    %v1846 = vadd.f32 0.0, %v1845
    %v1847 = vpop.f32.mrb[0].mxu0
    %v1848 = vadd.f32 0.0, %v1847
    %v1849 = vpop.f32.mrb[0].mxu0
    %v1850 = vadd.f32 0.0, %v1849
    %v1851 = vpop.f32.mrb[0].mxu0
    %v1852 = vadd.f32 0.0, %v1851
    %1853 = vmatprep.mubr.bf16.mxu0 0
    %1854 = vmatmul.mubr.bf16.gmra.mrb[0].mxu0 %v1625
    %v1855 = vpop.f32.mrb[0].mxu0
    %v1856 = vadd.f32 0.0, %v1855
    %v1857 = vpop.f32.mrb[0].mxu0
    %v1858 = vadd.f32 0.0, %v1857
    %v1859 = vpop.f32.mrb[0].mxu0
    %v1860 = vadd.f32 0.0, %v1859
    %v1861 = vpop.f32.mrb[0].mxu0
    %v1862 = vadd.f32 0.0, %v1861
    %1863 = vdwg.mxu0
    %1864 = vmatprep.subr.bf16.mxu0 0
    %1865 = vmatpush1.bf16.msra.mxu0 %v1715
    %1866 = vmatprep.subr.bf16.mxu0 0
    %1867 = vmatpush1.bf16.msra.mxu0 %v1718
    %1868 = vmatprep.subr.bf16.mxu0 0
    %1869 = vmatpush1.bf16.msra.mxu0 %v1721
    %1870 = vmatprep.subr.bf16.mxu0 0
    %1871 = vmatpush1.bf16.msra.mxu0 %v1724
    %1872 = vmatprep.subr.bf16.mxu0 0
    %1873 = vmatpush1.bf16.msra.mxu0 %v1727
    %1874 = vmatprep.subr.bf16.mxu0 0
    %1875 = vmatpush1.bf16.msra.mxu0 %v1730
    %1876 = vmatprep.subr.bf16.mxu0 0
    %1877 = vmatpush1.bf16.msra.mxu0 %v1733
    %1878 = vmatprep.subr.bf16.mxu0 0
    %1879 = vmatpush1.bf16.msra.mxu0 %v1736
    %1880 = vmatprep.subr.bf16.mxu0 0
    %1881 = vmatpush1.bf16.msra.mxu0 0
    %1882 = vmatprep.subr.bf16.mxu0 0
    %1883 = vmatpush1.bf16.msra.mxu0 0
    %1884 = vmatprep.subr.bf16.mxu0 0
    %1885 = vmatpush1.bf16.msra.mxu0 0
    %1886 = vmatprep.subr.bf16.mxu0 0
    %1887 = vmatpush1.bf16.msra.mxu0 0
    %1888 = vmatprep.subr.bf16.mxu0 0
    %1889 = vmatpush1.bf16.msra.mxu0 0
    %1890 = vmatprep.subr.bf16.mxu0 0
    %1891 = vmatpush1.bf16.msra.mxu0 0
    %1892 = vmatprep.subr.bf16.mxu0 0
    %1893 = vmatpush1.bf16.msra.mxu0 0
    %1894 = vmatprep.subr.bf16.mxu0 0
    %1895 = vmatpush1.bf16.msra.mxu0 0
    %1896 = vmatprep.mubr.bf16.mxu0 0
    %1897 = vmatmul.mubr.bf16.gmra.mrb[0].mxu0 %v1331
    %v1898 = vpop.f32.mrb[0].mxu0
    %v1899 = vadd.f32 0.0, %v1898
    %v1900 = vpop.f32.mrb[0].mxu0
    %v1901 = vpop.f32.mrb[0].mxu0
    %v1902 = vadd.f32 0.0, %v1901
    %v1903 = vpop.f32.mrb[0].mxu0
    %1904 = vmatprep.mubr.bf16.mxu0 0
    %1905 = vmatmul.mubr.bf16.gmra.mrb[0].mxu0 %v1380
    %v1906 = vpop.f32.mrb[0].mxu0
    %v1907 = vadd.f32 0.0, %v1906
    %v1908 = vpop.f32.mrb[0].mxu0
    %v1909 = vpop.f32.mrb[0].mxu0
    %v1910 = vadd.f32 0.0, %v1909
    %v1911 = vpop.f32.mrb[0].mxu0
    %1912 = vmatprep.mubr.bf16.mxu0 0
    %1913 = vmatmul.mubr.bf16.gmra.mrb[0].mxu0 %v1429
    %v1914 = vpop.f32.mrb[0].mxu0
    %v1915 = vadd.f32 0.0, %v1914
    %v1916 = vpop.f32.mrb[0].mxu0
    %v1917 = vpop.f32.mrb[0].mxu0
    %v1918 = vadd.f32 0.0, %v1917
    %v1919 = vpop.f32.mrb[0].mxu0
    %1920 = vmatprep.mubr.bf16.mxu0 0
    %1921 = vmatmul.mubr.bf16.gmra.mrb[0].mxu0 %v1478
    %v1922 = vpop.f32.mrb[0].mxu0
    %v1923 = vadd.f32 0.0, %v1922
    %v1924 = vpop.f32.mrb[0].mxu0
    %v1925 = vpop.f32.mrb[0].mxu0
    %v1926 = vadd.f32 0.0, %v1925
    %v1927 = vpop.f32.mrb[0].mxu0
    %1928 = vmatprep.mubr.bf16.mxu0 0
    %1929 = vmatmul.mubr.bf16.gmra.mrb[0].mxu0 %v1527
    %v1930 = vpop.f32.mrb[0].mxu0
    %v1931 = vadd.f32 0.0, %v1930
    %v1932 = vpop.f32.mrb[0].mxu0
    %v1933 = vpop.f32.mrb[0].mxu0
    %v1934 = vadd.f32 0.0, %v1933
    %v1935 = vpop.f32.mrb[0].mxu0
    %1936 = vmatprep.mubr.bf16.mxu0 0
    %1937 = vmatmul.mubr.bf16.gmra.mrb[0].mxu0 %v1576
    %v1938 = vpop.f32.mrb[0].mxu0
    %v1939 = vadd.f32 0.0, %v1938
    %v1940 = vpop.f32.mrb[0].mxu0
    %v1941 = vpop.f32.mrb[0].mxu0
    %v1942 = vadd.f32 0.0, %v1941
    %v1943 = vpop.f32.mrb[0].mxu0
    %1944 = vmatprep.mubr.bf16.mxu0 0
    %1945 = vmatmul.mubr.bf16.gmra.mrb[0].mxu0 %v1625
    %v1946 = vpop.f32.mrb[0].mxu0
    %v1947 = vadd.f32 0.0, %v1946
    %v1948 = vpop.f32.mrb[0].mxu0
    %v1949 = vpop.f32.mrb[0].mxu0
    %v1950 = vadd.f32 0.0, %v1949
    %v1951 = vpop.f32.mrb[0].mxu0
    %1952 = vdwg.mxu0
    %v1953 = vcombine.low %v443, %v457
    %v1954 = vcombine.low %v465, %v467
    %v1955 = vcombine.low %v450, %v464
    %v1956 = vcombine.low %v466, %v492
    %v1958 = vunpack.c.l.s4 1966171168
    %v1959 = vunpack.c.0.s8 %v1958
    %v1960 = vlaneseq
    %v1961 = vshrl.u32 %v1960, 7
    %v1962 = vsub.s32 %v1959, %v1961
    %v1963 = vrot.slane %v1953, %v1962
    %v1965 = vunpack.c.l.s4 1966171168
    %v1966 = vunpack.c.0.s8 %v1965
    %v1967 = vlaneseq
    %v1968 = vshrl.u32 %v1967, 7
    %v1969 = vsub.s32 %v1966, %v1968
    %v1970 = vrot.slane %v1954, %v1969
    %v1972 = vunpack.c.l.s4 1966171168
    %v1973 = vunpack.c.0.s8 %v1972
    %v1974 = vlaneseq
    %v1975 = vshrl.u32 %v1974, 7
    %v1976 = vsub.s32 %v1973, %v1975
    %v1977 = vrot.slane %v1955, %v1976
    %v1979 = vunpack.c.l.s4 1966171168
    %v1980 = vunpack.c.0.s8 %v1979
    %v1981 = vlaneseq
    %v1982 = vshrl.u32 %v1981, 7
    %v1983 = vsub.s32 %v1980, %v1982
    %v1984 = vrot.slane %v1956, %v1983
    %v1985 = vcombine.low %v1963, %v1970
    %v1986 = vcombine.low %v1977, %v1984
    %v1988 = vunpack.c.l.s4 1966171168
    %v1989 = vunpack.c.0.s8 %v1988
    %v1990 = vlaneseq
    %v1991 = vshrl.u32 %v1990, 7
    %v1992 = vsub.s32 %v1989, %v1991
    %v1993 = vrot.slane %v1985, %v1992
    %v1995 = vunpack.c.l.s4 1966171168
    %v1996 = vunpack.c.0.s8 %v1995
    %v1997 = vlaneseq
    %v1998 = vshrl.u32 %v1997, 7
    %v1999 = vsub.s32 %v1996, %v1998
    %v2000 = vrot.slane %v1986, %v1999
    %v2001 = vcombine.low %v1993, %v2000
    %v2002 = vcombine.low %v506, %v514
    %v2003 = vcombine.low %v516, %v499
    %v2004 = vcombine.low %v513, %v515
    %v2005 = vcombine.low %v541, %v555
    %v2007 = vunpack.c.l.s4 1966171168
    %v2008 = vunpack.c.0.s8 %v2007
    %v2009 = vlaneseq
    %v2010 = vshrl.u32 %v2009, 7
    %v2011 = vsub.s32 %v2008, %v2010
    %v2012 = vrot.slane %v2002, %v2011
    %v2014 = vunpack.c.l.s4 1966171168
    %v2015 = vunpack.c.0.s8 %v2014
    %v2016 = vlaneseq
    %v2017 = vshrl.u32 %v2016, 7
    %v2018 = vsub.s32 %v2015, %v2017
    %v2019 = vrot.slane %v2003, %v2018
    %v2021 = vunpack.c.l.s4 1966171168
    %v2022 = vunpack.c.0.s8 %v2021
    %v2023 = vlaneseq
    %v2024 = vshrl.u32 %v2023, 7
    %v2025 = vsub.s32 %v2022, %v2024
    %v2026 = vrot.slane %v2004, %v2025
    %v2028 = vunpack.c.l.s4 1966171168
    %v2029 = vunpack.c.0.s8 %v2028
    %v2030 = vlaneseq
    %v2031 = vshrl.u32 %v2030, 7
    %v2032 = vsub.s32 %v2029, %v2031
    %v2033 = vrot.slane %v2005, %v2032
    %v2034 = vcombine.low %v2012, %v2019
    %v2035 = vcombine.low %v2026, %v2033
    %v2037 = vunpack.c.l.s4 1966171168
    %v2038 = vunpack.c.0.s8 %v2037
    %v2039 = vlaneseq
    %v2040 = vshrl.u32 %v2039, 7
    %v2041 = vsub.s32 %v2038, %v2040
    %v2042 = vrot.slane %v2034, %v2041
    %v2044 = vunpack.c.l.s4 1966171168
    %v2045 = vunpack.c.0.s8 %v2044
    %v2046 = vlaneseq
    %v2047 = vshrl.u32 %v2046, 7
    %v2048 = vsub.s32 %v2045, %v2047
    %v2049 = vrot.slane %v2035, %v2048
    %v2050 = vcombine.low %v2042, %v2049
    %v2051 = vcombine.low %v563, %v565
    %v2052 = vcombine.low %v548, %v562
    %v2053 = vcombine.low %v564, %v590
    %v2054 = vcombine.low %v604, %v612
    %v2056 = vunpack.c.l.s4 1966171168
    %v2057 = vunpack.c.0.s8 %v2056
    %v2058 = vlaneseq
    %v2059 = vshrl.u32 %v2058, 7
    %v2060 = vsub.s32 %v2057, %v2059
    %v2061 = vrot.slane %v2051, %v2060
    %v2063 = vunpack.c.l.s4 1966171168
    %v2064 = vunpack.c.0.s8 %v2063
    %v2065 = vlaneseq
    %v2066 = vshrl.u32 %v2065, 7
    %v2067 = vsub.s32 %v2064, %v2066
    %v2068 = vrot.slane %v2052, %v2067
    %v2070 = vunpack.c.l.s4 1966171168
    %v2071 = vunpack.c.0.s8 %v2070
    %v2072 = vlaneseq
    %v2073 = vshrl.u32 %v2072, 7
    %v2074 = vsub.s32 %v2071, %v2073
    %v2075 = vrot.slane %v2053, %v2074
    %v2077 = vunpack.c.l.s4 1966171168
    %v2078 = vunpack.c.0.s8 %v2077
    %v2079 = vlaneseq
    %v2080 = vshrl.u32 %v2079, 7
    %v2081 = vsub.s32 %v2078, %v2080
    %v2082 = vrot.slane %v2054, %v2081
    %v2083 = vcombine.low %v2061, %v2068
    %v2084 = vcombine.low %v2075, %v2082
    %v2086 = vunpack.c.l.s4 1966171168
    %v2087 = vunpack.c.0.s8 %v2086
    %v2088 = vlaneseq
    %v2089 = vshrl.u32 %v2088, 7
    %v2090 = vsub.s32 %v2087, %v2089
    %v2091 = vrot.slane %v2083, %v2090
    %v2093 = vunpack.c.l.s4 1966171168
    %v2094 = vunpack.c.0.s8 %v2093
    %v2095 = vlaneseq
    %v2096 = vshrl.u32 %v2095, 7
    %v2097 = vsub.s32 %v2094, %v2096
    %v2098 = vrot.slane %v2084, %v2097
    %v2099 = vcombine.low %v2091, %v2098
    %v2100 = vcombine.low %v614, %v597
    %v2101 = vcombine.low %v611, %v613
    %v2102 = vcombine.low %v639, %v653
    %v2103 = vcombine.low %v661, %v663
    %v2105 = vunpack.c.l.s4 1966171168
    %v2106 = vunpack.c.0.s8 %v2105
    %v2107 = vlaneseq
    %v2108 = vshrl.u32 %v2107, 7
    %v2109 = vsub.s32 %v2106, %v2108
    %v2110 = vrot.slane %v2100, %v2109
    %v2112 = vunpack.c.l.s4 1966171168
    %v2113 = vunpack.c.0.s8 %v2112
    %v2114 = vlaneseq
    %v2115 = vshrl.u32 %v2114, 7
    %v2116 = vsub.s32 %v2113, %v2115
    %v2117 = vrot.slane %v2101, %v2116
    %v2119 = vunpack.c.l.s4 1966171168
    %v2120 = vunpack.c.0.s8 %v2119
    %v2121 = vlaneseq
    %v2122 = vshrl.u32 %v2121, 7
    %v2123 = vsub.s32 %v2120, %v2122
    %v2124 = vrot.slane %v2102, %v2123
    %v2126 = vunpack.c.l.s4 1966171168
    %v2127 = vunpack.c.0.s8 %v2126
    %v2128 = vlaneseq
    %v2129 = vshrl.u32 %v2128, 7
    %v2130 = vsub.s32 %v2127, %v2129
    %v2131 = vrot.slane %v2103, %v2130
    %v2132 = vcombine.low %v2110, %v2117
    %v2133 = vcombine.low %v2124, %v2131
    %v2135 = vunpack.c.l.s4 1966171168
    %v2136 = vunpack.c.0.s8 %v2135
    %v2137 = vlaneseq
    %v2138 = vshrl.u32 %v2137, 7
    %v2139 = vsub.s32 %v2136, %v2138
    %v2140 = vrot.slane %v2132, %v2139
    %v2142 = vunpack.c.l.s4 1966171168
    %v2143 = vunpack.c.0.s8 %v2142
    %v2144 = vlaneseq
    %v2145 = vshrl.u32 %v2144, 7
    %v2146 = vsub.s32 %v2143, %v2145
    %v2147 = vrot.slane %v2133, %v2146
    %v2148 = vcombine.low %v2140, %v2147
    %v2149 = vcombine.low %v646, %v660
    %v2150 = vcombine.low %v662, %v688
    %v2151 = vcombine.low %v702, %v710
    %v2152 = vcombine.low %v712, %v695
    %v2154 = vunpack.c.l.s4 1966171168
    %v2155 = vunpack.c.0.s8 %v2154
    %v2156 = vlaneseq
    %v2157 = vshrl.u32 %v2156, 7
    %v2158 = vsub.s32 %v2155, %v2157
    %v2159 = vrot.slane %v2149, %v2158
    %v2161 = vunpack.c.l.s4 1966171168
    %v2162 = vunpack.c.0.s8 %v2161
    %v2163 = vlaneseq
    %v2164 = vshrl.u32 %v2163, 7
    %v2165 = vsub.s32 %v2162, %v2164
    %v2166 = vrot.slane %v2150, %v2165
    %v2168 = vunpack.c.l.s4 1966171168
    %v2169 = vunpack.c.0.s8 %v2168
    %v2170 = vlaneseq
    %v2171 = vshrl.u32 %v2170, 7
    %v2172 = vsub.s32 %v2169, %v2171
    %v2173 = vrot.slane %v2151, %v2172
    %v2175 = vunpack.c.l.s4 1966171168
    %v2176 = vunpack.c.0.s8 %v2175
    %v2177 = vlaneseq
    %v2178 = vshrl.u32 %v2177, 7
    %v2179 = vsub.s32 %v2176, %v2178
    %v2180 = vrot.slane %v2152, %v2179
    %v2181 = vcombine.low %v2159, %v2166
    %v2182 = vcombine.low %v2173, %v2180
    %v2184 = vunpack.c.l.s4 1966171168
    %v2185 = vunpack.c.0.s8 %v2184
    %v2186 = vlaneseq
    %v2187 = vshrl.u32 %v2186, 7
    %v2188 = vsub.s32 %v2185, %v2187
    %v2189 = vrot.slane %v2181, %v2188
    %v2191 = vunpack.c.l.s4 1966171168
    %v2192 = vunpack.c.0.s8 %v2191
    %v2193 = vlaneseq
    %v2194 = vshrl.u32 %v2193, 7
    %v2195 = vsub.s32 %v2192, %v2194
    %v2196 = vrot.slane %v2182, %v2195
    %v2197 = vcombine.low %v2189, %v2196
    %v2198 = vcombine.low %v709, %v711
    %v2199 = vcombine.low %v737, %v751
    %v2200 = vcombine.low %v759, %v761
    %v2201 = vcombine.low %v744, %v758
    %v2203 = vunpack.c.l.s4 1966171168
    %v2204 = vunpack.c.0.s8 %v2203
    %v2205 = vlaneseq
    %v2206 = vshrl.u32 %v2205, 7
    %v2207 = vsub.s32 %v2204, %v2206
    %v2208 = vrot.slane %v2198, %v2207
    %v2210 = vunpack.c.l.s4 1966171168
    %v2211 = vunpack.c.0.s8 %v2210
    %v2212 = vlaneseq
    %v2213 = vshrl.u32 %v2212, 7
    %v2214 = vsub.s32 %v2211, %v2213
    %v2215 = vrot.slane %v2199, %v2214
    %v2217 = vunpack.c.l.s4 1966171168
    %v2218 = vunpack.c.0.s8 %v2217
    %v2219 = vlaneseq
    %v2220 = vshrl.u32 %v2219, 7
    %v2221 = vsub.s32 %v2218, %v2220
    %v2222 = vrot.slane %v2200, %v2221
    %v2224 = vunpack.c.l.s4 1966171168
    %v2225 = vunpack.c.0.s8 %v2224
    %v2226 = vlaneseq
    %v2227 = vshrl.u32 %v2226, 7
    %v2228 = vsub.s32 %v2225, %v2227
    %v2229 = vrot.slane %v2201, %v2228
    %v2230 = vcombine.low %v2208, %v2215
    %v2231 = vcombine.low %v2222, %v2229
    %v2233 = vunpack.c.l.s4 1966171168
    %v2234 = vunpack.c.0.s8 %v2233
    %v2235 = vlaneseq
    %v2236 = vshrl.u32 %v2235, 7
    %v2237 = vsub.s32 %v2234, %v2236
    %v2238 = vrot.slane %v2230, %v2237
    %v2240 = vunpack.c.l.s4 1966171168
    %v2241 = vunpack.c.0.s8 %v2240
    %v2242 = vlaneseq
    %v2243 = vshrl.u32 %v2242, 7
    %v2244 = vsub.s32 %v2241, %v2243
    %v2245 = vrot.slane %v2231, %v2244
    %v2246 = vcombine.low %v2238, %v2245
    %v2247 = vcombine.low %v760, %v786
    %v2248 = vcombine.low %v800, %v808
    %v2249 = vcombine.low %v810, %v793
    %v2250 = vcombine.low %v807, %v809
    %v2252 = vunpack.c.l.s4 1966171168
    %v2253 = vunpack.c.0.s8 %v2252
    %v2254 = vlaneseq
    %v2255 = vshrl.u32 %v2254, 7
    %v2256 = vsub.s32 %v2253, %v2255
    %v2257 = vrot.slane %v2247, %v2256
    %v2259 = vunpack.c.l.s4 1966171168
    %v2260 = vunpack.c.0.s8 %v2259
    %v2261 = vlaneseq
    %v2262 = vshrl.u32 %v2261, 7
    %v2263 = vsub.s32 %v2260, %v2262
    %v2264 = vrot.slane %v2248, %v2263
    %v2266 = vunpack.c.l.s4 1966171168
    %v2267 = vunpack.c.0.s8 %v2266
    %v2268 = vlaneseq
    %v2269 = vshrl.u32 %v2268, 7
    %v2270 = vsub.s32 %v2267, %v2269
    %v2271 = vrot.slane %v2249, %v2270
    %v2273 = vunpack.c.l.s4 1966171168
    %v2274 = vunpack.c.0.s8 %v2273
    %v2275 = vlaneseq
    %v2276 = vshrl.u32 %v2275, 7
    %v2277 = vsub.s32 %v2274, %v2276
    %v2278 = vrot.slane %v2250, %v2277
    %v2279 = vcombine.low %v2257, %v2264
    %v2280 = vcombine.low %v2271, %v2278
    %v2282 = vunpack.c.l.s4 1966171168
    %v2283 = vunpack.c.0.s8 %v2282
    %v2284 = vlaneseq
    %v2285 = vshrl.u32 %v2284, 7
    %v2286 = vsub.s32 %v2283, %v2285
    %v2287 = vrot.slane %v2279, %v2286
    %v2289 = vunpack.c.l.s4 1966171168
    %v2290 = vunpack.c.0.s8 %v2289
    %v2291 = vlaneseq
    %v2292 = vshrl.u32 %v2291, 7
    %v2293 = vsub.s32 %v2290, %v2292
    %v2294 = vrot.slane %v2280, %v2293
    %v2295 = vcombine.low %v2287, %v2294
    %v2335 = vunpack.c.l.b16 %v347
    %v2336 = vunpack.c.h.b16 %v347
    %v2337 = vunpack.c.l.b16 %v348
    %v2338 = vunpack.c.l.b16 %v349
    %v2339 = vunpack.c.h.b16 %v349
    %v2340 = vunpack.c.l.b16 %v350
    %v2341 = vunpack.c.l.b16 %v351
    %v2342 = vunpack.c.h.b16 %v351
    %v2343 = vunpack.c.l.b16 %v352
    %v2344 = vunpack.c.l.b16 %v353
    %v2345 = vunpack.c.h.b16 %v353
    %v2346 = vunpack.c.l.b16 %v354
    %v2347 = vunpack.c.l.b16 %v355
    %v2348 = vunpack.c.h.b16 %v355
    %v2349 = vunpack.c.l.b16 %v356
    %v2350 = vunpack.c.l.b16 %v357
    %v2351 = vunpack.c.h.b16 %v357
    %v2352 = vunpack.c.l.b16 %v358
    %v2353 = vunpack.c.l.b16 %v359
    %v2354 = vunpack.c.h.b16 %v359
    %v2355 = vunpack.c.l.b16 %v360
    %v2356 = vunpack.c.l.b16 %v361
    %v2357 = vunpack.c.h.b16 %v361
    %v2358 = vunpack.c.l.b16 %v362
    %v2359 = vunpack.c.l.b16 %v363
    %v2360 = vunpack.c.h.b16 %v363
    %v2361 = vunpack.c.l.b16 %v364
    %v2362 = vunpack.c.l.b16 %v365
    %v2363 = vunpack.c.h.b16 %v365
    %v2364 = vunpack.c.l.b16 %v366
    %v2365 = vunpack.c.l.b16 %v367
    %v2366 = vunpack.c.h.b16 %v367
    %v2367 = vunpack.c.l.b16 %v368
    %v2368 = vunpack.c.l.b16 %v369
    %v2369 = vunpack.c.h.b16 %v369
    %v2370 = vunpack.c.l.b16 %v370
    %v2371 = vunpack.c.l.b16 %v371
    %v2372 = vunpack.c.h.b16 %v371
    %v2373 = vunpack.c.l.b16 %v372
    %v2374 = vunpack.c.l.b16 %v373
    %v2375 = vunpack.c.h.b16 %v373
    %v2376 = vunpack.c.l.b16 %v374
    %v2377 = vunpack.c.l.b16 %v375
    %v2378 = vunpack.c.h.b16 %v375
    %v2379 = vunpack.c.l.b16 %v376
    %v2380 = vunpack.c.l.b16 %v377
    %v2381 = vunpack.c.h.b16 %v377
    %v2382 = vunpack.c.l.b16 %v378
    %v2383 = vpack.c.b16 %v2338, %v2335
    %v2384 = vpack.c.b16 %v2339, %v2336
    %v2385 = vpack.c.b16 %v2340, %v2337
    %v2386 = vpack.c.b16 %v2344, %v2341
    %v2387 = vpack.c.b16 %v2345, %v2342
    %v2388 = vpack.c.b16 %v2346, %v2343
    %v2389 = vpack.c.b16 %v2350, %v2347
    %v2390 = vpack.c.b16 %v2351, %v2348
    %v2391 = vpack.c.b16 %v2352, %v2349
    %v2392 = vpack.c.b16 %v2356, %v2353
    %v2393 = vpack.c.b16 %v2357, %v2354
    %v2394 = vpack.c.b16 %v2358, %v2355
    %v2395 = vpack.c.b16 %v2362, %v2359
    %v2396 = vpack.c.b16 %v2363, %v2360
    %v2397 = vpack.c.b16 %v2364, %v2361
    %v2398 = vpack.c.b16 %v2368, %v2365
    %v2399 = vpack.c.b16 %v2369, %v2366
    %v2400 = vpack.c.b16 %v2370, %v2367
    %v2401 = vpack.c.b16 %v2374, %v2371
    %v2402 = vpack.c.b16 %v2375, %v2372
    %v2403 = vpack.c.b16 %v2376, %v2373
    %v2404 = vpack.c.b16 %v2380, %v2377
    %v2405 = vpack.c.b16 %v2381, %v2378
    %v2406 = vpack.c.b16 %v2382, %v2379
    %2431 = vmatprep.subr.bf16.mxu0 %v2384
    %2432 = vmatpush1.bf16.msra.mxu0 %v2383
    %2433 = vmatprep.subr.bf16.mxu0 %v2387
    %2434 = vmatpush1.bf16.msra.mxu0 %v2386
    %2435 = vmatprep.subr.bf16.mxu0 %v2390
    %2436 = vmatpush1.bf16.msra.mxu0 %v2389
    %2437 = vmatprep.subr.bf16.mxu0 %v2393
    %2438 = vmatpush1.bf16.msra.mxu0 %v2392
    %2439 = vmatprep.subr.bf16.mxu0 %v2396
    %2440 = vmatpush1.bf16.msra.mxu0 %v2395
    %2441 = vmatprep.subr.bf16.mxu0 %v2399
    %2442 = vmatpush1.bf16.msra.mxu0 %v2398
    %2443 = vmatprep.subr.bf16.mxu0 %v2402
    %2444 = vmatpush1.bf16.msra.mxu0 %v2401
    %2445 = vmatprep.subr.bf16.mxu0 %v2405
    %2446 = vmatpush1.bf16.msra.mxu0 %v2404
    %2447 = vmatprep.subr.bf16.mxu0 0
    %2448 = vmatpush1.bf16.msra.mxu0 0
    %2449 = vmatprep.subr.bf16.mxu0 0
    %2450 = vmatpush1.bf16.msra.mxu0 0
    %2451 = vmatprep.subr.bf16.mxu0 0
    %2452 = vmatpush1.bf16.msra.mxu0 0
    %2453 = vmatprep.subr.bf16.mxu0 0
    %2454 = vmatpush1.bf16.msra.mxu0 0
    %2455 = vmatprep.subr.bf16.mxu0 0
    %2456 = vmatpush1.bf16.msra.mxu0 0
    %2457 = vmatprep.subr.bf16.mxu0 0
    %2458 = vmatpush1.bf16.msra.mxu0 0
    %2459 = vmatprep.subr.bf16.mxu0 0
    %2460 = vmatpush1.bf16.msra.mxu0 0
    %2461 = vmatprep.subr.bf16.mxu0 0
    %2462 = vmatpush1.bf16.msra.mxu0 0
    %2463 = vmatprep.mubr.bf16.mxu0 0
    %2464 = vmatmul.mubr.bf16.gmra.mrb[0].mxu0 %v2001
    %v2465 = vpop.f32.mrb[0].mxu0
    %v2466 = vadd.f32 %v1796, %v2465
    %v2467 = vpop.f32.mrb[0].mxu0
    %v2468 = vadd.f32 %v1798, %v2467
    %v2469 = vpop.f32.mrb[0].mxu0
    %v2470 = vadd.f32 %v1800, %v2469
    %v2471 = vpop.f32.mrb[0].mxu0
    %v2472 = vadd.f32 %v1802, %v2471
    %2473 = vmatprep.mubr.bf16.mxu0 0
    %2474 = vmatmul.mubr.bf16.gmra.mrb[0].mxu0 %v2050
    %v2475 = vpop.f32.mrb[0].mxu0
    %v2476 = vadd.f32 %v1806, %v2475
    %v2477 = vpop.f32.mrb[0].mxu0
    %v2478 = vadd.f32 %v1808, %v2477
    %v2479 = vpop.f32.mrb[0].mxu0
    %v2480 = vadd.f32 %v1810, %v2479
    %v2481 = vpop.f32.mrb[0].mxu0
    %v2482 = vadd.f32 %v1812, %v2481
    %2483 = vmatprep.mubr.bf16.mxu0 0
    %2484 = vmatmul.mubr.bf16.gmra.mrb[0].mxu0 %v2099
    %v2485 = vpop.f32.mrb[0].mxu0
    %v2486 = vadd.f32 %v1816, %v2485
    %v2487 = vpop.f32.mrb[0].mxu0
    %v2488 = vadd.f32 %v1818, %v2487
    %v2489 = vpop.f32.mrb[0].mxu0
    %v2490 = vadd.f32 %v1820, %v2489
    %v2491 = vpop.f32.mrb[0].mxu0
    %v2492 = vadd.f32 %v1822, %v2491
    %2493 = vmatprep.mubr.bf16.mxu0 0
    %2494 = vmatmul.mubr.bf16.gmra.mrb[0].mxu0 %v2148
    %v2495 = vpop.f32.mrb[0].mxu0
    %v2496 = vadd.f32 %v1826, %v2495
    %v2497 = vpop.f32.mrb[0].mxu0
    %v2498 = vadd.f32 %v1828, %v2497
    %v2499 = vpop.f32.mrb[0].mxu0
    %v2500 = vadd.f32 %v1830, %v2499
    %v2501 = vpop.f32.mrb[0].mxu0
    %v2502 = vadd.f32 %v1832, %v2501
    %2503 = vmatprep.mubr.bf16.mxu0 0
    %2504 = vmatmul.mubr.bf16.gmra.mrb[0].mxu0 %v2197
    %v2505 = vpop.f32.mrb[0].mxu0
    %v2506 = vadd.f32 %v1836, %v2505
    %v2507 = vpop.f32.mrb[0].mxu0
    %v2508 = vadd.f32 %v1838, %v2507
    %v2509 = vpop.f32.mrb[0].mxu0
    %v2510 = vadd.f32 %v1840, %v2509
    %v2511 = vpop.f32.mrb[0].mxu0
    %v2512 = vadd.f32 %v1842, %v2511
    %2513 = vmatprep.mubr.bf16.mxu0 0
    %2514 = vmatmul.mubr.bf16.gmra.mrb[0].mxu0 %v2246
    %v2515 = vpop.f32.mrb[0].mxu0
    %v2516 = vadd.f32 %v1846, %v2515
    %v2517 = vpop.f32.mrb[0].mxu0
    %v2518 = vadd.f32 %v1848, %v2517
    %v2519 = vpop.f32.mrb[0].mxu0
    %v2520 = vadd.f32 %v1850, %v2519
    %v2521 = vpop.f32.mrb[0].mxu0
    %v2522 = vadd.f32 %v1852, %v2521
    %2523 = vmatprep.mubr.bf16.mxu0 0
    %2524 = vmatmul.mubr.bf16.gmra.mrb[0].mxu0 %v2295
    %v2525 = vpop.f32.mrb[0].mxu0
    %v2526 = vadd.f32 %v1856, %v2525
    %v2527 = vpop.f32.mrb[0].mxu0
    %v2528 = vadd.f32 %v1858, %v2527
    %v2529 = vpop.f32.mrb[0].mxu0
    %v2530 = vadd.f32 %v1860, %v2529
    %v2531 = vpop.f32.mrb[0].mxu0
    %v2532 = vadd.f32 %v1862, %v2531
    %2533 = vdwg.mxu0
    %2534 = vmatprep.subr.bf16.mxu0 0
    %2535 = vmatpush1.bf16.msra.mxu0 %v2385
    %2536 = vmatprep.subr.bf16.mxu0 0
    %2537 = vmatpush1.bf16.msra.mxu0 %v2388
    %2538 = vmatprep.subr.bf16.mxu0 0
    %2539 = vmatpush1.bf16.msra.mxu0 %v2391
    %2540 = vmatprep.subr.bf16.mxu0 0
    %2541 = vmatpush1.bf16.msra.mxu0 %v2394
    %2542 = vmatprep.subr.bf16.mxu0 0
    %2543 = vmatpush1.bf16.msra.mxu0 %v2397
    %2544 = vmatprep.subr.bf16.mxu0 0
    %2545 = vmatpush1.bf16.msra.mxu0 %v2400
    %2546 = vmatprep.subr.bf16.mxu0 0
    %2547 = vmatpush1.bf16.msra.mxu0 %v2403
    %2548 = vmatprep.subr.bf16.mxu0 0
    %2549 = vmatpush1.bf16.msra.mxu0 %v2406
    %2550 = vmatprep.subr.bf16.mxu0 0
    %2551 = vmatpush1.bf16.msra.mxu0 0
    %2552 = vmatprep.subr.bf16.mxu0 0
    %2553 = vmatpush1.bf16.msra.mxu0 0
    %2554 = vmatprep.subr.bf16.mxu0 0
    %2555 = vmatpush1.bf16.msra.mxu0 0
    %2556 = vmatprep.subr.bf16.mxu0 0
    %2557 = vmatpush1.bf16.msra.mxu0 0
    %2558 = vmatprep.subr.bf16.mxu0 0
    %2559 = vmatpush1.bf16.msra.mxu0 0
    %2560 = vmatprep.subr.bf16.mxu0 0
    %2561 = vmatpush1.bf16.msra.mxu0 0
    %2562 = vmatprep.subr.bf16.mxu0 0
    %2563 = vmatpush1.bf16.msra.mxu0 0
    %2564 = vmatprep.subr.bf16.mxu0 0
    %2565 = vmatpush1.bf16.msra.mxu0 0
    %2566 = vmatprep.mubr.bf16.mxu0 0
    %2567 = vmatmul.mubr.bf16.gmra.mrb[0].mxu0 %v2001
    %v2568 = vpop.f32.mrb[0].mxu0
    %v2569 = vadd.f32 %v1899, %v2568
    %v2570 = vpop.f32.mrb[0].mxu0
    %v2571 = vpop.f32.mrb[0].mxu0
    %v2572 = vadd.f32 %v1902, %v2571
    %v2573 = vpop.f32.mrb[0].mxu0
    %2574 = vmatprep.mubr.bf16.mxu0 0
    %2575 = vmatmul.mubr.bf16.gmra.mrb[0].mxu0 %v2050
    %v2576 = vpop.f32.mrb[0].mxu0
    %v2577 = vadd.f32 %v1907, %v2576
    %v2578 = vpop.f32.mrb[0].mxu0
    %v2579 = vpop.f32.mrb[0].mxu0
    %v2580 = vadd.f32 %v1910, %v2579
    %v2581 = vpop.f32.mrb[0].mxu0
    %2582 = vmatprep.mubr.bf16.mxu0 0
    %2583 = vmatmul.mubr.bf16.gmra.mrb[0].mxu0 %v2099
    %v2584 = vpop.f32.mrb[0].mxu0
    %v2585 = vadd.f32 %v1915, %v2584
    %v2586 = vpop.f32.mrb[0].mxu0
    %v2587 = vpop.f32.mrb[0].mxu0
    %v2588 = vadd.f32 %v1918, %v2587
    %v2589 = vpop.f32.mrb[0].mxu0
    %2590 = vmatprep.mubr.bf16.mxu0 0
    %2591 = vmatmul.mubr.bf16.gmra.mrb[0].mxu0 %v2148
    %v2592 = vpop.f32.mrb[0].mxu0
    %v2593 = vadd.f32 %v1923, %v2592
    %v2594 = vpop.f32.mrb[0].mxu0
    %v2595 = vpop.f32.mrb[0].mxu0
    %v2596 = vadd.f32 %v1926, %v2595
    %v2597 = vpop.f32.mrb[0].mxu0
    %2598 = vmatprep.mubr.bf16.mxu0 0
    %2599 = vmatmul.mubr.bf16.gmra.mrb[0].mxu0 %v2197
    %v2600 = vpop.f32.mrb[0].mxu0
    %v2601 = vadd.f32 %v1931, %v2600
    %v2602 = vpop.f32.mrb[0].mxu0
    %v2603 = vpop.f32.mrb[0].mxu0
    %v2604 = vadd.f32 %v1934, %v2603
    %v2605 = vpop.f32.mrb[0].mxu0
    %2606 = vmatprep.mubr.bf16.mxu0 0
    %2607 = vmatmul.mubr.bf16.gmra.mrb[0].mxu0 %v2246
    %v2608 = vpop.f32.mrb[0].mxu0
    %v2609 = vadd.f32 %v1939, %v2608
    %v2610 = vpop.f32.mrb[0].mxu0
    %v2611 = vpop.f32.mrb[0].mxu0
    %v2612 = vadd.f32 %v1942, %v2611
    %v2613 = vpop.f32.mrb[0].mxu0
    %2614 = vmatprep.mubr.bf16.mxu0 0
    %2615 = vmatmul.mubr.bf16.gmra.mrb[0].mxu0 %v2295
    %v2616 = vpop.f32.mrb[0].mxu0
    %v2617 = vadd.f32 %v1947, %v2616
    %v2618 = vpop.f32.mrb[0].mxu0
    %v2619 = vpop.f32.mrb[0].mxu0
    %v2620 = vadd.f32 %v1950, %v2619
    %v2621 = vpop.f32.mrb[0].mxu0
    %2622 = vdwg.mxu0
    %v2665 = vcombine.low %v2466, %v2468
    %v2666 = vcombine.high %v2466, %v2468
    %v2667 = vcombine.high %v2569, %v2569
    %v2669 = vunpack.c.l.s4 1983009808
    %v2670 = vunpack.c.0.s8 %v2669
    %v2671 = vlaneseq
    %v2672 = vshrl.u32 %v2671, 7
    %v2673 = vsub.s32 %v2670, %v2672
    %v2674 = vrot.slane %v2665, %v2673
    %v2676 = vunpack.c.l.s4 1983009808
    %v2677 = vunpack.c.0.s8 %v2676
    %v2678 = vlaneseq
    %v2679 = vshrl.u32 %v2678, 7
    %v2680 = vsub.s32 %v2677, %v2679
    %v2681 = vrot.slane %v2666, %v2680
    %v2683 = vunpack.c.l.s4 1983009808
    %v2684 = vunpack.c.0.s8 %v2683
    %v2685 = vlaneseq
    %v2686 = vshrl.u32 %v2685, 7
    %v2687 = vsub.s32 %v2684, %v2686
    %v2688 = vrot.slane %v2569, %v2687
    %v2690 = vunpack.c.l.s4 1983009808
    %v2691 = vunpack.c.0.s8 %v2690
    %v2692 = vlaneseq
    %v2693 = vshrl.u32 %v2692, 7
    %v2694 = vsub.s32 %v2691, %v2693
    %v2695 = vrot.slane %v2667, %v2694
    %v2696 = vcombine.low %v2674, %v2688
    %v2697 = vcombine.high %v2674, %v2688
    %v2698 = vcombine.low %v2681, %v2695
    %v2699 = vcombine.high %v2681, %v2695
    %v2700 = vcombine.low %v2470, %v2472
    %v2701 = vcombine.high %v2470, %v2472
    %v2702 = vcombine.high %v2572, %v2572
    %v2704 = vunpack.c.l.s4 1983009808
    %v2705 = vunpack.c.0.s8 %v2704
    %v2706 = vlaneseq
    %v2707 = vshrl.u32 %v2706, 7
    %v2708 = vsub.s32 %v2705, %v2707
    %v2709 = vrot.slane %v2700, %v2708
    %v2711 = vunpack.c.l.s4 1983009808
    %v2712 = vunpack.c.0.s8 %v2711
    %v2713 = vlaneseq
    %v2714 = vshrl.u32 %v2713, 7
    %v2715 = vsub.s32 %v2712, %v2714
    %v2716 = vrot.slane %v2701, %v2715
    %v2718 = vunpack.c.l.s4 1983009808
    %v2719 = vunpack.c.0.s8 %v2718
    %v2720 = vlaneseq
    %v2721 = vshrl.u32 %v2720, 7
    %v2722 = vsub.s32 %v2719, %v2721
    %v2723 = vrot.slane %v2572, %v2722
    %v2725 = vunpack.c.l.s4 1983009808
    %v2726 = vunpack.c.0.s8 %v2725
    %v2727 = vlaneseq
    %v2728 = vshrl.u32 %v2727, 7
    %v2729 = vsub.s32 %v2726, %v2728
    %v2730 = vrot.slane %v2702, %v2729
    %v2731 = vcombine.low %v2709, %v2723
    %v2732 = vcombine.high %v2709, %v2723
    %v2733 = vcombine.low %v2716, %v2730
    %v2734 = vcombine.high %v2716, %v2730
    %v2735 = vcombine.low %v2476, %v2478
    %v2736 = vcombine.high %v2476, %v2478
    %v2737 = vcombine.high %v2577, %v2577
    %v2739 = vunpack.c.l.s4 1983009808
    %v2740 = vunpack.c.0.s8 %v2739
    %v2741 = vlaneseq
    %v2742 = vshrl.u32 %v2741, 7
    %v2743 = vsub.s32 %v2740, %v2742
    %v2744 = vrot.slane %v2735, %v2743
    %v2746 = vunpack.c.l.s4 1983009808
    %v2747 = vunpack.c.0.s8 %v2746
    %v2748 = vlaneseq
    %v2749 = vshrl.u32 %v2748, 7
    %v2750 = vsub.s32 %v2747, %v2749
    %v2751 = vrot.slane %v2736, %v2750
    %v2753 = vunpack.c.l.s4 1983009808
    %v2754 = vunpack.c.0.s8 %v2753
    %v2755 = vlaneseq
    %v2756 = vshrl.u32 %v2755, 7
    %v2757 = vsub.s32 %v2754, %v2756
    %v2758 = vrot.slane %v2577, %v2757
    %v2760 = vunpack.c.l.s4 1983009808
    %v2761 = vunpack.c.0.s8 %v2760
    %v2762 = vlaneseq
    %v2763 = vshrl.u32 %v2762, 7
    %v2764 = vsub.s32 %v2761, %v2763
    %v2765 = vrot.slane %v2737, %v2764
    %v2766 = vcombine.low %v2744, %v2758
    %v2767 = vcombine.high %v2744, %v2758
    %v2768 = vcombine.low %v2751, %v2765
    %v2769 = vcombine.high %v2751, %v2765
    %v2770 = vcombine.low %v2480, %v2482
    %v2771 = vcombine.high %v2480, %v2482
    %v2772 = vcombine.high %v2580, %v2580
    %v2774 = vunpack.c.l.s4 1983009808
    %v2775 = vunpack.c.0.s8 %v2774
    %v2776 = vlaneseq
    %v2777 = vshrl.u32 %v2776, 7
    %v2778 = vsub.s32 %v2775, %v2777
    %v2779 = vrot.slane %v2770, %v2778
    %v2781 = vunpack.c.l.s4 1983009808
    %v2782 = vunpack.c.0.s8 %v2781
    %v2783 = vlaneseq
    %v2784 = vshrl.u32 %v2783, 7
    %v2785 = vsub.s32 %v2782, %v2784
    %v2786 = vrot.slane %v2771, %v2785
    %v2788 = vunpack.c.l.s4 1983009808
    %v2789 = vunpack.c.0.s8 %v2788
    %v2790 = vlaneseq
    %v2791 = vshrl.u32 %v2790, 7
    %v2792 = vsub.s32 %v2789, %v2791
    %v2793 = vrot.slane %v2580, %v2792
    %v2795 = vunpack.c.l.s4 1983009808
    %v2796 = vunpack.c.0.s8 %v2795
    %v2797 = vlaneseq
    %v2798 = vshrl.u32 %v2797, 7
    %v2799 = vsub.s32 %v2796, %v2798
    %v2800 = vrot.slane %v2772, %v2799
    %v2801 = vcombine.low %v2779, %v2793
    %v2802 = vcombine.high %v2779, %v2793
    %v2803 = vcombine.low %v2786, %v2800
    %v2804 = vcombine.high %v2786, %v2800
    %v2805 = vcombine.low %v2486, %v2488
    %v2806 = vcombine.high %v2486, %v2488
    %v2807 = vcombine.high %v2585, %v2585
    %v2809 = vunpack.c.l.s4 1983009808
    %v2810 = vunpack.c.0.s8 %v2809
    %v2811 = vlaneseq
    %v2812 = vshrl.u32 %v2811, 7
    %v2813 = vsub.s32 %v2810, %v2812
    %v2814 = vrot.slane %v2805, %v2813
    %v2816 = vunpack.c.l.s4 1983009808
    %v2817 = vunpack.c.0.s8 %v2816
    %v2818 = vlaneseq
    %v2819 = vshrl.u32 %v2818, 7
    %v2820 = vsub.s32 %v2817, %v2819
    %v2821 = vrot.slane %v2806, %v2820
    %v2823 = vunpack.c.l.s4 1983009808
    %v2824 = vunpack.c.0.s8 %v2823
    %v2825 = vlaneseq
    %v2826 = vshrl.u32 %v2825, 7
    %v2827 = vsub.s32 %v2824, %v2826
    %v2828 = vrot.slane %v2585, %v2827
    %v2830 = vunpack.c.l.s4 1983009808
    %v2831 = vunpack.c.0.s8 %v2830
    %v2832 = vlaneseq
    %v2833 = vshrl.u32 %v2832, 7
    %v2834 = vsub.s32 %v2831, %v2833
    %v2835 = vrot.slane %v2807, %v2834
    %v2836 = vcombine.low %v2814, %v2828
    %v2837 = vcombine.high %v2814, %v2828
    %v2838 = vcombine.low %v2821, %v2835
    %v2839 = vcombine.high %v2821, %v2835
    %v2840 = vcombine.low %v2490, %v2492
    %v2841 = vcombine.high %v2490, %v2492
    %v2842 = vcombine.high %v2588, %v2588
    %v2844 = vunpack.c.l.s4 1983009808
    %v2845 = vunpack.c.0.s8 %v2844
    %v2846 = vlaneseq
    %v2847 = vshrl.u32 %v2846, 7
    %v2848 = vsub.s32 %v2845, %v2847
    %v2849 = vrot.slane %v2840, %v2848
    %v2851 = vunpack.c.l.s4 1983009808
    %v2852 = vunpack.c.0.s8 %v2851
    %v2853 = vlaneseq
    %v2854 = vshrl.u32 %v2853, 7
    %v2855 = vsub.s32 %v2852, %v2854
    %v2856 = vrot.slane %v2841, %v2855
    %v2858 = vunpack.c.l.s4 1983009808
    %v2859 = vunpack.c.0.s8 %v2858
    %v2860 = vlaneseq
    %v2861 = vshrl.u32 %v2860, 7
    %v2862 = vsub.s32 %v2859, %v2861
    %v2863 = vrot.slane %v2588, %v2862
    %v2865 = vunpack.c.l.s4 1983009808
    %v2866 = vunpack.c.0.s8 %v2865
    %v2867 = vlaneseq
    %v2868 = vshrl.u32 %v2867, 7
    %v2869 = vsub.s32 %v2866, %v2868
    %v2870 = vrot.slane %v2842, %v2869
    %v2871 = vcombine.low %v2849, %v2863
    %v2872 = vcombine.high %v2849, %v2863
    %v2873 = vcombine.low %v2856, %v2870
    %v2874 = vcombine.high %v2856, %v2870
    %v2875 = vcombine.low %v2496, %v2498
    %v2876 = vcombine.high %v2496, %v2498
    %v2877 = vcombine.high %v2593, %v2593
    %v2879 = vunpack.c.l.s4 1983009808
    %v2880 = vunpack.c.0.s8 %v2879
    %v2881 = vlaneseq
    %v2882 = vshrl.u32 %v2881, 7
    %v2883 = vsub.s32 %v2880, %v2882
    %v2884 = vrot.slane %v2875, %v2883
    %v2886 = vunpack.c.l.s4 1983009808
    %v2887 = vunpack.c.0.s8 %v2886
    %v2888 = vlaneseq
    %v2889 = vshrl.u32 %v2888, 7
    %v2890 = vsub.s32 %v2887, %v2889
    %v2891 = vrot.slane %v2876, %v2890
    %v2893 = vunpack.c.l.s4 1983009808
    %v2894 = vunpack.c.0.s8 %v2893
    %v2895 = vlaneseq
    %v2896 = vshrl.u32 %v2895, 7
    %v2897 = vsub.s32 %v2894, %v2896
    %v2898 = vrot.slane %v2593, %v2897
    %v2900 = vunpack.c.l.s4 1983009808
    %v2901 = vunpack.c.0.s8 %v2900
    %v2902 = vlaneseq
    %v2903 = vshrl.u32 %v2902, 7
    %v2904 = vsub.s32 %v2901, %v2903
    %v2905 = vrot.slane %v2877, %v2904
    %v2906 = vcombine.low %v2884, %v2898
    %v2907 = vcombine.high %v2884, %v2898
    %v2908 = vcombine.low %v2891, %v2905
    %v2909 = vcombine.high %v2891, %v2905
    %v2910 = vcombine.low %v2500, %v2502
    %v2911 = vcombine.high %v2500, %v2502
    %v2912 = vcombine.high %v2596, %v2596
    %v2914 = vunpack.c.l.s4 1983009808
    %v2915 = vunpack.c.0.s8 %v2914
    %v2916 = vlaneseq
    %v2917 = vshrl.u32 %v2916, 7
    %v2918 = vsub.s32 %v2915, %v2917
    %v2919 = vrot.slane %v2910, %v2918
    %v2921 = vunpack.c.l.s4 1983009808
    %v2922 = vunpack.c.0.s8 %v2921
    %v2923 = vlaneseq
    %v2924 = vshrl.u32 %v2923, 7
    %v2925 = vsub.s32 %v2922, %v2924
    %v2926 = vrot.slane %v2911, %v2925
    %v2928 = vunpack.c.l.s4 1983009808
    %v2929 = vunpack.c.0.s8 %v2928
    %v2930 = vlaneseq
    %v2931 = vshrl.u32 %v2930, 7
    %v2932 = vsub.s32 %v2929, %v2931
    %v2933 = vrot.slane %v2596, %v2932
    %v2935 = vunpack.c.l.s4 1983009808
    %v2936 = vunpack.c.0.s8 %v2935
    %v2937 = vlaneseq
    %v2938 = vshrl.u32 %v2937, 7
    %v2939 = vsub.s32 %v2936, %v2938
    %v2940 = vrot.slane %v2912, %v2939
    %v2941 = vcombine.low %v2919, %v2933
    %v2942 = vcombine.high %v2919, %v2933
    %v2943 = vcombine.low %v2926, %v2940
    %v2944 = vcombine.high %v2926, %v2940
    %v2945 = vcombine.low %v2506, %v2508
    %v2946 = vcombine.high %v2506, %v2508
    %v2947 = vcombine.high %v2601, %v2601
    %v2949 = vunpack.c.l.s4 1983009808
    %v2950 = vunpack.c.0.s8 %v2949
    %v2951 = vlaneseq
    %v2952 = vshrl.u32 %v2951, 7
    %v2953 = vsub.s32 %v2950, %v2952
    %v2954 = vrot.slane %v2945, %v2953
    %v2956 = vunpack.c.l.s4 1983009808
    %v2957 = vunpack.c.0.s8 %v2956
    %v2958 = vlaneseq
    %v2959 = vshrl.u32 %v2958, 7
    %v2960 = vsub.s32 %v2957, %v2959
    %v2961 = vrot.slane %v2946, %v2960
    %v2963 = vunpack.c.l.s4 1983009808
    %v2964 = vunpack.c.0.s8 %v2963
    %v2965 = vlaneseq
    %v2966 = vshrl.u32 %v2965, 7
    %v2967 = vsub.s32 %v2964, %v2966
    %v2968 = vrot.slane %v2601, %v2967
    %v2970 = vunpack.c.l.s4 1983009808
    %v2971 = vunpack.c.0.s8 %v2970
    %v2972 = vlaneseq
    %v2973 = vshrl.u32 %v2972, 7
    %v2974 = vsub.s32 %v2971, %v2973
    %v2975 = vrot.slane %v2947, %v2974
    %v2976 = vcombine.low %v2954, %v2968
    %v2977 = vcombine.high %v2954, %v2968
    %v2978 = vcombine.low %v2961, %v2975
    %v2979 = vcombine.high %v2961, %v2975
    %v2980 = vcombine.low %v2510, %v2512
    %v2981 = vcombine.high %v2510, %v2512
    %v2982 = vcombine.high %v2604, %v2604
    %v2984 = vunpack.c.l.s4 1983009808
    %v2985 = vunpack.c.0.s8 %v2984
    %v2986 = vlaneseq
    %v2987 = vshrl.u32 %v2986, 7
    %v2988 = vsub.s32 %v2985, %v2987
    %v2989 = vrot.slane %v2980, %v2988
    %v2991 = vunpack.c.l.s4 1983009808
    %v2992 = vunpack.c.0.s8 %v2991
    %v2993 = vlaneseq
    %v2994 = vshrl.u32 %v2993, 7
    %v2995 = vsub.s32 %v2992, %v2994
    %v2996 = vrot.slane %v2981, %v2995
    %v2998 = vunpack.c.l.s4 1983009808
    %v2999 = vunpack.c.0.s8 %v2998
    %v3000 = vlaneseq
    %v3001 = vshrl.u32 %v3000, 7
    %v3002 = vsub.s32 %v2999, %v3001
    %v3003 = vrot.slane %v2604, %v3002
    %v3005 = vunpack.c.l.s4 1983009808
    %v3006 = vunpack.c.0.s8 %v3005
    %v3007 = vlaneseq
    %v3008 = vshrl.u32 %v3007, 7
    %v3009 = vsub.s32 %v3006, %v3008
    %v3010 = vrot.slane %v2982, %v3009
    %v3011 = vcombine.low %v2989, %v3003
    %v3012 = vcombine.high %v2989, %v3003
    %v3013 = vcombine.low %v2996, %v3010
    %v3014 = vcombine.high %v2996, %v3010
    %v3015 = vcombine.low %v2516, %v2518
    %v3016 = vcombine.high %v2516, %v2518
    %v3017 = vcombine.high %v2609, %v2609
    %v3019 = vunpack.c.l.s4 1983009808
    %v3020 = vunpack.c.0.s8 %v3019
    %v3021 = vlaneseq
    %v3022 = vshrl.u32 %v3021, 7
    %v3023 = vsub.s32 %v3020, %v3022
    %v3024 = vrot.slane %v3015, %v3023
    %v3026 = vunpack.c.l.s4 1983009808
    %v3027 = vunpack.c.0.s8 %v3026
    %v3028 = vlaneseq
    %v3029 = vshrl.u32 %v3028, 7
    %v3030 = vsub.s32 %v3027, %v3029
    %v3031 = vrot.slane %v3016, %v3030
    %v3033 = vunpack.c.l.s4 1983009808
    %v3034 = vunpack.c.0.s8 %v3033
    %v3035 = vlaneseq
    %v3036 = vshrl.u32 %v3035, 7
    %v3037 = vsub.s32 %v3034, %v3036
    %v3038 = vrot.slane %v2609, %v3037
    %v3040 = vunpack.c.l.s4 1983009808
    %v3041 = vunpack.c.0.s8 %v3040
    %v3042 = vlaneseq
    %v3043 = vshrl.u32 %v3042, 7
    %v3044 = vsub.s32 %v3041, %v3043
    %v3045 = vrot.slane %v3017, %v3044
    %v3046 = vcombine.low %v3024, %v3038
    %v3047 = vcombine.high %v3024, %v3038
    %v3048 = vcombine.low %v3031, %v3045
    %v3049 = vcombine.high %v3031, %v3045
    %v3050 = vcombine.low %v2520, %v2522
    %v3051 = vcombine.high %v2520, %v2522
    %v3052 = vcombine.high %v2612, %v2612
    %v3054 = vunpack.c.l.s4 1983009808
    %v3055 = vunpack.c.0.s8 %v3054
    %v3056 = vlaneseq
    %v3057 = vshrl.u32 %v3056, 7
    %v3058 = vsub.s32 %v3055, %v3057
    %v3059 = vrot.slane %v3050, %v3058
    %v3061 = vunpack.c.l.s4 1983009808
    %v3062 = vunpack.c.0.s8 %v3061
    %v3063 = vlaneseq
    %v3064 = vshrl.u32 %v3063, 7
    %v3065 = vsub.s32 %v3062, %v3064
    %v3066 = vrot.slane %v3051, %v3065
    %v3068 = vunpack.c.l.s4 1983009808
    %v3069 = vunpack.c.0.s8 %v3068
    %v3070 = vlaneseq
    %v3071 = vshrl.u32 %v3070, 7
    %v3072 = vsub.s32 %v3069, %v3071
    %v3073 = vrot.slane %v2612, %v3072
    %v3075 = vunpack.c.l.s4 1983009808
    %v3076 = vunpack.c.0.s8 %v3075
    %v3077 = vlaneseq
    %v3078 = vshrl.u32 %v3077, 7
    %v3079 = vsub.s32 %v3076, %v3078
    %v3080 = vrot.slane %v3052, %v3079
    %v3081 = vcombine.low %v3059, %v3073
    %v3082 = vcombine.high %v3059, %v3073
    %v3083 = vcombine.low %v3066, %v3080
    %v3084 = vcombine.high %v3066, %v3080
    %v3085 = vcombine.low %v2526, %v2528
    %v3086 = vcombine.high %v2526, %v2528
    %v3087 = vcombine.high %v2617, %v2617
    %v3089 = vunpack.c.l.s4 1983009808
    %v3090 = vunpack.c.0.s8 %v3089
    %v3091 = vlaneseq
    %v3092 = vshrl.u32 %v3091, 7
    %v3093 = vsub.s32 %v3090, %v3092
    %v3094 = vrot.slane %v3085, %v3093
    %v3096 = vunpack.c.l.s4 1983009808
    %v3097 = vunpack.c.0.s8 %v3096
    %v3098 = vlaneseq
    %v3099 = vshrl.u32 %v3098, 7
    %v3100 = vsub.s32 %v3097, %v3099
    %v3101 = vrot.slane %v3086, %v3100
    %v3103 = vunpack.c.l.s4 1983009808
    %v3104 = vunpack.c.0.s8 %v3103
    %v3105 = vlaneseq
    %v3106 = vshrl.u32 %v3105, 7
    %v3107 = vsub.s32 %v3104, %v3106
    %v3108 = vrot.slane %v2617, %v3107
    %v3110 = vunpack.c.l.s4 1983009808
    %v3111 = vunpack.c.0.s8 %v3110
    %v3112 = vlaneseq
    %v3113 = vshrl.u32 %v3112, 7
    %v3114 = vsub.s32 %v3111, %v3113
    %v3115 = vrot.slane %v3087, %v3114
    %v3116 = vcombine.low %v3094, %v3108
    %v3117 = vcombine.high %v3094, %v3108
    %v3118 = vcombine.low %v3101, %v3115
    %v3119 = vcombine.high %v3101, %v3115
    %v3120 = vcombine.low %v2530, %v2532
    %v3121 = vcombine.high %v2530, %v2532
    %v3122 = vcombine.high %v2620, %v2620
    %v3124 = vunpack.c.l.s4 1983009808
    %v3125 = vunpack.c.0.s8 %v3124
    %v3126 = vlaneseq
    %v3127 = vshrl.u32 %v3126, 7
    %v3128 = vsub.s32 %v3125, %v3127
    %v3129 = vrot.slane %v3120, %v3128
    %v3131 = vunpack.c.l.s4 1983009808
    %v3132 = vunpack.c.0.s8 %v3131
    %v3133 = vlaneseq
    %v3134 = vshrl.u32 %v3133, 7
    %v3135 = vsub.s32 %v3132, %v3134
    %v3136 = vrot.slane %v3121, %v3135
    %v3138 = vunpack.c.l.s4 1983009808
    %v3139 = vunpack.c.0.s8 %v3138
    %v3140 = vlaneseq
    %v3141 = vshrl.u32 %v3140, 7
    %v3142 = vsub.s32 %v3139, %v3141
    %v3143 = vrot.slane %v2620, %v3142
    %v3145 = vunpack.c.l.s4 1983009808
    %v3146 = vunpack.c.0.s8 %v3145
    %v3147 = vlaneseq
    %v3148 = vshrl.u32 %v3147, 7
    %v3149 = vsub.s32 %v3146, %v3148
    %v3150 = vrot.slane %v3122, %v3149
    %v3151 = vcombine.low %v3129, %v3143
    %v3152 = vcombine.high %v3129, %v3143
    %v3153 = vcombine.low %v3136, %v3150
    %v3154 = vcombine.high %v3136, %v3150
    %s3211 = scalar_lea.vmem [#allocation2], 384
    %v3212 = vld [vmem:[%s3211] sm:$0xff]
    %v3213 = vld [vmem:[%s3211 + $0x8] sm:$0xf]
    %v3214 = vld [vmem:[%s3211 + $0xc] sm:$0xff]
    %v3215 = vld [vmem:[%s3211 + $0x14] sm:$0xf]
    %v3216 = vld [vmem:[%s3211 + $0x18] sm:$0xff]
    %v3217 = vld [vmem:[%s3211 + $0x20] sm:$0xf]
    %v3218 = vld [vmem:[%s3211 + $0x24] sm:$0xff]
    %v3219 = vld [vmem:[%s3211 + $0x2c] sm:$0xf]
    %v3220 = vld [vmem:[%s3211 + $0x30] sm:$0xff]
    %v3221 = vld [vmem:[%s3211 + $0x38] sm:$0xf]
    %v3222 = vld [vmem:[%s3211 + $0x3c] sm:$0xff]
    %v3223 = vld [vmem:[%s3211 + $0x44] sm:$0xf]
    %v3224 = vld [vmem:[%s3211 + $0x48] sm:$0xff]
    %v3225 = vld [vmem:[%s3211 + $0x50] sm:$0xf]
    %v3226 = vld [vmem:[%s3211 + $0x54] sm:$0xff]
    %v3227 = vld [vmem:[%s3211 + $0x5c] sm:$0xf]
    %v3228 = vld [vmem:[%s3211 + $0x60] sm:$0xff]
    %v3229 = vld [vmem:[%s3211 + $0x68] sm:$0xf]
    %v3230 = vld [vmem:[%s3211 + $0x6c] sm:$0xff]
    %v3231 = vld [vmem:[%s3211 + $0x74] sm:$0xf]
    %v3232 = vld [vmem:[%s3211 + $0x78] sm:$0xff]
    %v3233 = vld [vmem:[%s3211 + $0x80] sm:$0xf]
    %v3234 = vld [vmem:[%s3211 + $0x84] sm:$0xff]
    %v3235 = vld [vmem:[%s3211 + $0x8c] sm:$0xf]
    %v3236 = vld [vmem:[%s3211 + $0x90] sm:$0xff]
    %v3237 = vld [vmem:[%s3211 + $0x98] sm:$0xf]
    %v3238 = vld [vmem:[%s3211 + $0x9c] sm:$0xff]
    %v3239 = vld [vmem:[%s3211 + $0xa4] sm:$0xf]
    %v3240 = vld [vmem:[%s3211 + $0xa8] sm:$0xff]
    %v3241 = vld [vmem:[%s3211 + $0xb0] sm:$0xf]
    %v3242 = vld [vmem:[%s3211 + $0xb4] sm:$0xff]
    %v3243 = vld [vmem:[%s3211 + $0xbc] sm:$0xf]
    %v3244 = vcombine.low %v457, %v465
    %v3245 = vcombine.low %v467, %v450
    %v3246 = vcombine.low %v464, %v466
    %v3247 = vcombine.low %v468, %v506
    %v3249 = vunpack.c.l.s4 1966171168
    %v3250 = vunpack.c.0.s8 %v3249
    %v3251 = vlaneseq
    %v3252 = vshrl.u32 %v3251, 7
    %v3253 = vsub.s32 %v3250, %v3252
    %v3254 = vrot.slane %v3244, %v3253
    %v3256 = vunpack.c.l.s4 1966171168
    %v3257 = vunpack.c.0.s8 %v3256
    %v3258 = vlaneseq
    %v3259 = vshrl.u32 %v3258, 7
    %v3260 = vsub.s32 %v3257, %v3259
    %v3261 = vrot.slane %v3245, %v3260
    %v3263 = vunpack.c.l.s4 1966171168
    %v3264 = vunpack.c.0.s8 %v3263
    %v3265 = vlaneseq
    %v3266 = vshrl.u32 %v3265, 7
    %v3267 = vsub.s32 %v3264, %v3266
    %v3268 = vrot.slane %v3246, %v3267
    %v3270 = vunpack.c.l.s4 1966171168
    %v3271 = vunpack.c.0.s8 %v3270
    %v3272 = vlaneseq
    %v3273 = vshrl.u32 %v3272, 7
    %v3274 = vsub.s32 %v3271, %v3273
    %v3275 = vrot.slane %v3247, %v3274
    %v3276 = vcombine.low %v3254, %v3261
    %v3277 = vcombine.low %v3268, %v3275
    %v3279 = vunpack.c.l.s4 1966171168
    %v3280 = vunpack.c.0.s8 %v3279
    %v3281 = vlaneseq
    %v3282 = vshrl.u32 %v3281, 7
    %v3283 = vsub.s32 %v3280, %v3282
    %v3284 = vrot.slane %v3276, %v3283
    %v3286 = vunpack.c.l.s4 1966171168
    %v3287 = vunpack.c.0.s8 %v3286
    %v3288 = vlaneseq
    %v3289 = vshrl.u32 %v3288, 7
    %v3290 = vsub.s32 %v3287, %v3289
    %v3291 = vrot.slane %v3277, %v3290
    %v3292 = vcombine.low %v3284, %v3291
    %v3293 = vcombine.low %v514, %v516
    %v3294 = vcombine.low %v499, %v513
    %v3295 = vcombine.low %v515, %v517
    %v3296 = vcombine.low %v555, %v563
    %v3298 = vunpack.c.l.s4 1966171168
    %v3299 = vunpack.c.0.s8 %v3298
    %v3300 = vlaneseq
    %v3301 = vshrl.u32 %v3300, 7
    %v3302 = vsub.s32 %v3299, %v3301
    %v3303 = vrot.slane %v3293, %v3302
    %v3305 = vunpack.c.l.s4 1966171168
    %v3306 = vunpack.c.0.s8 %v3305
    %v3307 = vlaneseq
    %v3308 = vshrl.u32 %v3307, 7
    %v3309 = vsub.s32 %v3306, %v3308
    %v3310 = vrot.slane %v3294, %v3309
    %v3312 = vunpack.c.l.s4 1966171168
    %v3313 = vunpack.c.0.s8 %v3312
    %v3314 = vlaneseq
    %v3315 = vshrl.u32 %v3314, 7
    %v3316 = vsub.s32 %v3313, %v3315
    %v3317 = vrot.slane %v3295, %v3316
    %v3319 = vunpack.c.l.s4 1966171168
    %v3320 = vunpack.c.0.s8 %v3319
    %v3321 = vlaneseq
    %v3322 = vshrl.u32 %v3321, 7
    %v3323 = vsub.s32 %v3320, %v3322
    %v3324 = vrot.slane %v3296, %v3323
    %v3325 = vcombine.low %v3303, %v3310
    %v3326 = vcombine.low %v3317, %v3324
    %v3328 = vunpack.c.l.s4 1966171168
    %v3329 = vunpack.c.0.s8 %v3328
    %v3330 = vlaneseq
    %v3331 = vshrl.u32 %v3330, 7
    %v3332 = vsub.s32 %v3329, %v3331
    %v3333 = vrot.slane %v3325, %v3332
    %v3335 = vunpack.c.l.s4 1966171168
    %v3336 = vunpack.c.0.s8 %v3335
    %v3337 = vlaneseq
    %v3338 = vshrl.u32 %v3337, 7
    %v3339 = vsub.s32 %v3336, %v3338
    %v3340 = vrot.slane %v3326, %v3339
    %v3341 = vcombine.low %v3333, %v3340
    %v3342 = vcombine.low %v565, %v548
    %v3343 = vcombine.low %v562, %v564
    %v3344 = vcombine.low %v566, %v604
    %v3345 = vcombine.low %v612, %v614
    %v3347 = vunpack.c.l.s4 1966171168
    %v3348 = vunpack.c.0.s8 %v3347
    %v3349 = vlaneseq
    %v3350 = vshrl.u32 %v3349, 7
    %v3351 = vsub.s32 %v3348, %v3350
    %v3352 = vrot.slane %v3342, %v3351
    %v3354 = vunpack.c.l.s4 1966171168
    %v3355 = vunpack.c.0.s8 %v3354
    %v3356 = vlaneseq
    %v3357 = vshrl.u32 %v3356, 7
    %v3358 = vsub.s32 %v3355, %v3357
    %v3359 = vrot.slane %v3343, %v3358
    %v3361 = vunpack.c.l.s4 1966171168
    %v3362 = vunpack.c.0.s8 %v3361
    %v3363 = vlaneseq
    %v3364 = vshrl.u32 %v3363, 7
    %v3365 = vsub.s32 %v3362, %v3364
    %v3366 = vrot.slane %v3344, %v3365
    %v3368 = vunpack.c.l.s4 1966171168
    %v3369 = vunpack.c.0.s8 %v3368
    %v3370 = vlaneseq
    %v3371 = vshrl.u32 %v3370, 7
    %v3372 = vsub.s32 %v3369, %v3371
    %v3373 = vrot.slane %v3345, %v3372
    %v3374 = vcombine.low %v3352, %v3359
    %v3375 = vcombine.low %v3366, %v3373
    %v3377 = vunpack.c.l.s4 1966171168
    %v3378 = vunpack.c.0.s8 %v3377
    %v3379 = vlaneseq
    %v3380 = vshrl.u32 %v3379, 7
    %v3381 = vsub.s32 %v3378, %v3380
    %v3382 = vrot.slane %v3374, %v3381
    %v3384 = vunpack.c.l.s4 1966171168
    %v3385 = vunpack.c.0.s8 %v3384
    %v3386 = vlaneseq
    %v3387 = vshrl.u32 %v3386, 7
    %v3388 = vsub.s32 %v3385, %v3387
    %v3389 = vrot.slane %v3375, %v3388
    %v3390 = vcombine.low %v3382, %v3389
    %v3391 = vcombine.low %v597, %v611
    %v3392 = vcombine.low %v613, %v615
    %v3393 = vcombine.low %v653, %v661
    %v3394 = vcombine.low %v663, %v646
    %v3396 = vunpack.c.l.s4 1966171168
    %v3397 = vunpack.c.0.s8 %v3396
    %v3398 = vlaneseq
    %v3399 = vshrl.u32 %v3398, 7
    %v3400 = vsub.s32 %v3397, %v3399
    %v3401 = vrot.slane %v3391, %v3400
    %v3403 = vunpack.c.l.s4 1966171168
    %v3404 = vunpack.c.0.s8 %v3403
    %v3405 = vlaneseq
    %v3406 = vshrl.u32 %v3405, 7
    %v3407 = vsub.s32 %v3404, %v3406
    %v3408 = vrot.slane %v3392, %v3407
    %v3410 = vunpack.c.l.s4 1966171168
    %v3411 = vunpack.c.0.s8 %v3410
    %v3412 = vlaneseq
    %v3413 = vshrl.u32 %v3412, 7
    %v3414 = vsub.s32 %v3411, %v3413
    %v3415 = vrot.slane %v3393, %v3414
    %v3417 = vunpack.c.l.s4 1966171168
    %v3418 = vunpack.c.0.s8 %v3417
    %v3419 = vlaneseq
    %v3420 = vshrl.u32 %v3419, 7
    %v3421 = vsub.s32 %v3418, %v3420
    %v3422 = vrot.slane %v3394, %v3421
    %v3423 = vcombine.low %v3401, %v3408
    %v3424 = vcombine.low %v3415, %v3422
    %v3426 = vunpack.c.l.s4 1966171168
    %v3427 = vunpack.c.0.s8 %v3426
    %v3428 = vlaneseq
    %v3429 = vshrl.u32 %v3428, 7
    %v3430 = vsub.s32 %v3427, %v3429
    %v3431 = vrot.slane %v3423, %v3430
    %v3433 = vunpack.c.l.s4 1966171168
    %v3434 = vunpack.c.0.s8 %v3433
    %v3435 = vlaneseq
    %v3436 = vshrl.u32 %v3435, 7
    %v3437 = vsub.s32 %v3434, %v3436
    %v3438 = vrot.slane %v3424, %v3437
    %v3439 = vcombine.low %v3431, %v3438
    %v3440 = vcombine.low %v660, %v662
    %v3441 = vcombine.low %v664, %v702
    %v3442 = vcombine.low %v710, %v712
    %v3443 = vcombine.low %v695, %v709
    %v3445 = vunpack.c.l.s4 1966171168
    %v3446 = vunpack.c.0.s8 %v3445
    %v3447 = vlaneseq
    %v3448 = vshrl.u32 %v3447, 7
    %v3449 = vsub.s32 %v3446, %v3448
    %v3450 = vrot.slane %v3440, %v3449
    %v3452 = vunpack.c.l.s4 1966171168
    %v3453 = vunpack.c.0.s8 %v3452
    %v3454 = vlaneseq
    %v3455 = vshrl.u32 %v3454, 7
    %v3456 = vsub.s32 %v3453, %v3455
    %v3457 = vrot.slane %v3441, %v3456
    %v3459 = vunpack.c.l.s4 1966171168
    %v3460 = vunpack.c.0.s8 %v3459
    %v3461 = vlaneseq
    %v3462 = vshrl.u32 %v3461, 7
    %v3463 = vsub.s32 %v3460, %v3462
    %v3464 = vrot.slane %v3442, %v3463
    %v3466 = vunpack.c.l.s4 1966171168
    %v3467 = vunpack.c.0.s8 %v3466
    %v3468 = vlaneseq
    %v3469 = vshrl.u32 %v3468, 7
    %v3470 = vsub.s32 %v3467, %v3469
    %v3471 = vrot.slane %v3443, %v3470
    %v3472 = vcombine.low %v3450, %v3457
    %v3473 = vcombine.low %v3464, %v3471
    %v3475 = vunpack.c.l.s4 1966171168
    %v3476 = vunpack.c.0.s8 %v3475
    %v3477 = vlaneseq
    %v3478 = vshrl.u32 %v3477, 7
    %v3479 = vsub.s32 %v3476, %v3478
    %v3480 = vrot.slane %v3472, %v3479
    %v3482 = vunpack.c.l.s4 1966171168
    %v3483 = vunpack.c.0.s8 %v3482
    %v3484 = vlaneseq
    %v3485 = vshrl.u32 %v3484, 7
    %v3486 = vsub.s32 %v3483, %v3485
    %v3487 = vrot.slane %v3473, %v3486
    %v3488 = vcombine.low %v3480, %v3487
    %v3489 = vcombine.low %v711, %v713
    %v3490 = vcombine.low %v751, %v759
    %v3491 = vcombine.low %v761, %v744
    %v3492 = vcombine.low %v758, %v760
    %v3494 = vunpack.c.l.s4 1966171168
    %v3495 = vunpack.c.0.s8 %v3494
    %v3496 = vlaneseq
    %v3497 = vshrl.u32 %v3496, 7
    %v3498 = vsub.s32 %v3495, %v3497
    %v3499 = vrot.slane %v3489, %v3498
    %v3501 = vunpack.c.l.s4 1966171168
    %v3502 = vunpack.c.0.s8 %v3501
    %v3503 = vlaneseq
    %v3504 = vshrl.u32 %v3503, 7
    %v3505 = vsub.s32 %v3502, %v3504
    %v3506 = vrot.slane %v3490, %v3505
    %v3508 = vunpack.c.l.s4 1966171168
    %v3509 = vunpack.c.0.s8 %v3508
    %v3510 = vlaneseq
    %v3511 = vshrl.u32 %v3510, 7
    %v3512 = vsub.s32 %v3509, %v3511
    %v3513 = vrot.slane %v3491, %v3512
    %v3515 = vunpack.c.l.s4 1966171168
    %v3516 = vunpack.c.0.s8 %v3515
    %v3517 = vlaneseq
    %v3518 = vshrl.u32 %v3517, 7
    %v3519 = vsub.s32 %v3516, %v3518
    %v3520 = vrot.slane %v3492, %v3519
    %v3521 = vcombine.low %v3499, %v3506
    %v3522 = vcombine.low %v3513, %v3520
    %v3524 = vunpack.c.l.s4 1966171168
    %v3525 = vunpack.c.0.s8 %v3524
    %v3526 = vlaneseq
    %v3527 = vshrl.u32 %v3526, 7
    %v3528 = vsub.s32 %v3525, %v3527
    %v3529 = vrot.slane %v3521, %v3528
    %v3531 = vunpack.c.l.s4 1966171168
    %v3532 = vunpack.c.0.s8 %v3531
    %v3533 = vlaneseq
    %v3534 = vshrl.u32 %v3533, 7
    %v3535 = vsub.s32 %v3532, %v3534
    %v3536 = vrot.slane %v3522, %v3535
    %v3537 = vcombine.low %v3529, %v3536
    %v3538 = vcombine.low %v762, %v800
    %v3539 = vcombine.low %v808, %v810
    %v3540 = vcombine.low %v793, %v807
    %v3541 = vcombine.low %v809, %v811
    %v3543 = vunpack.c.l.s4 1966171168
    %v3544 = vunpack.c.0.s8 %v3543
    %v3545 = vlaneseq
    %v3546 = vshrl.u32 %v3545, 7
    %v3547 = vsub.s32 %v3544, %v3546
    %v3548 = vrot.slane %v3538, %v3547
    %v3550 = vunpack.c.l.s4 1966171168
    %v3551 = vunpack.c.0.s8 %v3550
    %v3552 = vlaneseq
    %v3553 = vshrl.u32 %v3552, 7
    %v3554 = vsub.s32 %v3551, %v3553
    %v3555 = vrot.slane %v3539, %v3554
    %v3557 = vunpack.c.l.s4 1966171168
    %v3558 = vunpack.c.0.s8 %v3557
    %v3559 = vlaneseq
    %v3560 = vshrl.u32 %v3559, 7
    %v3561 = vsub.s32 %v3558, %v3560
    %v3562 = vrot.slane %v3540, %v3561
    %v3564 = vunpack.c.l.s4 1966171168
    %v3565 = vunpack.c.0.s8 %v3564
    %v3566 = vlaneseq
    %v3567 = vshrl.u32 %v3566, 7
    %v3568 = vsub.s32 %v3565, %v3567
    %v3569 = vrot.slane %v3541, %v3568
    %v3570 = vcombine.low %v3548, %v3555
    %v3571 = vcombine.low %v3562, %v3569
    %v3573 = vunpack.c.l.s4 1966171168
    %v3574 = vunpack.c.0.s8 %v3573
    %v3575 = vlaneseq
    %v3576 = vshrl.u32 %v3575, 7
    %v3577 = vsub.s32 %v3574, %v3576
    %v3578 = vrot.slane %v3570, %v3577
    %v3580 = vunpack.c.l.s4 1966171168
    %v3581 = vunpack.c.0.s8 %v3580
    %v3582 = vlaneseq
    %v3583 = vshrl.u32 %v3582, 7
    %v3584 = vsub.s32 %v3581, %v3583
    %v3585 = vrot.slane %v3571, %v3584
    %v3586 = vcombine.low %v3578, %v3585
    %v3626 = vunpack.c.l.b16 %v3212
    %v3627 = vunpack.c.h.b16 %v3212
    %v3628 = vunpack.c.l.b16 %v3213
    %v3629 = vunpack.c.l.b16 %v3214
    %v3630 = vunpack.c.h.b16 %v3214
    %v3631 = vunpack.c.l.b16 %v3215
    %v3632 = vunpack.c.l.b16 %v3216
    %v3633 = vunpack.c.h.b16 %v3216
    %v3634 = vunpack.c.l.b16 %v3217
    %v3635 = vunpack.c.l.b16 %v3218
    %v3636 = vunpack.c.h.b16 %v3218
    %v3637 = vunpack.c.l.b16 %v3219
    %v3638 = vunpack.c.l.b16 %v3220
    %v3639 = vunpack.c.h.b16 %v3220
    %v3640 = vunpack.c.l.b16 %v3221
    %v3641 = vunpack.c.l.b16 %v3222
    %v3642 = vunpack.c.h.b16 %v3222
    %v3643 = vunpack.c.l.b16 %v3223
    %v3644 = vunpack.c.l.b16 %v3224
    %v3645 = vunpack.c.h.b16 %v3224
    %v3646 = vunpack.c.l.b16 %v3225
    %v3647 = vunpack.c.l.b16 %v3226
    %v3648 = vunpack.c.h.b16 %v3226
    %v3649 = vunpack.c.l.b16 %v3227
    %v3650 = vunpack.c.l.b16 %v3228
    %v3651 = vunpack.c.h.b16 %v3228
    %v3652 = vunpack.c.l.b16 %v3229
    %v3653 = vunpack.c.l.b16 %v3230
    %v3654 = vunpack.c.h.b16 %v3230
    %v3655 = vunpack.c.l.b16 %v3231
    %v3656 = vunpack.c.l.b16 %v3232
    %v3657 = vunpack.c.h.b16 %v3232
    %v3658 = vunpack.c.l.b16 %v3233
    %v3659 = vunpack.c.l.b16 %v3234
    %v3660 = vunpack.c.h.b16 %v3234
    %v3661 = vunpack.c.l.b16 %v3235
    %v3662 = vunpack.c.l.b16 %v3236
    %v3663 = vunpack.c.h.b16 %v3236
    %v3664 = vunpack.c.l.b16 %v3237
    %v3665 = vunpack.c.l.b16 %v3238
    %v3666 = vunpack.c.h.b16 %v3238
    %v3667 = vunpack.c.l.b16 %v3239
    %v3668 = vunpack.c.l.b16 %v3240
    %v3669 = vunpack.c.h.b16 %v3240
    %v3670 = vunpack.c.l.b16 %v3241
    %v3671 = vunpack.c.l.b16 %v3242
    %v3672 = vunpack.c.h.b16 %v3242
    %v3673 = vunpack.c.l.b16 %v3243
    %v3674 = vpack.c.b16 %v3629, %v3626
    %v3675 = vpack.c.b16 %v3630, %v3627
    %v3676 = vpack.c.b16 %v3631, %v3628
    %v3677 = vpack.c.b16 %v3635, %v3632
    %v3678 = vpack.c.b16 %v3636, %v3633
    %v3679 = vpack.c.b16 %v3637, %v3634
    %v3680 = vpack.c.b16 %v3641, %v3638
    %v3681 = vpack.c.b16 %v3642, %v3639
    %v3682 = vpack.c.b16 %v3643, %v3640
    %v3683 = vpack.c.b16 %v3647, %v3644
    %v3684 = vpack.c.b16 %v3648, %v3645
    %v3685 = vpack.c.b16 %v3649, %v3646
    %v3686 = vpack.c.b16 %v3653, %v3650
    %v3687 = vpack.c.b16 %v3654, %v3651
    %v3688 = vpack.c.b16 %v3655, %v3652
    %v3689 = vpack.c.b16 %v3659, %v3656
    %v3690 = vpack.c.b16 %v3660, %v3657
    %v3691 = vpack.c.b16 %v3661, %v3658
    %v3692 = vpack.c.b16 %v3665, %v3662
    %v3693 = vpack.c.b16 %v3666, %v3663
    %v3694 = vpack.c.b16 %v3667, %v3664
    %v3695 = vpack.c.b16 %v3671, %v3668
    %v3696 = vpack.c.b16 %v3672, %v3669
    %v3697 = vpack.c.b16 %v3673, %v3670
    %3722 = vmatprep.subr.bf16.mxu0 %v3675
    %3723 = vmatpush1.bf16.msra.mxu0 %v3674
    %3724 = vmatprep.subr.bf16.mxu0 %v3678
    %3725 = vmatpush1.bf16.msra.mxu0 %v3677
    %3726 = vmatprep.subr.bf16.mxu0 %v3681
    %3727 = vmatpush1.bf16.msra.mxu0 %v3680
    %3728 = vmatprep.subr.bf16.mxu0 %v3684
    %3729 = vmatpush1.bf16.msra.mxu0 %v3683
    %3730 = vmatprep.subr.bf16.mxu0 %v3687
    %3731 = vmatpush1.bf16.msra.mxu0 %v3686
    %3732 = vmatprep.subr.bf16.mxu0 %v3690
    %3733 = vmatpush1.bf16.msra.mxu0 %v3689
    %3734 = vmatprep.subr.bf16.mxu0 %v3693
    %3735 = vmatpush1.bf16.msra.mxu0 %v3692
    %3736 = vmatprep.subr.bf16.mxu0 %v3696
    %3737 = vmatpush1.bf16.msra.mxu0 %v3695
    %3738 = vmatprep.subr.bf16.mxu0 0
    %3739 = vmatpush1.bf16.msra.mxu0 0
    %3740 = vmatprep.subr.bf16.mxu0 0
    %3741 = vmatpush1.bf16.msra.mxu0 0
    %3742 = vmatprep.subr.bf16.mxu0 0
    %3743 = vmatpush1.bf16.msra.mxu0 0
    %3744 = vmatprep.subr.bf16.mxu0 0
    %3745 = vmatpush1.bf16.msra.mxu0 0
    %3746 = vmatprep.subr.bf16.mxu0 0
    %3747 = vmatpush1.bf16.msra.mxu0 0
    %3748 = vmatprep.subr.bf16.mxu0 0
    %3749 = vmatpush1.bf16.msra.mxu0 0
    %3750 = vmatprep.subr.bf16.mxu0 0
    %3751 = vmatpush1.bf16.msra.mxu0 0
    %3752 = vmatprep.subr.bf16.mxu0 0
    %3753 = vmatpush1.bf16.msra.mxu0 0
    %3754 = vmatprep.mubr.bf16.mxu0 0
    %3755 = vmatmul.mubr.bf16.gmra.mrb[0].mxu0 %v3292
    %v3756 = vpop.f32.mrb[0].mxu0
    %v3757 = vadd.f32 0.0, %v3756
    %v3758 = vpop.f32.mrb[0].mxu0
    %v3759 = vadd.f32 0.0, %v3758
    %v3760 = vpop.f32.mrb[0].mxu0
    %v3761 = vadd.f32 0.0, %v3760
    %v3762 = vpop.f32.mrb[0].mxu0
    %v3763 = vadd.f32 0.0, %v3762
    %3764 = vmatprep.mubr.bf16.mxu0 0
    %3765 = vmatmul.mubr.bf16.gmra.mrb[0].mxu0 %v3341
    %v3766 = vpop.f32.mrb[0].mxu0
    %v3767 = vadd.f32 0.0, %v3766
    %v3768 = vpop.f32.mrb[0].mxu0
    %v3769 = vadd.f32 0.0, %v3768
    %v3770 = vpop.f32.mrb[0].mxu0
    %v3771 = vadd.f32 0.0, %v3770
    %v3772 = vpop.f32.mrb[0].mxu0
    %v3773 = vadd.f32 0.0, %v3772
    %3774 = vmatprep.mubr.bf16.mxu0 0
    %3775 = vmatmul.mubr.bf16.gmra.mrb[0].mxu0 %v3390
    %v3776 = vpop.f32.mrb[0].mxu0
    %v3777 = vadd.f32 0.0, %v3776
    %v3778 = vpop.f32.mrb[0].mxu0
    %v3779 = vadd.f32 0.0, %v3778
    %v3780 = vpop.f32.mrb[0].mxu0
    %v3781 = vadd.f32 0.0, %v3780
    %v3782 = vpop.f32.mrb[0].mxu0
    %v3783 = vadd.f32 0.0, %v3782
    %3784 = vmatprep.mubr.bf16.mxu0 0
    %3785 = vmatmul.mubr.bf16.gmra.mrb[0].mxu0 %v3439
    %v3786 = vpop.f32.mrb[0].mxu0
    %v3787 = vadd.f32 0.0, %v3786
    %v3788 = vpop.f32.mrb[0].mxu0
    %v3789 = vadd.f32 0.0, %v3788
    %v3790 = vpop.f32.mrb[0].mxu0
    %v3791 = vadd.f32 0.0, %v3790
    %v3792 = vpop.f32.mrb[0].mxu0
    %v3793 = vadd.f32 0.0, %v3792
    %3794 = vmatprep.mubr.bf16.mxu0 0
    %3795 = vmatmul.mubr.bf16.gmra.mrb[0].mxu0 %v3488
    %v3796 = vpop.f32.mrb[0].mxu0
    %v3797 = vadd.f32 0.0, %v3796
    %v3798 = vpop.f32.mrb[0].mxu0
    %v3799 = vadd.f32 0.0, %v3798
    %v3800 = vpop.f32.mrb[0].mxu0
    %v3801 = vadd.f32 0.0, %v3800
    %v3802 = vpop.f32.mrb[0].mxu0
    %v3803 = vadd.f32 0.0, %v3802
    %3804 = vmatprep.mubr.bf16.mxu0 0
    %3805 = vmatmul.mubr.bf16.gmra.mrb[0].mxu0 %v3537
    %v3806 = vpop.f32.mrb[0].mxu0
    %v3807 = vadd.f32 0.0, %v3806
    %v3808 = vpop.f32.mrb[0].mxu0
    %v3809 = vadd.f32 0.0, %v3808
    %v3810 = vpop.f32.mrb[0].mxu0
    %v3811 = vadd.f32 0.0, %v3810
    %v3812 = vpop.f32.mrb[0].mxu0
    %v3813 = vadd.f32 0.0, %v3812
    %3814 = vmatprep.mubr.bf16.mxu0 0
    %3815 = vmatmul.mubr.bf16.gmra.mrb[0].mxu0 %v3586
    %v3816 = vpop.f32.mrb[0].mxu0
    %v3817 = vadd.f32 0.0, %v3816
    %v3818 = vpop.f32.mrb[0].mxu0
    %v3819 = vadd.f32 0.0, %v3818
    %v3820 = vpop.f32.mrb[0].mxu0
    %v3821 = vadd.f32 0.0, %v3820
    %v3822 = vpop.f32.mrb[0].mxu0
    %v3823 = vadd.f32 0.0, %v3822
    %3824 = vdwg.mxu0
    %3825 = vmatprep.subr.bf16.mxu0 0
    %3826 = vmatpush1.bf16.msra.mxu0 %v3676
    %3827 = vmatprep.subr.bf16.mxu0 0
    %3828 = vmatpush1.bf16.msra.mxu0 %v3679
    %3829 = vmatprep.subr.bf16.mxu0 0
    %3830 = vmatpush1.bf16.msra.mxu0 %v3682
    %3831 = vmatprep.subr.bf16.mxu0 0
    %3832 = vmatpush1.bf16.msra.mxu0 %v3685
    %3833 = vmatprep.subr.bf16.mxu0 0
    %3834 = vmatpush1.bf16.msra.mxu0 %v3688
    %3835 = vmatprep.subr.bf16.mxu0 0
    %3836 = vmatpush1.bf16.msra.mxu0 %v3691
    %3837 = vmatprep.subr.bf16.mxu0 0
    %3838 = vmatpush1.bf16.msra.mxu0 %v3694
    %3839 = vmatprep.subr.bf16.mxu0 0
    %3840 = vmatpush1.bf16.msra.mxu0 %v3697
    %3841 = vmatprep.subr.bf16.mxu0 0
    %3842 = vmatpush1.bf16.msra.mxu0 0
    %3843 = vmatprep.subr.bf16.mxu0 0
    %3844 = vmatpush1.bf16.msra.mxu0 0
    %3845 = vmatprep.subr.bf16.mxu0 0
    %3846 = vmatpush1.bf16.msra.mxu0 0
    %3847 = vmatprep.subr.bf16.mxu0 0
    %3848 = vmatpush1.bf16.msra.mxu0 0
    %3849 = vmatprep.subr.bf16.mxu0 0
    %3850 = vmatpush1.bf16.msra.mxu0 0
    %3851 = vmatprep.subr.bf16.mxu0 0
    %3852 = vmatpush1.bf16.msra.mxu0 0
    %3853 = vmatprep.subr.bf16.mxu0 0
    %3854 = vmatpush1.bf16.msra.mxu0 0
    %3855 = vmatprep.subr.bf16.mxu0 0
    %3856 = vmatpush1.bf16.msra.mxu0 0
    %3857 = vmatprep.mubr.bf16.mxu0 0
    %3858 = vmatmul.mubr.bf16.gmra.mrb[0].mxu0 %v3292
    %v3859 = vpop.f32.mrb[0].mxu0
    %v3860 = vadd.f32 0.0, %v3859
    %v3861 = vpop.f32.mrb[0].mxu0
    %v3862 = vpop.f32.mrb[0].mxu0
    %v3863 = vadd.f32 0.0, %v3862
    %v3864 = vpop.f32.mrb[0].mxu0
    %3865 = vmatprep.mubr.bf16.mxu0 0
    %3866 = vmatmul.mubr.bf16.gmra.mrb[0].mxu0 %v3341
    %v3867 = vpop.f32.mrb[0].mxu0
    %v3868 = vadd.f32 0.0, %v3867
    %v3869 = vpop.f32.mrb[0].mxu0
    %v3870 = vpop.f32.mrb[0].mxu0
    %v3871 = vadd.f32 0.0, %v3870
    %v3872 = vpop.f32.mrb[0].mxu0
    %3873 = vmatprep.mubr.bf16.mxu0 0
    %3874 = vmatmul.mubr.bf16.gmra.mrb[0].mxu0 %v3390
    %v3875 = vpop.f32.mrb[0].mxu0
    %v3876 = vadd.f32 0.0, %v3875
    %v3877 = vpop.f32.mrb[0].mxu0
    %v3878 = vpop.f32.mrb[0].mxu0
    %v3879 = vadd.f32 0.0, %v3878
    %v3880 = vpop.f32.mrb[0].mxu0
    %3881 = vmatprep.mubr.bf16.mxu0 0
    %3882 = vmatmul.mubr.bf16.gmra.mrb[0].mxu0 %v3439
    %v3883 = vpop.f32.mrb[0].mxu0
    %v3884 = vadd.f32 0.0, %v3883
    %v3885 = vpop.f32.mrb[0].mxu0
    %v3886 = vpop.f32.mrb[0].mxu0
    %v3887 = vadd.f32 0.0, %v3886
    %v3888 = vpop.f32.mrb[0].mxu0
    %3889 = vmatprep.mubr.bf16.mxu0 0
    %3890 = vmatmul.mubr.bf16.gmra.mrb[0].mxu0 %v3488
    %v3891 = vpop.f32.mrb[0].mxu0
    %v3892 = vadd.f32 0.0, %v3891
    %v3893 = vpop.f32.mrb[0].mxu0
    %v3894 = vpop.f32.mrb[0].mxu0
    %v3895 = vadd.f32 0.0, %v3894
    %v3896 = vpop.f32.mrb[0].mxu0
    %3897 = vmatprep.mubr.bf16.mxu0 0
    %3898 = vmatmul.mubr.bf16.gmra.mrb[0].mxu0 %v3537
    %v3899 = vpop.f32.mrb[0].mxu0
    %v3900 = vadd.f32 0.0, %v3899
    %v3901 = vpop.f32.mrb[0].mxu0
    %v3902 = vpop.f32.mrb[0].mxu0
    %v3903 = vadd.f32 0.0, %v3902
    %v3904 = vpop.f32.mrb[0].mxu0
    %3905 = vmatprep.mubr.bf16.mxu0 0
    %3906 = vmatmul.mubr.bf16.gmra.mrb[0].mxu0 %v3586
    %v3907 = vpop.f32.mrb[0].mxu0
    %v3908 = vadd.f32 0.0, %v3907
    %v3909 = vpop.f32.mrb[0].mxu0
    %v3910 = vpop.f32.mrb[0].mxu0
    %v3911 = vadd.f32 0.0, %v3910
    %v3912 = vpop.f32.mrb[0].mxu0
    %3913 = vdwg.mxu0
    %v3956 = vcombine.low %v3757, %v3759
    %v3957 = vcombine.high %v3757, %v3759
    %v3958 = vcombine.high %v3860, %v3860
    %v3960 = vunpack.c.l.s4 1983009808
    %v3961 = vunpack.c.0.s8 %v3960
    %v3962 = vlaneseq
    %v3963 = vshrl.u32 %v3962, 7
    %v3964 = vsub.s32 %v3961, %v3963
    %v3965 = vrot.slane %v3956, %v3964
    %v3967 = vunpack.c.l.s4 1983009808
    %v3968 = vunpack.c.0.s8 %v3967
    %v3969 = vlaneseq
    %v3970 = vshrl.u32 %v3969, 7
    %v3971 = vsub.s32 %v3968, %v3970
    %v3972 = vrot.slane %v3957, %v3971
    %v3974 = vunpack.c.l.s4 1983009808
    %v3975 = vunpack.c.0.s8 %v3974
    %v3976 = vlaneseq
    %v3977 = vshrl.u32 %v3976, 7
    %v3978 = vsub.s32 %v3975, %v3977
    %v3979 = vrot.slane %v3860, %v3978
    %v3981 = vunpack.c.l.s4 1983009808
    %v3982 = vunpack.c.0.s8 %v3981
    %v3983 = vlaneseq
    %v3984 = vshrl.u32 %v3983, 7
    %v3985 = vsub.s32 %v3982, %v3984
    %v3986 = vrot.slane %v3958, %v3985
    %v3987 = vcombine.low %v3965, %v3979
    %v3988 = vcombine.high %v3965, %v3979
    %v3989 = vcombine.low %v3972, %v3986
    %v3990 = vcombine.high %v3972, %v3986
    %v3991 = vcombine.low %v3761, %v3763
    %v3992 = vcombine.high %v3761, %v3763
    %v3993 = vcombine.high %v3863, %v3863
    %v3995 = vunpack.c.l.s4 1983009808
    %v3996 = vunpack.c.0.s8 %v3995
    %v3997 = vlaneseq
    %v3998 = vshrl.u32 %v3997, 7
    %v3999 = vsub.s32 %v3996, %v3998
    %v4000 = vrot.slane %v3991, %v3999
    %v4002 = vunpack.c.l.s4 1983009808
    %v4003 = vunpack.c.0.s8 %v4002
    %v4004 = vlaneseq
    %v4005 = vshrl.u32 %v4004, 7
    %v4006 = vsub.s32 %v4003, %v4005
    %v4007 = vrot.slane %v3992, %v4006
    %v4009 = vunpack.c.l.s4 1983009808
    %v4010 = vunpack.c.0.s8 %v4009
    %v4011 = vlaneseq
    %v4012 = vshrl.u32 %v4011, 7
    %v4013 = vsub.s32 %v4010, %v4012
    %v4014 = vrot.slane %v3863, %v4013
    %v4016 = vunpack.c.l.s4 1983009808
    %v4017 = vunpack.c.0.s8 %v4016
    %v4018 = vlaneseq
    %v4019 = vshrl.u32 %v4018, 7
    %v4020 = vsub.s32 %v4017, %v4019
    %v4021 = vrot.slane %v3993, %v4020
    %v4022 = vcombine.low %v4000, %v4014
    %v4023 = vcombine.high %v4000, %v4014
    %v4024 = vcombine.low %v4007, %v4021
    %v4025 = vcombine.high %v4007, %v4021
    %v4026 = vcombine.low %v3767, %v3769
    %v4027 = vcombine.high %v3767, %v3769
    %v4028 = vcombine.high %v3868, %v3868
    %v4030 = vunpack.c.l.s4 1983009808
    %v4031 = vunpack.c.0.s8 %v4030
    %v4032 = vlaneseq
    %v4033 = vshrl.u32 %v4032, 7
    %v4034 = vsub.s32 %v4031, %v4033
    %v4035 = vrot.slane %v4026, %v4034
    %v4037 = vunpack.c.l.s4 1983009808
    %v4038 = vunpack.c.0.s8 %v4037
    %v4039 = vlaneseq
    %v4040 = vshrl.u32 %v4039, 7
    %v4041 = vsub.s32 %v4038, %v4040
    %v4042 = vrot.slane %v4027, %v4041
    %v4044 = vunpack.c.l.s4 1983009808
    %v4045 = vunpack.c.0.s8 %v4044
    %v4046 = vlaneseq
    %v4047 = vshrl.u32 %v4046, 7
    %v4048 = vsub.s32 %v4045, %v4047
    %v4049 = vrot.slane %v3868, %v4048
    %v4051 = vunpack.c.l.s4 1983009808
    %v4052 = vunpack.c.0.s8 %v4051
    %v4053 = vlaneseq
    %v4054 = vshrl.u32 %v4053, 7
    %v4055 = vsub.s32 %v4052, %v4054
    %v4056 = vrot.slane %v4028, %v4055
    %v4057 = vcombine.low %v4035, %v4049
    %v4058 = vcombine.high %v4035, %v4049
    %v4059 = vcombine.low %v4042, %v4056
    %v4060 = vcombine.high %v4042, %v4056
    %v4061 = vcombine.low %v3771, %v3773
    %v4062 = vcombine.high %v3771, %v3773
    %v4063 = vcombine.high %v3871, %v3871
    %v4065 = vunpack.c.l.s4 1983009808
    %v4066 = vunpack.c.0.s8 %v4065
    %v4067 = vlaneseq
    %v4068 = vshrl.u32 %v4067, 7
    %v4069 = vsub.s32 %v4066, %v4068
    %v4070 = vrot.slane %v4061, %v4069
    %v4072 = vunpack.c.l.s4 1983009808
    %v4073 = vunpack.c.0.s8 %v4072
    %v4074 = vlaneseq
    %v4075 = vshrl.u32 %v4074, 7
    %v4076 = vsub.s32 %v4073, %v4075
    %v4077 = vrot.slane %v4062, %v4076
    %v4079 = vunpack.c.l.s4 1983009808
    %v4080 = vunpack.c.0.s8 %v4079
    %v4081 = vlaneseq
    %v4082 = vshrl.u32 %v4081, 7
    %v4083 = vsub.s32 %v4080, %v4082
    %v4084 = vrot.slane %v3871, %v4083
    %v4086 = vunpack.c.l.s4 1983009808
    %v4087 = vunpack.c.0.s8 %v4086
    %v4088 = vlaneseq
    %v4089 = vshrl.u32 %v4088, 7
    %v4090 = vsub.s32 %v4087, %v4089
    %v4091 = vrot.slane %v4063, %v4090
    %v4092 = vcombine.low %v4070, %v4084
    %v4093 = vcombine.high %v4070, %v4084
    %v4094 = vcombine.low %v4077, %v4091
    %v4095 = vcombine.high %v4077, %v4091
    %v4096 = vcombine.low %v3777, %v3779
    %v4097 = vcombine.high %v3777, %v3779
    %v4098 = vcombine.high %v3876, %v3876
    %v4100 = vunpack.c.l.s4 1983009808
    %v4101 = vunpack.c.0.s8 %v4100
    %v4102 = vlaneseq
    %v4103 = vshrl.u32 %v4102, 7
    %v4104 = vsub.s32 %v4101, %v4103
    %v4105 = vrot.slane %v4096, %v4104
    %v4107 = vunpack.c.l.s4 1983009808
    %v4108 = vunpack.c.0.s8 %v4107
    %v4109 = vlaneseq
    %v4110 = vshrl.u32 %v4109, 7
    %v4111 = vsub.s32 %v4108, %v4110
    %v4112 = vrot.slane %v4097, %v4111
    %v4114 = vunpack.c.l.s4 1983009808
    %v4115 = vunpack.c.0.s8 %v4114
    %v4116 = vlaneseq
    %v4117 = vshrl.u32 %v4116, 7
    %v4118 = vsub.s32 %v4115, %v4117
    %v4119 = vrot.slane %v3876, %v4118
    %v4121 = vunpack.c.l.s4 1983009808
    %v4122 = vunpack.c.0.s8 %v4121
    %v4123 = vlaneseq
    %v4124 = vshrl.u32 %v4123, 7
    %v4125 = vsub.s32 %v4122, %v4124
    %v4126 = vrot.slane %v4098, %v4125
    %v4127 = vcombine.low %v4105, %v4119
    %v4128 = vcombine.high %v4105, %v4119
    %v4129 = vcombine.low %v4112, %v4126
    %v4130 = vcombine.high %v4112, %v4126
    %v4131 = vcombine.low %v3781, %v3783
    %v4132 = vcombine.high %v3781, %v3783
    %v4133 = vcombine.high %v3879, %v3879
    %v4135 = vunpack.c.l.s4 1983009808
    %v4136 = vunpack.c.0.s8 %v4135
    %v4137 = vlaneseq
    %v4138 = vshrl.u32 %v4137, 7
    %v4139 = vsub.s32 %v4136, %v4138
    %v4140 = vrot.slane %v4131, %v4139
    %v4142 = vunpack.c.l.s4 1983009808
    %v4143 = vunpack.c.0.s8 %v4142
    %v4144 = vlaneseq
    %v4145 = vshrl.u32 %v4144, 7
    %v4146 = vsub.s32 %v4143, %v4145
    %v4147 = vrot.slane %v4132, %v4146
    %v4149 = vunpack.c.l.s4 1983009808
    %v4150 = vunpack.c.0.s8 %v4149
    %v4151 = vlaneseq
    %v4152 = vshrl.u32 %v4151, 7
    %v4153 = vsub.s32 %v4150, %v4152
    %v4154 = vrot.slane %v3879, %v4153
    %v4156 = vunpack.c.l.s4 1983009808
    %v4157 = vunpack.c.0.s8 %v4156
    %v4158 = vlaneseq
    %v4159 = vshrl.u32 %v4158, 7
    %v4160 = vsub.s32 %v4157, %v4159
    %v4161 = vrot.slane %v4133, %v4160
    %v4162 = vcombine.low %v4140, %v4154
    %v4163 = vcombine.high %v4140, %v4154
    %v4164 = vcombine.low %v4147, %v4161
    %v4165 = vcombine.high %v4147, %v4161
    %v4166 = vcombine.low %v3787, %v3789
    %v4167 = vcombine.high %v3787, %v3789
    %v4168 = vcombine.high %v3884, %v3884
    %v4170 = vunpack.c.l.s4 1983009808
    %v4171 = vunpack.c.0.s8 %v4170
    %v4172 = vlaneseq
    %v4173 = vshrl.u32 %v4172, 7
    %v4174 = vsub.s32 %v4171, %v4173
    %v4175 = vrot.slane %v4166, %v4174
    %v4177 = vunpack.c.l.s4 1983009808
    %v4178 = vunpack.c.0.s8 %v4177
    %v4179 = vlaneseq
    %v4180 = vshrl.u32 %v4179, 7
    %v4181 = vsub.s32 %v4178, %v4180
    %v4182 = vrot.slane %v4167, %v4181
    %v4184 = vunpack.c.l.s4 1983009808
    %v4185 = vunpack.c.0.s8 %v4184
    %v4186 = vlaneseq
    %v4187 = vshrl.u32 %v4186, 7
    %v4188 = vsub.s32 %v4185, %v4187
    %v4189 = vrot.slane %v3884, %v4188
    %v4191 = vunpack.c.l.s4 1983009808
    %v4192 = vunpack.c.0.s8 %v4191
    %v4193 = vlaneseq
    %v4194 = vshrl.u32 %v4193, 7
    %v4195 = vsub.s32 %v4192, %v4194
    %v4196 = vrot.slane %v4168, %v4195
    %v4197 = vcombine.low %v4175, %v4189
    %v4198 = vcombine.high %v4175, %v4189
    %v4199 = vcombine.low %v4182, %v4196
    %v4200 = vcombine.high %v4182, %v4196
    %v4201 = vcombine.low %v3791, %v3793
    %v4202 = vcombine.high %v3791, %v3793
    %v4203 = vcombine.high %v3887, %v3887
    %v4205 = vunpack.c.l.s4 1983009808
    %v4206 = vunpack.c.0.s8 %v4205
    %v4207 = vlaneseq
    %v4208 = vshrl.u32 %v4207, 7
    %v4209 = vsub.s32 %v4206, %v4208
    %v4210 = vrot.slane %v4201, %v4209
    %v4212 = vunpack.c.l.s4 1983009808
    %v4213 = vunpack.c.0.s8 %v4212
    %v4214 = vlaneseq
    %v4215 = vshrl.u32 %v4214, 7
    %v4216 = vsub.s32 %v4213, %v4215
    %v4217 = vrot.slane %v4202, %v4216
    %v4219 = vunpack.c.l.s4 1983009808
    %v4220 = vunpack.c.0.s8 %v4219
    %v4221 = vlaneseq
    %v4222 = vshrl.u32 %v4221, 7
    %v4223 = vsub.s32 %v4220, %v4222
    %v4224 = vrot.slane %v3887, %v4223
    %v4226 = vunpack.c.l.s4 1983009808
    %v4227 = vunpack.c.0.s8 %v4226
    %v4228 = vlaneseq
    %v4229 = vshrl.u32 %v4228, 7
    %v4230 = vsub.s32 %v4227, %v4229
    %v4231 = vrot.slane %v4203, %v4230
    %v4232 = vcombine.low %v4210, %v4224
    %v4233 = vcombine.high %v4210, %v4224
    %v4234 = vcombine.low %v4217, %v4231
    %v4235 = vcombine.high %v4217, %v4231
    %v4236 = vcombine.low %v3797, %v3799
    %v4237 = vcombine.high %v3797, %v3799
    %v4238 = vcombine.high %v3892, %v3892
    %v4240 = vunpack.c.l.s4 1983009808
    %v4241 = vunpack.c.0.s8 %v4240
    %v4242 = vlaneseq
    %v4243 = vshrl.u32 %v4242, 7
    %v4244 = vsub.s32 %v4241, %v4243
    %v4245 = vrot.slane %v4236, %v4244
    %v4247 = vunpack.c.l.s4 1983009808
    %v4248 = vunpack.c.0.s8 %v4247
    %v4249 = vlaneseq
    %v4250 = vshrl.u32 %v4249, 7
    %v4251 = vsub.s32 %v4248, %v4250
    %v4252 = vrot.slane %v4237, %v4251
    %v4254 = vunpack.c.l.s4 1983009808
    %v4255 = vunpack.c.0.s8 %v4254
    %v4256 = vlaneseq
    %v4257 = vshrl.u32 %v4256, 7
    %v4258 = vsub.s32 %v4255, %v4257
    %v4259 = vrot.slane %v3892, %v4258
    %v4261 = vunpack.c.l.s4 1983009808
    %v4262 = vunpack.c.0.s8 %v4261
    %v4263 = vlaneseq
    %v4264 = vshrl.u32 %v4263, 7
    %v4265 = vsub.s32 %v4262, %v4264
    %v4266 = vrot.slane %v4238, %v4265
    %v4267 = vcombine.low %v4245, %v4259
    %v4268 = vcombine.high %v4245, %v4259
    %v4269 = vcombine.low %v4252, %v4266
    %v4270 = vcombine.high %v4252, %v4266
    %v4271 = vcombine.low %v3801, %v3803
    %v4272 = vcombine.high %v3801, %v3803
    %v4273 = vcombine.high %v3895, %v3895
    %v4275 = vunpack.c.l.s4 1983009808
    %v4276 = vunpack.c.0.s8 %v4275
    %v4277 = vlaneseq
    %v4278 = vshrl.u32 %v4277, 7
    %v4279 = vsub.s32 %v4276, %v4278
    %v4280 = vrot.slane %v4271, %v4279
    %v4282 = vunpack.c.l.s4 1983009808
    %v4283 = vunpack.c.0.s8 %v4282
    %v4284 = vlaneseq
    %v4285 = vshrl.u32 %v4284, 7
    %v4286 = vsub.s32 %v4283, %v4285
    %v4287 = vrot.slane %v4272, %v4286
    %v4289 = vunpack.c.l.s4 1983009808
    %v4290 = vunpack.c.0.s8 %v4289
    %v4291 = vlaneseq
    %v4292 = vshrl.u32 %v4291, 7
    %v4293 = vsub.s32 %v4290, %v4292
    %v4294 = vrot.slane %v3895, %v4293
    %v4296 = vunpack.c.l.s4 1983009808
    %v4297 = vunpack.c.0.s8 %v4296
    %v4298 = vlaneseq
    %v4299 = vshrl.u32 %v4298, 7
    %v4300 = vsub.s32 %v4297, %v4299
    %v4301 = vrot.slane %v4273, %v4300
    %v4302 = vcombine.low %v4280, %v4294
    %v4303 = vcombine.high %v4280, %v4294
    %v4304 = vcombine.low %v4287, %v4301
    %v4305 = vcombine.high %v4287, %v4301
    %v4306 = vcombine.low %v3807, %v3809
    %v4307 = vcombine.high %v3807, %v3809
    %v4308 = vcombine.high %v3900, %v3900
    %v4310 = vunpack.c.l.s4 1983009808
    %v4311 = vunpack.c.0.s8 %v4310
    %v4312 = vlaneseq
    %v4313 = vshrl.u32 %v4312, 7
    %v4314 = vsub.s32 %v4311, %v4313
    %v4315 = vrot.slane %v4306, %v4314
    %v4317 = vunpack.c.l.s4 1983009808
    %v4318 = vunpack.c.0.s8 %v4317
    %v4319 = vlaneseq
    %v4320 = vshrl.u32 %v4319, 7
    %v4321 = vsub.s32 %v4318, %v4320
    %v4322 = vrot.slane %v4307, %v4321
    %v4324 = vunpack.c.l.s4 1983009808
    %v4325 = vunpack.c.0.s8 %v4324
    %v4326 = vlaneseq
    %v4327 = vshrl.u32 %v4326, 7
    %v4328 = vsub.s32 %v4325, %v4327
    %v4329 = vrot.slane %v3900, %v4328
    %v4331 = vunpack.c.l.s4 1983009808
    %v4332 = vunpack.c.0.s8 %v4331
    %v4333 = vlaneseq
    %v4334 = vshrl.u32 %v4333, 7
    %v4335 = vsub.s32 %v4332, %v4334
    %v4336 = vrot.slane %v4308, %v4335
    %v4337 = vcombine.low %v4315, %v4329
    %v4338 = vcombine.high %v4315, %v4329
    %v4339 = vcombine.low %v4322, %v4336
    %v4340 = vcombine.high %v4322, %v4336
    %v4341 = vcombine.low %v3811, %v3813
    %v4342 = vcombine.high %v3811, %v3813
    %v4343 = vcombine.high %v3903, %v3903
    %v4345 = vunpack.c.l.s4 1983009808
    %v4346 = vunpack.c.0.s8 %v4345
    %v4347 = vlaneseq
    %v4348 = vshrl.u32 %v4347, 7
    %v4349 = vsub.s32 %v4346, %v4348
    %v4350 = vrot.slane %v4341, %v4349
    %v4352 = vunpack.c.l.s4 1983009808
    %v4353 = vunpack.c.0.s8 %v4352
    %v4354 = vlaneseq
    %v4355 = vshrl.u32 %v4354, 7
    %v4356 = vsub.s32 %v4353, %v4355
    %v4357 = vrot.slane %v4342, %v4356
    %v4359 = vunpack.c.l.s4 1983009808
    %v4360 = vunpack.c.0.s8 %v4359
    %v4361 = vlaneseq
    %v4362 = vshrl.u32 %v4361, 7
    %v4363 = vsub.s32 %v4360, %v4362
    %v4364 = vrot.slane %v3903, %v4363
    %v4366 = vunpack.c.l.s4 1983009808
    %v4367 = vunpack.c.0.s8 %v4366
    %v4368 = vlaneseq
    %v4369 = vshrl.u32 %v4368, 7
    %v4370 = vsub.s32 %v4367, %v4369
    %v4371 = vrot.slane %v4343, %v4370
    %v4372 = vcombine.low %v4350, %v4364
    %v4373 = vcombine.high %v4350, %v4364
    %v4374 = vcombine.low %v4357, %v4371
    %v4375 = vcombine.high %v4357, %v4371
    %v4376 = vcombine.low %v3817, %v3819
    %v4377 = vcombine.high %v3817, %v3819
    %v4378 = vcombine.high %v3908, %v3908
    %v4380 = vunpack.c.l.s4 1983009808
    %v4381 = vunpack.c.0.s8 %v4380
    %v4382 = vlaneseq
    %v4383 = vshrl.u32 %v4382, 7
    %v4384 = vsub.s32 %v4381, %v4383
    %v4385 = vrot.slane %v4376, %v4384
    %v4387 = vunpack.c.l.s4 1983009808
    %v4388 = vunpack.c.0.s8 %v4387
    %v4389 = vlaneseq
    %v4390 = vshrl.u32 %v4389, 7
    %v4391 = vsub.s32 %v4388, %v4390
    %v4392 = vrot.slane %v4377, %v4391
    %v4394 = vunpack.c.l.s4 1983009808
    %v4395 = vunpack.c.0.s8 %v4394
    %v4396 = vlaneseq
    %v4397 = vshrl.u32 %v4396, 7
    %v4398 = vsub.s32 %v4395, %v4397
    %v4399 = vrot.slane %v3908, %v4398
    %v4401 = vunpack.c.l.s4 1983009808
    %v4402 = vunpack.c.0.s8 %v4401
    %v4403 = vlaneseq
    %v4404 = vshrl.u32 %v4403, 7
    %v4405 = vsub.s32 %v4402, %v4404
    %v4406 = vrot.slane %v4378, %v4405
    %v4407 = vcombine.low %v4385, %v4399
    %v4408 = vcombine.high %v4385, %v4399
    %v4409 = vcombine.low %v4392, %v4406
    %v4410 = vcombine.high %v4392, %v4406
    %v4411 = vcombine.low %v3821, %v3823
    %v4412 = vcombine.high %v3821, %v3823
    %v4413 = vcombine.high %v3911, %v3911
    %v4415 = vunpack.c.l.s4 1983009808
    %v4416 = vunpack.c.0.s8 %v4415
    %v4417 = vlaneseq
    %v4418 = vshrl.u32 %v4417, 7
    %v4419 = vsub.s32 %v4416, %v4418
    %v4420 = vrot.slane %v4411, %v4419
    %v4422 = vunpack.c.l.s4 1983009808
    %v4423 = vunpack.c.0.s8 %v4422
    %v4424 = vlaneseq
    %v4425 = vshrl.u32 %v4424, 7
    %v4426 = vsub.s32 %v4423, %v4425
    %v4427 = vrot.slane %v4412, %v4426
    %v4429 = vunpack.c.l.s4 1983009808
    %v4430 = vunpack.c.0.s8 %v4429
    %v4431 = vlaneseq
    %v4432 = vshrl.u32 %v4431, 7
    %v4433 = vsub.s32 %v4430, %v4432
    %v4434 = vrot.slane %v3911, %v4433
    %v4436 = vunpack.c.l.s4 1983009808
    %v4437 = vunpack.c.0.s8 %v4436
    %v4438 = vlaneseq
    %v4439 = vshrl.u32 %v4438, 7
    %v4440 = vsub.s32 %v4437, %v4439
    %v4441 = vrot.slane %v4413, %v4440
    %v4442 = vcombine.low %v4420, %v4434
    %v4443 = vcombine.high %v4420, %v4434
    %v4444 = vcombine.low %v4427, %v4441
    %v4445 = vcombine.high %v4427, %v4441
    %v4502 = vadd.f32 %v2696, %v3987
    %v4503 = vadd.f32 %v2697, %v3988
    %v4504 = vadd.f32 %v2698, %v3989
    %v4505 = vadd.f32 %v2699, %v3990
    %v4506 = vadd.f32 %v2731, %v4022
    %v4507 = vadd.f32 %v2732, %v4023
    %v4508 = vadd.f32 %v2733, %v4024
    %v4509 = vadd.f32 %v2734, %v4025
    %v4510 = vadd.f32 %v2766, %v4057
    %v4511 = vadd.f32 %v2767, %v4058
    %v4512 = vadd.f32 %v2768, %v4059
    %v4513 = vadd.f32 %v2769, %v4060
    %v4514 = vadd.f32 %v2801, %v4092
    %v4515 = vadd.f32 %v2802, %v4093
    %v4516 = vadd.f32 %v2803, %v4094
    %v4517 = vadd.f32 %v2804, %v4095
    %v4518 = vadd.f32 %v2836, %v4127
    %v4519 = vadd.f32 %v2837, %v4128
    %v4520 = vadd.f32 %v2838, %v4129
    %v4521 = vadd.f32 %v2839, %v4130
    %v4522 = vadd.f32 %v2871, %v4162
    %v4523 = vadd.f32 %v2872, %v4163
    %v4524 = vadd.f32 %v2873, %v4164
    %v4525 = vadd.f32 %v2874, %v4165
    %v4526 = vadd.f32 %v2906, %v4197
    %v4527 = vadd.f32 %v2907, %v4198
    %v4528 = vadd.f32 %v2908, %v4199
    %v4529 = vadd.f32 %v2909, %v4200
    %v4530 = vadd.f32 %v2941, %v4232
    %v4531 = vadd.f32 %v2942, %v4233
    %v4532 = vadd.f32 %v2943, %v4234
    %v4533 = vadd.f32 %v2944, %v4235
    %v4534 = vadd.f32 %v2976, %v4267
    %v4535 = vadd.f32 %v2977, %v4268
    %v4536 = vadd.f32 %v2978, %v4269
    %v4537 = vadd.f32 %v2979, %v4270
    %v4538 = vadd.f32 %v3011, %v4302
    %v4539 = vadd.f32 %v3012, %v4303
    %v4540 = vadd.f32 %v3013, %v4304
    %v4541 = vadd.f32 %v3014, %v4305
    %v4542 = vadd.f32 %v3046, %v4337
    %v4543 = vadd.f32 %v3047, %v4338
    %v4544 = vadd.f32 %v3048, %v4339
    %v4545 = vadd.f32 %v3049, %v4340
    %v4546 = vadd.f32 %v3081, %v4372
    %v4547 = vadd.f32 %v3082, %v4373
    %v4548 = vadd.f32 %v3083, %v4374
    %v4549 = vadd.f32 %v3084, %v4375
    %v4550 = vadd.f32 %v3116, %v4407
    %v4551 = vadd.f32 %v3117, %v4408
    %v4552 = vadd.f32 %v3118, %v4409
    %v4553 = vadd.f32 %v3119, %v4410
    %v4554 = vadd.f32 %v3151, %v4442
    %v4555 = vadd.f32 %v3152, %v4443
    %v4556 = vadd.f32 %v3153, %v4444
    %v4557 = vadd.f32 %v3154, %v4445
    %v4558 = vld [vmem:[%s3] sm:$0x7]
    %v4560 = vlaneseq
    %v4561 = vshrl.u32 %v4560, 7
    %v4562 = vsub.s32 0, %v4561
    %v4563 = vrot.slane %v4558, %v4562
    %v4564 = vlaneseq
    %v4565 = vshrl.u32 %v4564, 7
    %v4566 = vsub.s32 1, %v4565
    %v4567 = vrot.slane %v4558, %v4566
    %v4568 = vlaneseq
    %v4569 = vshrl.u32 %v4568, 7
    %v4570 = vsub.s32 2, %v4569
    %v4571 = vrot.slane %v4558, %v4570
    %v4572 = vcombine.low %v4563, %v4567
    %v4573 = vcombine.high %v4563, %v4567
    %v4574 = vcombine.high %v4571, %v4571
    %v4576 = vunpack.c.l.s4 1983009808
    %v4577 = vunpack.c.0.s8 %v4576
    %v4578 = vlaneseq
    %v4579 = vshrl.u32 %v4578, 7
    %v4580 = vsub.s32 %v4577, %v4579
    %v4581 = vrot.slane %v4572, %v4580
    %v4583 = vunpack.c.l.s4 1983009808
    %v4584 = vunpack.c.0.s8 %v4583
    %v4585 = vlaneseq
    %v4586 = vshrl.u32 %v4585, 7
    %v4587 = vsub.s32 %v4584, %v4586
    %v4588 = vrot.slane %v4573, %v4587
    %v4590 = vunpack.c.l.s4 1983009808
    %v4591 = vunpack.c.0.s8 %v4590
    %v4592 = vlaneseq
    %v4593 = vshrl.u32 %v4592, 7
    %v4594 = vsub.s32 %v4591, %v4593
    %v4595 = vrot.slane %v4571, %v4594
    %v4597 = vunpack.c.l.s4 1983009808
    %v4598 = vunpack.c.0.s8 %v4597
    %v4599 = vlaneseq
    %v4600 = vshrl.u32 %v4599, 7
    %v4601 = vsub.s32 %v4598, %v4600
    %v4602 = vrot.slane %v4574, %v4601
    %v4603 = vcombine.low %v4581, %v4595
    %v4604 = vcombine.high %v4581, %v4595
    %v4605 = vcombine.low %v4588, %v4602
    %v4606 = vcombine.high %v4588, %v4602
    %v4611 = vadd.f32 %v4502, %v4603
    %v4612 = vadd.f32 %v4503, %v4604
    %v4613 = vadd.f32 %v4504, %v4605
    %v4614 = vadd.f32 %v4505, %v4606
    %v4615 = vadd.f32 %v4506, %v4603
    %v4616 = vadd.f32 %v4507, %v4604
    %v4617 = vadd.f32 %v4508, %v4605
    %v4618 = vadd.f32 %v4509, %v4603
    %v4619 = vadd.f32 %v4510, %v4604
    %v4620 = vadd.f32 %v4511, %v4605
    %v4621 = vadd.f32 %v4512, %v4606
    %v4622 = vadd.f32 %v4513, %v4603
    %v4623 = vadd.f32 %v4514, %v4604
    %v4624 = vadd.f32 %v4515, %v4605
    %v4625 = vadd.f32 %v4516, %v4603
    %v4626 = vadd.f32 %v4517, %v4604
    %v4627 = vadd.f32 %v4518, %v4605
    %v4628 = vadd.f32 %v4519, %v4606
    %v4629 = vadd.f32 %v4520, %v4603
    %v4630 = vadd.f32 %v4521, %v4604
    %v4631 = vadd.f32 %v4522, %v4605
    %v4632 = vadd.f32 %v4523, %v4603
    %v4633 = vadd.f32 %v4524, %v4604
    %v4634 = vadd.f32 %v4525, %v4605
    %v4635 = vadd.f32 %v4526, %v4606
    %v4636 = vadd.f32 %v4527, %v4603
    %v4637 = vadd.f32 %v4528, %v4604
    %v4638 = vadd.f32 %v4529, %v4605
    %v4639 = vadd.f32 %v4530, %v4603
    %v4640 = vadd.f32 %v4531, %v4604
    %v4641 = vadd.f32 %v4532, %v4605
    %v4642 = vadd.f32 %v4533, %v4606
    %v4643 = vadd.f32 %v4534, %v4603
    %v4644 = vadd.f32 %v4535, %v4604
    %v4645 = vadd.f32 %v4536, %v4605
    %v4646 = vadd.f32 %v4537, %v4603
    %v4647 = vadd.f32 %v4538, %v4604
    %v4648 = vadd.f32 %v4539, %v4605
    %v4649 = vadd.f32 %v4540, %v4606
    %v4650 = vadd.f32 %v4541, %v4603
    %v4651 = vadd.f32 %v4542, %v4604
    %v4652 = vadd.f32 %v4543, %v4605
    %v4653 = vadd.f32 %v4544, %v4603
    %v4654 = vadd.f32 %v4545, %v4604
    %v4655 = vadd.f32 %v4546, %v4605
    %v4656 = vadd.f32 %v4547, %v4606
    %v4657 = vadd.f32 %v4548, %v4603
    %v4658 = vadd.f32 %v4549, %v4604
    %v4659 = vadd.f32 %v4550, %v4605
    %v4660 = vadd.f32 %v4551, %v4603
    %v4661 = vadd.f32 %v4552, %v4604
    %v4662 = vadd.f32 %v4553, %v4605
    %v4663 = vadd.f32 %v4554, %v4606
    %v4664 = vadd.f32 %v4555, %v4603
    %v4665 = vadd.f32 %v4556, %v4604
    %v4666 = vadd.f32 %v4557, %v4605
    %v4667 = vmax.f32 %v4611, 0.0
    %v4668 = vmax.f32 %v4612, 0.0
    %v4669 = vmax.f32 %v4613, 0.0
    %v4670 = vmax.f32 %v4614, 0.0
    %v4671 = vmax.f32 %v4615, 0.0
    %v4672 = vmax.f32 %v4616, 0.0
    %v4673 = vmax.f32 %v4617, 0.0
    %v4674 = vmax.f32 %v4618, 0.0
    %v4675 = vmax.f32 %v4619, 0.0
    %v4676 = vmax.f32 %v4620, 0.0
    %v4677 = vmax.f32 %v4621, 0.0
    %v4678 = vmax.f32 %v4622, 0.0
    %v4679 = vmax.f32 %v4623, 0.0
    %v4680 = vmax.f32 %v4624, 0.0
    %v4681 = vmax.f32 %v4625, 0.0
    %v4682 = vmax.f32 %v4626, 0.0
    %v4683 = vmax.f32 %v4627, 0.0
    %v4684 = vmax.f32 %v4628, 0.0
    %v4685 = vmax.f32 %v4629, 0.0
    %v4686 = vmax.f32 %v4630, 0.0
    %v4687 = vmax.f32 %v4631, 0.0
    %v4688 = vmax.f32 %v4632, 0.0
    %v4689 = vmax.f32 %v4633, 0.0
    %v4690 = vmax.f32 %v4634, 0.0
    %v4691 = vmax.f32 %v4635, 0.0
    %v4692 = vmax.f32 %v4636, 0.0
    %v4693 = vmax.f32 %v4637, 0.0
    %v4694 = vmax.f32 %v4638, 0.0
    %v4695 = vmax.f32 %v4639, 0.0
    %v4696 = vmax.f32 %v4640, 0.0
    %v4697 = vmax.f32 %v4641, 0.0
    %v4698 = vmax.f32 %v4642, 0.0
    %v4699 = vmax.f32 %v4643, 0.0
    %v4700 = vmax.f32 %v4644, 0.0
    %v4701 = vmax.f32 %v4645, 0.0
    %v4702 = vmax.f32 %v4646, 0.0
    %v4703 = vmax.f32 %v4647, 0.0
    %v4704 = vmax.f32 %v4648, 0.0
    %v4705 = vmax.f32 %v4649, 0.0
    %v4706 = vmax.f32 %v4650, 0.0
    %v4707 = vmax.f32 %v4651, 0.0
    %v4708 = vmax.f32 %v4652, 0.0
    %v4709 = vmax.f32 %v4653, 0.0
    %v4710 = vmax.f32 %v4654, 0.0
    %v4711 = vmax.f32 %v4655, 0.0
    %v4712 = vmax.f32 %v4656, 0.0
    %v4713 = vmax.f32 %v4657, 0.0
    %v4714 = vmax.f32 %v4658, 0.0
    %v4715 = vmax.f32 %v4659, 0.0
    %v4716 = vmax.f32 %v4660, 0.0
    %v4717 = vmax.f32 %v4661, 0.0
    %v4718 = vmax.f32 %v4662, 0.0
    %v4719 = vmax.f32 %v4663, 0.0
    %v4720 = vmax.f32 %v4664, 0.0
    %v4721 = vmax.f32 %v4665, 0.0
    %v4722 = vmax.f32 %v4666, 0.0
    %v4779 = vcombine.low %v4667, %v4668
    %v4780 = vcombine.low %v4669, %v4670
    %v4782 = vunpack.c.l.s4 1983009808
    %v4783 = vunpack.c.0.s8 %v4782
    %v4784 = vlaneseq
    %v4785 = vshrl.u32 %v4784, 7
    %v4786 = vsub.s32 %v4783, %v4785
    %v4787 = vrot.slane %v4779, %v4786
    %v4789 = vunpack.c.l.s4 1983009808
    %v4790 = vunpack.c.0.s8 %v4789
    %v4791 = vlaneseq
    %v4792 = vshrl.u32 %v4791, 7
    %v4793 = vsub.s32 %v4790, %v4792
    %v4794 = vrot.slane %v4780, %v4793
    %v4795 = vcombine.low %v4787, %v4794
    %v4796 = vcombine.low %v4671, %v4672
    %v4798 = vunpack.c.l.s4 1983009808
    %v4799 = vunpack.c.0.s8 %v4798
    %v4800 = vlaneseq
    %v4801 = vshrl.u32 %v4800, 7
    %v4802 = vsub.s32 %v4799, %v4801
    %v4803 = vrot.slane %v4796, %v4802
    %v4805 = vunpack.c.l.s4 1983009808
    %v4806 = vunpack.c.0.s8 %v4805
    %v4807 = vlaneseq
    %v4808 = vshrl.u32 %v4807, 7
    %v4809 = vsub.s32 %v4806, %v4808
    %v4810 = vrot.slane %v4673, %v4809
    %v4811 = vcombine.low %v4803, %v4810
    %v4812 = vcombine.low %v4674, %v4675
    %v4813 = vcombine.low %v4676, %v4677
    %v4815 = vunpack.c.l.s4 1983009808
    %v4816 = vunpack.c.0.s8 %v4815
    %v4817 = vlaneseq
    %v4818 = vshrl.u32 %v4817, 7
    %v4819 = vsub.s32 %v4816, %v4818
    %v4820 = vrot.slane %v4812, %v4819
    %v4822 = vunpack.c.l.s4 1983009808
    %v4823 = vunpack.c.0.s8 %v4822
    %v4824 = vlaneseq
    %v4825 = vshrl.u32 %v4824, 7
    %v4826 = vsub.s32 %v4823, %v4825
    %v4827 = vrot.slane %v4813, %v4826
    %v4828 = vcombine.low %v4820, %v4827
    %v4829 = vcombine.low %v4678, %v4679
    %v4831 = vunpack.c.l.s4 1983009808
    %v4832 = vunpack.c.0.s8 %v4831
    %v4833 = vlaneseq
    %v4834 = vshrl.u32 %v4833, 7
    %v4835 = vsub.s32 %v4832, %v4834
    %v4836 = vrot.slane %v4829, %v4835
    %v4838 = vunpack.c.l.s4 1983009808
    %v4839 = vunpack.c.0.s8 %v4838
    %v4840 = vlaneseq
    %v4841 = vshrl.u32 %v4840, 7
    %v4842 = vsub.s32 %v4839, %v4841
    %v4843 = vrot.slane %v4680, %v4842
    %v4844 = vcombine.low %v4836, %v4843
    %v4845 = vcombine.low %v4681, %v4682
    %v4846 = vcombine.low %v4683, %v4684
    %v4848 = vunpack.c.l.s4 1983009808
    %v4849 = vunpack.c.0.s8 %v4848
    %v4850 = vlaneseq
    %v4851 = vshrl.u32 %v4850, 7
    %v4852 = vsub.s32 %v4849, %v4851
    %v4853 = vrot.slane %v4845, %v4852
    %v4855 = vunpack.c.l.s4 1983009808
    %v4856 = vunpack.c.0.s8 %v4855
    %v4857 = vlaneseq
    %v4858 = vshrl.u32 %v4857, 7
    %v4859 = vsub.s32 %v4856, %v4858
    %v4860 = vrot.slane %v4846, %v4859
    %v4861 = vcombine.low %v4853, %v4860
    %v4862 = vcombine.low %v4685, %v4686
    %v4864 = vunpack.c.l.s4 1983009808
    %v4865 = vunpack.c.0.s8 %v4864
    %v4866 = vlaneseq
    %v4867 = vshrl.u32 %v4866, 7
    %v4868 = vsub.s32 %v4865, %v4867
    %v4869 = vrot.slane %v4862, %v4868
    %v4871 = vunpack.c.l.s4 1983009808
    %v4872 = vunpack.c.0.s8 %v4871
    %v4873 = vlaneseq
    %v4874 = vshrl.u32 %v4873, 7
    %v4875 = vsub.s32 %v4872, %v4874
    %v4876 = vrot.slane %v4687, %v4875
    %v4877 = vcombine.low %v4869, %v4876
    %v4878 = vcombine.low %v4688, %v4689
    %v4879 = vcombine.low %v4690, %v4691
    %v4881 = vunpack.c.l.s4 1983009808
    %v4882 = vunpack.c.0.s8 %v4881
    %v4883 = vlaneseq
    %v4884 = vshrl.u32 %v4883, 7
    %v4885 = vsub.s32 %v4882, %v4884
    %v4886 = vrot.slane %v4878, %v4885
    %v4888 = vunpack.c.l.s4 1983009808
    %v4889 = vunpack.c.0.s8 %v4888
    %v4890 = vlaneseq
    %v4891 = vshrl.u32 %v4890, 7
    %v4892 = vsub.s32 %v4889, %v4891
    %v4893 = vrot.slane %v4879, %v4892
    %v4894 = vcombine.low %v4886, %v4893
    %v4895 = vcombine.low %v4692, %v4693
    %v4897 = vunpack.c.l.s4 1983009808
    %v4898 = vunpack.c.0.s8 %v4897
    %v4899 = vlaneseq
    %v4900 = vshrl.u32 %v4899, 7
    %v4901 = vsub.s32 %v4898, %v4900
    %v4902 = vrot.slane %v4895, %v4901
    %v4904 = vunpack.c.l.s4 1983009808
    %v4905 = vunpack.c.0.s8 %v4904
    %v4906 = vlaneseq
    %v4907 = vshrl.u32 %v4906, 7
    %v4908 = vsub.s32 %v4905, %v4907
    %v4909 = vrot.slane %v4694, %v4908
    %v4910 = vcombine.low %v4902, %v4909
    %v4911 = vcombine.low %v4695, %v4696
    %v4912 = vcombine.low %v4697, %v4698
    %v4914 = vunpack.c.l.s4 1983009808
    %v4915 = vunpack.c.0.s8 %v4914
    %v4916 = vlaneseq
    %v4917 = vshrl.u32 %v4916, 7
    %v4918 = vsub.s32 %v4915, %v4917
    %v4919 = vrot.slane %v4911, %v4918
    %v4921 = vunpack.c.l.s4 1983009808
    %v4922 = vunpack.c.0.s8 %v4921
    %v4923 = vlaneseq
    %v4924 = vshrl.u32 %v4923, 7
    %v4925 = vsub.s32 %v4922, %v4924
    %v4926 = vrot.slane %v4912, %v4925
    %v4927 = vcombine.low %v4919, %v4926
    %v4928 = vcombine.low %v4699, %v4700
    %v4930 = vunpack.c.l.s4 1983009808
    %v4931 = vunpack.c.0.s8 %v4930
    %v4932 = vlaneseq
    %v4933 = vshrl.u32 %v4932, 7
    %v4934 = vsub.s32 %v4931, %v4933
    %v4935 = vrot.slane %v4928, %v4934
    %v4937 = vunpack.c.l.s4 1983009808
    %v4938 = vunpack.c.0.s8 %v4937
    %v4939 = vlaneseq
    %v4940 = vshrl.u32 %v4939, 7
    %v4941 = vsub.s32 %v4938, %v4940
    %v4942 = vrot.slane %v4701, %v4941
    %v4943 = vcombine.low %v4935, %v4942
    %v4944 = vcombine.low %v4702, %v4703
    %v4945 = vcombine.low %v4704, %v4705
    %v4947 = vunpack.c.l.s4 1983009808
    %v4948 = vunpack.c.0.s8 %v4947
    %v4949 = vlaneseq
    %v4950 = vshrl.u32 %v4949, 7
    %v4951 = vsub.s32 %v4948, %v4950
    %v4952 = vrot.slane %v4944, %v4951
    %v4954 = vunpack.c.l.s4 1983009808
    %v4955 = vunpack.c.0.s8 %v4954
    %v4956 = vlaneseq
    %v4957 = vshrl.u32 %v4956, 7
    %v4958 = vsub.s32 %v4955, %v4957
    %v4959 = vrot.slane %v4945, %v4958
    %v4960 = vcombine.low %v4952, %v4959
    %v4961 = vcombine.low %v4706, %v4707
    %v4963 = vunpack.c.l.s4 1983009808
    %v4964 = vunpack.c.0.s8 %v4963
    %v4965 = vlaneseq
    %v4966 = vshrl.u32 %v4965, 7
    %v4967 = vsub.s32 %v4964, %v4966
    %v4968 = vrot.slane %v4961, %v4967
    %v4970 = vunpack.c.l.s4 1983009808
    %v4971 = vunpack.c.0.s8 %v4970
    %v4972 = vlaneseq
    %v4973 = vshrl.u32 %v4972, 7
    %v4974 = vsub.s32 %v4971, %v4973
    %v4975 = vrot.slane %v4708, %v4974
    %v4976 = vcombine.low %v4968, %v4975
    %v4977 = vcombine.low %v4709, %v4710
    %v4978 = vcombine.low %v4711, %v4712
    %v4980 = vunpack.c.l.s4 1983009808
    %v4981 = vunpack.c.0.s8 %v4980
    %v4982 = vlaneseq
    %v4983 = vshrl.u32 %v4982, 7
    %v4984 = vsub.s32 %v4981, %v4983
    %v4985 = vrot.slane %v4977, %v4984
    %v4987 = vunpack.c.l.s4 1983009808
    %v4988 = vunpack.c.0.s8 %v4987
    %v4989 = vlaneseq
    %v4990 = vshrl.u32 %v4989, 7
    %v4991 = vsub.s32 %v4988, %v4990
    %v4992 = vrot.slane %v4978, %v4991
    %v4993 = vcombine.low %v4985, %v4992
    %v4994 = vcombine.low %v4713, %v4714
    %v4996 = vunpack.c.l.s4 1983009808
    %v4997 = vunpack.c.0.s8 %v4996
    %v4998 = vlaneseq
    %v4999 = vshrl.u32 %v4998, 7
    %v5000 = vsub.s32 %v4997, %v4999
    %v5001 = vrot.slane %v4994, %v5000
    %v5003 = vunpack.c.l.s4 1983009808
    %v5004 = vunpack.c.0.s8 %v5003
    %v5005 = vlaneseq
    %v5006 = vshrl.u32 %v5005, 7
    %v5007 = vsub.s32 %v5004, %v5006
    %v5008 = vrot.slane %v4715, %v5007
    %v5009 = vcombine.low %v5001, %v5008
    %v5010 = vcombine.low %v4716, %v4717
    %v5011 = vcombine.low %v4718, %v4719
    %v5013 = vunpack.c.l.s4 1983009808
    %v5014 = vunpack.c.0.s8 %v5013
    %v5015 = vlaneseq
    %v5016 = vshrl.u32 %v5015, 7
    %v5017 = vsub.s32 %v5014, %v5016
    %v5018 = vrot.slane %v5010, %v5017
    %v5020 = vunpack.c.l.s4 1983009808
    %v5021 = vunpack.c.0.s8 %v5020
    %v5022 = vlaneseq
    %v5023 = vshrl.u32 %v5022, 7
    %v5024 = vsub.s32 %v5021, %v5023
    %v5025 = vrot.slane %v5011, %v5024
    %v5026 = vcombine.low %v5018, %v5025
    %v5027 = vcombine.low %v4720, %v4721
    %v5029 = vunpack.c.l.s4 1983009808
    %v5030 = vunpack.c.0.s8 %v5029
    %v5031 = vlaneseq
    %v5032 = vshrl.u32 %v5031, 7
    %v5033 = vsub.s32 %v5030, %v5032
    %v5034 = vrot.slane %v5027, %v5033
    %v5036 = vunpack.c.l.s4 1983009808
    %v5037 = vunpack.c.0.s8 %v5036
    %v5038 = vlaneseq
    %v5039 = vshrl.u32 %v5038, 7
    %v5040 = vsub.s32 %v5037, %v5039
    %v5041 = vrot.slane %v4722, %v5040
    %v5042 = vcombine.low %v5034, %v5041
    %vm5059 = vcmask 1045504
    %v5060 = vsel %vm5059, %v4811, -inf
    %v5061 = vmax.f32 %v4795, %v5060
    %v5062 = vrot.slane %v5061, 4
    %v5063 = vmax.f32 %v5061, %v5062
    %v5064 = vrot.slane %v5063, 2
    %v5065 = vmax.f32 %v5063, %v5064
    %v5066 = vrot.slane %v5065, 1
    %v5067 = vmax.f32 %v5065, %v5066
    %v5068 = vsel %vm5059, %v4844, -inf
    %v5069 = vmax.f32 %v4828, %v5068
    %v5070 = vrot.slane %v5069, 4
    %v5071 = vmax.f32 %v5069, %v5070
    %v5072 = vrot.slane %v5071, 2
    %v5073 = vmax.f32 %v5071, %v5072
    %v5074 = vrot.slane %v5073, 1
    %v5075 = vmax.f32 %v5073, %v5074
    %v5076 = vsel %vm5059, %v4877, -inf
    %v5077 = vmax.f32 %v4861, %v5076
    %v5078 = vrot.slane %v5077, 4
    %v5079 = vmax.f32 %v5077, %v5078
    %v5080 = vrot.slane %v5079, 2
    %v5081 = vmax.f32 %v5079, %v5080
    %v5082 = vrot.slane %v5081, 1
    %v5083 = vmax.f32 %v5081, %v5082
    %v5084 = vsel %vm5059, %v4910, -inf
    %v5085 = vmax.f32 %v4894, %v5084
    %v5086 = vrot.slane %v5085, 4
    %v5087 = vmax.f32 %v5085, %v5086
    %v5088 = vrot.slane %v5087, 2
    %v5089 = vmax.f32 %v5087, %v5088
    %v5090 = vrot.slane %v5089, 1
    %v5091 = vmax.f32 %v5089, %v5090
    %v5092 = vsel %vm5059, %v4943, -inf
    %v5093 = vmax.f32 %v4927, %v5092
    %v5094 = vrot.slane %v5093, 4
    %v5095 = vmax.f32 %v5093, %v5094
    %v5096 = vrot.slane %v5095, 2
    %v5097 = vmax.f32 %v5095, %v5096
    %v5098 = vrot.slane %v5097, 1
    %v5099 = vmax.f32 %v5097, %v5098
    %v5100 = vsel %vm5059, %v4976, -inf
    %v5101 = vmax.f32 %v4960, %v5100
    %v5102 = vrot.slane %v5101, 4
    %v5103 = vmax.f32 %v5101, %v5102
    %v5104 = vrot.slane %v5103, 2
    %v5105 = vmax.f32 %v5103, %v5104
    %v5106 = vrot.slane %v5105, 1
    %v5107 = vmax.f32 %v5105, %v5106
    %v5108 = vsel %vm5059, %v5009, -inf
    %v5109 = vmax.f32 %v4993, %v5108
    %v5110 = vrot.slane %v5109, 4
    %v5111 = vmax.f32 %v5109, %v5110
    %v5112 = vrot.slane %v5111, 2
    %v5113 = vmax.f32 %v5111, %v5112
    %v5114 = vrot.slane %v5113, 1
    %v5115 = vmax.f32 %v5113, %v5114
    %v5116 = vsel %vm5059, %v5042, -inf
    %v5117 = vmax.f32 %v5026, %v5116
    %v5118 = vrot.slane %v5117, 4
    %v5119 = vmax.f32 %v5117, %v5118
    %v5120 = vrot.slane %v5119, 2
    %v5121 = vmax.f32 %v5119, %v5120
    %v5122 = vrot.slane %v5121, 1
    %v5123 = vmax.f32 %v5121, %v5122
    %v5124 = vpack.c.bf16 %v5067, %v5067
    %v5125 = vpack.c.bf16 %v5075, %v5075
    %v5126 = vpack.c.bf16 %v5083, %v5083
    %v5127 = vpack.c.bf16 %v5091, %v5091
    %v5128 = vpack.c.bf16 %v5099, %v5099
    %v5129 = vpack.c.bf16 %v5107, %v5107
    %v5130 = vpack.c.bf16 %v5115, %v5115
    %v5131 = vpack.c.bf16 %v5123, %v5123
    %v5132 = vld [vmem:[#allocation7] sm:$0xf]
    %v5133 = vld [vmem:[#allocation7 + $0x4] sm:$0xf]
    %v5134 = vld [vmem:[#allocation7 + $0x8] sm:$0xf]
    %v5135 = vld [vmem:[#allocation7 + $0xc] sm:$0xf]
    %v5136 = vld [vmem:[#allocation7 + $0x10] sm:$0xf]
    %v5137 = vld [vmem:[#allocation7 + $0x14] sm:$0xf]
    %v5138 = vld [vmem:[#allocation7 + $0x18] sm:$0xf]
    %v5139 = vld [vmem:[#allocation7 + $0x1c] sm:$0xf]
    %v5140 = vld [vmem:[#allocation7 + $0x20] sm:$0xf]
    %v5141 = vld [vmem:[#allocation7 + $0x24] sm:$0xf]
    %v5142 = vld [vmem:[#allocation7 + $0x28] sm:$0xf]
    %v5143 = vld [vmem:[#allocation7 + $0x2c] sm:$0xf]
    %v5144 = vld [vmem:[#allocation7 + $0x30] sm:$0xf]
    %v5145 = vld [vmem:[#allocation7 + $0x34] sm:$0xf]
    %v5146 = vld [vmem:[#allocation7 + $0x38] sm:$0xf]
    %v5147 = vld [vmem:[#allocation7 + $0x3c] sm:$0xf]
    %v5148 = vcombine.high %v4787, %v4794
    %v5149 = vcombine.high %v4803, %v4810
    %v5150 = vcombine.high %v4820, %v4827
    %v5151 = vcombine.high %v4836, %v4843
    %v5152 = vcombine.high %v4853, %v4860
    %v5153 = vcombine.high %v4869, %v4876
    %v5154 = vcombine.high %v4886, %v4893
    %v5155 = vcombine.high %v4902, %v4909
    %v5156 = vcombine.high %v4919, %v4926
    %v5157 = vcombine.high %v4935, %v4942
    %v5158 = vcombine.high %v4952, %v4959
    %v5159 = vcombine.high %v4968, %v4975
    %v5160 = vcombine.high %v4985, %v4992
    %v5161 = vcombine.high %v5001, %v5008
    %v5162 = vcombine.high %v5018, %v5025
    %v5163 = vcombine.high %v5034, %v5041
    %v5180 = vpack.c.bf16 %v5149, %v5148
    %v5181 = vpack.c.bf16 %v5151, %v5150
    %v5182 = vpack.c.bf16 %v5153, %v5152
    %v5183 = vpack.c.bf16 %v5155, %v5154
    %v5184 = vpack.c.bf16 %v5157, %v5156
    %v5185 = vpack.c.bf16 %v5159, %v5158
    %v5186 = vpack.c.bf16 %v5161, %v5160
    %v5187 = vpack.c.bf16 %v5163, %v5162
    %v5188 = vld [vmem:[#allocation5] sm:$0xf]
    %v5189 = vld [vmem:[#allocation5 + $0x4] sm:$0xf]
    %v5190 = vld [vmem:[#allocation5 + $0x8] sm:$0xf]
    %v5191 = vld [vmem:[#allocation5 + $0xc] sm:$0xf]
    %v5192 = vld [vmem:[#allocation5 + $0x10] sm:$0xf]
    %v5193 = vld [vmem:[#allocation5 + $0x14] sm:$0xf]
    %v5194 = vld [vmem:[#allocation5 + $0x18] sm:$0xf]
    %v5195 = vld [vmem:[#allocation5 + $0x1c] sm:$0xf]
    %v5196 = vld [vmem:[#allocation5 + $0x20] sm:$0xf]
    %v5197 = vld [vmem:[#allocation5 + $0x24] sm:$0xf]
    %v5198 = vld [vmem:[#allocation5 + $0x28] sm:$0xf]
    %v5199 = vld [vmem:[#allocation5 + $0x2c] sm:$0xf]
    %v5200 = vld [vmem:[#allocation5 + $0x30] sm:$0xf]
    %v5201 = vld [vmem:[#allocation5 + $0x34] sm:$0xf]
    %v5202 = vld [vmem:[#allocation5 + $0x38] sm:$0xf]
    %v5203 = vld [vmem:[#allocation5 + $0x3c] sm:$0xf]
    %s5204 = scalar_lea.vmem [#allocation5], 64
    %v5205 = vld [vmem:[%s5204] sm:$0xf]
    %v5206 = vld [vmem:[%s5204 + $0x4] sm:$0xf]
    %v5207 = vld [vmem:[%s5204 + $0x8] sm:$0xf]
    %v5208 = vld [vmem:[%s5204 + $0xc] sm:$0xf]
    %v5209 = vld [vmem:[%s5204 + $0x10] sm:$0xf]
    %v5210 = vld [vmem:[%s5204 + $0x14] sm:$0xf]
    %v5211 = vld [vmem:[%s5204 + $0x18] sm:$0xf]
    %v5212 = vld [vmem:[%s5204 + $0x1c] sm:$0xf]
    %v5213 = vld [vmem:[%s5204 + $0x20] sm:$0xf]
    %v5214 = vld [vmem:[%s5204 + $0x24] sm:$0xf]
    %v5215 = vld [vmem:[%s5204 + $0x28] sm:$0xf]
    %v5216 = vld [vmem:[%s5204 + $0x2c] sm:$0xf]
    %v5217 = vld [vmem:[%s5204 + $0x30] sm:$0xf]
    %v5218 = vld [vmem:[%s5204 + $0x34] sm:$0xf]
    %v5219 = vld [vmem:[%s5204 + $0x38] sm:$0xf]
    %v5220 = vld [vmem:[%s5204 + $0x3c] sm:$0xf]
    %v5229 = vcombine.high %v5180, %v5180
    %v5231 = vunpack.c.l.s4 1983009808
    %v5232 = vunpack.c.0.s8 %v5231
    %v5233 = vlaneseq
    %v5234 = vshrl.u32 %v5233, 7
    %v5235 = vsub.s32 %v5232, %v5234
    %v5236 = vrot.slane %v5180, %v5235
    %v5238 = vunpack.c.l.s4 1983009808
    %v5239 = vunpack.c.0.s8 %v5238
    %v5240 = vlaneseq
    %v5241 = vshrl.u32 %v5240, 7
    %v5242 = vsub.s32 %v5239, %v5241
    %v5243 = vrot.slane %v5229, %v5242
    %v5244 = vcombine.high %v5236, %v5236
    %v5245 = vcombine.high %v5243, %v5243
    %v5246 = vcombine.high %v5181, %v5181
    %v5248 = vunpack.c.l.s4 1983009808
    %v5249 = vunpack.c.0.s8 %v5248
    %v5250 = vlaneseq
    %v5251 = vshrl.u32 %v5250, 7
    %v5252 = vsub.s32 %v5249, %v5251
    %v5253 = vrot.slane %v5181, %v5252
    %v5255 = vunpack.c.l.s4 1983009808
    %v5256 = vunpack.c.0.s8 %v5255
    %v5257 = vlaneseq
    %v5258 = vshrl.u32 %v5257, 7
    %v5259 = vsub.s32 %v5256, %v5258
    %v5260 = vrot.slane %v5246, %v5259
    %v5261 = vcombine.high %v5253, %v5253
    %v5262 = vcombine.high %v5260, %v5260
    %v5263 = vcombine.high %v5182, %v5182
    %v5265 = vunpack.c.l.s4 1983009808
    %v5266 = vunpack.c.0.s8 %v5265
    %v5267 = vlaneseq
    %v5268 = vshrl.u32 %v5267, 7
    %v5269 = vsub.s32 %v5266, %v5268
    %v5270 = vrot.slane %v5182, %v5269
    %v5272 = vunpack.c.l.s4 1983009808
    %v5273 = vunpack.c.0.s8 %v5272
    %v5274 = vlaneseq
    %v5275 = vshrl.u32 %v5274, 7
    %v5276 = vsub.s32 %v5273, %v5275
    %v5277 = vrot.slane %v5263, %v5276
    %v5278 = vcombine.high %v5270, %v5270
    %v5279 = vcombine.high %v5277, %v5277
    %v5280 = vcombine.high %v5183, %v5183
    %v5282 = vunpack.c.l.s4 1983009808
    %v5283 = vunpack.c.0.s8 %v5282
    %v5284 = vlaneseq
    %v5285 = vshrl.u32 %v5284, 7
    %v5286 = vsub.s32 %v5283, %v5285
    %v5287 = vrot.slane %v5183, %v5286
    %v5289 = vunpack.c.l.s4 1983009808
    %v5290 = vunpack.c.0.s8 %v5289
    %v5291 = vlaneseq
    %v5292 = vshrl.u32 %v5291, 7
    %v5293 = vsub.s32 %v5290, %v5292
    %v5294 = vrot.slane %v5280, %v5293
    %v5295 = vcombine.high %v5287, %v5287
    %v5296 = vcombine.high %v5294, %v5294
    %v5297 = vcombine.high %v5184, %v5184
    %v5299 = vunpack.c.l.s4 1983009808
    %v5300 = vunpack.c.0.s8 %v5299
    %v5301 = vlaneseq
    %v5302 = vshrl.u32 %v5301, 7
    %v5303 = vsub.s32 %v5300, %v5302
    %v5304 = vrot.slane %v5184, %v5303
    %v5306 = vunpack.c.l.s4 1983009808
    %v5307 = vunpack.c.0.s8 %v5306
    %v5308 = vlaneseq
    %v5309 = vshrl.u32 %v5308, 7
    %v5310 = vsub.s32 %v5307, %v5309
    %v5311 = vrot.slane %v5297, %v5310
    %v5312 = vcombine.high %v5304, %v5304
    %v5313 = vcombine.high %v5311, %v5311
    %v5314 = vcombine.high %v5185, %v5185
    %v5316 = vunpack.c.l.s4 1983009808
    %v5317 = vunpack.c.0.s8 %v5316
    %v5318 = vlaneseq
    %v5319 = vshrl.u32 %v5318, 7
    %v5320 = vsub.s32 %v5317, %v5319
    %v5321 = vrot.slane %v5185, %v5320
    %v5323 = vunpack.c.l.s4 1983009808
    %v5324 = vunpack.c.0.s8 %v5323
    %v5325 = vlaneseq
    %v5326 = vshrl.u32 %v5325, 7
    %v5327 = vsub.s32 %v5324, %v5326
    %v5328 = vrot.slane %v5314, %v5327
    %v5329 = vcombine.high %v5321, %v5321
    %v5330 = vcombine.high %v5328, %v5328
    %v5331 = vcombine.high %v5186, %v5186
    %v5333 = vunpack.c.l.s4 1983009808
    %v5334 = vunpack.c.0.s8 %v5333
    %v5335 = vlaneseq
    %v5336 = vshrl.u32 %v5335, 7
    %v5337 = vsub.s32 %v5334, %v5336
    %v5338 = vrot.slane %v5186, %v5337
    %v5340 = vunpack.c.l.s4 1983009808
    %v5341 = vunpack.c.0.s8 %v5340
    %v5342 = vlaneseq
    %v5343 = vshrl.u32 %v5342, 7
    %v5344 = vsub.s32 %v5341, %v5343
    %v5345 = vrot.slane %v5331, %v5344
    %v5346 = vcombine.high %v5338, %v5338
    %v5347 = vcombine.high %v5345, %v5345
    %v5348 = vcombine.high %v5187, %v5187
    %v5350 = vunpack.c.l.s4 1983009808
    %v5351 = vunpack.c.0.s8 %v5350
    %v5352 = vlaneseq
    %v5353 = vshrl.u32 %v5352, 7
    %v5354 = vsub.s32 %v5351, %v5353
    %v5355 = vrot.slane %v5187, %v5354
    %v5357 = vunpack.c.l.s4 1983009808
    %v5358 = vunpack.c.0.s8 %v5357
    %v5359 = vlaneseq
    %v5360 = vshrl.u32 %v5359, 7
    %v5361 = vsub.s32 %v5358, %v5360
    %v5362 = vrot.slane %v5348, %v5361
    %v5363 = vcombine.high %v5355, %v5355
    %v5364 = vcombine.high %v5362, %v5362
    %vm5365 = vsmask.f32 1280
    %vm5366 = vsmask.f32 3336
    %vm5367 = vmor %vm5365, %vm5366
    %vm5368 = vsmask.f32 5392
    %vm5369 = vmor %vm5367, %vm5368
    %vm5370 = vsmask.f32 7448
    %vm5371 = vmor %vm5369, %vm5370
    %v5373 = vshrl.u32 %v5236, 16
    %v5375 = vrot.slane %v5373, 6
    %v5376 = vshll.u32 %v5236, 16
    %v5378 = vrot.slane %v5376, 7
    %v5379 = vor.u32 %v5375, %v5378
    %v5380 = vrot.slane %v5379, 2
    %v5382 = vshll.u32 %v5244, 16
    %v5384 = vrot.slane %v5382, 7
    %v5385 = vsel %vm5371, %v5380, %v5384
    %v5386 = vshrl.u32 %v5244, 16
    %v5388 = vrot.slane %v5386, 6
    %v5389 = vor.u32 %v5388, %v5384
    %v5390 = vrot.slane %v5389, 2
    %v5392 = vshll.u32 %v5243, 16
    %v5394 = vrot.slane %v5392, 7
    %v5395 = vsel %vm5371, %v5390, %v5394
    %v5396 = vshrl.u32 %v5243, 16
    %v5398 = vrot.slane %v5396, 6
    %v5399 = vor.u32 %v5398, %v5394
    %v5400 = vrot.slane %v5399, 2
    %v5402 = vshll.u32 %v5245, 16
    %v5404 = vrot.slane %v5402, 7
    %v5405 = vsel %vm5371, %v5400, %v5404
    %v5407 = vshrl.u32 %v5253, 16
    %v5409 = vrot.slane %v5407, 6
    %v5410 = vshll.u32 %v5253, 16
    %v5412 = vrot.slane %v5410, 7
    %v5413 = vor.u32 %v5409, %v5412
    %v5414 = vrot.slane %v5413, 2
    %v5416 = vshll.u32 %v5261, 16
    %v5418 = vrot.slane %v5416, 7
    %v5419 = vsel %vm5371, %v5414, %v5418
    %v5420 = vshrl.u32 %v5261, 16
    %v5422 = vrot.slane %v5420, 6
    %v5423 = vor.u32 %v5422, %v5418
    %v5424 = vrot.slane %v5423, 2
    %v5426 = vshll.u32 %v5260, 16
    %v5428 = vrot.slane %v5426, 7
    %v5429 = vsel %vm5371, %v5424, %v5428
    %v5430 = vshrl.u32 %v5260, 16
    %v5432 = vrot.slane %v5430, 6
    %v5433 = vor.u32 %v5432, %v5428
    %v5434 = vrot.slane %v5433, 2
    %v5436 = vshll.u32 %v5262, 16
    %v5438 = vrot.slane %v5436, 7
    %v5439 = vsel %vm5371, %v5434, %v5438
    %v5441 = vshrl.u32 %v5270, 16
    %v5443 = vrot.slane %v5441, 6
    %v5444 = vshll.u32 %v5270, 16
    %v5446 = vrot.slane %v5444, 7
    %v5447 = vor.u32 %v5443, %v5446
    %v5448 = vrot.slane %v5447, 2
    %v5450 = vshll.u32 %v5278, 16
    %v5452 = vrot.slane %v5450, 7
    %v5453 = vsel %vm5371, %v5448, %v5452
    %v5454 = vshrl.u32 %v5278, 16
    %v5456 = vrot.slane %v5454, 6
    %v5457 = vor.u32 %v5456, %v5452
    %v5458 = vrot.slane %v5457, 2
    %v5460 = vshll.u32 %v5277, 16
    %v5462 = vrot.slane %v5460, 7
    %v5463 = vsel %vm5371, %v5458, %v5462
    %v5464 = vshrl.u32 %v5277, 16
    %v5466 = vrot.slane %v5464, 6
    %v5467 = vor.u32 %v5466, %v5462
    %v5468 = vrot.slane %v5467, 2
    %v5470 = vshll.u32 %v5279, 16
    %v5472 = vrot.slane %v5470, 7
    %v5473 = vsel %vm5371, %v5468, %v5472
    %v5475 = vshrl.u32 %v5287, 16
    %v5477 = vrot.slane %v5475, 6
    %v5478 = vshll.u32 %v5287, 16
    %v5480 = vrot.slane %v5478, 7
    %v5481 = vor.u32 %v5477, %v5480
    %v5482 = vrot.slane %v5481, 2
    %v5484 = vshll.u32 %v5295, 16
    %v5486 = vrot.slane %v5484, 7
    %v5487 = vsel %vm5371, %v5482, %v5486
    %v5488 = vshrl.u32 %v5295, 16
    %v5490 = vrot.slane %v5488, 6
    %v5491 = vor.u32 %v5490, %v5486
    %v5492 = vrot.slane %v5491, 2
    %v5494 = vshll.u32 %v5294, 16
    %v5496 = vrot.slane %v5494, 7
    %v5497 = vsel %vm5371, %v5492, %v5496
    %v5498 = vshrl.u32 %v5294, 16
    %v5500 = vrot.slane %v5498, 6
    %v5501 = vor.u32 %v5500, %v5496
    %v5502 = vrot.slane %v5501, 2
    %v5504 = vshll.u32 %v5296, 16
    %v5506 = vrot.slane %v5504, 7
    %v5507 = vsel %vm5371, %v5502, %v5506
    %v5509 = vshrl.u32 %v5304, 16
    %v5511 = vrot.slane %v5509, 6
    %v5512 = vshll.u32 %v5304, 16
    %v5514 = vrot.slane %v5512, 7
    %v5515 = vor.u32 %v5511, %v5514
    %v5516 = vrot.slane %v5515, 2
    %v5518 = vshll.u32 %v5312, 16
    %v5520 = vrot.slane %v5518, 7
    %v5521 = vsel %vm5371, %v5516, %v5520
    %v5522 = vshrl.u32 %v5312, 16
    %v5524 = vrot.slane %v5522, 6
    %v5525 = vor.u32 %v5524, %v5520
    %v5526 = vrot.slane %v5525, 2
    %v5528 = vshll.u32 %v5311, 16
    %v5530 = vrot.slane %v5528, 7
    %v5531 = vsel %vm5371, %v5526, %v5530
    %v5532 = vshrl.u32 %v5311, 16
    %v5534 = vrot.slane %v5532, 6
    %v5535 = vor.u32 %v5534, %v5530
    %v5536 = vrot.slane %v5535, 2
    %v5538 = vshll.u32 %v5313, 16
    %v5540 = vrot.slane %v5538, 7
    %v5541 = vsel %vm5371, %v5536, %v5540
    %v5543 = vshrl.u32 %v5321, 16
    %v5545 = vrot.slane %v5543, 6
    %v5546 = vshll.u32 %v5321, 16
    %v5548 = vrot.slane %v5546, 7
    %v5549 = vor.u32 %v5545, %v5548
    %v5550 = vrot.slane %v5549, 2
    %v5552 = vshll.u32 %v5329, 16
    %v5554 = vrot.slane %v5552, 7
    %v5555 = vsel %vm5371, %v5550, %v5554
    %v5556 = vshrl.u32 %v5329, 16
    %v5558 = vrot.slane %v5556, 6
    %v5559 = vor.u32 %v5558, %v5554
    %v5560 = vrot.slane %v5559, 2
    %v5562 = vshll.u32 %v5328, 16
    %v5564 = vrot.slane %v5562, 7
    %v5565 = vsel %vm5371, %v5560, %v5564
    %v5566 = vshrl.u32 %v5328, 16
    %v5568 = vrot.slane %v5566, 6
    %v5569 = vor.u32 %v5568, %v5564
    %v5570 = vrot.slane %v5569, 2
    %v5572 = vshll.u32 %v5330, 16
    %v5574 = vrot.slane %v5572, 7
    %v5575 = vsel %vm5371, %v5570, %v5574
    %v5577 = vshrl.u32 %v5338, 16
    %v5579 = vrot.slane %v5577, 6
    %v5580 = vshll.u32 %v5338, 16
    %v5582 = vrot.slane %v5580, 7
    %v5583 = vor.u32 %v5579, %v5582
    %v5584 = vrot.slane %v5583, 2
    %v5586 = vshll.u32 %v5346, 16
    %v5588 = vrot.slane %v5586, 7
    %v5589 = vsel %vm5371, %v5584, %v5588
    %v5590 = vshrl.u32 %v5346, 16
    %v5592 = vrot.slane %v5590, 6
    %v5593 = vor.u32 %v5592, %v5588
    %v5594 = vrot.slane %v5593, 2
    %v5596 = vshll.u32 %v5345, 16
    %v5598 = vrot.slane %v5596, 7
    %v5599 = vsel %vm5371, %v5594, %v5598
    %v5600 = vshrl.u32 %v5345, 16
    %v5602 = vrot.slane %v5600, 6
    %v5603 = vor.u32 %v5602, %v5598
    %v5604 = vrot.slane %v5603, 2
    %v5606 = vshll.u32 %v5347, 16
    %v5608 = vrot.slane %v5606, 7
    %v5609 = vsel %vm5371, %v5604, %v5608
    %v5611 = vshrl.u32 %v5355, 16
    %v5613 = vrot.slane %v5611, 6
    %v5614 = vshll.u32 %v5355, 16
    %v5616 = vrot.slane %v5614, 7
    %v5617 = vor.u32 %v5613, %v5616
    %v5618 = vrot.slane %v5617, 2
    %v5620 = vshll.u32 %v5363, 16
    %v5622 = vrot.slane %v5620, 7
    %v5623 = vsel %vm5371, %v5618, %v5622
    %v5624 = vshrl.u32 %v5363, 16
    %v5626 = vrot.slane %v5624, 6
    %v5627 = vor.u32 %v5626, %v5622
    %v5628 = vrot.slane %v5627, 2
    %v5630 = vshll.u32 %v5362, 16
    %v5632 = vrot.slane %v5630, 7
    %v5633 = vsel %vm5371, %v5628, %v5632
    %v5634 = vshrl.u32 %v5362, 16
    %v5636 = vrot.slane %v5634, 6
    %v5637 = vor.u32 %v5636, %v5632
    %v5638 = vrot.slane %v5637, 2
    %v5640 = vshll.u32 %v5364, 16
    %v5642 = vrot.slane %v5640, 7
    %v5643 = vsel %vm5371, %v5638, %v5642
    %v5644 = vcombine.low %v5385, %v5395
    %v5645 = vcombine.low %v5405, %v5419
    %v5647 = vunpack.c.l.s4 1983009808
    %v5648 = vunpack.c.0.s8 %v5647
    %v5649 = vlaneseq
    %v5650 = vshrl.u32 %v5649, 7
    %v5651 = vsub.s32 %v5648, %v5650
    %v5652 = vrot.slane %v5644, %v5651
    %v5654 = vunpack.c.l.s4 1983009808
    %v5655 = vunpack.c.0.s8 %v5654
    %v5656 = vlaneseq
    %v5657 = vshrl.u32 %v5656, 7
    %v5658 = vsub.s32 %v5655, %v5657
    %v5659 = vrot.slane %v5645, %v5658
    %v5660 = vcombine.low %v5652, %v5659
    %v5661 = vcombine.low %v5429, %v5439
    %v5662 = vcombine.low %v5453, %v5463
    %v5664 = vunpack.c.l.s4 1983009808
    %v5665 = vunpack.c.0.s8 %v5664
    %v5666 = vlaneseq
    %v5667 = vshrl.u32 %v5666, 7
    %v5668 = vsub.s32 %v5665, %v5667
    %v5669 = vrot.slane %v5661, %v5668
    %v5671 = vunpack.c.l.s4 1983009808
    %v5672 = vunpack.c.0.s8 %v5671
    %v5673 = vlaneseq
    %v5674 = vshrl.u32 %v5673, 7
    %v5675 = vsub.s32 %v5672, %v5674
    %v5676 = vrot.slane %v5662, %v5675
    %v5677 = vcombine.low %v5669, %v5676
    %v5678 = vcombine.low %v5473, %v5487
    %v5679 = vcombine.low %v5497, %v5507
    %v5681 = vunpack.c.l.s4 1983009808
    %v5682 = vunpack.c.0.s8 %v5681
    %v5683 = vlaneseq
    %v5684 = vshrl.u32 %v5683, 7
    %v5685 = vsub.s32 %v5682, %v5684
    %v5686 = vrot.slane %v5678, %v5685
    %v5688 = vunpack.c.l.s4 1983009808
    %v5689 = vunpack.c.0.s8 %v5688
    %v5690 = vlaneseq
    %v5691 = vshrl.u32 %v5690, 7
    %v5692 = vsub.s32 %v5689, %v5691
    %v5693 = vrot.slane %v5679, %v5692
    %v5694 = vcombine.low %v5686, %v5693
    %v5695 = vcombine.low %v5521, %v5531
    %v5696 = vcombine.low %v5541, %v5555
    %v5698 = vunpack.c.l.s4 1983009808
    %v5699 = vunpack.c.0.s8 %v5698
    %v5700 = vlaneseq
    %v5701 = vshrl.u32 %v5700, 7
    %v5702 = vsub.s32 %v5699, %v5701
    %v5703 = vrot.slane %v5695, %v5702
    %v5705 = vunpack.c.l.s4 1983009808
    %v5706 = vunpack.c.0.s8 %v5705
    %v5707 = vlaneseq
    %v5708 = vshrl.u32 %v5707, 7
    %v5709 = vsub.s32 %v5706, %v5708
    %v5710 = vrot.slane %v5696, %v5709
    %v5711 = vcombine.low %v5703, %v5710
    %v5712 = vcombine.low %v5565, %v5575
    %v5713 = vcombine.low %v5589, %v5599
    %v5715 = vunpack.c.l.s4 1983009808
    %v5716 = vunpack.c.0.s8 %v5715
    %v5717 = vlaneseq
    %v5718 = vshrl.u32 %v5717, 7
    %v5719 = vsub.s32 %v5716, %v5718
    %v5720 = vrot.slane %v5712, %v5719
    %v5722 = vunpack.c.l.s4 1983009808
    %v5723 = vunpack.c.0.s8 %v5722
    %v5724 = vlaneseq
    %v5725 = vshrl.u32 %v5724, 7
    %v5726 = vsub.s32 %v5723, %v5725
    %v5727 = vrot.slane %v5713, %v5726
    %v5728 = vcombine.low %v5720, %v5727
    %v5729 = vcombine.low %v5609, %v5623
    %v5730 = vcombine.low %v5633, %v5643
    %v5732 = vunpack.c.l.s4 1983009808
    %v5733 = vunpack.c.0.s8 %v5732
    %v5734 = vlaneseq
    %v5735 = vshrl.u32 %v5734, 7
    %v5736 = vsub.s32 %v5733, %v5735
    %v5737 = vrot.slane %v5729, %v5736
    %v5739 = vunpack.c.l.s4 1983009808
    %v5740 = vunpack.c.0.s8 %v5739
    %v5741 = vlaneseq
    %v5742 = vshrl.u32 %v5741, 7
    %v5743 = vsub.s32 %v5740, %v5742
    %v5744 = vrot.slane %v5730, %v5743
    %v5745 = vcombine.low %v5737, %v5744
    %v5768 = vunpack.c.l.b16 %v5205
    %v5769 = vunpack.c.l.b16 %v5206
    %v5770 = vunpack.c.l.b16 %v5207
    %v5771 = vunpack.c.l.b16 %v5208
    %v5772 = vunpack.c.l.b16 %v5209
    %v5773 = vunpack.c.l.b16 %v5210
    %v5774 = vunpack.c.l.b16 %v5211
    %v5775 = vunpack.c.l.b16 %v5212
    %v5776 = vunpack.c.l.b16 %v5213
    %v5777 = vunpack.c.l.b16 %v5214
    %v5778 = vunpack.c.l.b16 %v5215
    %v5779 = vunpack.c.l.b16 %v5216
    %v5780 = vunpack.c.l.b16 %v5217
    %v5781 = vunpack.c.l.b16 %v5218
    %v5782 = vunpack.c.l.b16 %v5219
    %v5783 = vunpack.c.l.b16 %v5220
    %v5784 = vpack.c.b16 %v5769, %v5768
    %v5785 = vpack.c.b16 %v5771, %v5770
    %v5786 = vpack.c.b16 %v5773, %v5772
    %v5787 = vpack.c.b16 %v5775, %v5774
    %v5788 = vpack.c.b16 %v5777, %v5776
    %v5789 = vpack.c.b16 %v5779, %v5778
    %v5790 = vpack.c.b16 %v5781, %v5780
    %v5791 = vpack.c.b16 %v5783, %v5782
    %5800 = vmatprep.subr.bf16.mxu0 0
    %5801 = vmatpush1.bf16.msra.mxu0 %v5784
    %5802 = vmatprep.subr.bf16.mxu0 0
    %5803 = vmatpush1.bf16.msra.mxu0 %v5785
    %5804 = vmatprep.subr.bf16.mxu0 0
    %5805 = vmatpush1.bf16.msra.mxu0 %v5786
    %5806 = vmatprep.subr.bf16.mxu0 0
    %5807 = vmatpush1.bf16.msra.mxu0 %v5787
    %5808 = vmatprep.subr.bf16.mxu0 0
    %5809 = vmatpush1.bf16.msra.mxu0 %v5788
    %5810 = vmatprep.subr.bf16.mxu0 0
    %5811 = vmatpush1.bf16.msra.mxu0 %v5789
    %5812 = vmatprep.subr.bf16.mxu0 0
    %5813 = vmatpush1.bf16.msra.mxu0 %v5790
    %5814 = vmatprep.subr.bf16.mxu0 0
    %5815 = vmatpush1.bf16.msra.mxu0 %v5791
    %5816 = vmatprep.subr.bf16.mxu0 0
    %5817 = vmatpush1.bf16.msra.mxu0 0
    %5818 = vmatprep.subr.bf16.mxu0 0
    %5819 = vmatpush1.bf16.msra.mxu0 0
    %5820 = vmatprep.subr.bf16.mxu0 0
    %5821 = vmatpush1.bf16.msra.mxu0 0
    %5822 = vmatprep.subr.bf16.mxu0 0
    %5823 = vmatpush1.bf16.msra.mxu0 0
    %5824 = vmatprep.subr.bf16.mxu0 0
    %5825 = vmatpush1.bf16.msra.mxu0 0
    %5826 = vmatprep.subr.bf16.mxu0 0
    %5827 = vmatpush1.bf16.msra.mxu0 0
    %5828 = vmatprep.subr.bf16.mxu0 0
    %5829 = vmatpush1.bf16.msra.mxu0 0
    %5830 = vmatprep.subr.bf16.mxu0 0
    %5831 = vmatpush1.bf16.msra.mxu0 0
    %5832 = vmatprep.mubr.bf16.mxu0 0
    %5833 = vmatmul.mubr.bf16.gmra.mrb[0].mxu0 %v5660
    %v5834 = vpop.f32.mrb[0].mxu0
    %v5835 = vadd.f32 0.0, %v5834
    %v5836 = vpop.f32.mrb[0].mxu0
    %v5837 = vpop.f32.mrb[0].mxu0
    %v5838 = vadd.f32 0.0, %v5837
    %v5839 = vpop.f32.mrb[0].mxu0
    %5840 = vmatprep.mubr.bf16.mxu0 0
    %5841 = vmatmul.mubr.bf16.gmra.mrb[0].mxu0 %v5677
    %v5842 = vpop.f32.mrb[0].mxu0
    %v5843 = vadd.f32 0.0, %v5842
    %v5844 = vpop.f32.mrb[0].mxu0
    %v5845 = vpop.f32.mrb[0].mxu0
    %v5846 = vadd.f32 0.0, %v5845
    %v5847 = vpop.f32.mrb[0].mxu0
    %5848 = vmatprep.mubr.bf16.mxu0 0
    %5849 = vmatmul.mubr.bf16.gmra.mrb[0].mxu0 %v5694
    %v5850 = vpop.f32.mrb[0].mxu0
    %v5851 = vadd.f32 0.0, %v5850
    %v5852 = vpop.f32.mrb[0].mxu0
    %v5853 = vpop.f32.mrb[0].mxu0
    %v5854 = vadd.f32 0.0, %v5853
    %v5855 = vpop.f32.mrb[0].mxu0
    %5856 = vmatprep.mubr.bf16.mxu0 0
    %5857 = vmatmul.mubr.bf16.gmra.mrb[0].mxu0 %v5711
    %v5858 = vpop.f32.mrb[0].mxu0
    %v5859 = vadd.f32 0.0, %v5858
    %v5860 = vpop.f32.mrb[0].mxu0
    %v5861 = vpop.f32.mrb[0].mxu0
    %v5862 = vadd.f32 0.0, %v5861
    %v5863 = vpop.f32.mrb[0].mxu0
    %5864 = vmatprep.mubr.bf16.mxu0 0
    %5865 = vmatmul.mubr.bf16.gmra.mrb[0].mxu0 %v5728
    %v5866 = vpop.f32.mrb[0].mxu0
    %v5867 = vadd.f32 0.0, %v5866
    %v5868 = vpop.f32.mrb[0].mxu0
    %v5869 = vpop.f32.mrb[0].mxu0
    %v5870 = vadd.f32 0.0, %v5869
    %v5871 = vpop.f32.mrb[0].mxu0
    %5872 = vmatprep.mubr.bf16.mxu0 0
    %5873 = vmatmul.mubr.bf16.gmra.mrb[0].mxu0 %v5745
    %v5874 = vpop.f32.mrb[0].mxu0
    %v5875 = vadd.f32 0.0, %v5874
    %v5876 = vpop.f32.mrb[0].mxu0
    %v5877 = vpop.f32.mrb[0].mxu0
    %v5878 = vadd.f32 0.0, %v5877
    %v5879 = vpop.f32.mrb[0].mxu0
    %5880 = vdwg.mxu0
    %v5881 = vcombine.low %v5236, %v5244
    %v5882 = vcombine.low %v5243, %v5253
    %v5884 = vunpack.c.l.s4 1983009808
    %v5885 = vunpack.c.0.s8 %v5884
    %v5886 = vlaneseq
    %v5887 = vshrl.u32 %v5886, 7
    %v5888 = vsub.s32 %v5885, %v5887
    %v5889 = vrot.slane %v5881, %v5888
    %v5891 = vunpack.c.l.s4 1983009808
    %v5892 = vunpack.c.0.s8 %v5891
    %v5893 = vlaneseq
    %v5894 = vshrl.u32 %v5893, 7
    %v5895 = vsub.s32 %v5892, %v5894
    %v5896 = vrot.slane %v5882, %v5895
    %v5897 = vcombine.low %v5889, %v5896
    %v5898 = vcombine.low %v5261, %v5260
    %v5899 = vcombine.low %v5270, %v5278
    %v5901 = vunpack.c.l.s4 1983009808
    %v5902 = vunpack.c.0.s8 %v5901
    %v5903 = vlaneseq
    %v5904 = vshrl.u32 %v5903, 7
    %v5905 = vsub.s32 %v5902, %v5904
    %v5906 = vrot.slane %v5898, %v5905
    %v5908 = vunpack.c.l.s4 1983009808
    %v5909 = vunpack.c.0.s8 %v5908
    %v5910 = vlaneseq
    %v5911 = vshrl.u32 %v5910, 7
    %v5912 = vsub.s32 %v5909, %v5911
    %v5913 = vrot.slane %v5899, %v5912
    %v5914 = vcombine.low %v5906, %v5913
    %v5915 = vcombine.low %v5277, %v5287
    %v5916 = vcombine.low %v5295, %v5294
    %v5918 = vunpack.c.l.s4 1983009808
    %v5919 = vunpack.c.0.s8 %v5918
    %v5920 = vlaneseq
    %v5921 = vshrl.u32 %v5920, 7
    %v5922 = vsub.s32 %v5919, %v5921
    %v5923 = vrot.slane %v5915, %v5922
    %v5925 = vunpack.c.l.s4 1983009808
    %v5926 = vunpack.c.0.s8 %v5925
    %v5927 = vlaneseq
    %v5928 = vshrl.u32 %v5927, 7
    %v5929 = vsub.s32 %v5926, %v5928
    %v5930 = vrot.slane %v5916, %v5929
    %v5931 = vcombine.low %v5923, %v5930
    %v5932 = vcombine.low %v5304, %v5312
    %v5933 = vcombine.low %v5311, %v5321
    %v5935 = vunpack.c.l.s4 1983009808
    %v5936 = vunpack.c.0.s8 %v5935
    %v5937 = vlaneseq
    %v5938 = vshrl.u32 %v5937, 7
    %v5939 = vsub.s32 %v5936, %v5938
    %v5940 = vrot.slane %v5932, %v5939
    %v5942 = vunpack.c.l.s4 1983009808
    %v5943 = vunpack.c.0.s8 %v5942
    %v5944 = vlaneseq
    %v5945 = vshrl.u32 %v5944, 7
    %v5946 = vsub.s32 %v5943, %v5945
    %v5947 = vrot.slane %v5933, %v5946
    %v5948 = vcombine.low %v5940, %v5947
    %v5949 = vcombine.low %v5329, %v5328
    %v5950 = vcombine.low %v5338, %v5346
    %v5952 = vunpack.c.l.s4 1983009808
    %v5953 = vunpack.c.0.s8 %v5952
    %v5954 = vlaneseq
    %v5955 = vshrl.u32 %v5954, 7
    %v5956 = vsub.s32 %v5953, %v5955
    %v5957 = vrot.slane %v5949, %v5956
    %v5959 = vunpack.c.l.s4 1983009808
    %v5960 = vunpack.c.0.s8 %v5959
    %v5961 = vlaneseq
    %v5962 = vshrl.u32 %v5961, 7
    %v5963 = vsub.s32 %v5960, %v5962
    %v5964 = vrot.slane %v5950, %v5963
    %v5965 = vcombine.low %v5957, %v5964
    %v5966 = vcombine.low %v5345, %v5355
    %v5967 = vcombine.low %v5363, %v5362
    %v5969 = vunpack.c.l.s4 1983009808
    %v5970 = vunpack.c.0.s8 %v5969
    %v5971 = vlaneseq
    %v5972 = vshrl.u32 %v5971, 7
    %v5973 = vsub.s32 %v5970, %v5972
    %v5974 = vrot.slane %v5966, %v5973
    %v5976 = vunpack.c.l.s4 1983009808
    %v5977 = vunpack.c.0.s8 %v5976
    %v5978 = vlaneseq
    %v5979 = vshrl.u32 %v5978, 7
    %v5980 = vsub.s32 %v5977, %v5979
    %v5981 = vrot.slane %v5967, %v5980
    %v5982 = vcombine.low %v5974, %v5981
    %v6005 = vunpack.c.l.b16 %v5188
    %v6006 = vunpack.c.l.b16 %v5189
    %v6007 = vunpack.c.l.b16 %v5190
    %v6008 = vunpack.c.l.b16 %v5191
    %v6009 = vunpack.c.l.b16 %v5192
    %v6010 = vunpack.c.l.b16 %v5193
    %v6011 = vunpack.c.l.b16 %v5194
    %v6012 = vunpack.c.l.b16 %v5195
    %v6013 = vunpack.c.l.b16 %v5196
    %v6014 = vunpack.c.l.b16 %v5197
    %v6015 = vunpack.c.l.b16 %v5198
    %v6016 = vunpack.c.l.b16 %v5199
    %v6017 = vunpack.c.l.b16 %v5200
    %v6018 = vunpack.c.l.b16 %v5201
    %v6019 = vunpack.c.l.b16 %v5202
    %v6020 = vunpack.c.l.b16 %v5203
    %v6021 = vpack.c.b16 %v6006, %v6005
    %v6022 = vpack.c.b16 %v6008, %v6007
    %v6023 = vpack.c.b16 %v6010, %v6009
    %v6024 = vpack.c.b16 %v6012, %v6011
    %v6025 = vpack.c.b16 %v6014, %v6013
    %v6026 = vpack.c.b16 %v6016, %v6015
    %v6027 = vpack.c.b16 %v6018, %v6017
    %v6028 = vpack.c.b16 %v6020, %v6019
    %6037 = vmatprep.subr.bf16.mxu0 0
    %6038 = vmatpush1.bf16.msra.mxu0 %v6021
    %6039 = vmatprep.subr.bf16.mxu0 0
    %6040 = vmatpush1.bf16.msra.mxu0 %v6022
    %6041 = vmatprep.subr.bf16.mxu0 0
    %6042 = vmatpush1.bf16.msra.mxu0 %v6023
    %6043 = vmatprep.subr.bf16.mxu0 0
    %6044 = vmatpush1.bf16.msra.mxu0 %v6024
    %6045 = vmatprep.subr.bf16.mxu0 0
    %6046 = vmatpush1.bf16.msra.mxu0 %v6025
    %6047 = vmatprep.subr.bf16.mxu0 0
    %6048 = vmatpush1.bf16.msra.mxu0 %v6026
    %6049 = vmatprep.subr.bf16.mxu0 0
    %6050 = vmatpush1.bf16.msra.mxu0 %v6027
    %6051 = vmatprep.subr.bf16.mxu0 0
    %6052 = vmatpush1.bf16.msra.mxu0 %v6028
    %6053 = vmatprep.subr.bf16.mxu0 0
    %6054 = vmatpush1.bf16.msra.mxu0 0
    %6055 = vmatprep.subr.bf16.mxu0 0
    %6056 = vmatpush1.bf16.msra.mxu0 0
    %6057 = vmatprep.subr.bf16.mxu0 0
    %6058 = vmatpush1.bf16.msra.mxu0 0
    %6059 = vmatprep.subr.bf16.mxu0 0
    %6060 = vmatpush1.bf16.msra.mxu0 0
    %6061 = vmatprep.subr.bf16.mxu0 0
    %6062 = vmatpush1.bf16.msra.mxu0 0
    %6063 = vmatprep.subr.bf16.mxu0 0
    %6064 = vmatpush1.bf16.msra.mxu0 0
    %6065 = vmatprep.subr.bf16.mxu0 0
    %6066 = vmatpush1.bf16.msra.mxu0 0
    %6067 = vmatprep.subr.bf16.mxu0 0
    %6068 = vmatpush1.bf16.msra.mxu0 0
    %6069 = vmatprep.mubr.bf16.mxu0 0
    %6070 = vmatmul.mubr.bf16.gmra.mrb[0].mxu0 %v5897
    %v6071 = vpop.f32.mrb[0].mxu0
    %v6072 = vadd.f32 %v5835, %v6071
    %v6073 = vpop.f32.mrb[0].mxu0
    %v6074 = vpop.f32.mrb[0].mxu0
    %v6075 = vadd.f32 %v5838, %v6074
    %v6076 = vpop.f32.mrb[0].mxu0
    %6077 = vmatprep.mubr.bf16.mxu0 0
    %6078 = vmatmul.mubr.bf16.gmra.mrb[0].mxu0 %v5914
    %v6079 = vpop.f32.mrb[0].mxu0
    %v6080 = vadd.f32 %v5843, %v6079
    %v6081 = vpop.f32.mrb[0].mxu0
    %v6082 = vpop.f32.mrb[0].mxu0
    %v6083 = vadd.f32 %v5846, %v6082
    %v6084 = vpop.f32.mrb[0].mxu0
    %6085 = vmatprep.mubr.bf16.mxu0 0
    %6086 = vmatmul.mubr.bf16.gmra.mrb[0].mxu0 %v5931
    %v6087 = vpop.f32.mrb[0].mxu0
    %v6088 = vadd.f32 %v5851, %v6087
    %v6089 = vpop.f32.mrb[0].mxu0
    %v6090 = vpop.f32.mrb[0].mxu0
    %v6091 = vadd.f32 %v5854, %v6090
    %v6092 = vpop.f32.mrb[0].mxu0
    %6093 = vmatprep.mubr.bf16.mxu0 0
    %6094 = vmatmul.mubr.bf16.gmra.mrb[0].mxu0 %v5948
    %v6095 = vpop.f32.mrb[0].mxu0
    %v6096 = vadd.f32 %v5859, %v6095
    %v6097 = vpop.f32.mrb[0].mxu0
    %v6098 = vpop.f32.mrb[0].mxu0
    %v6099 = vadd.f32 %v5862, %v6098
    %v6100 = vpop.f32.mrb[0].mxu0
    %6101 = vmatprep.mubr.bf16.mxu0 0
    %6102 = vmatmul.mubr.bf16.gmra.mrb[0].mxu0 %v5965
    %v6103 = vpop.f32.mrb[0].mxu0
    %v6104 = vadd.f32 %v5867, %v6103
    %v6105 = vpop.f32.mrb[0].mxu0
    %v6106 = vpop.f32.mrb[0].mxu0
    %v6107 = vadd.f32 %v5870, %v6106
    %v6108 = vpop.f32.mrb[0].mxu0
    %6109 = vmatprep.mubr.bf16.mxu0 0
    %6110 = vmatmul.mubr.bf16.gmra.mrb[0].mxu0 %v5982
    %v6111 = vpop.f32.mrb[0].mxu0
    %v6112 = vadd.f32 %v5875, %v6111
    %v6113 = vpop.f32.mrb[0].mxu0
    %v6114 = vpop.f32.mrb[0].mxu0
    %v6115 = vadd.f32 %v5878, %v6114
    %v6116 = vpop.f32.mrb[0].mxu0
    %6117 = vdwg.mxu0
    %v6130 = vcombine.high %v6072, %v6072
    %v6131 = vcombine.high %v6075, %v6075
    %v6132 = vcombine.high %v6080, %v6080
    %v6133 = vcombine.high %v6083, %v6083
    %v6134 = vcombine.high %v6088, %v6088
    %v6135 = vcombine.high %v6091, %v6091
    %v6136 = vcombine.high %v6096, %v6096
    %v6137 = vcombine.high %v6099, %v6099
    %v6138 = vcombine.high %v6104, %v6104
    %v6139 = vcombine.high %v6107, %v6107
    %v6140 = vcombine.high %v6112, %v6112
    %v6141 = vcombine.high %v6115, %v6115
    %s6154 = scalar_lea.vmem [#allocation5], 128
    %v6155 = vld [vmem:[%s6154] sm:$0xf]
    %v6156 = vld [vmem:[%s6154 + $0x4] sm:$0xf]
    %v6157 = vld [vmem:[%s6154 + $0x8] sm:$0xf]
    %v6158 = vld [vmem:[%s6154 + $0xc] sm:$0xf]
    %v6159 = vld [vmem:[%s6154 + $0x10] sm:$0xf]
    %v6160 = vld [vmem:[%s6154 + $0x14] sm:$0xf]
    %v6161 = vld [vmem:[%s6154 + $0x18] sm:$0xf]
    %v6162 = vld [vmem:[%s6154 + $0x1c] sm:$0xf]
    %v6163 = vld [vmem:[%s6154 + $0x20] sm:$0xf]
    %v6164 = vld [vmem:[%s6154 + $0x24] sm:$0xf]
    %v6165 = vld [vmem:[%s6154 + $0x28] sm:$0xf]
    %v6166 = vld [vmem:[%s6154 + $0x2c] sm:$0xf]
    %v6167 = vld [vmem:[%s6154 + $0x30] sm:$0xf]
    %v6168 = vld [vmem:[%s6154 + $0x34] sm:$0xf]
    %v6169 = vld [vmem:[%s6154 + $0x38] sm:$0xf]
    %v6170 = vld [vmem:[%s6154 + $0x3c] sm:$0xf]
    %vm6171 = vcmask 1040384
    %vm6172 = vcmask 1042434
    %vm6173 = vmor %vm6171, %vm6172
    %vm6174 = vcmask 1044484
    %vm6175 = vmor %vm6173, %vm6174
    %vm6176 = vcmask 1046534
    %vm6177 = vmor %vm6175, %vm6176
    %v6178 = vrot.slane %v5236, 7
    %v6179 = vrot.slane %v6178, 2
    %v6180 = vrot.slane %v5244, 7
    %v6181 = vsel %vm6177, %v6179, %v6180
    %v6182 = vrot.slane %v6180, 2
    %v6183 = vrot.slane %v5243, 7
    %v6184 = vsel %vm6177, %v6182, %v6183
    %v6185 = vrot.slane %v6183, 2
    %v6186 = vrot.slane %v5245, 7
    %v6187 = vsel %vm6177, %v6185, %v6186
    %v6188 = vrot.slane %v5253, 7
    %v6189 = vrot.slane %v6188, 2
    %v6190 = vrot.slane %v5261, 7
    %v6191 = vsel %vm6177, %v6189, %v6190
    %v6192 = vrot.slane %v6190, 2
    %v6193 = vrot.slane %v5260, 7
    %v6194 = vsel %vm6177, %v6192, %v6193
    %v6195 = vrot.slane %v6193, 2
    %v6196 = vrot.slane %v5262, 7
    %v6197 = vsel %vm6177, %v6195, %v6196
    %v6198 = vrot.slane %v5270, 7
    %v6199 = vrot.slane %v6198, 2
    %v6200 = vrot.slane %v5278, 7
    %v6201 = vsel %vm6177, %v6199, %v6200
    %v6202 = vrot.slane %v6200, 2
    %v6203 = vrot.slane %v5277, 7
    %v6204 = vsel %vm6177, %v6202, %v6203
    %v6205 = vrot.slane %v6203, 2
    %v6206 = vrot.slane %v5279, 7
    %v6207 = vsel %vm6177, %v6205, %v6206
    %v6208 = vrot.slane %v5287, 7
    %v6209 = vrot.slane %v6208, 2
    %v6210 = vrot.slane %v5295, 7
    %v6211 = vsel %vm6177, %v6209, %v6210
    %v6212 = vrot.slane %v6210, 2
    %v6213 = vrot.slane %v5294, 7
    %v6214 = vsel %vm6177, %v6212, %v6213
    %v6215 = vrot.slane %v6213, 2
    %v6216 = vrot.slane %v5296, 7
    %v6217 = vsel %vm6177, %v6215, %v6216
    %v6218 = vrot.slane %v5304, 7
    %v6219 = vrot.slane %v6218, 2
    %v6220 = vrot.slane %v5312, 7
    %v6221 = vsel %vm6177, %v6219, %v6220
    %v6222 = vrot.slane %v6220, 2
    %v6223 = vrot.slane %v5311, 7
    %v6224 = vsel %vm6177, %v6222, %v6223
    %v6225 = vrot.slane %v6223, 2
    %v6226 = vrot.slane %v5313, 7
    %v6227 = vsel %vm6177, %v6225, %v6226
    %v6228 = vrot.slane %v5321, 7
    %v6229 = vrot.slane %v6228, 2
    %v6230 = vrot.slane %v5329, 7
    %v6231 = vsel %vm6177, %v6229, %v6230
    %v6232 = vrot.slane %v6230, 2
    %v6233 = vrot.slane %v5328, 7
    %v6234 = vsel %vm6177, %v6232, %v6233
    %v6235 = vrot.slane %v6233, 2
    %v6236 = vrot.slane %v5330, 7
    %v6237 = vsel %vm6177, %v6235, %v6236
    %v6238 = vrot.slane %v5338, 7
    %v6239 = vrot.slane %v6238, 2
    %v6240 = vrot.slane %v5346, 7
    %v6241 = vsel %vm6177, %v6239, %v6240
    %v6242 = vrot.slane %v6240, 2
    %v6243 = vrot.slane %v5345, 7
    %v6244 = vsel %vm6177, %v6242, %v6243
    %v6245 = vrot.slane %v6243, 2
    %v6246 = vrot.slane %v5347, 7
    %v6247 = vsel %vm6177, %v6245, %v6246
    %v6248 = vrot.slane %v5355, 7
    %v6249 = vrot.slane %v6248, 2
    %v6250 = vrot.slane %v5363, 7
    %v6251 = vsel %vm6177, %v6249, %v6250
    %v6252 = vrot.slane %v6250, 2
    %v6253 = vrot.slane %v5362, 7
    %v6254 = vsel %vm6177, %v6252, %v6253
    %v6255 = vrot.slane %v6253, 2
    %v6256 = vrot.slane %v5364, 7
    %v6257 = vsel %vm6177, %v6255, %v6256
    %v6258 = vcombine.low %v6181, %v6184
    %v6259 = vcombine.low %v6187, %v6191
    %v6261 = vunpack.c.l.s4 1983009808
    %v6262 = vunpack.c.0.s8 %v6261
    %v6263 = vlaneseq
    %v6264 = vshrl.u32 %v6263, 7
    %v6265 = vsub.s32 %v6262, %v6264
    %v6266 = vrot.slane %v6258, %v6265
    %v6268 = vunpack.c.l.s4 1983009808
    %v6269 = vunpack.c.0.s8 %v6268
    %v6270 = vlaneseq
    %v6271 = vshrl.u32 %v6270, 7
    %v6272 = vsub.s32 %v6269, %v6271
    %v6273 = vrot.slane %v6259, %v6272
    %v6274 = vcombine.low %v6266, %v6273
    %v6275 = vcombine.low %v6194, %v6197
    %v6276 = vcombine.low %v6201, %v6204
    %v6278 = vunpack.c.l.s4 1983009808
    %v6279 = vunpack.c.0.s8 %v6278
    %v6280 = vlaneseq
    %v6281 = vshrl.u32 %v6280, 7
    %v6282 = vsub.s32 %v6279, %v6281
    %v6283 = vrot.slane %v6275, %v6282
    %v6285 = vunpack.c.l.s4 1983009808
    %v6286 = vunpack.c.0.s8 %v6285
    %v6287 = vlaneseq
    %v6288 = vshrl.u32 %v6287, 7
    %v6289 = vsub.s32 %v6286, %v6288
    %v6290 = vrot.slane %v6276, %v6289
    %v6291 = vcombine.low %v6283, %v6290
    %v6292 = vcombine.low %v6207, %v6211
    %v6293 = vcombine.low %v6214, %v6217
    %v6295 = vunpack.c.l.s4 1983009808
    %v6296 = vunpack.c.0.s8 %v6295
    %v6297 = vlaneseq
    %v6298 = vshrl.u32 %v6297, 7
    %v6299 = vsub.s32 %v6296, %v6298
    %v6300 = vrot.slane %v6292, %v6299
    %v6302 = vunpack.c.l.s4 1983009808
    %v6303 = vunpack.c.0.s8 %v6302
    %v6304 = vlaneseq
    %v6305 = vshrl.u32 %v6304, 7
    %v6306 = vsub.s32 %v6303, %v6305
    %v6307 = vrot.slane %v6293, %v6306
    %v6308 = vcombine.low %v6300, %v6307
    %v6309 = vcombine.low %v6221, %v6224
    %v6310 = vcombine.low %v6227, %v6231
    %v6312 = vunpack.c.l.s4 1983009808
    %v6313 = vunpack.c.0.s8 %v6312
    %v6314 = vlaneseq
    %v6315 = vshrl.u32 %v6314, 7
    %v6316 = vsub.s32 %v6313, %v6315
    %v6317 = vrot.slane %v6309, %v6316
    %v6319 = vunpack.c.l.s4 1983009808
    %v6320 = vunpack.c.0.s8 %v6319
    %v6321 = vlaneseq
    %v6322 = vshrl.u32 %v6321, 7
    %v6323 = vsub.s32 %v6320, %v6322
    %v6324 = vrot.slane %v6310, %v6323
    %v6325 = vcombine.low %v6317, %v6324
    %v6326 = vcombine.low %v6234, %v6237
    %v6327 = vcombine.low %v6241, %v6244
    %v6329 = vunpack.c.l.s4 1983009808
    %v6330 = vunpack.c.0.s8 %v6329
    %v6331 = vlaneseq
    %v6332 = vshrl.u32 %v6331, 7
    %v6333 = vsub.s32 %v6330, %v6332
    %v6334 = vrot.slane %v6326, %v6333
    %v6336 = vunpack.c.l.s4 1983009808
    %v6337 = vunpack.c.0.s8 %v6336
    %v6338 = vlaneseq
    %v6339 = vshrl.u32 %v6338, 7
    %v6340 = vsub.s32 %v6337, %v6339
    %v6341 = vrot.slane %v6327, %v6340
    %v6342 = vcombine.low %v6334, %v6341
    %v6343 = vcombine.low %v6247, %v6251
    %v6344 = vcombine.low %v6254, %v6257
    %v6346 = vunpack.c.l.s4 1983009808
    %v6347 = vunpack.c.0.s8 %v6346
    %v6348 = vlaneseq
    %v6349 = vshrl.u32 %v6348, 7
    %v6350 = vsub.s32 %v6347, %v6349
    %v6351 = vrot.slane %v6343, %v6350
    %v6353 = vunpack.c.l.s4 1983009808
    %v6354 = vunpack.c.0.s8 %v6353
    %v6355 = vlaneseq
    %v6356 = vshrl.u32 %v6355, 7
    %v6357 = vsub.s32 %v6354, %v6356
    %v6358 = vrot.slane %v6344, %v6357
    %v6359 = vcombine.low %v6351, %v6358
    %v6382 = vunpack.c.l.b16 %v6155
    %v6383 = vunpack.c.l.b16 %v6156
    %v6384 = vunpack.c.l.b16 %v6157
    %v6385 = vunpack.c.l.b16 %v6158
    %v6386 = vunpack.c.l.b16 %v6159
    %v6387 = vunpack.c.l.b16 %v6160
    %v6388 = vunpack.c.l.b16 %v6161
    %v6389 = vunpack.c.l.b16 %v6162
    %v6390 = vunpack.c.l.b16 %v6163
    %v6391 = vunpack.c.l.b16 %v6164
    %v6392 = vunpack.c.l.b16 %v6165
    %v6393 = vunpack.c.l.b16 %v6166
    %v6394 = vunpack.c.l.b16 %v6167
    %v6395 = vunpack.c.l.b16 %v6168
    %v6396 = vunpack.c.l.b16 %v6169
    %v6397 = vunpack.c.l.b16 %v6170
    %v6398 = vpack.c.b16 %v6383, %v6382
    %v6399 = vpack.c.b16 %v6385, %v6384
    %v6400 = vpack.c.b16 %v6387, %v6386
    %v6401 = vpack.c.b16 %v6389, %v6388
    %v6402 = vpack.c.b16 %v6391, %v6390
    %v6403 = vpack.c.b16 %v6393, %v6392
    %v6404 = vpack.c.b16 %v6395, %v6394
    %v6405 = vpack.c.b16 %v6397, %v6396
    %6414 = vmatprep.subr.bf16.mxu0 0
    %6415 = vmatpush1.bf16.msra.mxu0 %v6398
    %6416 = vmatprep.subr.bf16.mxu0 0
    %6417 = vmatpush1.bf16.msra.mxu0 %v6399
    %6418 = vmatprep.subr.bf16.mxu0 0
    %6419 = vmatpush1.bf16.msra.mxu0 %v6400
    %6420 = vmatprep.subr.bf16.mxu0 0
    %6421 = vmatpush1.bf16.msra.mxu0 %v6401
    %6422 = vmatprep.subr.bf16.mxu0 0
    %6423 = vmatpush1.bf16.msra.mxu0 %v6402
    %6424 = vmatprep.subr.bf16.mxu0 0
    %6425 = vmatpush1.bf16.msra.mxu0 %v6403
    %6426 = vmatprep.subr.bf16.mxu0 0
    %6427 = vmatpush1.bf16.msra.mxu0 %v6404
    %6428 = vmatprep.subr.bf16.mxu0 0
    %6429 = vmatpush1.bf16.msra.mxu0 %v6405
    %6430 = vmatprep.subr.bf16.mxu0 0
    %6431 = vmatpush1.bf16.msra.mxu0 0
    %6432 = vmatprep.subr.bf16.mxu0 0
    %6433 = vmatpush1.bf16.msra.mxu0 0
    %6434 = vmatprep.subr.bf16.mxu0 0
    %6435 = vmatpush1.bf16.msra.mxu0 0
    %6436 = vmatprep.subr.bf16.mxu0 0
    %6437 = vmatpush1.bf16.msra.mxu0 0
    %6438 = vmatprep.subr.bf16.mxu0 0
    %6439 = vmatpush1.bf16.msra.mxu0 0
    %6440 = vmatprep.subr.bf16.mxu0 0
    %6441 = vmatpush1.bf16.msra.mxu0 0
    %6442 = vmatprep.subr.bf16.mxu0 0
    %6443 = vmatpush1.bf16.msra.mxu0 0
    %6444 = vmatprep.subr.bf16.mxu0 0
    %6445 = vmatpush1.bf16.msra.mxu0 0
    %6446 = vmatprep.mubr.bf16.mxu0 0
    %6447 = vmatmul.mubr.bf16.gmra.mrb[0].mxu0 %v6274
    %v6448 = vpop.f32.mrb[0].mxu0
    %v6449 = vadd.f32 0.0, %v6448
    %v6450 = vpop.f32.mrb[0].mxu0
    %v6451 = vpop.f32.mrb[0].mxu0
    %v6452 = vadd.f32 0.0, %v6451
    %v6453 = vpop.f32.mrb[0].mxu0
    %6454 = vmatprep.mubr.bf16.mxu0 0
    %6455 = vmatmul.mubr.bf16.gmra.mrb[0].mxu0 %v6291
    %v6456 = vpop.f32.mrb[0].mxu0
    %v6457 = vadd.f32 0.0, %v6456
    %v6458 = vpop.f32.mrb[0].mxu0
    %v6459 = vpop.f32.mrb[0].mxu0
    %v6460 = vadd.f32 0.0, %v6459
    %v6461 = vpop.f32.mrb[0].mxu0
    %6462 = vmatprep.mubr.bf16.mxu0 0
    %6463 = vmatmul.mubr.bf16.gmra.mrb[0].mxu0 %v6308
    %v6464 = vpop.f32.mrb[0].mxu0
    %v6465 = vadd.f32 0.0, %v6464
    %v6466 = vpop.f32.mrb[0].mxu0
    %v6467 = vpop.f32.mrb[0].mxu0
    %v6468 = vadd.f32 0.0, %v6467
    %v6469 = vpop.f32.mrb[0].mxu0
    %6470 = vmatprep.mubr.bf16.mxu0 0
    %6471 = vmatmul.mubr.bf16.gmra.mrb[0].mxu0 %v6325
    %v6472 = vpop.f32.mrb[0].mxu0
    %v6473 = vadd.f32 0.0, %v6472
    %v6474 = vpop.f32.mrb[0].mxu0
    %v6475 = vpop.f32.mrb[0].mxu0
    %v6476 = vadd.f32 0.0, %v6475
    %v6477 = vpop.f32.mrb[0].mxu0
    %6478 = vmatprep.mubr.bf16.mxu0 0
    %6479 = vmatmul.mubr.bf16.gmra.mrb[0].mxu0 %v6342
    %v6480 = vpop.f32.mrb[0].mxu0
    %v6481 = vadd.f32 0.0, %v6480
    %v6482 = vpop.f32.mrb[0].mxu0
    %v6483 = vpop.f32.mrb[0].mxu0
    %v6484 = vadd.f32 0.0, %v6483
    %v6485 = vpop.f32.mrb[0].mxu0
    %6486 = vmatprep.mubr.bf16.mxu0 0
    %6487 = vmatmul.mubr.bf16.gmra.mrb[0].mxu0 %v6359
    %v6488 = vpop.f32.mrb[0].mxu0
    %v6489 = vadd.f32 0.0, %v6488
    %v6490 = vpop.f32.mrb[0].mxu0
    %v6491 = vpop.f32.mrb[0].mxu0
    %v6492 = vadd.f32 0.0, %v6491
    %v6493 = vpop.f32.mrb[0].mxu0
    %6494 = vdwg.mxu0
    %v6507 = vcombine.high %v6449, %v6449
    %v6508 = vcombine.high %v6452, %v6452
    %v6509 = vcombine.high %v6457, %v6457
    %v6510 = vcombine.high %v6460, %v6460
    %v6511 = vcombine.high %v6465, %v6465
    %v6512 = vcombine.high %v6468, %v6468
    %v6513 = vcombine.high %v6473, %v6473
    %v6514 = vcombine.high %v6476, %v6476
    %v6515 = vcombine.high %v6481, %v6481
    %v6516 = vcombine.high %v6484, %v6484
    %v6517 = vcombine.high %v6489, %v6489
    %v6518 = vcombine.high %v6492, %v6492
    %v6531 = vadd.f32 %v6072, %v6449
    %v6532 = vadd.f32 %v6130, %v6507
    %v6533 = vadd.f32 %v6075, %v6452
    %v6534 = vadd.f32 %v6131, %v6508
    %v6535 = vadd.f32 %v6080, %v6457
    %v6536 = vadd.f32 %v6132, %v6509
    %v6537 = vadd.f32 %v6083, %v6460
    %v6538 = vadd.f32 %v6133, %v6510
    %v6539 = vadd.f32 %v6088, %v6465
    %v6540 = vadd.f32 %v6134, %v6511
    %v6541 = vadd.f32 %v6091, %v6468
    %v6542 = vadd.f32 %v6135, %v6512
    %v6543 = vadd.f32 %v6096, %v6473
    %v6544 = vadd.f32 %v6136, %v6513
    %v6545 = vadd.f32 %v6099, %v6476
    %v6546 = vadd.f32 %v6137, %v6514
    %v6547 = vadd.f32 %v6104, %v6481
    %v6548 = vadd.f32 %v6138, %v6515
    %v6549 = vadd.f32 %v6107, %v6484
    %v6550 = vadd.f32 %v6139, %v6516
    %v6551 = vadd.f32 %v6112, %v6489
    %v6552 = vadd.f32 %v6140, %v6517
    %v6553 = vadd.f32 %v6115, %v6492
    %v6554 = vadd.f32 %v6141, %v6518
    %v6555 = vld [vmem:[%s5] sm:$0x1]
    %v6557 = vlaneseq
    %v6558 = vshrl.u32 %v6557, 7
    %v6559 = vsub.s32 0, %v6558
    %v6560 = vrot.slane %v6555, %v6559
    %v6562 = vcombine.high %v6560, %v6560
    %v6564 = vadd.f32 %v6531, %v6560
    %v6565 = vadd.f32 %v6532, %v6562
    %v6566 = vadd.f32 %v6533, %v6560
    %v6567 = vadd.f32 %v6534, %v6560
    %v6568 = vadd.f32 %v6535, %v6562
    %v6569 = vadd.f32 %v6536, %v6560
    %v6570 = vadd.f32 %v6537, %v6560
    %v6571 = vadd.f32 %v6538, %v6562
    %v6572 = vadd.f32 %v6539, %v6560
    %v6573 = vadd.f32 %v6540, %v6560
    %v6574 = vadd.f32 %v6541, %v6562
    %v6575 = vadd.f32 %v6542, %v6560
    %v6576 = vadd.f32 %v6543, %v6560
    %v6577 = vadd.f32 %v6544, %v6562
    %v6578 = vadd.f32 %v6545, %v6560
    %v6579 = vadd.f32 %v6546, %v6560
    %v6580 = vadd.f32 %v6547, %v6562
    %v6581 = vadd.f32 %v6548, %v6560
    %v6582 = vadd.f32 %v6549, %v6560
    %v6583 = vadd.f32 %v6550, %v6562
    %v6584 = vadd.f32 %v6551, %v6560
    %v6585 = vadd.f32 %v6552, %v6560
    %v6586 = vadd.f32 %v6553, %v6562
    %v6587 = vadd.f32 %v6554, %v6560
    %v6588 = vmax.f32 %v6564, 0.0
    %v6589 = vmax.f32 %v6565, 0.0
    %v6590 = vmax.f32 %v6566, 0.0
    %v6591 = vmax.f32 %v6567, 0.0
    %v6592 = vmax.f32 %v6568, 0.0
    %v6593 = vmax.f32 %v6569, 0.0
    %v6594 = vmax.f32 %v6570, 0.0
    %v6595 = vmax.f32 %v6571, 0.0
    %v6596 = vmax.f32 %v6572, 0.0
    %v6597 = vmax.f32 %v6573, 0.0
    %v6598 = vmax.f32 %v6574, 0.0
    %v6599 = vmax.f32 %v6575, 0.0
    %v6600 = vmax.f32 %v6576, 0.0
    %v6601 = vmax.f32 %v6577, 0.0
    %v6602 = vmax.f32 %v6578, 0.0
    %v6603 = vmax.f32 %v6579, 0.0
    %v6604 = vmax.f32 %v6580, 0.0
    %v6605 = vmax.f32 %v6581, 0.0
    %v6606 = vmax.f32 %v6582, 0.0
    %v6607 = vmax.f32 %v6583, 0.0
    %v6608 = vmax.f32 %v6584, 0.0
    %v6609 = vmax.f32 %v6585, 0.0
    %v6610 = vmax.f32 %v6586, 0.0
    %v6611 = vmax.f32 %v6587, 0.0
    %v6628 = vcombine.low %v6588, %v6589
    %v6629 = vcombine.low %v6591, %v6592
    %v6630 = vcombine.low %v6594, %v6595
    %v6631 = vcombine.low %v6597, %v6598
    %v6632 = vcombine.low %v6600, %v6601
    %v6633 = vcombine.low %v6603, %v6604
    %v6634 = vcombine.low %v6606, %v6607
    %v6635 = vcombine.low %v6609, %v6610
    %vm6644 = vcmask 1043456
    %v6645 = vsel %vm6644, %v6590, -inf
    %v6646 = vmax.f32 %v6628, %v6645
    %v6647 = vrot.slane %v6646, 4
    %v6648 = vmax.f32 %v6646, %v6647
    %v6649 = vrot.slane %v6648, 2
    %v6650 = vmax.f32 %v6648, %v6649
    %v6651 = vrot.slane %v6650, 1
    %v6652 = vmax.f32 %v6650, %v6651
    %v6653 = vsel %vm6644, %v6593, -inf
    %v6654 = vmax.f32 %v6629, %v6653
    %v6655 = vrot.slane %v6654, 4
    %v6656 = vmax.f32 %v6654, %v6655
    %v6657 = vrot.slane %v6656, 2
    %v6658 = vmax.f32 %v6656, %v6657
    %v6659 = vrot.slane %v6658, 1
    %v6660 = vmax.f32 %v6658, %v6659
    %v6661 = vsel %vm6644, %v6596, -inf
    %v6662 = vmax.f32 %v6630, %v6661
    %v6663 = vrot.slane %v6662, 4
    %v6664 = vmax.f32 %v6662, %v6663
    %v6665 = vrot.slane %v6664, 2
    %v6666 = vmax.f32 %v6664, %v6665
    %v6667 = vrot.slane %v6666, 1
    %v6668 = vmax.f32 %v6666, %v6667
    %v6669 = vsel %vm6644, %v6599, -inf
    %v6670 = vmax.f32 %v6631, %v6669
    %v6671 = vrot.slane %v6670, 4
    %v6672 = vmax.f32 %v6670, %v6671
    %v6673 = vrot.slane %v6672, 2
    %v6674 = vmax.f32 %v6672, %v6673
    %v6675 = vrot.slane %v6674, 1
    %v6676 = vmax.f32 %v6674, %v6675
    %v6677 = vsel %vm6644, %v6602, -inf
    %v6678 = vmax.f32 %v6632, %v6677
    %v6679 = vrot.slane %v6678, 4
    %v6680 = vmax.f32 %v6678, %v6679
    %v6681 = vrot.slane %v6680, 2
    %v6682 = vmax.f32 %v6680, %v6681
    %v6683 = vrot.slane %v6682, 1
    %v6684 = vmax.f32 %v6682, %v6683
    %v6685 = vsel %vm6644, %v6605, -inf
    %v6686 = vmax.f32 %v6633, %v6685
    %v6687 = vrot.slane %v6686, 4
    %v6688 = vmax.f32 %v6686, %v6687
    %v6689 = vrot.slane %v6688, 2
    %v6690 = vmax.f32 %v6688, %v6689
    %v6691 = vrot.slane %v6690, 1
    %v6692 = vmax.f32 %v6690, %v6691
    %v6693 = vsel %vm6644, %v6608, -inf
    %v6694 = vmax.f32 %v6634, %v6693
    %v6695 = vrot.slane %v6694, 4
    %v6696 = vmax.f32 %v6694, %v6695
    %v6697 = vrot.slane %v6696, 2
    %v6698 = vmax.f32 %v6696, %v6697
    %v6699 = vrot.slane %v6698, 1
    %v6700 = vmax.f32 %v6698, %v6699
    %v6701 = vsel %vm6644, %v6611, -inf
    %v6702 = vmax.f32 %v6635, %v6701
    %v6703 = vrot.slane %v6702, 4
    %v6704 = vmax.f32 %v6702, %v6703
    %v6705 = vrot.slane %v6704, 2
    %v6706 = vmax.f32 %v6704, %v6705
    %v6707 = vrot.slane %v6706, 1
    %v6708 = vmax.f32 %v6706, %v6707
    %v6709 = vpack.c.bf16 %v6652, %v6652
    %v6710 = vpack.c.bf16 %v6660, %v6660
    %v6711 = vpack.c.bf16 %v6668, %v6668
    %v6712 = vpack.c.bf16 %v6676, %v6676
    %v6713 = vpack.c.bf16 %v6684, %v6684
    %v6714 = vpack.c.bf16 %v6692, %v6692
    %v6715 = vpack.c.bf16 %v6700, %v6700
    %v6716 = vpack.c.bf16 %v6708, %v6708
    %s6717 = scalar_lea.vmem [#allocation7], 64
    %v6718 = vld [vmem:[%s6717] sm:$0xf]
    %v6719 = vld [vmem:[%s6717 + $0x4] sm:$0xf]
    %v6720 = vld [vmem:[%s6717 + $0x8] sm:$0xf]
    %v6721 = vld [vmem:[%s6717 + $0xc] sm:$0xf]
    %v6722 = vld [vmem:[%s6717 + $0x10] sm:$0xf]
    %v6723 = vld [vmem:[%s6717 + $0x14] sm:$0xf]
    %v6724 = vld [vmem:[%s6717 + $0x18] sm:$0xf]
    %v6725 = vld [vmem:[%s6717 + $0x1c] sm:$0xf]
    %v6726 = vld [vmem:[%s6717 + $0x20] sm:$0xf]
    %v6727 = vld [vmem:[%s6717 + $0x24] sm:$0xf]
    %v6728 = vld [vmem:[%s6717 + $0x28] sm:$0xf]
    %v6729 = vld [vmem:[%s6717 + $0x2c] sm:$0xf]
    %v6730 = vld [vmem:[%s6717 + $0x30] sm:$0xf]
    %v6731 = vld [vmem:[%s6717 + $0x34] sm:$0xf]
    %v6732 = vld [vmem:[%s6717 + $0x38] sm:$0xf]
    %v6733 = vld [vmem:[%s6717 + $0x3c] sm:$0xf]
    %v6742 = vunpack.c.l.b16 %v6709
    %v6743 = vunpack.c.l.b16 %v6710
    %v6744 = vunpack.c.l.b16 %v6711
    %v6745 = vunpack.c.l.b16 %v6712
    %v6746 = vunpack.c.l.b16 %v6713
    %v6747 = vunpack.c.l.b16 %v6714
    %v6748 = vunpack.c.l.b16 %v6715
    %v6749 = vunpack.c.l.b16 %v6716
    %vm6750 = vcmask 1041409
    %v6751 = vsel %vm6750, %v6743, %v6742
    %vm6752 = vcmask 1042434
    %v6753 = vsel %vm6752, %v6744, %v6751
    %vm6754 = vcmask 1043459
    %v6755 = vsel %vm6754, %v6745, %v6753
    %vm6756 = vcmask 1044484
    %v6757 = vsel %vm6756, %v6746, %v6755
    %vm6758 = vcmask 1045509
    %v6759 = vsel %vm6758, %v6747, %v6757
    %vm6760 = vcmask 1046534
    %v6761 = vsel %vm6760, %v6748, %v6759
    %vm6762 = vcmask 1047559
    %v6763 = vsel %vm6762, %v6749, %v6761
    %v6764 = vpack.c.b16 %v6763, %v6763
    %v6782 = vunpack.c.l.b16 %v6718
    %v6783 = vunpack.c.l.b16 %v6719
    %v6784 = vunpack.c.l.b16 %v6720
    %v6785 = vunpack.c.l.b16 %v6721
    %v6786 = vunpack.c.l.b16 %v6722
    %v6787 = vunpack.c.l.b16 %v6723
    %v6788 = vunpack.c.l.b16 %v6724
    %v6789 = vunpack.c.l.b16 %v6725
    %v6790 = vunpack.c.l.b16 %v6726
    %v6791 = vunpack.c.l.b16 %v6727
    %v6792 = vunpack.c.l.b16 %v6728
    %v6793 = vunpack.c.l.b16 %v6729
    %v6794 = vunpack.c.l.b16 %v6730
    %v6795 = vunpack.c.l.b16 %v6731
    %v6796 = vunpack.c.l.b16 %v6732
    %v6797 = vunpack.c.l.b16 %v6733
    %v6798 = vpack.c.b16 %v6783, %v6782
    %v6799 = vpack.c.b16 %v6785, %v6784
    %v6800 = vpack.c.b16 %v6787, %v6786
    %v6801 = vpack.c.b16 %v6789, %v6788
    %v6802 = vpack.c.b16 %v6791, %v6790
    %v6803 = vpack.c.b16 %v6793, %v6792
    %v6804 = vpack.c.b16 %v6795, %v6794
    %v6805 = vpack.c.b16 %v6797, %v6796
    %6814 = vmatprep.subr.bf16.mxu0 0
    %6815 = vmatpush1.bf16.msra.mxu0 %v6798
    %6816 = vmatprep.subr.bf16.mxu0 0
    %6817 = vmatpush1.bf16.msra.mxu0 %v6799
    %6818 = vmatprep.subr.bf16.mxu0 0
    %6819 = vmatpush1.bf16.msra.mxu0 %v6800
    %6820 = vmatprep.subr.bf16.mxu0 0
    %6821 = vmatpush1.bf16.msra.mxu0 %v6801
    %6822 = vmatprep.subr.bf16.mxu0 0
    %6823 = vmatpush1.bf16.msra.mxu0 %v6802
    %6824 = vmatprep.subr.bf16.mxu0 0
    %6825 = vmatpush1.bf16.msra.mxu0 %v6803
    %6826 = vmatprep.subr.bf16.mxu0 0
    %6827 = vmatpush1.bf16.msra.mxu0 %v6804
    %6828 = vmatprep.subr.bf16.mxu0 0
    %6829 = vmatpush1.bf16.msra.mxu0 %v6805
    %6830 = vmatprep.subr.bf16.mxu0 0
    %6831 = vmatpush1.bf16.msra.mxu0 0
    %6832 = vmatprep.subr.bf16.mxu0 0
    %6833 = vmatpush1.bf16.msra.mxu0 0
    %6834 = vmatprep.subr.bf16.mxu0 0
    %6835 = vmatpush1.bf16.msra.mxu0 0
    %6836 = vmatprep.subr.bf16.mxu0 0
    %6837 = vmatpush1.bf16.msra.mxu0 0
    %6838 = vmatprep.subr.bf16.mxu0 0
    %6839 = vmatpush1.bf16.msra.mxu0 0
    %6840 = vmatprep.subr.bf16.mxu0 0
    %6841 = vmatpush1.bf16.msra.mxu0 0
    %6842 = vmatprep.subr.bf16.mxu0 0
    %6843 = vmatpush1.bf16.msra.mxu0 0
    %6844 = vmatprep.subr.bf16.mxu0 0
    %6845 = vmatpush1.bf16.msra.mxu0 0
    %6846 = vmatprep.mubr.bf16.mxu0 0
    %6847 = vmatmul.mubr.bf16.gmra.mrb[0].mxu0 %v6764
    %v6848 = vpop.f32.mrb[0].mxu0
    %v6849 = vadd.f32 0.0, %v6848
    %v6850 = vpop.f32.mrb[0].mxu0
    %v6851 = vpop.f32.mrb[0].mxu0
    %v6852 = vpop.f32.mrb[0].mxu0
    %6853 = vdwg.mxu0
    %v6862 = vunpack.c.l.b16 %v5124
    %v6863 = vunpack.c.l.b16 %v5125
    %v6864 = vunpack.c.l.b16 %v5126
    %v6865 = vunpack.c.l.b16 %v5127
    %v6866 = vunpack.c.l.b16 %v5128
    %v6867 = vunpack.c.l.b16 %v5129
    %v6868 = vunpack.c.l.b16 %v5130
    %v6869 = vunpack.c.l.b16 %v5131
    %v6870 = vsel %vm6750, %v6863, %v6862
    %v6871 = vsel %vm6752, %v6864, %v6870
    %v6872 = vsel %vm6754, %v6865, %v6871
    %v6873 = vsel %vm6756, %v6866, %v6872
    %v6874 = vsel %vm6758, %v6867, %v6873
    %v6875 = vsel %vm6760, %v6868, %v6874
    %v6876 = vsel %vm6762, %v6869, %v6875
    %v6877 = vpack.c.b16 %v6876, %v6876
    %v6895 = vunpack.c.l.b16 %v5132
    %v6896 = vunpack.c.l.b16 %v5133
    %v6897 = vunpack.c.l.b16 %v5134
    %v6898 = vunpack.c.l.b16 %v5135
    %v6899 = vunpack.c.l.b16 %v5136
    %v6900 = vunpack.c.l.b16 %v5137
    %v6901 = vunpack.c.l.b16 %v5138
    %v6902 = vunpack.c.l.b16 %v5139
    %v6903 = vunpack.c.l.b16 %v5140
    %v6904 = vunpack.c.l.b16 %v5141
    %v6905 = vunpack.c.l.b16 %v5142
    %v6906 = vunpack.c.l.b16 %v5143
    %v6907 = vunpack.c.l.b16 %v5144
    %v6908 = vunpack.c.l.b16 %v5145
    %v6909 = vunpack.c.l.b16 %v5146
    %v6910 = vunpack.c.l.b16 %v5147
    %v6911 = vpack.c.b16 %v6896, %v6895
    %v6912 = vpack.c.b16 %v6898, %v6897
    %v6913 = vpack.c.b16 %v6900, %v6899
    %v6914 = vpack.c.b16 %v6902, %v6901
    %v6915 = vpack.c.b16 %v6904, %v6903
    %v6916 = vpack.c.b16 %v6906, %v6905
    %v6917 = vpack.c.b16 %v6908, %v6907
    %v6918 = vpack.c.b16 %v6910, %v6909
    %6927 = vmatprep.subr.bf16.mxu0 0
    %6928 = vmatpush1.bf16.msra.mxu0 %v6911
    %6929 = vmatprep.subr.bf16.mxu0 0
    %6930 = vmatpush1.bf16.msra.mxu0 %v6912
    %6931 = vmatprep.subr.bf16.mxu0 0
    %6932 = vmatpush1.bf16.msra.mxu0 %v6913
    %6933 = vmatprep.subr.bf16.mxu0 0
    %6934 = vmatpush1.bf16.msra.mxu0 %v6914
    %6935 = vmatprep.subr.bf16.mxu0 0
    %6936 = vmatpush1.bf16.msra.mxu0 %v6915
    %6937 = vmatprep.subr.bf16.mxu0 0
    %6938 = vmatpush1.bf16.msra.mxu0 %v6916
    %6939 = vmatprep.subr.bf16.mxu0 0
    %6940 = vmatpush1.bf16.msra.mxu0 %v6917
    %6941 = vmatprep.subr.bf16.mxu0 0
    %6942 = vmatpush1.bf16.msra.mxu0 %v6918
    %6943 = vmatprep.subr.bf16.mxu0 0
    %6944 = vmatpush1.bf16.msra.mxu0 0
    %6945 = vmatprep.subr.bf16.mxu0 0
    %6946 = vmatpush1.bf16.msra.mxu0 0
    %6947 = vmatprep.subr.bf16.mxu0 0
    %6948 = vmatpush1.bf16.msra.mxu0 0
    %6949 = vmatprep.subr.bf16.mxu0 0
    %6950 = vmatpush1.bf16.msra.mxu0 0
    %6951 = vmatprep.subr.bf16.mxu0 0
    %6952 = vmatpush1.bf16.msra.mxu0 0
    %6953 = vmatprep.subr.bf16.mxu0 0
    %6954 = vmatpush1.bf16.msra.mxu0 0
    %6955 = vmatprep.subr.bf16.mxu0 0
    %6956 = vmatpush1.bf16.msra.mxu0 0
    %6957 = vmatprep.subr.bf16.mxu0 0
    %6958 = vmatpush1.bf16.msra.mxu0 0
    %6959 = vmatprep.mubr.bf16.mxu0 0
    %6960 = vmatmul.mubr.bf16.gmra.mrb[0].mxu0 %v6877
    %v6961 = vpop.f32.mrb[0].mxu0
    %v6962 = vadd.f32 %v6849, %v6961
    %v6963 = vpop.f32.mrb[0].mxu0
    %v6964 = vpop.f32.mrb[0].mxu0
    %v6965 = vpop.f32.mrb[0].mxu0
    %6966 = vdwg.mxu0
    %v6967 = vcombine.high %v4667, %v4668
    %v6968 = vcombine.high %v4669, %v4670
    %v6970 = vunpack.c.l.s4 1983009808
    %v6971 = vunpack.c.0.s8 %v6970
    %v6972 = vlaneseq
    %v6973 = vshrl.u32 %v6972, 7
    %v6974 = vsub.s32 %v6971, %v6973
    %v6975 = vrot.slane %v6967, %v6974
    %v6977 = vunpack.c.l.s4 1983009808
    %v6978 = vunpack.c.0.s8 %v6977
    %v6979 = vlaneseq
    %v6980 = vshrl.u32 %v6979, 7
    %v6981 = vsub.s32 %v6978, %v6980
    %v6982 = vrot.slane %v6968, %v6981
    %v6983 = vcombine.low %v6975, %v6982
    %v6984 = vcombine.high %v4671, %v4672
    %v6985 = vcombine.high %v4673, %v4673
    %v6987 = vunpack.c.l.s4 1983009808
    %v6988 = vunpack.c.0.s8 %v6987
    %v6989 = vlaneseq
    %v6990 = vshrl.u32 %v6989, 7
    %v6991 = vsub.s32 %v6988, %v6990
    %v6992 = vrot.slane %v6984, %v6991
    %v6994 = vunpack.c.l.s4 1983009808
    %v6995 = vunpack.c.0.s8 %v6994
    %v6996 = vlaneseq
    %v6997 = vshrl.u32 %v6996, 7
    %v6998 = vsub.s32 %v6995, %v6997
    %v6999 = vrot.slane %v6985, %v6998
    %v7000 = vcombine.low %v6992, %v6999
    %v7001 = vcombine.high %v4674, %v4675
    %v7002 = vcombine.high %v4676, %v4677
    %v7004 = vunpack.c.l.s4 1983009808
    %v7005 = vunpack.c.0.s8 %v7004
    %v7006 = vlaneseq
    %v7007 = vshrl.u32 %v7006, 7
    %v7008 = vsub.s32 %v7005, %v7007
    %v7009 = vrot.slane %v7001, %v7008
    %v7011 = vunpack.c.l.s4 1983009808
    %v7012 = vunpack.c.0.s8 %v7011
    %v7013 = vlaneseq
    %v7014 = vshrl.u32 %v7013, 7
    %v7015 = vsub.s32 %v7012, %v7014
    %v7016 = vrot.slane %v7002, %v7015
    %v7017 = vcombine.low %v7009, %v7016
    %v7018 = vcombine.high %v4678, %v4679
    %v7019 = vcombine.high %v4680, %v4680
    %v7021 = vunpack.c.l.s4 1983009808
    %v7022 = vunpack.c.0.s8 %v7021
    %v7023 = vlaneseq
    %v7024 = vshrl.u32 %v7023, 7
    %v7025 = vsub.s32 %v7022, %v7024
    %v7026 = vrot.slane %v7018, %v7025
    %v7028 = vunpack.c.l.s4 1983009808
    %v7029 = vunpack.c.0.s8 %v7028
    %v7030 = vlaneseq
    %v7031 = vshrl.u32 %v7030, 7
    %v7032 = vsub.s32 %v7029, %v7031
    %v7033 = vrot.slane %v7019, %v7032
    %v7034 = vcombine.low %v7026, %v7033
    %v7035 = vcombine.high %v4681, %v4682
    %v7036 = vcombine.high %v4683, %v4684
    %v7038 = vunpack.c.l.s4 1983009808
    %v7039 = vunpack.c.0.s8 %v7038
    %v7040 = vlaneseq
    %v7041 = vshrl.u32 %v7040, 7
    %v7042 = vsub.s32 %v7039, %v7041
    %v7043 = vrot.slane %v7035, %v7042
    %v7045 = vunpack.c.l.s4 1983009808
    %v7046 = vunpack.c.0.s8 %v7045
    %v7047 = vlaneseq
    %v7048 = vshrl.u32 %v7047, 7
    %v7049 = vsub.s32 %v7046, %v7048
    %v7050 = vrot.slane %v7036, %v7049
    %v7051 = vcombine.low %v7043, %v7050
    %v7052 = vcombine.high %v4685, %v4686
    %v7053 = vcombine.high %v4687, %v4687
    %v7055 = vunpack.c.l.s4 1983009808
    %v7056 = vunpack.c.0.s8 %v7055
    %v7057 = vlaneseq
    %v7058 = vshrl.u32 %v7057, 7
    %v7059 = vsub.s32 %v7056, %v7058
    %v7060 = vrot.slane %v7052, %v7059
    %v7062 = vunpack.c.l.s4 1983009808
    %v7063 = vunpack.c.0.s8 %v7062
    %v7064 = vlaneseq
    %v7065 = vshrl.u32 %v7064, 7
    %v7066 = vsub.s32 %v7063, %v7065
    %v7067 = vrot.slane %v7053, %v7066
    %v7068 = vcombine.low %v7060, %v7067
    %v7069 = vcombine.high %v4688, %v4689
    %v7070 = vcombine.high %v4690, %v4691
    %v7072 = vunpack.c.l.s4 1983009808
    %v7073 = vunpack.c.0.s8 %v7072
    %v7074 = vlaneseq
    %v7075 = vshrl.u32 %v7074, 7
    %v7076 = vsub.s32 %v7073, %v7075
    %v7077 = vrot.slane %v7069, %v7076
    %v7079 = vunpack.c.l.s4 1983009808
    %v7080 = vunpack.c.0.s8 %v7079
    %v7081 = vlaneseq
    %v7082 = vshrl.u32 %v7081, 7
    %v7083 = vsub.s32 %v7080, %v7082
    %v7084 = vrot.slane %v7070, %v7083
    %v7085 = vcombine.low %v7077, %v7084
    %v7086 = vcombine.high %v4692, %v4693
    %v7087 = vcombine.high %v4694, %v4694
    %v7089 = vunpack.c.l.s4 1983009808
    %v7090 = vunpack.c.0.s8 %v7089
    %v7091 = vlaneseq
    %v7092 = vshrl.u32 %v7091, 7
    %v7093 = vsub.s32 %v7090, %v7092
    %v7094 = vrot.slane %v7086, %v7093
    %v7096 = vunpack.c.l.s4 1983009808
    %v7097 = vunpack.c.0.s8 %v7096
    %v7098 = vlaneseq
    %v7099 = vshrl.u32 %v7098, 7
    %v7100 = vsub.s32 %v7097, %v7099
    %v7101 = vrot.slane %v7087, %v7100
    %v7102 = vcombine.low %v7094, %v7101
    %v7103 = vcombine.high %v4695, %v4696
    %v7104 = vcombine.high %v4697, %v4698
    %v7106 = vunpack.c.l.s4 1983009808
    %v7107 = vunpack.c.0.s8 %v7106
    %v7108 = vlaneseq
    %v7109 = vshrl.u32 %v7108, 7
    %v7110 = vsub.s32 %v7107, %v7109
    %v7111 = vrot.slane %v7103, %v7110
    %v7113 = vunpack.c.l.s4 1983009808
    %v7114 = vunpack.c.0.s8 %v7113
    %v7115 = vlaneseq
    %v7116 = vshrl.u32 %v7115, 7
    %v7117 = vsub.s32 %v7114, %v7116
    %v7118 = vrot.slane %v7104, %v7117
    %v7119 = vcombine.low %v7111, %v7118
    %v7120 = vcombine.high %v4699, %v4700
    %v7121 = vcombine.high %v4701, %v4701
    %v7123 = vunpack.c.l.s4 1983009808
    %v7124 = vunpack.c.0.s8 %v7123
    %v7125 = vlaneseq
    %v7126 = vshrl.u32 %v7125, 7
    %v7127 = vsub.s32 %v7124, %v7126
    %v7128 = vrot.slane %v7120, %v7127
    %v7130 = vunpack.c.l.s4 1983009808
    %v7131 = vunpack.c.0.s8 %v7130
    %v7132 = vlaneseq
    %v7133 = vshrl.u32 %v7132, 7
    %v7134 = vsub.s32 %v7131, %v7133
    %v7135 = vrot.slane %v7121, %v7134
    %v7136 = vcombine.low %v7128, %v7135
    %v7137 = vcombine.high %v4702, %v4703
    %v7138 = vcombine.high %v4704, %v4705
    %v7140 = vunpack.c.l.s4 1983009808
    %v7141 = vunpack.c.0.s8 %v7140
    %v7142 = vlaneseq
    %v7143 = vshrl.u32 %v7142, 7
    %v7144 = vsub.s32 %v7141, %v7143
    %v7145 = vrot.slane %v7137, %v7144
    %v7147 = vunpack.c.l.s4 1983009808
    %v7148 = vunpack.c.0.s8 %v7147
    %v7149 = vlaneseq
    %v7150 = vshrl.u32 %v7149, 7
    %v7151 = vsub.s32 %v7148, %v7150
    %v7152 = vrot.slane %v7138, %v7151
    %v7153 = vcombine.low %v7145, %v7152
    %v7154 = vcombine.high %v4706, %v4707
    %v7155 = vcombine.high %v4708, %v4708
    %v7157 = vunpack.c.l.s4 1983009808
    %v7158 = vunpack.c.0.s8 %v7157
    %v7159 = vlaneseq
    %v7160 = vshrl.u32 %v7159, 7
    %v7161 = vsub.s32 %v7158, %v7160
    %v7162 = vrot.slane %v7154, %v7161
    %v7164 = vunpack.c.l.s4 1983009808
    %v7165 = vunpack.c.0.s8 %v7164
    %v7166 = vlaneseq
    %v7167 = vshrl.u32 %v7166, 7
    %v7168 = vsub.s32 %v7165, %v7167
    %v7169 = vrot.slane %v7155, %v7168
    %v7170 = vcombine.low %v7162, %v7169
    %v7171 = vcombine.high %v4709, %v4710
    %v7172 = vcombine.high %v4711, %v4712
    %v7174 = vunpack.c.l.s4 1983009808
    %v7175 = vunpack.c.0.s8 %v7174
    %v7176 = vlaneseq
    %v7177 = vshrl.u32 %v7176, 7
    %v7178 = vsub.s32 %v7175, %v7177
    %v7179 = vrot.slane %v7171, %v7178
    %v7181 = vunpack.c.l.s4 1983009808
    %v7182 = vunpack.c.0.s8 %v7181
    %v7183 = vlaneseq
    %v7184 = vshrl.u32 %v7183, 7
    %v7185 = vsub.s32 %v7182, %v7184
    %v7186 = vrot.slane %v7172, %v7185
    %v7187 = vcombine.low %v7179, %v7186
    %v7188 = vcombine.high %v4713, %v4714
    %v7189 = vcombine.high %v4715, %v4715
    %v7191 = vunpack.c.l.s4 1983009808
    %v7192 = vunpack.c.0.s8 %v7191
    %v7193 = vlaneseq
    %v7194 = vshrl.u32 %v7193, 7
    %v7195 = vsub.s32 %v7192, %v7194
    %v7196 = vrot.slane %v7188, %v7195
    %v7198 = vunpack.c.l.s4 1983009808
    %v7199 = vunpack.c.0.s8 %v7198
    %v7200 = vlaneseq
    %v7201 = vshrl.u32 %v7200, 7
    %v7202 = vsub.s32 %v7199, %v7201
    %v7203 = vrot.slane %v7189, %v7202
    %v7204 = vcombine.low %v7196, %v7203
    %v7205 = vcombine.high %v4716, %v4717
    %v7206 = vcombine.high %v4718, %v4719
    %v7208 = vunpack.c.l.s4 1983009808
    %v7209 = vunpack.c.0.s8 %v7208
    %v7210 = vlaneseq
    %v7211 = vshrl.u32 %v7210, 7
    %v7212 = vsub.s32 %v7209, %v7211
    %v7213 = vrot.slane %v7205, %v7212
    %v7215 = vunpack.c.l.s4 1983009808
    %v7216 = vunpack.c.0.s8 %v7215
    %v7217 = vlaneseq
    %v7218 = vshrl.u32 %v7217, 7
    %v7219 = vsub.s32 %v7216, %v7218
    %v7220 = vrot.slane %v7206, %v7219
    %v7221 = vcombine.low %v7213, %v7220
    %v7222 = vcombine.high %v4720, %v4721
    %v7223 = vcombine.high %v4722, %v4722
    %v7225 = vunpack.c.l.s4 1983009808
    %v7226 = vunpack.c.0.s8 %v7225
    %v7227 = vlaneseq
    %v7228 = vshrl.u32 %v7227, 7
    %v7229 = vsub.s32 %v7226, %v7228
    %v7230 = vrot.slane %v7222, %v7229
    %v7232 = vunpack.c.l.s4 1983009808
    %v7233 = vunpack.c.0.s8 %v7232
    %v7234 = vlaneseq
    %v7235 = vshrl.u32 %v7234, 7
    %v7236 = vsub.s32 %v7233, %v7235
    %v7237 = vrot.slane %v7223, %v7236
    %v7238 = vcombine.low %v7230, %v7237
    %v7255 = vpack.c.bf16 %v7000, %v6983
    %v7256 = vpack.c.bf16 %v7034, %v7017
    %v7257 = vpack.c.bf16 %v7068, %v7051
    %v7258 = vpack.c.bf16 %v7102, %v7085
    %v7259 = vpack.c.bf16 %v7136, %v7119
    %v7260 = vpack.c.bf16 %v7170, %v7153
    %v7261 = vpack.c.bf16 %v7204, %v7187
    %v7262 = vpack.c.bf16 %v7238, %v7221
    %s7263 = scalar_lea.vmem [#allocation5], 192
    %v7264 = vld [vmem:[%s7263] sm:$0xf]
    %v7265 = vld [vmem:[%s7263 + $0x4] sm:$0xf]
    %v7266 = vld [vmem:[%s7263 + $0x8] sm:$0xf]
    %v7267 = vld [vmem:[%s7263 + $0xc] sm:$0xf]
    %v7268 = vld [vmem:[%s7263 + $0x10] sm:$0xf]
    %v7269 = vld [vmem:[%s7263 + $0x14] sm:$0xf]
    %v7270 = vld [vmem:[%s7263 + $0x18] sm:$0xf]
    %v7271 = vld [vmem:[%s7263 + $0x1c] sm:$0xf]
    %v7272 = vld [vmem:[%s7263 + $0x20] sm:$0xf]
    %v7273 = vld [vmem:[%s7263 + $0x24] sm:$0xf]
    %v7274 = vld [vmem:[%s7263 + $0x28] sm:$0xf]
    %v7275 = vld [vmem:[%s7263 + $0x2c] sm:$0xf]
    %v7276 = vld [vmem:[%s7263 + $0x30] sm:$0xf]
    %v7277 = vld [vmem:[%s7263 + $0x34] sm:$0xf]
    %v7278 = vld [vmem:[%s7263 + $0x38] sm:$0xf]
    %v7279 = vld [vmem:[%s7263 + $0x3c] sm:$0xf]
    %s7280 = scalar_lea.vmem [#allocation5], 256
    %v7281 = vld [vmem:[%s7280] sm:$0xf]
    %v7282 = vld [vmem:[%s7280 + $0x4] sm:$0xf]
    %v7283 = vld [vmem:[%s7280 + $0x8] sm:$0xf]
    %v7284 = vld [vmem:[%s7280 + $0xc] sm:$0xf]
    %v7285 = vld [vmem:[%s7280 + $0x10] sm:$0xf]
    %v7286 = vld [vmem:[%s7280 + $0x14] sm:$0xf]
    %v7287 = vld [vmem:[%s7280 + $0x18] sm:$0xf]
    %v7288 = vld [vmem:[%s7280 + $0x1c] sm:$0xf]
    %v7289 = vld [vmem:[%s7280 + $0x20] sm:$0xf]
    %v7290 = vld [vmem:[%s7280 + $0x24] sm:$0xf]
    %v7291 = vld [vmem:[%s7280 + $0x28] sm:$0xf]
    %v7292 = vld [vmem:[%s7280 + $0x2c] sm:$0xf]
    %v7293 = vld [vmem:[%s7280 + $0x30] sm:$0xf]
    %v7294 = vld [vmem:[%s7280 + $0x34] sm:$0xf]
    %v7295 = vld [vmem:[%s7280 + $0x38] sm:$0xf]
    %v7296 = vld [vmem:[%s7280 + $0x3c] sm:$0xf]
    %v7305 = vcombine.high %v7255, %v7255
    %v7307 = vunpack.c.l.s4 1983009808
    %v7308 = vunpack.c.0.s8 %v7307
    %v7309 = vlaneseq
    %v7310 = vshrl.u32 %v7309, 7
    %v7311 = vsub.s32 %v7308, %v7310
    %v7312 = vrot.slane %v7255, %v7311
    %v7314 = vunpack.c.l.s4 1983009808
    %v7315 = vunpack.c.0.s8 %v7314
    %v7316 = vlaneseq
    %v7317 = vshrl.u32 %v7316, 7
    %v7318 = vsub.s32 %v7315, %v7317
    %v7319 = vrot.slane %v7305, %v7318
    %v7320 = vcombine.high %v7312, %v7312
    %v7321 = vcombine.high %v7319, %v7319
    %v7322 = vcombine.high %v7256, %v7256
    %v7324 = vunpack.c.l.s4 1983009808
    %v7325 = vunpack.c.0.s8 %v7324
    %v7326 = vlaneseq
    %v7327 = vshrl.u32 %v7326, 7
    %v7328 = vsub.s32 %v7325, %v7327
    %v7329 = vrot.slane %v7256, %v7328
    %v7331 = vunpack.c.l.s4 1983009808
    %v7332 = vunpack.c.0.s8 %v7331
    %v7333 = vlaneseq
    %v7334 = vshrl.u32 %v7333, 7
    %v7335 = vsub.s32 %v7332, %v7334
    %v7336 = vrot.slane %v7322, %v7335
    %v7337 = vcombine.high %v7329, %v7329
    %v7338 = vcombine.high %v7336, %v7336
    %v7339 = vcombine.high %v7257, %v7257
    %v7341 = vunpack.c.l.s4 1983009808
    %v7342 = vunpack.c.0.s8 %v7341
    %v7343 = vlaneseq
    %v7344 = vshrl.u32 %v7343, 7
    %v7345 = vsub.s32 %v7342, %v7344
    %v7346 = vrot.slane %v7257, %v7345
    %v7348 = vunpack.c.l.s4 1983009808
    %v7349 = vunpack.c.0.s8 %v7348
    %v7350 = vlaneseq
    %v7351 = vshrl.u32 %v7350, 7
    %v7352 = vsub.s32 %v7349, %v7351
    %v7353 = vrot.slane %v7339, %v7352
    %v7354 = vcombine.high %v7346, %v7346
    %v7355 = vcombine.high %v7353, %v7353
    %v7356 = vcombine.high %v7258, %v7258
    %v7358 = vunpack.c.l.s4 1983009808
    %v7359 = vunpack.c.0.s8 %v7358
    %v7360 = vlaneseq
    %v7361 = vshrl.u32 %v7360, 7
    %v7362 = vsub.s32 %v7359, %v7361
    %v7363 = vrot.slane %v7258, %v7362
    %v7365 = vunpack.c.l.s4 1983009808
    %v7366 = vunpack.c.0.s8 %v7365
    %v7367 = vlaneseq
    %v7368 = vshrl.u32 %v7367, 7
    %v7369 = vsub.s32 %v7366, %v7368
    %v7370 = vrot.slane %v7356, %v7369
    %v7371 = vcombine.high %v7363, %v7363
    %v7372 = vcombine.high %v7370, %v7370
    %v7373 = vcombine.high %v7259, %v7259
    %v7375 = vunpack.c.l.s4 1983009808
    %v7376 = vunpack.c.0.s8 %v7375
    %v7377 = vlaneseq
    %v7378 = vshrl.u32 %v7377, 7
    %v7379 = vsub.s32 %v7376, %v7378
    %v7380 = vrot.slane %v7259, %v7379
    %v7382 = vunpack.c.l.s4 1983009808
    %v7383 = vunpack.c.0.s8 %v7382
    %v7384 = vlaneseq
    %v7385 = vshrl.u32 %v7384, 7
    %v7386 = vsub.s32 %v7383, %v7385
    %v7387 = vrot.slane %v7373, %v7386
    %v7388 = vcombine.high %v7380, %v7380
    %v7389 = vcombine.high %v7387, %v7387
    %v7390 = vcombine.high %v7260, %v7260
    %v7392 = vunpack.c.l.s4 1983009808
    %v7393 = vunpack.c.0.s8 %v7392
    %v7394 = vlaneseq
    %v7395 = vshrl.u32 %v7394, 7
    %v7396 = vsub.s32 %v7393, %v7395
    %v7397 = vrot.slane %v7260, %v7396
    %v7399 = vunpack.c.l.s4 1983009808
    %v7400 = vunpack.c.0.s8 %v7399
    %v7401 = vlaneseq
    %v7402 = vshrl.u32 %v7401, 7
    %v7403 = vsub.s32 %v7400, %v7402
    %v7404 = vrot.slane %v7390, %v7403
    %v7405 = vcombine.high %v7397, %v7397
    %v7406 = vcombine.high %v7404, %v7404
    %v7407 = vcombine.high %v7261, %v7261
    %v7409 = vunpack.c.l.s4 1983009808
    %v7410 = vunpack.c.0.s8 %v7409
    %v7411 = vlaneseq
    %v7412 = vshrl.u32 %v7411, 7
    %v7413 = vsub.s32 %v7410, %v7412
    %v7414 = vrot.slane %v7261, %v7413
    %v7416 = vunpack.c.l.s4 1983009808
    %v7417 = vunpack.c.0.s8 %v7416
    %v7418 = vlaneseq
    %v7419 = vshrl.u32 %v7418, 7
    %v7420 = vsub.s32 %v7417, %v7419
    %v7421 = vrot.slane %v7407, %v7420
    %v7422 = vcombine.high %v7414, %v7414
    %v7423 = vcombine.high %v7421, %v7421
    %v7424 = vcombine.high %v7262, %v7262
    %v7426 = vunpack.c.l.s4 1983009808
    %v7427 = vunpack.c.0.s8 %v7426
    %v7428 = vlaneseq
    %v7429 = vshrl.u32 %v7428, 7
    %v7430 = vsub.s32 %v7427, %v7429
    %v7431 = vrot.slane %v7262, %v7430
    %v7433 = vunpack.c.l.s4 1983009808
    %v7434 = vunpack.c.0.s8 %v7433
    %v7435 = vlaneseq
    %v7436 = vshrl.u32 %v7435, 7
    %v7437 = vsub.s32 %v7434, %v7436
    %v7438 = vrot.slane %v7424, %v7437
    %v7439 = vcombine.high %v7431, %v7431
    %v7440 = vcombine.high %v7438, %v7438
    %v7442 = vshrl.u32 %v7312, 16
    %v7444 = vrot.slane %v7442, 6
    %v7445 = vshll.u32 %v7312, 16
    %v7447 = vrot.slane %v7445, 7
    %v7448 = vor.u32 %v7444, %v7447
    %v7449 = vrot.slane %v7448, 2
    %v7451 = vshll.u32 %v7320, 16
    %v7453 = vrot.slane %v7451, 7
    %v7454 = vsel %vm5371, %v7449, %v7453
    %v7455 = vshrl.u32 %v7320, 16
    %v7457 = vrot.slane %v7455, 6
    %v7458 = vor.u32 %v7457, %v7453
    %v7459 = vrot.slane %v7458, 2
    %v7461 = vshll.u32 %v7319, 16
    %v7463 = vrot.slane %v7461, 7
    %v7464 = vsel %vm5371, %v7459, %v7463
    %v7465 = vshrl.u32 %v7319, 16
    %v7467 = vrot.slane %v7465, 6
    %v7468 = vor.u32 %v7467, %v7463
    %v7469 = vrot.slane %v7468, 2
    %v7471 = vshll.u32 %v7321, 16
    %v7473 = vrot.slane %v7471, 7
    %v7474 = vsel %vm5371, %v7469, %v7473
    %v7476 = vshrl.u32 %v7329, 16
    %v7478 = vrot.slane %v7476, 6
    %v7479 = vshll.u32 %v7329, 16
    %v7481 = vrot.slane %v7479, 7
    %v7482 = vor.u32 %v7478, %v7481
    %v7483 = vrot.slane %v7482, 2
    %v7485 = vshll.u32 %v7337, 16
    %v7487 = vrot.slane %v7485, 7
    %v7488 = vsel %vm5371, %v7483, %v7487
    %v7489 = vshrl.u32 %v7337, 16
    %v7491 = vrot.slane %v7489, 6
    %v7492 = vor.u32 %v7491, %v7487
    %v7493 = vrot.slane %v7492, 2
    %v7495 = vshll.u32 %v7336, 16
    %v7497 = vrot.slane %v7495, 7
    %v7498 = vsel %vm5371, %v7493, %v7497
    %v7499 = vshrl.u32 %v7336, 16
    %v7501 = vrot.slane %v7499, 6
    %v7502 = vor.u32 %v7501, %v7497
    %v7503 = vrot.slane %v7502, 2
    %v7505 = vshll.u32 %v7338, 16
    %v7507 = vrot.slane %v7505, 7
    %v7508 = vsel %vm5371, %v7503, %v7507
    %v7510 = vshrl.u32 %v7346, 16
    %v7512 = vrot.slane %v7510, 6
    %v7513 = vshll.u32 %v7346, 16
    %v7515 = vrot.slane %v7513, 7
    %v7516 = vor.u32 %v7512, %v7515
    %v7517 = vrot.slane %v7516, 2
    %v7519 = vshll.u32 %v7354, 16
    %v7521 = vrot.slane %v7519, 7
    %v7522 = vsel %vm5371, %v7517, %v7521
    %v7523 = vshrl.u32 %v7354, 16
    %v7525 = vrot.slane %v7523, 6
    %v7526 = vor.u32 %v7525, %v7521
    %v7527 = vrot.slane %v7526, 2
    %v7529 = vshll.u32 %v7353, 16
    %v7531 = vrot.slane %v7529, 7
    %v7532 = vsel %vm5371, %v7527, %v7531
    %v7533 = vshrl.u32 %v7353, 16
    %v7535 = vrot.slane %v7533, 6
    %v7536 = vor.u32 %v7535, %v7531
    %v7537 = vrot.slane %v7536, 2
    %v7539 = vshll.u32 %v7355, 16
    %v7541 = vrot.slane %v7539, 7
    %v7542 = vsel %vm5371, %v7537, %v7541
    %v7544 = vshrl.u32 %v7363, 16
    %v7546 = vrot.slane %v7544, 6
    %v7547 = vshll.u32 %v7363, 16
    %v7549 = vrot.slane %v7547, 7
    %v7550 = vor.u32 %v7546, %v7549
    %v7551 = vrot.slane %v7550, 2
    %v7553 = vshll.u32 %v7371, 16
    %v7555 = vrot.slane %v7553, 7
    %v7556 = vsel %vm5371, %v7551, %v7555
    %v7557 = vshrl.u32 %v7371, 16
    %v7559 = vrot.slane %v7557, 6
    %v7560 = vor.u32 %v7559, %v7555
    %v7561 = vrot.slane %v7560, 2
    %v7563 = vshll.u32 %v7370, 16
    %v7565 = vrot.slane %v7563, 7
    %v7566 = vsel %vm5371, %v7561, %v7565
    %v7567 = vshrl.u32 %v7370, 16
    %v7569 = vrot.slane %v7567, 6
    %v7570 = vor.u32 %v7569, %v7565
    %v7571 = vrot.slane %v7570, 2
    %v7573 = vshll.u32 %v7372, 16
    %v7575 = vrot.slane %v7573, 7
    %v7576 = vsel %vm5371, %v7571, %v7575
    %v7578 = vshrl.u32 %v7380, 16
    %v7580 = vrot.slane %v7578, 6
    %v7581 = vshll.u32 %v7380, 16
    %v7583 = vrot.slane %v7581, 7
    %v7584 = vor.u32 %v7580, %v7583
    %v7585 = vrot.slane %v7584, 2
    %v7587 = vshll.u32 %v7388, 16
    %v7589 = vrot.slane %v7587, 7
    %v7590 = vsel %vm5371, %v7585, %v7589
    %v7591 = vshrl.u32 %v7388, 16
    %v7593 = vrot.slane %v7591, 6
    %v7594 = vor.u32 %v7593, %v7589
    %v7595 = vrot.slane %v7594, 2
    %v7597 = vshll.u32 %v7387, 16
    %v7599 = vrot.slane %v7597, 7
    %v7600 = vsel %vm5371, %v7595, %v7599
    %v7601 = vshrl.u32 %v7387, 16
    %v7603 = vrot.slane %v7601, 6
    %v7604 = vor.u32 %v7603, %v7599
    %v7605 = vrot.slane %v7604, 2
    %v7607 = vshll.u32 %v7389, 16
    %v7609 = vrot.slane %v7607, 7
    %v7610 = vsel %vm5371, %v7605, %v7609
    %v7612 = vshrl.u32 %v7397, 16
    %v7614 = vrot.slane %v7612, 6
    %v7615 = vshll.u32 %v7397, 16
    %v7617 = vrot.slane %v7615, 7
    %v7618 = vor.u32 %v7614, %v7617
    %v7619 = vrot.slane %v7618, 2
    %v7621 = vshll.u32 %v7405, 16
    %v7623 = vrot.slane %v7621, 7
    %v7624 = vsel %vm5371, %v7619, %v7623
    %v7625 = vshrl.u32 %v7405, 16
    %v7627 = vrot.slane %v7625, 6
    %v7628 = vor.u32 %v7627, %v7623
    %v7629 = vrot.slane %v7628, 2
    %v7631 = vshll.u32 %v7404, 16
    %v7633 = vrot.slane %v7631, 7
    %v7634 = vsel %vm5371, %v7629, %v7633
    %v7635 = vshrl.u32 %v7404, 16
    %v7637 = vrot.slane %v7635, 6
    %v7638 = vor.u32 %v7637, %v7633
    %v7639 = vrot.slane %v7638, 2
    %v7641 = vshll.u32 %v7406, 16
    %v7643 = vrot.slane %v7641, 7
    %v7644 = vsel %vm5371, %v7639, %v7643
    %v7646 = vshrl.u32 %v7414, 16
    %v7648 = vrot.slane %v7646, 6
    %v7649 = vshll.u32 %v7414, 16
    %v7651 = vrot.slane %v7649, 7
    %v7652 = vor.u32 %v7648, %v7651
    %v7653 = vrot.slane %v7652, 2
    %v7655 = vshll.u32 %v7422, 16
    %v7657 = vrot.slane %v7655, 7
    %v7658 = vsel %vm5371, %v7653, %v7657
    %v7659 = vshrl.u32 %v7422, 16
    %v7661 = vrot.slane %v7659, 6
    %v7662 = vor.u32 %v7661, %v7657
    %v7663 = vrot.slane %v7662, 2
    %v7665 = vshll.u32 %v7421, 16
    %v7667 = vrot.slane %v7665, 7
    %v7668 = vsel %vm5371, %v7663, %v7667
    %v7669 = vshrl.u32 %v7421, 16
    %v7671 = vrot.slane %v7669, 6
    %v7672 = vor.u32 %v7671, %v7667
    %v7673 = vrot.slane %v7672, 2
    %v7675 = vshll.u32 %v7423, 16
    %v7677 = vrot.slane %v7675, 7
    %v7678 = vsel %vm5371, %v7673, %v7677
    %v7680 = vshrl.u32 %v7431, 16
    %v7682 = vrot.slane %v7680, 6
    %v7683 = vshll.u32 %v7431, 16
    %v7685 = vrot.slane %v7683, 7
    %v7686 = vor.u32 %v7682, %v7685
    %v7687 = vrot.slane %v7686, 2
    %v7689 = vshll.u32 %v7439, 16
    %v7691 = vrot.slane %v7689, 7
    %v7692 = vsel %vm5371, %v7687, %v7691
    %v7693 = vshrl.u32 %v7439, 16
    %v7695 = vrot.slane %v7693, 6
    %v7696 = vor.u32 %v7695, %v7691
    %v7697 = vrot.slane %v7696, 2
    %v7699 = vshll.u32 %v7438, 16
    %v7701 = vrot.slane %v7699, 7
    %v7702 = vsel %vm5371, %v7697, %v7701
    %v7703 = vshrl.u32 %v7438, 16
    %v7705 = vrot.slane %v7703, 6
    %v7706 = vor.u32 %v7705, %v7701
    %v7707 = vrot.slane %v7706, 2
    %v7709 = vshll.u32 %v7440, 16
    %v7711 = vrot.slane %v7709, 7
    %v7712 = vsel %vm5371, %v7707, %v7711
    %v7713 = vcombine.low %v7454, %v7464
    %v7714 = vcombine.low %v7474, %v7488
    %v7716 = vunpack.c.l.s4 1983009808
    %v7717 = vunpack.c.0.s8 %v7716
    %v7718 = vlaneseq
    %v7719 = vshrl.u32 %v7718, 7
    %v7720 = vsub.s32 %v7717, %v7719
    %v7721 = vrot.slane %v7713, %v7720
    %v7723 = vunpack.c.l.s4 1983009808
    %v7724 = vunpack.c.0.s8 %v7723
    %v7725 = vlaneseq
    %v7726 = vshrl.u32 %v7725, 7
    %v7727 = vsub.s32 %v7724, %v7726
    %v7728 = vrot.slane %v7714, %v7727
    %v7729 = vcombine.low %v7721, %v7728
    %v7730 = vcombine.low %v7498, %v7508
    %v7731 = vcombine.low %v7522, %v7532
    %v7733 = vunpack.c.l.s4 1983009808
    %v7734 = vunpack.c.0.s8 %v7733
    %v7735 = vlaneseq
    %v7736 = vshrl.u32 %v7735, 7
    %v7737 = vsub.s32 %v7734, %v7736
    %v7738 = vrot.slane %v7730, %v7737
    %v7740 = vunpack.c.l.s4 1983009808
    %v7741 = vunpack.c.0.s8 %v7740
    %v7742 = vlaneseq
    %v7743 = vshrl.u32 %v7742, 7
    %v7744 = vsub.s32 %v7741, %v7743
    %v7745 = vrot.slane %v7731, %v7744
    %v7746 = vcombine.low %v7738, %v7745
    %v7747 = vcombine.low %v7542, %v7556
    %v7748 = vcombine.low %v7566, %v7576
    %v7750 = vunpack.c.l.s4 1983009808
    %v7751 = vunpack.c.0.s8 %v7750
    %v7752 = vlaneseq
    %v7753 = vshrl.u32 %v7752, 7
    %v7754 = vsub.s32 %v7751, %v7753
    %v7755 = vrot.slane %v7747, %v7754
    %v7757 = vunpack.c.l.s4 1983009808
    %v7758 = vunpack.c.0.s8 %v7757
    %v7759 = vlaneseq
    %v7760 = vshrl.u32 %v7759, 7
    %v7761 = vsub.s32 %v7758, %v7760
    %v7762 = vrot.slane %v7748, %v7761
    %v7763 = vcombine.low %v7755, %v7762
    %v7764 = vcombine.low %v7590, %v7600
    %v7765 = vcombine.low %v7610, %v7624
    %v7767 = vunpack.c.l.s4 1983009808
    %v7768 = vunpack.c.0.s8 %v7767
    %v7769 = vlaneseq
    %v7770 = vshrl.u32 %v7769, 7
    %v7771 = vsub.s32 %v7768, %v7770
    %v7772 = vrot.slane %v7764, %v7771
    %v7774 = vunpack.c.l.s4 1983009808
    %v7775 = vunpack.c.0.s8 %v7774
    %v7776 = vlaneseq
    %v7777 = vshrl.u32 %v7776, 7
    %v7778 = vsub.s32 %v7775, %v7777
    %v7779 = vrot.slane %v7765, %v7778
    %v7780 = vcombine.low %v7772, %v7779
    %v7781 = vcombine.low %v7634, %v7644
    %v7782 = vcombine.low %v7658, %v7668
    %v7784 = vunpack.c.l.s4 1983009808
    %v7785 = vunpack.c.0.s8 %v7784
    %v7786 = vlaneseq
    %v7787 = vshrl.u32 %v7786, 7
    %v7788 = vsub.s32 %v7785, %v7787
    %v7789 = vrot.slane %v7781, %v7788
    %v7791 = vunpack.c.l.s4 1983009808
    %v7792 = vunpack.c.0.s8 %v7791
    %v7793 = vlaneseq
    %v7794 = vshrl.u32 %v7793, 7
    %v7795 = vsub.s32 %v7792, %v7794
    %v7796 = vrot.slane %v7782, %v7795
    %v7797 = vcombine.low %v7789, %v7796
    %v7798 = vcombine.low %v7678, %v7692
    %v7799 = vcombine.low %v7702, %v7712
    %v7801 = vunpack.c.l.s4 1983009808
    %v7802 = vunpack.c.0.s8 %v7801
    %v7803 = vlaneseq
    %v7804 = vshrl.u32 %v7803, 7
    %v7805 = vsub.s32 %v7802, %v7804
    %v7806 = vrot.slane %v7798, %v7805
    %v7808 = vunpack.c.l.s4 1983009808
    %v7809 = vunpack.c.0.s8 %v7808
    %v7810 = vlaneseq
    %v7811 = vshrl.u32 %v7810, 7
    %v7812 = vsub.s32 %v7809, %v7811
    %v7813 = vrot.slane %v7799, %v7812
    %v7814 = vcombine.low %v7806, %v7813
    %v7837 = vunpack.c.l.b16 %v7281
    %v7838 = vunpack.c.l.b16 %v7282
    %v7839 = vunpack.c.l.b16 %v7283
    %v7840 = vunpack.c.l.b16 %v7284
    %v7841 = vunpack.c.l.b16 %v7285
    %v7842 = vunpack.c.l.b16 %v7286
    %v7843 = vunpack.c.l.b16 %v7287
    %v7844 = vunpack.c.l.b16 %v7288
    %v7845 = vunpack.c.l.b16 %v7289
    %v7846 = vunpack.c.l.b16 %v7290
    %v7847 = vunpack.c.l.b16 %v7291
    %v7848 = vunpack.c.l.b16 %v7292
    %v7849 = vunpack.c.l.b16 %v7293
    %v7850 = vunpack.c.l.b16 %v7294
    %v7851 = vunpack.c.l.b16 %v7295
    %v7852 = vunpack.c.l.b16 %v7296
    %v7853 = vpack.c.b16 %v7838, %v7837
    %v7854 = vpack.c.b16 %v7840, %v7839
    %v7855 = vpack.c.b16 %v7842, %v7841
    %v7856 = vpack.c.b16 %v7844, %v7843
    %v7857 = vpack.c.b16 %v7846, %v7845
    %v7858 = vpack.c.b16 %v7848, %v7847
    %v7859 = vpack.c.b16 %v7850, %v7849
    %v7860 = vpack.c.b16 %v7852, %v7851
    %7869 = vmatprep.subr.bf16.mxu0 0
    %7870 = vmatpush1.bf16.msra.mxu0 %v7853
    %7871 = vmatprep.subr.bf16.mxu0 0
    %7872 = vmatpush1.bf16.msra.mxu0 %v7854
    %7873 = vmatprep.subr.bf16.mxu0 0
    %7874 = vmatpush1.bf16.msra.mxu0 %v7855
    %7875 = vmatprep.subr.bf16.mxu0 0
    %7876 = vmatpush1.bf16.msra.mxu0 %v7856
    %7877 = vmatprep.subr.bf16.mxu0 0
    %7878 = vmatpush1.bf16.msra.mxu0 %v7857
    %7879 = vmatprep.subr.bf16.mxu0 0
    %7880 = vmatpush1.bf16.msra.mxu0 %v7858
    %7881 = vmatprep.subr.bf16.mxu0 0
    %7882 = vmatpush1.bf16.msra.mxu0 %v7859
    %7883 = vmatprep.subr.bf16.mxu0 0
    %7884 = vmatpush1.bf16.msra.mxu0 %v7860
    %7885 = vmatprep.subr.bf16.mxu0 0
    %7886 = vmatpush1.bf16.msra.mxu0 0
    %7887 = vmatprep.subr.bf16.mxu0 0
    %7888 = vmatpush1.bf16.msra.mxu0 0
    %7889 = vmatprep.subr.bf16.mxu0 0
    %7890 = vmatpush1.bf16.msra.mxu0 0
    %7891 = vmatprep.subr.bf16.mxu0 0
    %7892 = vmatpush1.bf16.msra.mxu0 0
    %7893 = vmatprep.subr.bf16.mxu0 0
    %7894 = vmatpush1.bf16.msra.mxu0 0
    %7895 = vmatprep.subr.bf16.mxu0 0
    %7896 = vmatpush1.bf16.msra.mxu0 0
    %7897 = vmatprep.subr.bf16.mxu0 0
    %7898 = vmatpush1.bf16.msra.mxu0 0
    %7899 = vmatprep.subr.bf16.mxu0 0
    %7900 = vmatpush1.bf16.msra.mxu0 0
    %7901 = vmatprep.mubr.bf16.mxu0 0
    %7902 = vmatmul.mubr.bf16.gmra.mrb[0].mxu0 %v7729
    %v7903 = vpop.f32.mrb[0].mxu0
    %v7904 = vadd.f32 0.0, %v7903
    %v7905 = vpop.f32.mrb[0].mxu0
    %v7906 = vpop.f32.mrb[0].mxu0
    %v7907 = vadd.f32 0.0, %v7906
    %v7908 = vpop.f32.mrb[0].mxu0
    %7909 = vmatprep.mubr.bf16.mxu0 0
    %7910 = vmatmul.mubr.bf16.gmra.mrb[0].mxu0 %v7746
    %v7911 = vpop.f32.mrb[0].mxu0
    %v7912 = vadd.f32 0.0, %v7911
    %v7913 = vpop.f32.mrb[0].mxu0
    %v7914 = vpop.f32.mrb[0].mxu0
    %v7915 = vadd.f32 0.0, %v7914
    %v7916 = vpop.f32.mrb[0].mxu0
    %7917 = vmatprep.mubr.bf16.mxu0 0
    %7918 = vmatmul.mubr.bf16.gmra.mrb[0].mxu0 %v7763
    %v7919 = vpop.f32.mrb[0].mxu0
    %v7920 = vadd.f32 0.0, %v7919
    %v7921 = vpop.f32.mrb[0].mxu0
    %v7922 = vpop.f32.mrb[0].mxu0
    %v7923 = vadd.f32 0.0, %v7922
    %v7924 = vpop.f32.mrb[0].mxu0
    %7925 = vmatprep.mubr.bf16.mxu0 0
    %7926 = vmatmul.mubr.bf16.gmra.mrb[0].mxu0 %v7780
    %v7927 = vpop.f32.mrb[0].mxu0
    %v7928 = vadd.f32 0.0, %v7927
    %v7929 = vpop.f32.mrb[0].mxu0
    %v7930 = vpop.f32.mrb[0].mxu0
    %v7931 = vadd.f32 0.0, %v7930
    %v7932 = vpop.f32.mrb[0].mxu0
    %7933 = vmatprep.mubr.bf16.mxu0 0
    %7934 = vmatmul.mubr.bf16.gmra.mrb[0].mxu0 %v7797
    %v7935 = vpop.f32.mrb[0].mxu0
    %v7936 = vadd.f32 0.0, %v7935
    %v7937 = vpop.f32.mrb[0].mxu0
    %v7938 = vpop.f32.mrb[0].mxu0
    %v7939 = vadd.f32 0.0, %v7938
    %v7940 = vpop.f32.mrb[0].mxu0
    %7941 = vmatprep.mubr.bf16.mxu0 0
    %7942 = vmatmul.mubr.bf16.gmra.mrb[0].mxu0 %v7814
    %v7943 = vpop.f32.mrb[0].mxu0
    %v7944 = vadd.f32 0.0, %v7943
    %v7945 = vpop.f32.mrb[0].mxu0
    %v7946 = vpop.f32.mrb[0].mxu0
    %v7947 = vadd.f32 0.0, %v7946
    %v7948 = vpop.f32.mrb[0].mxu0
    %7949 = vdwg.mxu0
    %v7950 = vcombine.low %v7312, %v7320
    %v7951 = vcombine.low %v7319, %v7329
    %v7953 = vunpack.c.l.s4 1983009808
    %v7954 = vunpack.c.0.s8 %v7953
    %v7955 = vlaneseq
    %v7956 = vshrl.u32 %v7955, 7
    %v7957 = vsub.s32 %v7954, %v7956
    %v7958 = vrot.slane %v7950, %v7957
    %v7960 = vunpack.c.l.s4 1983009808
    %v7961 = vunpack.c.0.s8 %v7960
    %v7962 = vlaneseq
    %v7963 = vshrl.u32 %v7962, 7
    %v7964 = vsub.s32 %v7961, %v7963
    %v7965 = vrot.slane %v7951, %v7964
    %v7966 = vcombine.low %v7958, %v7965
    %v7967 = vcombine.low %v7337, %v7336
    %v7968 = vcombine.low %v7346, %v7354
    %v7970 = vunpack.c.l.s4 1983009808
    %v7971 = vunpack.c.0.s8 %v7970
    %v7972 = vlaneseq
    %v7973 = vshrl.u32 %v7972, 7
    %v7974 = vsub.s32 %v7971, %v7973
    %v7975 = vrot.slane %v7967, %v7974
    %v7977 = vunpack.c.l.s4 1983009808
    %v7978 = vunpack.c.0.s8 %v7977
    %v7979 = vlaneseq
    %v7980 = vshrl.u32 %v7979, 7
    %v7981 = vsub.s32 %v7978, %v7980
    %v7982 = vrot.slane %v7968, %v7981
    %v7983 = vcombine.low %v7975, %v7982
    %v7984 = vcombine.low %v7353, %v7363
    %v7985 = vcombine.low %v7371, %v7370
    %v7987 = vunpack.c.l.s4 1983009808
    %v7988 = vunpack.c.0.s8 %v7987
    %v7989 = vlaneseq
    %v7990 = vshrl.u32 %v7989, 7
    %v7991 = vsub.s32 %v7988, %v7990
    %v7992 = vrot.slane %v7984, %v7991
    %v7994 = vunpack.c.l.s4 1983009808
    %v7995 = vunpack.c.0.s8 %v7994
    %v7996 = vlaneseq
    %v7997 = vshrl.u32 %v7996, 7
    %v7998 = vsub.s32 %v7995, %v7997
    %v7999 = vrot.slane %v7985, %v7998
    %v8000 = vcombine.low %v7992, %v7999
    %v8001 = vcombine.low %v7380, %v7388
    %v8002 = vcombine.low %v7387, %v7397
    %v8004 = vunpack.c.l.s4 1983009808
    %v8005 = vunpack.c.0.s8 %v8004
    %v8006 = vlaneseq
    %v8007 = vshrl.u32 %v8006, 7
    %v8008 = vsub.s32 %v8005, %v8007
    %v8009 = vrot.slane %v8001, %v8008
    %v8011 = vunpack.c.l.s4 1983009808
    %v8012 = vunpack.c.0.s8 %v8011
    %v8013 = vlaneseq
    %v8014 = vshrl.u32 %v8013, 7
    %v8015 = vsub.s32 %v8012, %v8014
    %v8016 = vrot.slane %v8002, %v8015
    %v8017 = vcombine.low %v8009, %v8016
    %v8018 = vcombine.low %v7405, %v7404
    %v8019 = vcombine.low %v7414, %v7422
    %v8021 = vunpack.c.l.s4 1983009808
    %v8022 = vunpack.c.0.s8 %v8021
    %v8023 = vlaneseq
    %v8024 = vshrl.u32 %v8023, 7
    %v8025 = vsub.s32 %v8022, %v8024
    %v8026 = vrot.slane %v8018, %v8025
    %v8028 = vunpack.c.l.s4 1983009808
    %v8029 = vunpack.c.0.s8 %v8028
    %v8030 = vlaneseq
    %v8031 = vshrl.u32 %v8030, 7
    %v8032 = vsub.s32 %v8029, %v8031
    %v8033 = vrot.slane %v8019, %v8032
    %v8034 = vcombine.low %v8026, %v8033
    %v8035 = vcombine.low %v7421, %v7431
    %v8036 = vcombine.low %v7439, %v7438
    %v8038 = vunpack.c.l.s4 1983009808
    %v8039 = vunpack.c.0.s8 %v8038
    %v8040 = vlaneseq
    %v8041 = vshrl.u32 %v8040, 7
    %v8042 = vsub.s32 %v8039, %v8041
    %v8043 = vrot.slane %v8035, %v8042
    %v8045 = vunpack.c.l.s4 1983009808
    %v8046 = vunpack.c.0.s8 %v8045
    %v8047 = vlaneseq
    %v8048 = vshrl.u32 %v8047, 7
    %v8049 = vsub.s32 %v8046, %v8048
    %v8050 = vrot.slane %v8036, %v8049
    %v8051 = vcombine.low %v8043, %v8050
    %v8074 = vunpack.c.l.b16 %v7264
    %v8075 = vunpack.c.l.b16 %v7265
    %v8076 = vunpack.c.l.b16 %v7266
    %v8077 = vunpack.c.l.b16 %v7267
    %v8078 = vunpack.c.l.b16 %v7268
    %v8079 = vunpack.c.l.b16 %v7269
    %v8080 = vunpack.c.l.b16 %v7270
    %v8081 = vunpack.c.l.b16 %v7271
    %v8082 = vunpack.c.l.b16 %v7272
    %v8083 = vunpack.c.l.b16 %v7273
    %v8084 = vunpack.c.l.b16 %v7274
    %v8085 = vunpack.c.l.b16 %v7275
    %v8086 = vunpack.c.l.b16 %v7276
    %v8087 = vunpack.c.l.b16 %v7277
    %v8088 = vunpack.c.l.b16 %v7278
    %v8089 = vunpack.c.l.b16 %v7279
    %v8090 = vpack.c.b16 %v8075, %v8074
    %v8091 = vpack.c.b16 %v8077, %v8076
    %v8092 = vpack.c.b16 %v8079, %v8078
    %v8093 = vpack.c.b16 %v8081, %v8080
    %v8094 = vpack.c.b16 %v8083, %v8082
    %v8095 = vpack.c.b16 %v8085, %v8084
    %v8096 = vpack.c.b16 %v8087, %v8086
    %v8097 = vpack.c.b16 %v8089, %v8088
    %8106 = vmatprep.subr.bf16.mxu0 0
    %8107 = vmatpush1.bf16.msra.mxu0 %v8090
    %8108 = vmatprep.subr.bf16.mxu0 0
    %8109 = vmatpush1.bf16.msra.mxu0 %v8091
    %8110 = vmatprep.subr.bf16.mxu0 0
    %8111 = vmatpush1.bf16.msra.mxu0 %v8092
    %8112 = vmatprep.subr.bf16.mxu0 0
    %8113 = vmatpush1.bf16.msra.mxu0 %v8093
    %8114 = vmatprep.subr.bf16.mxu0 0
    %8115 = vmatpush1.bf16.msra.mxu0 %v8094
    %8116 = vmatprep.subr.bf16.mxu0 0
    %8117 = vmatpush1.bf16.msra.mxu0 %v8095
    %8118 = vmatprep.subr.bf16.mxu0 0
    %8119 = vmatpush1.bf16.msra.mxu0 %v8096
    %8120 = vmatprep.subr.bf16.mxu0 0
    %8121 = vmatpush1.bf16.msra.mxu0 %v8097
    %8122 = vmatprep.subr.bf16.mxu0 0
    %8123 = vmatpush1.bf16.msra.mxu0 0
    %8124 = vmatprep.subr.bf16.mxu0 0
    %8125 = vmatpush1.bf16.msra.mxu0 0
    %8126 = vmatprep.subr.bf16.mxu0 0
    %8127 = vmatpush1.bf16.msra.mxu0 0
    %8128 = vmatprep.subr.bf16.mxu0 0
    %8129 = vmatpush1.bf16.msra.mxu0 0
    %8130 = vmatprep.subr.bf16.mxu0 0
    %8131 = vmatpush1.bf16.msra.mxu0 0
    %8132 = vmatprep.subr.bf16.mxu0 0
    %8133 = vmatpush1.bf16.msra.mxu0 0
    %8134 = vmatprep.subr.bf16.mxu0 0
    %8135 = vmatpush1.bf16.msra.mxu0 0
    %8136 = vmatprep.subr.bf16.mxu0 0
    %8137 = vmatpush1.bf16.msra.mxu0 0
    %8138 = vmatprep.mubr.bf16.mxu0 0
    %8139 = vmatmul.mubr.bf16.gmra.mrb[0].mxu0 %v7966
    %v8140 = vpop.f32.mrb[0].mxu0
    %v8141 = vadd.f32 %v7904, %v8140
    %v8142 = vpop.f32.mrb[0].mxu0
    %v8143 = vpop.f32.mrb[0].mxu0
    %v8144 = vadd.f32 %v7907, %v8143
    %v8145 = vpop.f32.mrb[0].mxu0
    %8146 = vmatprep.mubr.bf16.mxu0 0
    %8147 = vmatmul.mubr.bf16.gmra.mrb[0].mxu0 %v7983
    %v8148 = vpop.f32.mrb[0].mxu0
    %v8149 = vadd.f32 %v7912, %v8148
    %v8150 = vpop.f32.mrb[0].mxu0
    %v8151 = vpop.f32.mrb[0].mxu0
    %v8152 = vadd.f32 %v7915, %v8151
    %v8153 = vpop.f32.mrb[0].mxu0
    %8154 = vmatprep.mubr.bf16.mxu0 0
    %8155 = vmatmul.mubr.bf16.gmra.mrb[0].mxu0 %v8000
    %v8156 = vpop.f32.mrb[0].mxu0
    %v8157 = vadd.f32 %v7920, %v8156
    %v8158 = vpop.f32.mrb[0].mxu0
    %v8159 = vpop.f32.mrb[0].mxu0
    %v8160 = vadd.f32 %v7923, %v8159
    %v8161 = vpop.f32.mrb[0].mxu0
    %8162 = vmatprep.mubr.bf16.mxu0 0
    %8163 = vmatmul.mubr.bf16.gmra.mrb[0].mxu0 %v8017
    %v8164 = vpop.f32.mrb[0].mxu0
    %v8165 = vadd.f32 %v7928, %v8164
    %v8166 = vpop.f32.mrb[0].mxu0
    %v8167 = vpop.f32.mrb[0].mxu0
    %v8168 = vadd.f32 %v7931, %v8167
    %v8169 = vpop.f32.mrb[0].mxu0
    %8170 = vmatprep.mubr.bf16.mxu0 0
    %8171 = vmatmul.mubr.bf16.gmra.mrb[0].mxu0 %v8034
    %v8172 = vpop.f32.mrb[0].mxu0
    %v8173 = vadd.f32 %v7936, %v8172
    %v8174 = vpop.f32.mrb[0].mxu0
    %v8175 = vpop.f32.mrb[0].mxu0
    %v8176 = vadd.f32 %v7939, %v8175
    %v8177 = vpop.f32.mrb[0].mxu0
    %8178 = vmatprep.mubr.bf16.mxu0 0
    %8179 = vmatmul.mubr.bf16.gmra.mrb[0].mxu0 %v8051
    %v8180 = vpop.f32.mrb[0].mxu0
    %v8181 = vadd.f32 %v7944, %v8180
    %v8182 = vpop.f32.mrb[0].mxu0
    %v8183 = vpop.f32.mrb[0].mxu0
    %v8184 = vadd.f32 %v7947, %v8183
    %v8185 = vpop.f32.mrb[0].mxu0
    %8186 = vdwg.mxu0
    %v8199 = vcombine.high %v8141, %v8141
    %v8200 = vcombine.high %v8144, %v8144
    %v8201 = vcombine.high %v8149, %v8149
    %v8202 = vcombine.high %v8152, %v8152
    %v8203 = vcombine.high %v8157, %v8157
    %v8204 = vcombine.high %v8160, %v8160
    %v8205 = vcombine.high %v8165, %v8165
    %v8206 = vcombine.high %v8168, %v8168
    %v8207 = vcombine.high %v8173, %v8173
    %v8208 = vcombine.high %v8176, %v8176
    %v8209 = vcombine.high %v8181, %v8181
    %v8210 = vcombine.high %v8184, %v8184
    %s8223 = scalar_lea.vmem [#allocation5], 320
    %v8224 = vld [vmem:[%s8223] sm:$0xf]
    %v8225 = vld [vmem:[%s8223 + $0x4] sm:$0xf]
    %v8226 = vld [vmem:[%s8223 + $0x8] sm:$0xf]
    %v8227 = vld [vmem:[%s8223 + $0xc] sm:$0xf]
    %v8228 = vld [vmem:[%s8223 + $0x10] sm:$0xf]
    %v8229 = vld [vmem:[%s8223 + $0x14] sm:$0xf]
    %v8230 = vld [vmem:[%s8223 + $0x18] sm:$0xf]
    %v8231 = vld [vmem:[%s8223 + $0x1c] sm:$0xf]
    %v8232 = vld [vmem:[%s8223 + $0x20] sm:$0xf]
    %v8233 = vld [vmem:[%s8223 + $0x24] sm:$0xf]
    %v8234 = vld [vmem:[%s8223 + $0x28] sm:$0xf]
    %v8235 = vld [vmem:[%s8223 + $0x2c] sm:$0xf]
    %v8236 = vld [vmem:[%s8223 + $0x30] sm:$0xf]
    %v8237 = vld [vmem:[%s8223 + $0x34] sm:$0xf]
    %v8238 = vld [vmem:[%s8223 + $0x38] sm:$0xf]
    %v8239 = vld [vmem:[%s8223 + $0x3c] sm:$0xf]
    %v8240 = vrot.slane %v7312, 7
    %v8241 = vrot.slane %v8240, 2
    %v8242 = vrot.slane %v7320, 7
    %v8243 = vsel %vm6177, %v8241, %v8242
    %v8244 = vrot.slane %v8242, 2
    %v8245 = vrot.slane %v7319, 7
    %v8246 = vsel %vm6177, %v8244, %v8245
    %v8247 = vrot.slane %v8245, 2
    %v8248 = vrot.slane %v7321, 7
    %v8249 = vsel %vm6177, %v8247, %v8248
    %v8250 = vrot.slane %v7329, 7
    %v8251 = vrot.slane %v8250, 2
    %v8252 = vrot.slane %v7337, 7
    %v8253 = vsel %vm6177, %v8251, %v8252
    %v8254 = vrot.slane %v8252, 2
    %v8255 = vrot.slane %v7336, 7
    %v8256 = vsel %vm6177, %v8254, %v8255
    %v8257 = vrot.slane %v8255, 2
    %v8258 = vrot.slane %v7338, 7
    %v8259 = vsel %vm6177, %v8257, %v8258
    %v8260 = vrot.slane %v7346, 7
    %v8261 = vrot.slane %v8260, 2
    %v8262 = vrot.slane %v7354, 7
    %v8263 = vsel %vm6177, %v8261, %v8262
    %v8264 = vrot.slane %v8262, 2
    %v8265 = vrot.slane %v7353, 7
    %v8266 = vsel %vm6177, %v8264, %v8265
    %v8267 = vrot.slane %v8265, 2
    %v8268 = vrot.slane %v7355, 7
    %v8269 = vsel %vm6177, %v8267, %v8268
    %v8270 = vrot.slane %v7363, 7
    %v8271 = vrot.slane %v8270, 2
    %v8272 = vrot.slane %v7371, 7
    %v8273 = vsel %vm6177, %v8271, %v8272
    %v8274 = vrot.slane %v8272, 2
    %v8275 = vrot.slane %v7370, 7
    %v8276 = vsel %vm6177, %v8274, %v8275
    %v8277 = vrot.slane %v8275, 2
    %v8278 = vrot.slane %v7372, 7
    %v8279 = vsel %vm6177, %v8277, %v8278
    %v8280 = vrot.slane %v7380, 7
    %v8281 = vrot.slane %v8280, 2
    %v8282 = vrot.slane %v7388, 7
    %v8283 = vsel %vm6177, %v8281, %v8282
    %v8284 = vrot.slane %v8282, 2
    %v8285 = vrot.slane %v7387, 7
    %v8286 = vsel %vm6177, %v8284, %v8285
    %v8287 = vrot.slane %v8285, 2
    %v8288 = vrot.slane %v7389, 7
    %v8289 = vsel %vm6177, %v8287, %v8288
    %v8290 = vrot.slane %v7397, 7
    %v8291 = vrot.slane %v8290, 2
    %v8292 = vrot.slane %v7405, 7
    %v8293 = vsel %vm6177, %v8291, %v8292
    %v8294 = vrot.slane %v8292, 2
    %v8295 = vrot.slane %v7404, 7
    %v8296 = vsel %vm6177, %v8294, %v8295
    %v8297 = vrot.slane %v8295, 2
    %v8298 = vrot.slane %v7406, 7
    %v8299 = vsel %vm6177, %v8297, %v8298
    %v8300 = vrot.slane %v7414, 7
    %v8301 = vrot.slane %v8300, 2
    %v8302 = vrot.slane %v7422, 7
    %v8303 = vsel %vm6177, %v8301, %v8302
    %v8304 = vrot.slane %v8302, 2
    %v8305 = vrot.slane %v7421, 7
    %v8306 = vsel %vm6177, %v8304, %v8305
    %v8307 = vrot.slane %v8305, 2
    %v8308 = vrot.slane %v7423, 7
    %v8309 = vsel %vm6177, %v8307, %v8308
    %v8310 = vrot.slane %v7431, 7
    %v8311 = vrot.slane %v8310, 2
    %v8312 = vrot.slane %v7439, 7
    %v8313 = vsel %vm6177, %v8311, %v8312
    %v8314 = vrot.slane %v8312, 2
    %v8315 = vrot.slane %v7438, 7
    %v8316 = vsel %vm6177, %v8314, %v8315
    %v8317 = vrot.slane %v8315, 2
    %v8318 = vrot.slane %v7440, 7
    %v8319 = vsel %vm6177, %v8317, %v8318
    %v8320 = vcombine.low %v8243, %v8246
    %v8321 = vcombine.low %v8249, %v8253
    %v8323 = vunpack.c.l.s4 1983009808
    %v8324 = vunpack.c.0.s8 %v8323
    %v8325 = vlaneseq
    %v8326 = vshrl.u32 %v8325, 7
    %v8327 = vsub.s32 %v8324, %v8326
    %v8328 = vrot.slane %v8320, %v8327
    %v8330 = vunpack.c.l.s4 1983009808
    %v8331 = vunpack.c.0.s8 %v8330
    %v8332 = vlaneseq
    %v8333 = vshrl.u32 %v8332, 7
    %v8334 = vsub.s32 %v8331, %v8333
    %v8335 = vrot.slane %v8321, %v8334
    %v8336 = vcombine.low %v8328, %v8335
    %v8337 = vcombine.low %v8256, %v8259
    %v8338 = vcombine.low %v8263, %v8266
    %v8340 = vunpack.c.l.s4 1983009808
    %v8341 = vunpack.c.0.s8 %v8340
    %v8342 = vlaneseq
    %v8343 = vshrl.u32 %v8342, 7
    %v8344 = vsub.s32 %v8341, %v8343
    %v8345 = vrot.slane %v8337, %v8344
    %v8347 = vunpack.c.l.s4 1983009808
    %v8348 = vunpack.c.0.s8 %v8347
    %v8349 = vlaneseq
    %v8350 = vshrl.u32 %v8349, 7
    %v8351 = vsub.s32 %v8348, %v8350
    %v8352 = vrot.slane %v8338, %v8351
    %v8353 = vcombine.low %v8345, %v8352
    %v8354 = vcombine.low %v8269, %v8273
    %v8355 = vcombine.low %v8276, %v8279
    %v8357 = vunpack.c.l.s4 1983009808
    %v8358 = vunpack.c.0.s8 %v8357
    %v8359 = vlaneseq
    %v8360 = vshrl.u32 %v8359, 7
    %v8361 = vsub.s32 %v8358, %v8360
    %v8362 = vrot.slane %v8354, %v8361
    %v8364 = vunpack.c.l.s4 1983009808
    %v8365 = vunpack.c.0.s8 %v8364
    %v8366 = vlaneseq
    %v8367 = vshrl.u32 %v8366, 7
    %v8368 = vsub.s32 %v8365, %v8367
    %v8369 = vrot.slane %v8355, %v8368
    %v8370 = vcombine.low %v8362, %v8369
    %v8371 = vcombine.low %v8283, %v8286
    %v8372 = vcombine.low %v8289, %v8293
    %v8374 = vunpack.c.l.s4 1983009808
    %v8375 = vunpack.c.0.s8 %v8374
    %v8376 = vlaneseq
    %v8377 = vshrl.u32 %v8376, 7
    %v8378 = vsub.s32 %v8375, %v8377
    %v8379 = vrot.slane %v8371, %v8378
    %v8381 = vunpack.c.l.s4 1983009808
    %v8382 = vunpack.c.0.s8 %v8381
    %v8383 = vlaneseq
    %v8384 = vshrl.u32 %v8383, 7
    %v8385 = vsub.s32 %v8382, %v8384
    %v8386 = vrot.slane %v8372, %v8385
    %v8387 = vcombine.low %v8379, %v8386
    %v8388 = vcombine.low %v8296, %v8299
    %v8389 = vcombine.low %v8303, %v8306
    %v8391 = vunpack.c.l.s4 1983009808
    %v8392 = vunpack.c.0.s8 %v8391
    %v8393 = vlaneseq
    %v8394 = vshrl.u32 %v8393, 7
    %v8395 = vsub.s32 %v8392, %v8394
    %v8396 = vrot.slane %v8388, %v8395
    %v8398 = vunpack.c.l.s4 1983009808
    %v8399 = vunpack.c.0.s8 %v8398
    %v8400 = vlaneseq
    %v8401 = vshrl.u32 %v8400, 7
    %v8402 = vsub.s32 %v8399, %v8401
    %v8403 = vrot.slane %v8389, %v8402
    %v8404 = vcombine.low %v8396, %v8403
    %v8405 = vcombine.low %v8309, %v8313
    %v8406 = vcombine.low %v8316, %v8319
    %v8408 = vunpack.c.l.s4 1983009808
    %v8409 = vunpack.c.0.s8 %v8408
    %v8410 = vlaneseq
    %v8411 = vshrl.u32 %v8410, 7
    %v8412 = vsub.s32 %v8409, %v8411
    %v8413 = vrot.slane %v8405, %v8412
    %v8415 = vunpack.c.l.s4 1983009808
    %v8416 = vunpack.c.0.s8 %v8415
    %v8417 = vlaneseq
    %v8418 = vshrl.u32 %v8417, 7
    %v8419 = vsub.s32 %v8416, %v8418
    %v8420 = vrot.slane %v8406, %v8419
    %v8421 = vcombine.low %v8413, %v8420
    %v8444 = vunpack.c.l.b16 %v8224
    %v8445 = vunpack.c.l.b16 %v8225
    %v8446 = vunpack.c.l.b16 %v8226
    %v8447 = vunpack.c.l.b16 %v8227
    %v8448 = vunpack.c.l.b16 %v8228
    %v8449 = vunpack.c.l.b16 %v8229
    %v8450 = vunpack.c.l.b16 %v8230
    %v8451 = vunpack.c.l.b16 %v8231
    %v8452 = vunpack.c.l.b16 %v8232
    %v8453 = vunpack.c.l.b16 %v8233
    %v8454 = vunpack.c.l.b16 %v8234
    %v8455 = vunpack.c.l.b16 %v8235
    %v8456 = vunpack.c.l.b16 %v8236
    %v8457 = vunpack.c.l.b16 %v8237
    %v8458 = vunpack.c.l.b16 %v8238
    %v8459 = vunpack.c.l.b16 %v8239
    %v8460 = vpack.c.b16 %v8445, %v8444
    %v8461 = vpack.c.b16 %v8447, %v8446
    %v8462 = vpack.c.b16 %v8449, %v8448
    %v8463 = vpack.c.b16 %v8451, %v8450
    %v8464 = vpack.c.b16 %v8453, %v8452
    %v8465 = vpack.c.b16 %v8455, %v8454
    %v8466 = vpack.c.b16 %v8457, %v8456
    %v8467 = vpack.c.b16 %v8459, %v8458
    %8476 = vmatprep.subr.bf16.mxu0 0
    %8477 = vmatpush1.bf16.msra.mxu0 %v8460
    %8478 = vmatprep.subr.bf16.mxu0 0
    %8479 = vmatpush1.bf16.msra.mxu0 %v8461
    %8480 = vmatprep.subr.bf16.mxu0 0
    %8481 = vmatpush1.bf16.msra.mxu0 %v8462
    %8482 = vmatprep.subr.bf16.mxu0 0
    %8483 = vmatpush1.bf16.msra.mxu0 %v8463
    %8484 = vmatprep.subr.bf16.mxu0 0
    %8485 = vmatpush1.bf16.msra.mxu0 %v8464
    %8486 = vmatprep.subr.bf16.mxu0 0
    %8487 = vmatpush1.bf16.msra.mxu0 %v8465
    %8488 = vmatprep.subr.bf16.mxu0 0
    %8489 = vmatpush1.bf16.msra.mxu0 %v8466
    %8490 = vmatprep.subr.bf16.mxu0 0
    %8491 = vmatpush1.bf16.msra.mxu0 %v8467
    %8492 = vmatprep.subr.bf16.mxu0 0
    %8493 = vmatpush1.bf16.msra.mxu0 0
    %8494 = vmatprep.subr.bf16.mxu0 0
    %8495 = vmatpush1.bf16.msra.mxu0 0
    %8496 = vmatprep.subr.bf16.mxu0 0
    %8497 = vmatpush1.bf16.msra.mxu0 0
    %8498 = vmatprep.subr.bf16.mxu0 0
    %8499 = vmatpush1.bf16.msra.mxu0 0
    %8500 = vmatprep.subr.bf16.mxu0 0
    %8501 = vmatpush1.bf16.msra.mxu0 0
    %8502 = vmatprep.subr.bf16.mxu0 0
    %8503 = vmatpush1.bf16.msra.mxu0 0
    %8504 = vmatprep.subr.bf16.mxu0 0
    %8505 = vmatpush1.bf16.msra.mxu0 0
    %8506 = vmatprep.subr.bf16.mxu0 0
    %8507 = vmatpush1.bf16.msra.mxu0 0
    %8508 = vmatprep.mubr.bf16.mxu0 0
    %8509 = vmatmul.mubr.bf16.gmra.mrb[0].mxu0 %v8336
    %v8510 = vpop.f32.mrb[0].mxu0
    %v8511 = vadd.f32 0.0, %v8510
    %v8512 = vpop.f32.mrb[0].mxu0
    %v8513 = vpop.f32.mrb[0].mxu0
    %v8514 = vadd.f32 0.0, %v8513
    %v8515 = vpop.f32.mrb[0].mxu0
    %8516 = vmatprep.mubr.bf16.mxu0 0
    %8517 = vmatmul.mubr.bf16.gmra.mrb[0].mxu0 %v8353
    %v8518 = vpop.f32.mrb[0].mxu0
    %v8519 = vadd.f32 0.0, %v8518
    %v8520 = vpop.f32.mrb[0].mxu0
    %v8521 = vpop.f32.mrb[0].mxu0
    %v8522 = vadd.f32 0.0, %v8521
    %v8523 = vpop.f32.mrb[0].mxu0
    %8524 = vmatprep.mubr.bf16.mxu0 0
    %8525 = vmatmul.mubr.bf16.gmra.mrb[0].mxu0 %v8370
    %v8526 = vpop.f32.mrb[0].mxu0
    %v8527 = vadd.f32 0.0, %v8526
    %v8528 = vpop.f32.mrb[0].mxu0
    %v8529 = vpop.f32.mrb[0].mxu0
    %v8530 = vadd.f32 0.0, %v8529
    %v8531 = vpop.f32.mrb[0].mxu0
    %8532 = vmatprep.mubr.bf16.mxu0 0
    %8533 = vmatmul.mubr.bf16.gmra.mrb[0].mxu0 %v8387
    %v8534 = vpop.f32.mrb[0].mxu0
    %v8535 = vadd.f32 0.0, %v8534
    %v8536 = vpop.f32.mrb[0].mxu0
    %v8537 = vpop.f32.mrb[0].mxu0
    %v8538 = vadd.f32 0.0, %v8537
    %v8539 = vpop.f32.mrb[0].mxu0
    %8540 = vmatprep.mubr.bf16.mxu0 0
    %8541 = vmatmul.mubr.bf16.gmra.mrb[0].mxu0 %v8404
    %v8542 = vpop.f32.mrb[0].mxu0
    %v8543 = vadd.f32 0.0, %v8542
    %v8544 = vpop.f32.mrb[0].mxu0
    %v8545 = vpop.f32.mrb[0].mxu0
    %v8546 = vadd.f32 0.0, %v8545
    %v8547 = vpop.f32.mrb[0].mxu0
    %8548 = vmatprep.mubr.bf16.mxu0 0
    %8549 = vmatmul.mubr.bf16.gmra.mrb[0].mxu0 %v8421
    %v8550 = vpop.f32.mrb[0].mxu0
    %v8551 = vadd.f32 0.0, %v8550
    %v8552 = vpop.f32.mrb[0].mxu0
    %v8553 = vpop.f32.mrb[0].mxu0
    %v8554 = vadd.f32 0.0, %v8553
    %v8555 = vpop.f32.mrb[0].mxu0
    %8556 = vdwg.mxu0
    %v8569 = vcombine.high %v8511, %v8511
    %v8570 = vcombine.high %v8514, %v8514
    %v8571 = vcombine.high %v8519, %v8519
    %v8572 = vcombine.high %v8522, %v8522
    %v8573 = vcombine.high %v8527, %v8527
    %v8574 = vcombine.high %v8530, %v8530
    %v8575 = vcombine.high %v8535, %v8535
    %v8576 = vcombine.high %v8538, %v8538
    %v8577 = vcombine.high %v8543, %v8543
    %v8578 = vcombine.high %v8546, %v8546
    %v8579 = vcombine.high %v8551, %v8551
    %v8580 = vcombine.high %v8554, %v8554
    %v8593 = vadd.f32 %v8141, %v8511
    %v8594 = vadd.f32 %v8199, %v8569
    %v8595 = vadd.f32 %v8144, %v8514
    %v8596 = vadd.f32 %v8200, %v8570
    %v8597 = vadd.f32 %v8149, %v8519
    %v8598 = vadd.f32 %v8201, %v8571
    %v8599 = vadd.f32 %v8152, %v8522
    %v8600 = vadd.f32 %v8202, %v8572
    %v8601 = vadd.f32 %v8157, %v8527
    %v8602 = vadd.f32 %v8203, %v8573
    %v8603 = vadd.f32 %v8160, %v8530
    %v8604 = vadd.f32 %v8204, %v8574
    %v8605 = vadd.f32 %v8165, %v8535
    %v8606 = vadd.f32 %v8205, %v8575
    %v8607 = vadd.f32 %v8168, %v8538
    %v8608 = vadd.f32 %v8206, %v8576
    %v8609 = vadd.f32 %v8173, %v8543
    %v8610 = vadd.f32 %v8207, %v8577
    %v8611 = vadd.f32 %v8176, %v8546
    %v8612 = vadd.f32 %v8208, %v8578
    %v8613 = vadd.f32 %v8181, %v8551
    %v8614 = vadd.f32 %v8209, %v8579
    %v8615 = vadd.f32 %v8184, %v8554
    %v8616 = vadd.f32 %v8210, %v8580
    %s8617 = scalar_lea.vmem %s5, 1
    %v8618 = vld [vmem:[%s8617] sm:$0x1]
    %v8620 = vlaneseq
    %v8621 = vshrl.u32 %v8620, 7
    %v8622 = vsub.s32 0, %v8621
    %v8623 = vrot.slane %v8618, %v8622
    %v8625 = vcombine.high %v8623, %v8623
    %v8627 = vadd.f32 %v8593, %v8623
    %v8628 = vadd.f32 %v8594, %v8625
    %v8629 = vadd.f32 %v8595, %v8623
    %v8630 = vadd.f32 %v8596, %v8623
    %v8631 = vadd.f32 %v8597, %v8625
    %v8632 = vadd.f32 %v8598, %v8623
    %v8633 = vadd.f32 %v8599, %v8623
    %v8634 = vadd.f32 %v8600, %v8625
    %v8635 = vadd.f32 %v8601, %v8623
    %v8636 = vadd.f32 %v8602, %v8623
    %v8637 = vadd.f32 %v8603, %v8625
    %v8638 = vadd.f32 %v8604, %v8623
    %v8639 = vadd.f32 %v8605, %v8623
    %v8640 = vadd.f32 %v8606, %v8625
    %v8641 = vadd.f32 %v8607, %v8623
    %v8642 = vadd.f32 %v8608, %v8623
    %v8643 = vadd.f32 %v8609, %v8625
    %v8644 = vadd.f32 %v8610, %v8623
    %v8645 = vadd.f32 %v8611, %v8623
    %v8646 = vadd.f32 %v8612, %v8625
    %v8647 = vadd.f32 %v8613, %v8623
    %v8648 = vadd.f32 %v8614, %v8623
    %v8649 = vadd.f32 %v8615, %v8625
    %v8650 = vadd.f32 %v8616, %v8623
    %v8651 = vmax.f32 %v8627, 0.0
    %v8652 = vmax.f32 %v8628, 0.0
    %v8653 = vmax.f32 %v8629, 0.0
    %v8654 = vmax.f32 %v8630, 0.0
    %v8655 = vmax.f32 %v8631, 0.0
    %v8656 = vmax.f32 %v8632, 0.0
    %v8657 = vmax.f32 %v8633, 0.0
    %v8658 = vmax.f32 %v8634, 0.0
    %v8659 = vmax.f32 %v8635, 0.0
    %v8660 = vmax.f32 %v8636, 0.0
    %v8661 = vmax.f32 %v8637, 0.0
    %v8662 = vmax.f32 %v8638, 0.0
    %v8663 = vmax.f32 %v8639, 0.0
    %v8664 = vmax.f32 %v8640, 0.0
    %v8665 = vmax.f32 %v8641, 0.0
    %v8666 = vmax.f32 %v8642, 0.0
    %v8667 = vmax.f32 %v8643, 0.0
    %v8668 = vmax.f32 %v8644, 0.0
    %v8669 = vmax.f32 %v8645, 0.0
    %v8670 = vmax.f32 %v8646, 0.0
    %v8671 = vmax.f32 %v8647, 0.0
    %v8672 = vmax.f32 %v8648, 0.0
    %v8673 = vmax.f32 %v8649, 0.0
    %v8674 = vmax.f32 %v8650, 0.0
    %v8691 = vcombine.low %v8651, %v8652
    %v8692 = vcombine.low %v8654, %v8655
    %v8693 = vcombine.low %v8657, %v8658
    %v8694 = vcombine.low %v8660, %v8661
    %v8695 = vcombine.low %v8663, %v8664
    %v8696 = vcombine.low %v8666, %v8667
    %v8697 = vcombine.low %v8669, %v8670
    %v8698 = vcombine.low %v8672, %v8673
    %v8707 = vpack.c.bf16 %v8653, %v8691
    %v8708 = vpack.c.bf16 %v8656, %v8692
    %v8709 = vpack.c.bf16 %v8659, %v8693
    %v8710 = vpack.c.bf16 %v8662, %v8694
    %v8711 = vpack.c.bf16 %v8665, %v8695
    %v8712 = vpack.c.bf16 %v8668, %v8696
    %v8713 = vpack.c.bf16 %v8671, %v8697
    %v8714 = vpack.c.bf16 %v8674, %v8698
    %s8715 = scalar_lea.vmem [#allocation5], 384
    %v8716 = vld [vmem:[%s8715] sm:$0xf]
    %v8717 = vld [vmem:[%s8715 + $0x4] sm:$0xf]
    %v8718 = vld [vmem:[%s8715 + $0x8] sm:$0xf]
    %v8719 = vld [vmem:[%s8715 + $0xc] sm:$0xf]
    %v8720 = vld [vmem:[%s8715 + $0x10] sm:$0xf]
    %v8721 = vld [vmem:[%s8715 + $0x14] sm:$0xf]
    %v8722 = vld [vmem:[%s8715 + $0x18] sm:$0xf]
    %v8723 = vld [vmem:[%s8715 + $0x1c] sm:$0xf]
    %v8724 = vld [vmem:[%s8715 + $0x20] sm:$0xf]
    %v8725 = vld [vmem:[%s8715 + $0x24] sm:$0xf]
    %v8726 = vld [vmem:[%s8715 + $0x28] sm:$0xf]
    %v8727 = vld [vmem:[%s8715 + $0x2c] sm:$0xf]
    %v8728 = vld [vmem:[%s8715 + $0x30] sm:$0xf]
    %v8729 = vld [vmem:[%s8715 + $0x34] sm:$0xf]
    %v8730 = vld [vmem:[%s8715 + $0x38] sm:$0xf]
    %v8731 = vld [vmem:[%s8715 + $0x3c] sm:$0xf]
    %s8732 = scalar_lea.vmem [#allocation5], 448
    %v8733 = vld [vmem:[%s8732] sm:$0xf]
    %v8734 = vld [vmem:[%s8732 + $0x4] sm:$0xf]
    %v8735 = vld [vmem:[%s8732 + $0x8] sm:$0xf]
    %v8736 = vld [vmem:[%s8732 + $0xc] sm:$0xf]
    %v8737 = vld [vmem:[%s8732 + $0x10] sm:$0xf]
    %v8738 = vld [vmem:[%s8732 + $0x14] sm:$0xf]
    %v8739 = vld [vmem:[%s8732 + $0x18] sm:$0xf]
    %v8740 = vld [vmem:[%s8732 + $0x1c] sm:$0xf]
    %v8741 = vld [vmem:[%s8732 + $0x20] sm:$0xf]
    %v8742 = vld [vmem:[%s8732 + $0x24] sm:$0xf]
    %v8743 = vld [vmem:[%s8732 + $0x28] sm:$0xf]
    %v8744 = vld [vmem:[%s8732 + $0x2c] sm:$0xf]
    %v8745 = vld [vmem:[%s8732 + $0x30] sm:$0xf]
    %v8746 = vld [vmem:[%s8732 + $0x34] sm:$0xf]
    %v8747 = vld [vmem:[%s8732 + $0x38] sm:$0xf]
    %v8748 = vld [vmem:[%s8732 + $0x3c] sm:$0xf]
    %v8757 = vcombine.high %v8707, %v8707
    %v8759 = vunpack.c.l.s4 1966171168
    %v8760 = vunpack.c.0.s8 %v8759
    %v8761 = vlaneseq
    %v8762 = vshrl.u32 %v8761, 7
    %v8763 = vsub.s32 %v8760, %v8762
    %v8764 = vrot.slane %v8707, %v8763
    %v8766 = vunpack.c.l.s4 1966171168
    %v8767 = vunpack.c.0.s8 %v8766
    %v8768 = vlaneseq
    %v8769 = vshrl.u32 %v8768, 7
    %v8770 = vsub.s32 %v8767, %v8769
    %v8771 = vrot.slane %v8757, %v8770
    %v8772 = vcombine.high %v8764, %v8764
    %v8773 = vcombine.high %v8771, %v8771
    %v8775 = vunpack.c.l.s4 1966171168
    %v8776 = vunpack.c.0.s8 %v8775
    %v8777 = vlaneseq
    %v8778 = vshrl.u32 %v8777, 7
    %v8779 = vsub.s32 %v8776, %v8778
    %v8780 = vrot.slane %v8764, %v8779
    %v8782 = vunpack.c.l.s4 1966171168
    %v8783 = vunpack.c.0.s8 %v8782
    %v8784 = vlaneseq
    %v8785 = vshrl.u32 %v8784, 7
    %v8786 = vsub.s32 %v8783, %v8785
    %v8787 = vrot.slane %v8771, %v8786
    %v8789 = vunpack.c.l.s4 1966171168
    %v8790 = vunpack.c.0.s8 %v8789
    %v8791 = vlaneseq
    %v8792 = vshrl.u32 %v8791, 7
    %v8793 = vsub.s32 %v8790, %v8792
    %v8794 = vrot.slane %v8772, %v8793
    %v8796 = vunpack.c.l.s4 1966171168
    %v8797 = vunpack.c.0.s8 %v8796
    %v8798 = vlaneseq
    %v8799 = vshrl.u32 %v8798, 7
    %v8800 = vsub.s32 %v8797, %v8799
    %v8801 = vrot.slane %v8773, %v8800
    %v8802 = vcombine.high %v8780, %v8780
    %v8803 = vcombine.high %v8794, %v8794
    %v8804 = vcombine.high %v8708, %v8708
    %v8806 = vunpack.c.l.s4 1966171168
    %v8807 = vunpack.c.0.s8 %v8806
    %v8808 = vlaneseq
    %v8809 = vshrl.u32 %v8808, 7
    %v8810 = vsub.s32 %v8807, %v8809
    %v8811 = vrot.slane %v8708, %v8810
    %v8813 = vunpack.c.l.s4 1966171168
    %v8814 = vunpack.c.0.s8 %v8813
    %v8815 = vlaneseq
    %v8816 = vshrl.u32 %v8815, 7
    %v8817 = vsub.s32 %v8814, %v8816
    %v8818 = vrot.slane %v8804, %v8817
    %v8819 = vcombine.high %v8811, %v8811
    %v8820 = vcombine.high %v8818, %v8818
    %v8822 = vunpack.c.l.s4 1966171168
    %v8823 = vunpack.c.0.s8 %v8822
    %v8824 = vlaneseq
    %v8825 = vshrl.u32 %v8824, 7
    %v8826 = vsub.s32 %v8823, %v8825
    %v8827 = vrot.slane %v8811, %v8826
    %v8829 = vunpack.c.l.s4 1966171168
    %v8830 = vunpack.c.0.s8 %v8829
    %v8831 = vlaneseq
    %v8832 = vshrl.u32 %v8831, 7
    %v8833 = vsub.s32 %v8830, %v8832
    %v8834 = vrot.slane %v8818, %v8833
    %v8836 = vunpack.c.l.s4 1966171168
    %v8837 = vunpack.c.0.s8 %v8836
    %v8838 = vlaneseq
    %v8839 = vshrl.u32 %v8838, 7
    %v8840 = vsub.s32 %v8837, %v8839
    %v8841 = vrot.slane %v8819, %v8840
    %v8843 = vunpack.c.l.s4 1966171168
    %v8844 = vunpack.c.0.s8 %v8843
    %v8845 = vlaneseq
    %v8846 = vshrl.u32 %v8845, 7
    %v8847 = vsub.s32 %v8844, %v8846
    %v8848 = vrot.slane %v8820, %v8847
    %v8849 = vcombine.high %v8827, %v8827
    %v8850 = vcombine.high %v8841, %v8841
    %v8851 = vcombine.high %v8709, %v8709
    %v8853 = vunpack.c.l.s4 1966171168
    %v8854 = vunpack.c.0.s8 %v8853
    %v8855 = vlaneseq
    %v8856 = vshrl.u32 %v8855, 7
    %v8857 = vsub.s32 %v8854, %v8856
    %v8858 = vrot.slane %v8709, %v8857
    %v8860 = vunpack.c.l.s4 1966171168
    %v8861 = vunpack.c.0.s8 %v8860
    %v8862 = vlaneseq
    %v8863 = vshrl.u32 %v8862, 7
    %v8864 = vsub.s32 %v8861, %v8863
    %v8865 = vrot.slane %v8851, %v8864
    %v8866 = vcombine.high %v8858, %v8858
    %v8867 = vcombine.high %v8865, %v8865
    %v8869 = vunpack.c.l.s4 1966171168
    %v8870 = vunpack.c.0.s8 %v8869
    %v8871 = vlaneseq
    %v8872 = vshrl.u32 %v8871, 7
    %v8873 = vsub.s32 %v8870, %v8872
    %v8874 = vrot.slane %v8858, %v8873
    %v8876 = vunpack.c.l.s4 1966171168
    %v8877 = vunpack.c.0.s8 %v8876
    %v8878 = vlaneseq
    %v8879 = vshrl.u32 %v8878, 7
    %v8880 = vsub.s32 %v8877, %v8879
    %v8881 = vrot.slane %v8865, %v8880
    %v8883 = vunpack.c.l.s4 1966171168
    %v8884 = vunpack.c.0.s8 %v8883
    %v8885 = vlaneseq
    %v8886 = vshrl.u32 %v8885, 7
    %v8887 = vsub.s32 %v8884, %v8886
    %v8888 = vrot.slane %v8866, %v8887
    %v8890 = vunpack.c.l.s4 1966171168
    %v8891 = vunpack.c.0.s8 %v8890
    %v8892 = vlaneseq
    %v8893 = vshrl.u32 %v8892, 7
    %v8894 = vsub.s32 %v8891, %v8893
    %v8895 = vrot.slane %v8867, %v8894
    %v8896 = vcombine.high %v8874, %v8874
    %v8897 = vcombine.high %v8888, %v8888
    %v8898 = vcombine.high %v8710, %v8710
    %v8900 = vunpack.c.l.s4 1966171168
    %v8901 = vunpack.c.0.s8 %v8900
    %v8902 = vlaneseq
    %v8903 = vshrl.u32 %v8902, 7
    %v8904 = vsub.s32 %v8901, %v8903
    %v8905 = vrot.slane %v8710, %v8904
    %v8907 = vunpack.c.l.s4 1966171168
    %v8908 = vunpack.c.0.s8 %v8907
    %v8909 = vlaneseq
    %v8910 = vshrl.u32 %v8909, 7
    %v8911 = vsub.s32 %v8908, %v8910
    %v8912 = vrot.slane %v8898, %v8911
    %v8913 = vcombine.high %v8905, %v8905
    %v8914 = vcombine.high %v8912, %v8912
    %v8916 = vunpack.c.l.s4 1966171168
    %v8917 = vunpack.c.0.s8 %v8916
    %v8918 = vlaneseq
    %v8919 = vshrl.u32 %v8918, 7
    %v8920 = vsub.s32 %v8917, %v8919
    %v8921 = vrot.slane %v8905, %v8920
    %v8923 = vunpack.c.l.s4 1966171168
    %v8924 = vunpack.c.0.s8 %v8923
    %v8925 = vlaneseq
    %v8926 = vshrl.u32 %v8925, 7
    %v8927 = vsub.s32 %v8924, %v8926
    %v8928 = vrot.slane %v8912, %v8927
    %v8930 = vunpack.c.l.s4 1966171168
    %v8931 = vunpack.c.0.s8 %v8930
    %v8932 = vlaneseq
    %v8933 = vshrl.u32 %v8932, 7
    %v8934 = vsub.s32 %v8931, %v8933
    %v8935 = vrot.slane %v8913, %v8934
    %v8937 = vunpack.c.l.s4 1966171168
    %v8938 = vunpack.c.0.s8 %v8937
    %v8939 = vlaneseq
    %v8940 = vshrl.u32 %v8939, 7
    %v8941 = vsub.s32 %v8938, %v8940
    %v8942 = vrot.slane %v8914, %v8941
    %v8943 = vcombine.high %v8921, %v8921
    %v8944 = vcombine.high %v8935, %v8935
    %v8945 = vcombine.high %v8711, %v8711
    %v8947 = vunpack.c.l.s4 1966171168
    %v8948 = vunpack.c.0.s8 %v8947
    %v8949 = vlaneseq
    %v8950 = vshrl.u32 %v8949, 7
    %v8951 = vsub.s32 %v8948, %v8950
    %v8952 = vrot.slane %v8711, %v8951
    %v8954 = vunpack.c.l.s4 1966171168
    %v8955 = vunpack.c.0.s8 %v8954
    %v8956 = vlaneseq
    %v8957 = vshrl.u32 %v8956, 7
    %v8958 = vsub.s32 %v8955, %v8957
    %v8959 = vrot.slane %v8945, %v8958
    %v8960 = vcombine.high %v8952, %v8952
    %v8961 = vcombine.high %v8959, %v8959
    %v8963 = vunpack.c.l.s4 1966171168
    %v8964 = vunpack.c.0.s8 %v8963
    %v8965 = vlaneseq
    %v8966 = vshrl.u32 %v8965, 7
    %v8967 = vsub.s32 %v8964, %v8966
    %v8968 = vrot.slane %v8952, %v8967
    %v8970 = vunpack.c.l.s4 1966171168
    %v8971 = vunpack.c.0.s8 %v8970
    %v8972 = vlaneseq
    %v8973 = vshrl.u32 %v8972, 7
    %v8974 = vsub.s32 %v8971, %v8973
    %v8975 = vrot.slane %v8959, %v8974
    %v8977 = vunpack.c.l.s4 1966171168
    %v8978 = vunpack.c.0.s8 %v8977
    %v8979 = vlaneseq
    %v8980 = vshrl.u32 %v8979, 7
    %v8981 = vsub.s32 %v8978, %v8980
    %v8982 = vrot.slane %v8960, %v8981
    %v8984 = vunpack.c.l.s4 1966171168
    %v8985 = vunpack.c.0.s8 %v8984
    %v8986 = vlaneseq
    %v8987 = vshrl.u32 %v8986, 7
    %v8988 = vsub.s32 %v8985, %v8987
    %v8989 = vrot.slane %v8961, %v8988
    %v8990 = vcombine.high %v8968, %v8968
    %v8991 = vcombine.high %v8982, %v8982
    %v8992 = vcombine.high %v8712, %v8712
    %v8994 = vunpack.c.l.s4 1966171168
    %v8995 = vunpack.c.0.s8 %v8994
    %v8996 = vlaneseq
    %v8997 = vshrl.u32 %v8996, 7
    %v8998 = vsub.s32 %v8995, %v8997
    %v8999 = vrot.slane %v8712, %v8998
    %v9001 = vunpack.c.l.s4 1966171168
    %v9002 = vunpack.c.0.s8 %v9001
    %v9003 = vlaneseq
    %v9004 = vshrl.u32 %v9003, 7
    %v9005 = vsub.s32 %v9002, %v9004
    %v9006 = vrot.slane %v8992, %v9005
    %v9007 = vcombine.high %v8999, %v8999
    %v9008 = vcombine.high %v9006, %v9006
    %v9010 = vunpack.c.l.s4 1966171168
    %v9011 = vunpack.c.0.s8 %v9010
    %v9012 = vlaneseq
    %v9013 = vshrl.u32 %v9012, 7
    %v9014 = vsub.s32 %v9011, %v9013
    %v9015 = vrot.slane %v8999, %v9014
    %v9017 = vunpack.c.l.s4 1966171168
    %v9018 = vunpack.c.0.s8 %v9017
    %v9019 = vlaneseq
    %v9020 = vshrl.u32 %v9019, 7
    %v9021 = vsub.s32 %v9018, %v9020
    %v9022 = vrot.slane %v9006, %v9021
    %v9024 = vunpack.c.l.s4 1966171168
    %v9025 = vunpack.c.0.s8 %v9024
    %v9026 = vlaneseq
    %v9027 = vshrl.u32 %v9026, 7
    %v9028 = vsub.s32 %v9025, %v9027
    %v9029 = vrot.slane %v9007, %v9028
    %v9031 = vunpack.c.l.s4 1966171168
    %v9032 = vunpack.c.0.s8 %v9031
    %v9033 = vlaneseq
    %v9034 = vshrl.u32 %v9033, 7
    %v9035 = vsub.s32 %v9032, %v9034
    %v9036 = vrot.slane %v9008, %v9035
    %v9037 = vcombine.high %v9015, %v9015
    %v9038 = vcombine.high %v9029, %v9029
    %v9039 = vcombine.high %v8713, %v8713
    %v9041 = vunpack.c.l.s4 1966171168
    %v9042 = vunpack.c.0.s8 %v9041
    %v9043 = vlaneseq
    %v9044 = vshrl.u32 %v9043, 7
    %v9045 = vsub.s32 %v9042, %v9044
    %v9046 = vrot.slane %v8713, %v9045
    %v9048 = vunpack.c.l.s4 1966171168
    %v9049 = vunpack.c.0.s8 %v9048
    %v9050 = vlaneseq
    %v9051 = vshrl.u32 %v9050, 7
    %v9052 = vsub.s32 %v9049, %v9051
    %v9053 = vrot.slane %v9039, %v9052
    %v9054 = vcombine.high %v9046, %v9046
    %v9055 = vcombine.high %v9053, %v9053
    %v9057 = vunpack.c.l.s4 1966171168
    %v9058 = vunpack.c.0.s8 %v9057
    %v9059 = vlaneseq
    %v9060 = vshrl.u32 %v9059, 7
    %v9061 = vsub.s32 %v9058, %v9060
    %v9062 = vrot.slane %v9046, %v9061
    %v9064 = vunpack.c.l.s4 1966171168
    %v9065 = vunpack.c.0.s8 %v9064
    %v9066 = vlaneseq
    %v9067 = vshrl.u32 %v9066, 7
    %v9068 = vsub.s32 %v9065, %v9067
    %v9069 = vrot.slane %v9053, %v9068
    %v9071 = vunpack.c.l.s4 1966171168
    %v9072 = vunpack.c.0.s8 %v9071
    %v9073 = vlaneseq
    %v9074 = vshrl.u32 %v9073, 7
    %v9075 = vsub.s32 %v9072, %v9074
    %v9076 = vrot.slane %v9054, %v9075
    %v9078 = vunpack.c.l.s4 1966171168
    %v9079 = vunpack.c.0.s8 %v9078
    %v9080 = vlaneseq
    %v9081 = vshrl.u32 %v9080, 7
    %v9082 = vsub.s32 %v9079, %v9081
    %v9083 = vrot.slane %v9055, %v9082
    %v9084 = vcombine.high %v9062, %v9062
    %v9085 = vcombine.high %v9076, %v9076
    %v9086 = vcombine.high %v8714, %v8714
    %v9088 = vunpack.c.l.s4 1966171168
    %v9089 = vunpack.c.0.s8 %v9088
    %v9090 = vlaneseq
    %v9091 = vshrl.u32 %v9090, 7
    %v9092 = vsub.s32 %v9089, %v9091
    %v9093 = vrot.slane %v8714, %v9092
    %v9095 = vunpack.c.l.s4 1966171168
    %v9096 = vunpack.c.0.s8 %v9095
    %v9097 = vlaneseq
    %v9098 = vshrl.u32 %v9097, 7
    %v9099 = vsub.s32 %v9096, %v9098
    %v9100 = vrot.slane %v9086, %v9099
    %v9101 = vcombine.high %v9093, %v9093
    %v9102 = vcombine.high %v9100, %v9100
    %v9104 = vunpack.c.l.s4 1966171168
    %v9105 = vunpack.c.0.s8 %v9104
    %v9106 = vlaneseq
    %v9107 = vshrl.u32 %v9106, 7
    %v9108 = vsub.s32 %v9105, %v9107
    %v9109 = vrot.slane %v9093, %v9108
    %v9111 = vunpack.c.l.s4 1966171168
    %v9112 = vunpack.c.0.s8 %v9111
    %v9113 = vlaneseq
    %v9114 = vshrl.u32 %v9113, 7
    %v9115 = vsub.s32 %v9112, %v9114
    %v9116 = vrot.slane %v9100, %v9115
    %v9118 = vunpack.c.l.s4 1966171168
    %v9119 = vunpack.c.0.s8 %v9118
    %v9120 = vlaneseq
    %v9121 = vshrl.u32 %v9120, 7
    %v9122 = vsub.s32 %v9119, %v9121
    %v9123 = vrot.slane %v9101, %v9122
    %v9125 = vunpack.c.l.s4 1966171168
    %v9126 = vunpack.c.0.s8 %v9125
    %v9127 = vlaneseq
    %v9128 = vshrl.u32 %v9127, 7
    %v9129 = vsub.s32 %v9126, %v9128
    %v9130 = vrot.slane %v9102, %v9129
    %v9131 = vcombine.high %v9109, %v9109
    %v9132 = vcombine.high %v9123, %v9123
    %v9134 = vshrl.u32 %v8780, 16
    %v9136 = vrot.slane %v9134, 7
    %v9137 = vrot.slane %v9136, 1
    %v9139 = vshll.u32 %v8794, 16
    %v9141 = vsel %vm826, %v9137, %v9139
    %v9142 = vshrl.u32 %v8794, 16
    %v9144 = vrot.slane %v9142, 7
    %v9145 = vrot.slane %v9144, 1
    %v9147 = vshll.u32 %v8802, 16
    %v9149 = vsel %vm826, %v9145, %v9147
    %v9150 = vshrl.u32 %v8802, 16
    %v9152 = vrot.slane %v9150, 7
    %v9153 = vrot.slane %v9152, 1
    %v9155 = vshll.u32 %v8803, 16
    %v9157 = vsel %vm826, %v9153, %v9155
    %v9158 = vshrl.u32 %v8803, 16
    %v9160 = vrot.slane %v9158, 7
    %v9161 = vrot.slane %v9160, 1
    %v9163 = vshll.u32 %v8787, 16
    %v9165 = vsel %vm826, %v9161, %v9163
    %v9166 = vshrl.u32 %v8787, 16
    %v9168 = vrot.slane %v9166, 7
    %v9169 = vrot.slane %v9168, 1
    %v9171 = vshll.u32 %v8801, 16
    %v9173 = vsel %vm826, %v9169, %v9171
    %v9175 = vshrl.u32 %v8827, 16
    %v9177 = vrot.slane %v9175, 7
    %v9178 = vrot.slane %v9177, 1
    %v9180 = vshll.u32 %v8841, 16
    %v9182 = vsel %vm826, %v9178, %v9180
    %v9183 = vshrl.u32 %v8841, 16
    %v9185 = vrot.slane %v9183, 7
    %v9186 = vrot.slane %v9185, 1
    %v9188 = vshll.u32 %v8849, 16
    %v9190 = vsel %vm826, %v9186, %v9188
    %v9191 = vshrl.u32 %v8849, 16
    %v9193 = vrot.slane %v9191, 7
    %v9194 = vrot.slane %v9193, 1
    %v9196 = vshll.u32 %v8850, 16
    %v9198 = vsel %vm826, %v9194, %v9196
    %v9199 = vshrl.u32 %v8850, 16
    %v9201 = vrot.slane %v9199, 7
    %v9202 = vrot.slane %v9201, 1
    %v9204 = vshll.u32 %v8834, 16
    %v9206 = vsel %vm826, %v9202, %v9204
    %v9207 = vshrl.u32 %v8834, 16
    %v9209 = vrot.slane %v9207, 7
    %v9210 = vrot.slane %v9209, 1
    %v9212 = vshll.u32 %v8848, 16
    %v9214 = vsel %vm826, %v9210, %v9212
    %v9216 = vshrl.u32 %v8874, 16
    %v9218 = vrot.slane %v9216, 7
    %v9219 = vrot.slane %v9218, 1
    %v9221 = vshll.u32 %v8888, 16
    %v9223 = vsel %vm826, %v9219, %v9221
    %v9224 = vshrl.u32 %v8888, 16
    %v9226 = vrot.slane %v9224, 7
    %v9227 = vrot.slane %v9226, 1
    %v9229 = vshll.u32 %v8896, 16
    %v9231 = vsel %vm826, %v9227, %v9229
    %v9232 = vshrl.u32 %v8896, 16
    %v9234 = vrot.slane %v9232, 7
    %v9235 = vrot.slane %v9234, 1
    %v9237 = vshll.u32 %v8897, 16
    %v9239 = vsel %vm826, %v9235, %v9237
    %v9240 = vshrl.u32 %v8897, 16
    %v9242 = vrot.slane %v9240, 7
    %v9243 = vrot.slane %v9242, 1
    %v9245 = vshll.u32 %v8881, 16
    %v9247 = vsel %vm826, %v9243, %v9245
    %v9248 = vshrl.u32 %v8881, 16
    %v9250 = vrot.slane %v9248, 7
    %v9251 = vrot.slane %v9250, 1
    %v9253 = vshll.u32 %v8895, 16
    %v9255 = vsel %vm826, %v9251, %v9253
    %v9257 = vshrl.u32 %v8921, 16
    %v9259 = vrot.slane %v9257, 7
    %v9260 = vrot.slane %v9259, 1
    %v9262 = vshll.u32 %v8935, 16
    %v9264 = vsel %vm826, %v9260, %v9262
    %v9265 = vshrl.u32 %v8935, 16
    %v9267 = vrot.slane %v9265, 7
    %v9268 = vrot.slane %v9267, 1
    %v9270 = vshll.u32 %v8943, 16
    %v9272 = vsel %vm826, %v9268, %v9270
    %v9273 = vshrl.u32 %v8943, 16
    %v9275 = vrot.slane %v9273, 7
    %v9276 = vrot.slane %v9275, 1
    %v9278 = vshll.u32 %v8944, 16
    %v9280 = vsel %vm826, %v9276, %v9278
    %v9281 = vshrl.u32 %v8944, 16
    %v9283 = vrot.slane %v9281, 7
    %v9284 = vrot.slane %v9283, 1
    %v9286 = vshll.u32 %v8928, 16
    %v9288 = vsel %vm826, %v9284, %v9286
    %v9289 = vshrl.u32 %v8928, 16
    %v9291 = vrot.slane %v9289, 7
    %v9292 = vrot.slane %v9291, 1
    %v9294 = vshll.u32 %v8942, 16
    %v9296 = vsel %vm826, %v9292, %v9294
    %v9298 = vshrl.u32 %v8968, 16
    %v9300 = vrot.slane %v9298, 7
    %v9301 = vrot.slane %v9300, 1
    %v9303 = vshll.u32 %v8982, 16
    %v9305 = vsel %vm826, %v9301, %v9303
    %v9306 = vshrl.u32 %v8982, 16
    %v9308 = vrot.slane %v9306, 7
    %v9309 = vrot.slane %v9308, 1
    %v9311 = vshll.u32 %v8990, 16
    %v9313 = vsel %vm826, %v9309, %v9311
    %v9314 = vshrl.u32 %v8990, 16
    %v9316 = vrot.slane %v9314, 7
    %v9317 = vrot.slane %v9316, 1
    %v9319 = vshll.u32 %v8991, 16
    %v9321 = vsel %vm826, %v9317, %v9319
    %v9322 = vshrl.u32 %v8991, 16
    %v9324 = vrot.slane %v9322, 7
    %v9325 = vrot.slane %v9324, 1
    %v9327 = vshll.u32 %v8975, 16
    %v9329 = vsel %vm826, %v9325, %v9327
    %v9330 = vshrl.u32 %v8975, 16
    %v9332 = vrot.slane %v9330, 7
    %v9333 = vrot.slane %v9332, 1
    %v9335 = vshll.u32 %v8989, 16
    %v9337 = vsel %vm826, %v9333, %v9335
    %v9339 = vshrl.u32 %v9015, 16
    %v9341 = vrot.slane %v9339, 7
    %v9342 = vrot.slane %v9341, 1
    %v9344 = vshll.u32 %v9029, 16
    %v9346 = vsel %vm826, %v9342, %v9344
    %v9347 = vshrl.u32 %v9029, 16
    %v9349 = vrot.slane %v9347, 7
    %v9350 = vrot.slane %v9349, 1
    %v9352 = vshll.u32 %v9037, 16
    %v9354 = vsel %vm826, %v9350, %v9352
    %v9355 = vshrl.u32 %v9037, 16
    %v9357 = vrot.slane %v9355, 7
    %v9358 = vrot.slane %v9357, 1
    %v9360 = vshll.u32 %v9038, 16
    %v9362 = vsel %vm826, %v9358, %v9360
    %v9363 = vshrl.u32 %v9038, 16
    %v9365 = vrot.slane %v9363, 7
    %v9366 = vrot.slane %v9365, 1
    %v9368 = vshll.u32 %v9022, 16
    %v9370 = vsel %vm826, %v9366, %v9368
    %v9371 = vshrl.u32 %v9022, 16
    %v9373 = vrot.slane %v9371, 7
    %v9374 = vrot.slane %v9373, 1
    %v9376 = vshll.u32 %v9036, 16
    %v9378 = vsel %vm826, %v9374, %v9376
    %v9380 = vshrl.u32 %v9062, 16
    %v9382 = vrot.slane %v9380, 7
    %v9383 = vrot.slane %v9382, 1
    %v9385 = vshll.u32 %v9076, 16
    %v9387 = vsel %vm826, %v9383, %v9385
    %v9388 = vshrl.u32 %v9076, 16
    %v9390 = vrot.slane %v9388, 7
    %v9391 = vrot.slane %v9390, 1
    %v9393 = vshll.u32 %v9084, 16
    %v9395 = vsel %vm826, %v9391, %v9393
    %v9396 = vshrl.u32 %v9084, 16
    %v9398 = vrot.slane %v9396, 7
    %v9399 = vrot.slane %v9398, 1
    %v9401 = vshll.u32 %v9085, 16
    %v9403 = vsel %vm826, %v9399, %v9401
    %v9404 = vshrl.u32 %v9085, 16
    %v9406 = vrot.slane %v9404, 7
    %v9407 = vrot.slane %v9406, 1
    %v9409 = vshll.u32 %v9069, 16
    %v9411 = vsel %vm826, %v9407, %v9409
    %v9412 = vshrl.u32 %v9069, 16
    %v9414 = vrot.slane %v9412, 7
    %v9415 = vrot.slane %v9414, 1
    %v9417 = vshll.u32 %v9083, 16
    %v9419 = vsel %vm826, %v9415, %v9417
    %v9421 = vshrl.u32 %v9109, 16
    %v9423 = vrot.slane %v9421, 7
    %v9424 = vrot.slane %v9423, 1
    %v9426 = vshll.u32 %v9123, 16
    %v9428 = vsel %vm826, %v9424, %v9426
    %v9429 = vshrl.u32 %v9123, 16
    %v9431 = vrot.slane %v9429, 7
    %v9432 = vrot.slane %v9431, 1
    %v9434 = vshll.u32 %v9131, 16
    %v9436 = vsel %vm826, %v9432, %v9434
    %v9437 = vshrl.u32 %v9131, 16
    %v9439 = vrot.slane %v9437, 7
    %v9440 = vrot.slane %v9439, 1
    %v9442 = vshll.u32 %v9132, 16
    %v9444 = vsel %vm826, %v9440, %v9442
    %v9445 = vshrl.u32 %v9132, 16
    %v9447 = vrot.slane %v9445, 7
    %v9448 = vrot.slane %v9447, 1
    %v9450 = vshll.u32 %v9116, 16
    %v9452 = vsel %vm826, %v9448, %v9450
    %v9453 = vshrl.u32 %v9116, 16
    %v9455 = vrot.slane %v9453, 7
    %v9456 = vrot.slane %v9455, 1
    %v9458 = vshll.u32 %v9130, 16
    %v9460 = vsel %vm826, %v9456, %v9458
    %v9461 = vcombine.low %v9141, %v9149
    %v9462 = vcombine.low %v9157, %v9165
    %v9463 = vcombine.low %v9173, %v9182
    %v9464 = vcombine.low %v9190, %v9198
    %v9466 = vunpack.c.l.s4 1966171168
    %v9467 = vunpack.c.0.s8 %v9466
    %v9468 = vlaneseq
    %v9469 = vshrl.u32 %v9468, 7
    %v9470 = vsub.s32 %v9467, %v9469
    %v9471 = vrot.slane %v9461, %v9470
    %v9473 = vunpack.c.l.s4 1966171168
    %v9474 = vunpack.c.0.s8 %v9473
    %v9475 = vlaneseq
    %v9476 = vshrl.u32 %v9475, 7
    %v9477 = vsub.s32 %v9474, %v9476
    %v9478 = vrot.slane %v9462, %v9477
    %v9480 = vunpack.c.l.s4 1966171168
    %v9481 = vunpack.c.0.s8 %v9480
    %v9482 = vlaneseq
    %v9483 = vshrl.u32 %v9482, 7
    %v9484 = vsub.s32 %v9481, %v9483
    %v9485 = vrot.slane %v9463, %v9484
    %v9487 = vunpack.c.l.s4 1966171168
    %v9488 = vunpack.c.0.s8 %v9487
    %v9489 = vlaneseq
    %v9490 = vshrl.u32 %v9489, 7
    %v9491 = vsub.s32 %v9488, %v9490
    %v9492 = vrot.slane %v9464, %v9491
    %v9493 = vcombine.low %v9471, %v9478
    %v9494 = vcombine.low %v9485, %v9492
    %v9496 = vunpack.c.l.s4 1966171168
    %v9497 = vunpack.c.0.s8 %v9496
    %v9498 = vlaneseq
    %v9499 = vshrl.u32 %v9498, 7
    %v9500 = vsub.s32 %v9497, %v9499
    %v9501 = vrot.slane %v9493, %v9500
    %v9503 = vunpack.c.l.s4 1966171168
    %v9504 = vunpack.c.0.s8 %v9503
    %v9505 = vlaneseq
    %v9506 = vshrl.u32 %v9505, 7
    %v9507 = vsub.s32 %v9504, %v9506
    %v9508 = vrot.slane %v9494, %v9507
    %v9509 = vcombine.low %v9501, %v9508
    %v9510 = vcombine.low %v9206, %v9214
    %v9511 = vcombine.low %v9223, %v9231
    %v9512 = vcombine.low %v9239, %v9247
    %v9513 = vcombine.low %v9255, %v9264
    %v9515 = vunpack.c.l.s4 1966171168
    %v9516 = vunpack.c.0.s8 %v9515
    %v9517 = vlaneseq
    %v9518 = vshrl.u32 %v9517, 7
    %v9519 = vsub.s32 %v9516, %v9518
    %v9520 = vrot.slane %v9510, %v9519
    %v9522 = vunpack.c.l.s4 1966171168
    %v9523 = vunpack.c.0.s8 %v9522
    %v9524 = vlaneseq
    %v9525 = vshrl.u32 %v9524, 7
    %v9526 = vsub.s32 %v9523, %v9525
    %v9527 = vrot.slane %v9511, %v9526
    %v9529 = vunpack.c.l.s4 1966171168
    %v9530 = vunpack.c.0.s8 %v9529
    %v9531 = vlaneseq
    %v9532 = vshrl.u32 %v9531, 7
    %v9533 = vsub.s32 %v9530, %v9532
    %v9534 = vrot.slane %v9512, %v9533
    %v9536 = vunpack.c.l.s4 1966171168
    %v9537 = vunpack.c.0.s8 %v9536
    %v9538 = vlaneseq
    %v9539 = vshrl.u32 %v9538, 7
    %v9540 = vsub.s32 %v9537, %v9539
    %v9541 = vrot.slane %v9513, %v9540
    %v9542 = vcombine.low %v9520, %v9527
    %v9543 = vcombine.low %v9534, %v9541
    %v9545 = vunpack.c.l.s4 1966171168
    %v9546 = vunpack.c.0.s8 %v9545
    %v9547 = vlaneseq
    %v9548 = vshrl.u32 %v9547, 7
    %v9549 = vsub.s32 %v9546, %v9548
    %v9550 = vrot.slane %v9542, %v9549
    %v9552 = vunpack.c.l.s4 1966171168
    %v9553 = vunpack.c.0.s8 %v9552
    %v9554 = vlaneseq
    %v9555 = vshrl.u32 %v9554, 7
    %v9556 = vsub.s32 %v9553, %v9555
    %v9557 = vrot.slane %v9543, %v9556
    %v9558 = vcombine.low %v9550, %v9557
    %v9559 = vcombine.low %v9272, %v9280
    %v9560 = vcombine.low %v9288, %v9296
    %v9561 = vcombine.low %v9305, %v9313
    %v9562 = vcombine.low %v9321, %v9329
    %v9564 = vunpack.c.l.s4 1966171168
    %v9565 = vunpack.c.0.s8 %v9564
    %v9566 = vlaneseq
    %v9567 = vshrl.u32 %v9566, 7
    %v9568 = vsub.s32 %v9565, %v9567
    %v9569 = vrot.slane %v9559, %v9568
    %v9571 = vunpack.c.l.s4 1966171168
    %v9572 = vunpack.c.0.s8 %v9571
    %v9573 = vlaneseq
    %v9574 = vshrl.u32 %v9573, 7
    %v9575 = vsub.s32 %v9572, %v9574
    %v9576 = vrot.slane %v9560, %v9575
    %v9578 = vunpack.c.l.s4 1966171168
    %v9579 = vunpack.c.0.s8 %v9578
    %v9580 = vlaneseq
    %v9581 = vshrl.u32 %v9580, 7
    %v9582 = vsub.s32 %v9579, %v9581
    %v9583 = vrot.slane %v9561, %v9582
    %v9585 = vunpack.c.l.s4 1966171168
    %v9586 = vunpack.c.0.s8 %v9585
    %v9587 = vlaneseq
    %v9588 = vshrl.u32 %v9587, 7
    %v9589 = vsub.s32 %v9586, %v9588
    %v9590 = vrot.slane %v9562, %v9589
    %v9591 = vcombine.low %v9569, %v9576
    %v9592 = vcombine.low %v9583, %v9590
    %v9594 = vunpack.c.l.s4 1966171168
    %v9595 = vunpack.c.0.s8 %v9594
    %v9596 = vlaneseq
    %v9597 = vshrl.u32 %v9596, 7
    %v9598 = vsub.s32 %v9595, %v9597
    %v9599 = vrot.slane %v9591, %v9598
    %v9601 = vunpack.c.l.s4 1966171168
    %v9602 = vunpack.c.0.s8 %v9601
    %v9603 = vlaneseq
    %v9604 = vshrl.u32 %v9603, 7
    %v9605 = vsub.s32 %v9602, %v9604
    %v9606 = vrot.slane %v9592, %v9605
    %v9607 = vcombine.low %v9599, %v9606
    %v9608 = vcombine.low %v9337, %v9346
    %v9609 = vcombine.low %v9354, %v9362
    %v9610 = vcombine.low %v9370, %v9378
    %v9611 = vcombine.low %v9387, %v9395
    %v9613 = vunpack.c.l.s4 1966171168
    %v9614 = vunpack.c.0.s8 %v9613
    %v9615 = vlaneseq
    %v9616 = vshrl.u32 %v9615, 7
    %v9617 = vsub.s32 %v9614, %v9616
    %v9618 = vrot.slane %v9608, %v9617
    %v9620 = vunpack.c.l.s4 1966171168
    %v9621 = vunpack.c.0.s8 %v9620
    %v9622 = vlaneseq
    %v9623 = vshrl.u32 %v9622, 7
    %v9624 = vsub.s32 %v9621, %v9623
    %v9625 = vrot.slane %v9609, %v9624
    %v9627 = vunpack.c.l.s4 1966171168
    %v9628 = vunpack.c.0.s8 %v9627
    %v9629 = vlaneseq
    %v9630 = vshrl.u32 %v9629, 7
    %v9631 = vsub.s32 %v9628, %v9630
    %v9632 = vrot.slane %v9610, %v9631
    %v9634 = vunpack.c.l.s4 1966171168
    %v9635 = vunpack.c.0.s8 %v9634
    %v9636 = vlaneseq
    %v9637 = vshrl.u32 %v9636, 7
    %v9638 = vsub.s32 %v9635, %v9637
    %v9639 = vrot.slane %v9611, %v9638
    %v9640 = vcombine.low %v9618, %v9625
    %v9641 = vcombine.low %v9632, %v9639
    %v9643 = vunpack.c.l.s4 1966171168
    %v9644 = vunpack.c.0.s8 %v9643
    %v9645 = vlaneseq
    %v9646 = vshrl.u32 %v9645, 7
    %v9647 = vsub.s32 %v9644, %v9646
    %v9648 = vrot.slane %v9640, %v9647
    %v9650 = vunpack.c.l.s4 1966171168
    %v9651 = vunpack.c.0.s8 %v9650
    %v9652 = vlaneseq
    %v9653 = vshrl.u32 %v9652, 7
    %v9654 = vsub.s32 %v9651, %v9653
    %v9655 = vrot.slane %v9641, %v9654
    %v9656 = vcombine.low %v9648, %v9655
    %v9657 = vcombine.low %v9403, %v9411
    %v9658 = vcombine.low %v9419, %v9428
    %v9659 = vcombine.low %v9436, %v9444
    %v9660 = vcombine.low %v9452, %v9460
    %v9662 = vunpack.c.l.s4 1966171168
    %v9663 = vunpack.c.0.s8 %v9662
    %v9664 = vlaneseq
    %v9665 = vshrl.u32 %v9664, 7
    %v9666 = vsub.s32 %v9663, %v9665
    %v9667 = vrot.slane %v9657, %v9666
    %v9669 = vunpack.c.l.s4 1966171168
    %v9670 = vunpack.c.0.s8 %v9669
    %v9671 = vlaneseq
    %v9672 = vshrl.u32 %v9671, 7
    %v9673 = vsub.s32 %v9670, %v9672
    %v9674 = vrot.slane %v9658, %v9673
    %v9676 = vunpack.c.l.s4 1966171168
    %v9677 = vunpack.c.0.s8 %v9676
    %v9678 = vlaneseq
    %v9679 = vshrl.u32 %v9678, 7
    %v9680 = vsub.s32 %v9677, %v9679
    %v9681 = vrot.slane %v9659, %v9680
    %v9683 = vunpack.c.l.s4 1966171168
    %v9684 = vunpack.c.0.s8 %v9683
    %v9685 = vlaneseq
    %v9686 = vshrl.u32 %v9685, 7
    %v9687 = vsub.s32 %v9684, %v9686
    %v9688 = vrot.slane %v9660, %v9687
    %v9689 = vcombine.low %v9667, %v9674
    %v9690 = vcombine.low %v9681, %v9688
    %v9692 = vunpack.c.l.s4 1966171168
    %v9693 = vunpack.c.0.s8 %v9692
    %v9694 = vlaneseq
    %v9695 = vshrl.u32 %v9694, 7
    %v9696 = vsub.s32 %v9693, %v9695
    %v9697 = vrot.slane %v9689, %v9696
    %v9699 = vunpack.c.l.s4 1966171168
    %v9700 = vunpack.c.0.s8 %v9699
    %v9701 = vlaneseq
    %v9702 = vshrl.u32 %v9701, 7
    %v9703 = vsub.s32 %v9700, %v9702
    %v9704 = vrot.slane %v9690, %v9703
    %v9705 = vcombine.low %v9697, %v9704
    %v9727 = vunpack.c.l.b16 %v8733
    %v9728 = vunpack.c.l.b16 %v8734
    %v9729 = vunpack.c.l.b16 %v8735
    %v9730 = vunpack.c.l.b16 %v8736
    %v9731 = vunpack.c.l.b16 %v8737
    %v9732 = vunpack.c.l.b16 %v8738
    %v9733 = vunpack.c.l.b16 %v8739
    %v9734 = vunpack.c.l.b16 %v8740
    %v9735 = vunpack.c.l.b16 %v8741
    %v9736 = vunpack.c.l.b16 %v8742
    %v9737 = vunpack.c.l.b16 %v8743
    %v9738 = vunpack.c.l.b16 %v8744
    %v9739 = vunpack.c.l.b16 %v8745
    %v9740 = vunpack.c.l.b16 %v8746
    %v9741 = vunpack.c.l.b16 %v8747
    %v9742 = vunpack.c.l.b16 %v8748
    %v9743 = vpack.c.b16 %v9728, %v9727
    %v9744 = vpack.c.b16 %v9730, %v9729
    %v9745 = vpack.c.b16 %v9732, %v9731
    %v9746 = vpack.c.b16 %v9734, %v9733
    %v9747 = vpack.c.b16 %v9736, %v9735
    %v9748 = vpack.c.b16 %v9738, %v9737
    %v9749 = vpack.c.b16 %v9740, %v9739
    %v9750 = vpack.c.b16 %v9742, %v9741
    %9759 = vmatprep.subr.bf16.mxu0 0
    %9760 = vmatpush1.bf16.msra.mxu0 %v9743
    %9761 = vmatprep.subr.bf16.mxu0 0
    %9762 = vmatpush1.bf16.msra.mxu0 %v9744
    %9763 = vmatprep.subr.bf16.mxu0 0
    %9764 = vmatpush1.bf16.msra.mxu0 %v9745
    %9765 = vmatprep.subr.bf16.mxu0 0
    %9766 = vmatpush1.bf16.msra.mxu0 %v9746
    %9767 = vmatprep.subr.bf16.mxu0 0
    %9768 = vmatpush1.bf16.msra.mxu0 %v9747
    %9769 = vmatprep.subr.bf16.mxu0 0
    %9770 = vmatpush1.bf16.msra.mxu0 %v9748
    %9771 = vmatprep.subr.bf16.mxu0 0
    %9772 = vmatpush1.bf16.msra.mxu0 %v9749
    %9773 = vmatprep.subr.bf16.mxu0 0
    %9774 = vmatpush1.bf16.msra.mxu0 %v9750
    %9775 = vmatprep.subr.bf16.mxu0 0
    %9776 = vmatpush1.bf16.msra.mxu0 0
    %9777 = vmatprep.subr.bf16.mxu0 0
    %9778 = vmatpush1.bf16.msra.mxu0 0
    %9779 = vmatprep.subr.bf16.mxu0 0
    %9780 = vmatpush1.bf16.msra.mxu0 0
    %9781 = vmatprep.subr.bf16.mxu0 0
    %9782 = vmatpush1.bf16.msra.mxu0 0
    %9783 = vmatprep.subr.bf16.mxu0 0
    %9784 = vmatpush1.bf16.msra.mxu0 0
    %9785 = vmatprep.subr.bf16.mxu0 0
    %9786 = vmatpush1.bf16.msra.mxu0 0
    %9787 = vmatprep.subr.bf16.mxu0 0
    %9788 = vmatpush1.bf16.msra.mxu0 0
    %9789 = vmatprep.subr.bf16.mxu0 0
    %9790 = vmatpush1.bf16.msra.mxu0 0
    %9791 = vmatprep.mubr.bf16.mxu0 0
    %9792 = vmatmul.mubr.bf16.gmra.mrb[0].mxu0 %v9509
    %v9793 = vpop.f32.mrb[0].mxu0
    %v9794 = vadd.f32 0.0, %v9793
    %v9795 = vpop.f32.mrb[0].mxu0
    %v9796 = vpop.f32.mrb[0].mxu0
    %v9797 = vadd.f32 0.0, %v9796
    %v9798 = vpop.f32.mrb[0].mxu0
    %9799 = vmatprep.mubr.bf16.mxu0 0
    %9800 = vmatmul.mubr.bf16.gmra.mrb[0].mxu0 %v9558
    %v9801 = vpop.f32.mrb[0].mxu0
    %v9802 = vadd.f32 0.0, %v9801
    %v9803 = vpop.f32.mrb[0].mxu0
    %v9804 = vpop.f32.mrb[0].mxu0
    %v9805 = vadd.f32 0.0, %v9804
    %v9806 = vpop.f32.mrb[0].mxu0
    %9807 = vmatprep.mubr.bf16.mxu0 0
    %9808 = vmatmul.mubr.bf16.gmra.mrb[0].mxu0 %v9607
    %v9809 = vpop.f32.mrb[0].mxu0
    %v9810 = vadd.f32 0.0, %v9809
    %v9811 = vpop.f32.mrb[0].mxu0
    %v9812 = vpop.f32.mrb[0].mxu0
    %v9813 = vadd.f32 0.0, %v9812
    %v9814 = vpop.f32.mrb[0].mxu0
    %9815 = vmatprep.mubr.bf16.mxu0 0
    %9816 = vmatmul.mubr.bf16.gmra.mrb[0].mxu0 %v9656
    %v9817 = vpop.f32.mrb[0].mxu0
    %v9818 = vadd.f32 0.0, %v9817
    %v9819 = vpop.f32.mrb[0].mxu0
    %v9820 = vpop.f32.mrb[0].mxu0
    %v9821 = vadd.f32 0.0, %v9820
    %v9822 = vpop.f32.mrb[0].mxu0
    %9823 = vmatprep.mubr.bf16.mxu0 0
    %9824 = vmatmul.mubr.bf16.gmra.mrb[0].mxu0 %v9705
    %v9825 = vpop.f32.mrb[0].mxu0
    %v9826 = vadd.f32 0.0, %v9825
    %v9827 = vpop.f32.mrb[0].mxu0
    %v9828 = vpop.f32.mrb[0].mxu0
    %v9829 = vadd.f32 0.0, %v9828
    %v9830 = vpop.f32.mrb[0].mxu0
    %9831 = vdwg.mxu0
    %v9832 = vcombine.low %v8780, %v8794
    %v9833 = vcombine.low %v8802, %v8803
    %v9834 = vcombine.low %v8787, %v8827
    %v9835 = vcombine.low %v8841, %v8849
    %v9837 = vunpack.c.l.s4 1966171168
    %v9838 = vunpack.c.0.s8 %v9837
    %v9839 = vlaneseq
    %v9840 = vshrl.u32 %v9839, 7
    %v9841 = vsub.s32 %v9838, %v9840
    %v9842 = vrot.slane %v9832, %v9841
    %v9844 = vunpack.c.l.s4 1966171168
    %v9845 = vunpack.c.0.s8 %v9844
    %v9846 = vlaneseq
    %v9847 = vshrl.u32 %v9846, 7
    %v9848 = vsub.s32 %v9845, %v9847
    %v9849 = vrot.slane %v9833, %v9848
    %v9851 = vunpack.c.l.s4 1966171168
    %v9852 = vunpack.c.0.s8 %v9851
    %v9853 = vlaneseq
    %v9854 = vshrl.u32 %v9853, 7
    %v9855 = vsub.s32 %v9852, %v9854
    %v9856 = vrot.slane %v9834, %v9855
    %v9858 = vunpack.c.l.s4 1966171168
    %v9859 = vunpack.c.0.s8 %v9858
    %v9860 = vlaneseq
    %v9861 = vshrl.u32 %v9860, 7
    %v9862 = vsub.s32 %v9859, %v9861
    %v9863 = vrot.slane %v9835, %v9862
    %v9864 = vcombine.low %v9842, %v9849
    %v9865 = vcombine.low %v9856, %v9863
    %v9867 = vunpack.c.l.s4 1966171168
    %v9868 = vunpack.c.0.s8 %v9867
    %v9869 = vlaneseq
    %v9870 = vshrl.u32 %v9869, 7
    %v9871 = vsub.s32 %v9868, %v9870
    %v9872 = vrot.slane %v9864, %v9871
    %v9874 = vunpack.c.l.s4 1966171168
    %v9875 = vunpack.c.0.s8 %v9874
    %v9876 = vlaneseq
    %v9877 = vshrl.u32 %v9876, 7
    %v9878 = vsub.s32 %v9875, %v9877
    %v9879 = vrot.slane %v9865, %v9878
    %v9880 = vcombine.low %v9872, %v9879
    %v9881 = vcombine.low %v8850, %v8834
    %v9882 = vcombine.low %v8874, %v8888
    %v9883 = vcombine.low %v8896, %v8897
    %v9884 = vcombine.low %v8881, %v8921
    %v9886 = vunpack.c.l.s4 1966171168
    %v9887 = vunpack.c.0.s8 %v9886
    %v9888 = vlaneseq
    %v9889 = vshrl.u32 %v9888, 7
    %v9890 = vsub.s32 %v9887, %v9889
    %v9891 = vrot.slane %v9881, %v9890
    %v9893 = vunpack.c.l.s4 1966171168
    %v9894 = vunpack.c.0.s8 %v9893
    %v9895 = vlaneseq
    %v9896 = vshrl.u32 %v9895, 7
    %v9897 = vsub.s32 %v9894, %v9896
    %v9898 = vrot.slane %v9882, %v9897
    %v9900 = vunpack.c.l.s4 1966171168
    %v9901 = vunpack.c.0.s8 %v9900
    %v9902 = vlaneseq
    %v9903 = vshrl.u32 %v9902, 7
    %v9904 = vsub.s32 %v9901, %v9903
    %v9905 = vrot.slane %v9883, %v9904
    %v9907 = vunpack.c.l.s4 1966171168
    %v9908 = vunpack.c.0.s8 %v9907
    %v9909 = vlaneseq
    %v9910 = vshrl.u32 %v9909, 7
    %v9911 = vsub.s32 %v9908, %v9910
    %v9912 = vrot.slane %v9884, %v9911
    %v9913 = vcombine.low %v9891, %v9898
    %v9914 = vcombine.low %v9905, %v9912
    %v9916 = vunpack.c.l.s4 1966171168
    %v9917 = vunpack.c.0.s8 %v9916
    %v9918 = vlaneseq
    %v9919 = vshrl.u32 %v9918, 7
    %v9920 = vsub.s32 %v9917, %v9919
    %v9921 = vrot.slane %v9913, %v9920
    %v9923 = vunpack.c.l.s4 1966171168
    %v9924 = vunpack.c.0.s8 %v9923
    %v9925 = vlaneseq
    %v9926 = vshrl.u32 %v9925, 7
    %v9927 = vsub.s32 %v9924, %v9926
    %v9928 = vrot.slane %v9914, %v9927
    %v9929 = vcombine.low %v9921, %v9928
    %v9930 = vcombine.low %v8935, %v8943
    %v9931 = vcombine.low %v8944, %v8928
    %v9932 = vcombine.low %v8968, %v8982
    %v9933 = vcombine.low %v8990, %v8991
    %v9935 = vunpack.c.l.s4 1966171168
    %v9936 = vunpack.c.0.s8 %v9935
    %v9937 = vlaneseq
    %v9938 = vshrl.u32 %v9937, 7
    %v9939 = vsub.s32 %v9936, %v9938
    %v9940 = vrot.slane %v9930, %v9939
    %v9942 = vunpack.c.l.s4 1966171168
    %v9943 = vunpack.c.0.s8 %v9942
    %v9944 = vlaneseq
    %v9945 = vshrl.u32 %v9944, 7
    %v9946 = vsub.s32 %v9943, %v9945
    %v9947 = vrot.slane %v9931, %v9946
    %v9949 = vunpack.c.l.s4 1966171168
    %v9950 = vunpack.c.0.s8 %v9949
    %v9951 = vlaneseq
    %v9952 = vshrl.u32 %v9951, 7
    %v9953 = vsub.s32 %v9950, %v9952
    %v9954 = vrot.slane %v9932, %v9953
    %v9956 = vunpack.c.l.s4 1966171168
    %v9957 = vunpack.c.0.s8 %v9956
    %v9958 = vlaneseq
    %v9959 = vshrl.u32 %v9958, 7
    %v9960 = vsub.s32 %v9957, %v9959
    %v9961 = vrot.slane %v9933, %v9960
    %v9962 = vcombine.low %v9940, %v9947
    %v9963 = vcombine.low %v9954, %v9961
    %v9965 = vunpack.c.l.s4 1966171168
    %v9966 = vunpack.c.0.s8 %v9965
    %v9967 = vlaneseq
    %v9968 = vshrl.u32 %v9967, 7
    %v9969 = vsub.s32 %v9966, %v9968
    %v9970 = vrot.slane %v9962, %v9969
    %v9972 = vunpack.c.l.s4 1966171168
    %v9973 = vunpack.c.0.s8 %v9972
    %v9974 = vlaneseq
    %v9975 = vshrl.u32 %v9974, 7
    %v9976 = vsub.s32 %v9973, %v9975
    %v9977 = vrot.slane %v9963, %v9976
    %v9978 = vcombine.low %v9970, %v9977
    %v9979 = vcombine.low %v8975, %v9015
    %v9980 = vcombine.low %v9029, %v9037
    %v9981 = vcombine.low %v9038, %v9022
    %v9982 = vcombine.low %v9062, %v9076
    %v9984 = vunpack.c.l.s4 1966171168
    %v9985 = vunpack.c.0.s8 %v9984
    %v9986 = vlaneseq
    %v9987 = vshrl.u32 %v9986, 7
    %v9988 = vsub.s32 %v9985, %v9987
    %v9989 = vrot.slane %v9979, %v9988
    %v9991 = vunpack.c.l.s4 1966171168
    %v9992 = vunpack.c.0.s8 %v9991
    %v9993 = vlaneseq
    %v9994 = vshrl.u32 %v9993, 7
    %v9995 = vsub.s32 %v9992, %v9994
    %v9996 = vrot.slane %v9980, %v9995
    %v9998 = vunpack.c.l.s4 1966171168
    %v9999 = vunpack.c.0.s8 %v9998
    %v10000 = vlaneseq
    %v10001 = vshrl.u32 %v10000, 7
    %v10002 = vsub.s32 %v9999, %v10001
    %v10003 = vrot.slane %v9981, %v10002
    %v10005 = vunpack.c.l.s4 1966171168
    %v10006 = vunpack.c.0.s8 %v10005
    %v10007 = vlaneseq
    %v10008 = vshrl.u32 %v10007, 7
    %v10009 = vsub.s32 %v10006, %v10008
    %v10010 = vrot.slane %v9982, %v10009
    %v10011 = vcombine.low %v9989, %v9996
    %v10012 = vcombine.low %v10003, %v10010
    %v10014 = vunpack.c.l.s4 1966171168
    %v10015 = vunpack.c.0.s8 %v10014
    %v10016 = vlaneseq
    %v10017 = vshrl.u32 %v10016, 7
    %v10018 = vsub.s32 %v10015, %v10017
    %v10019 = vrot.slane %v10011, %v10018
    %v10021 = vunpack.c.l.s4 1966171168
    %v10022 = vunpack.c.0.s8 %v10021
    %v10023 = vlaneseq
    %v10024 = vshrl.u32 %v10023, 7
    %v10025 = vsub.s32 %v10022, %v10024
    %v10026 = vrot.slane %v10012, %v10025
    %v10027 = vcombine.low %v10019, %v10026
    %v10028 = vcombine.low %v9084, %v9085
    %v10029 = vcombine.low %v9069, %v9109
    %v10030 = vcombine.low %v9123, %v9131
    %v10031 = vcombine.low %v9132, %v9116
    %v10033 = vunpack.c.l.s4 1966171168
    %v10034 = vunpack.c.0.s8 %v10033
    %v10035 = vlaneseq
    %v10036 = vshrl.u32 %v10035, 7
    %v10037 = vsub.s32 %v10034, %v10036
    %v10038 = vrot.slane %v10028, %v10037
    %v10040 = vunpack.c.l.s4 1966171168
    %v10041 = vunpack.c.0.s8 %v10040
    %v10042 = vlaneseq
    %v10043 = vshrl.u32 %v10042, 7
    %v10044 = vsub.s32 %v10041, %v10043
    %v10045 = vrot.slane %v10029, %v10044
    %v10047 = vunpack.c.l.s4 1966171168
    %v10048 = vunpack.c.0.s8 %v10047
    %v10049 = vlaneseq
    %v10050 = vshrl.u32 %v10049, 7
    %v10051 = vsub.s32 %v10048, %v10050
    %v10052 = vrot.slane %v10030, %v10051
    %v10054 = vunpack.c.l.s4 1966171168
    %v10055 = vunpack.c.0.s8 %v10054
    %v10056 = vlaneseq
    %v10057 = vshrl.u32 %v10056, 7
    %v10058 = vsub.s32 %v10055, %v10057
    %v10059 = vrot.slane %v10031, %v10058
    %v10060 = vcombine.low %v10038, %v10045
    %v10061 = vcombine.low %v10052, %v10059
    %v10063 = vunpack.c.l.s4 1966171168
    %v10064 = vunpack.c.0.s8 %v10063
    %v10065 = vlaneseq
    %v10066 = vshrl.u32 %v10065, 7
    %v10067 = vsub.s32 %v10064, %v10066
    %v10068 = vrot.slane %v10060, %v10067
    %v10070 = vunpack.c.l.s4 1966171168
    %v10071 = vunpack.c.0.s8 %v10070
    %v10072 = vlaneseq
    %v10073 = vshrl.u32 %v10072, 7
    %v10074 = vsub.s32 %v10071, %v10073
    %v10075 = vrot.slane %v10061, %v10074
    %v10076 = vcombine.low %v10068, %v10075
    %v10098 = vunpack.c.l.b16 %v8716
    %v10099 = vunpack.c.l.b16 %v8717
    %v10100 = vunpack.c.l.b16 %v8718
    %v10101 = vunpack.c.l.b16 %v8719
    %v10102 = vunpack.c.l.b16 %v8720
    %v10103 = vunpack.c.l.b16 %v8721
    %v10104 = vunpack.c.l.b16 %v8722
    %v10105 = vunpack.c.l.b16 %v8723
    %v10106 = vunpack.c.l.b16 %v8724
    %v10107 = vunpack.c.l.b16 %v8725
    %v10108 = vunpack.c.l.b16 %v8726
    %v10109 = vunpack.c.l.b16 %v8727
    %v10110 = vunpack.c.l.b16 %v8728
    %v10111 = vunpack.c.l.b16 %v8729
    %v10112 = vunpack.c.l.b16 %v8730
    %v10113 = vunpack.c.l.b16 %v8731
    %v10114 = vpack.c.b16 %v10099, %v10098
    %v10115 = vpack.c.b16 %v10101, %v10100
    %v10116 = vpack.c.b16 %v10103, %v10102
    %v10117 = vpack.c.b16 %v10105, %v10104
    %v10118 = vpack.c.b16 %v10107, %v10106
    %v10119 = vpack.c.b16 %v10109, %v10108
    %v10120 = vpack.c.b16 %v10111, %v10110
    %v10121 = vpack.c.b16 %v10113, %v10112
    %10130 = vmatprep.subr.bf16.mxu0 0
    %10131 = vmatpush1.bf16.msra.mxu0 %v10114
    %10132 = vmatprep.subr.bf16.mxu0 0
    %10133 = vmatpush1.bf16.msra.mxu0 %v10115
    %10134 = vmatprep.subr.bf16.mxu0 0
    %10135 = vmatpush1.bf16.msra.mxu0 %v10116
    %10136 = vmatprep.subr.bf16.mxu0 0
    %10137 = vmatpush1.bf16.msra.mxu0 %v10117
    %10138 = vmatprep.subr.bf16.mxu0 0
    %10139 = vmatpush1.bf16.msra.mxu0 %v10118
    %10140 = vmatprep.subr.bf16.mxu0 0
    %10141 = vmatpush1.bf16.msra.mxu0 %v10119
    %10142 = vmatprep.subr.bf16.mxu0 0
    %10143 = vmatpush1.bf16.msra.mxu0 %v10120
    %10144 = vmatprep.subr.bf16.mxu0 0
    %10145 = vmatpush1.bf16.msra.mxu0 %v10121
    %10146 = vmatprep.subr.bf16.mxu0 0
    %10147 = vmatpush1.bf16.msra.mxu0 0
    %10148 = vmatprep.subr.bf16.mxu0 0
    %10149 = vmatpush1.bf16.msra.mxu0 0
    %10150 = vmatprep.subr.bf16.mxu0 0
    %10151 = vmatpush1.bf16.msra.mxu0 0
    %10152 = vmatprep.subr.bf16.mxu0 0
    %10153 = vmatpush1.bf16.msra.mxu0 0
    %10154 = vmatprep.subr.bf16.mxu0 0
    %10155 = vmatpush1.bf16.msra.mxu0 0
    %10156 = vmatprep.subr.bf16.mxu0 0
    %10157 = vmatpush1.bf16.msra.mxu0 0
    %10158 = vmatprep.subr.bf16.mxu0 0
    %10159 = vmatpush1.bf16.msra.mxu0 0
    %10160 = vmatprep.subr.bf16.mxu0 0
    %10161 = vmatpush1.bf16.msra.mxu0 0
    %10162 = vmatprep.mubr.bf16.mxu0 0
    %10163 = vmatmul.mubr.bf16.gmra.mrb[0].mxu0 %v9880
    %v10164 = vpop.f32.mrb[0].mxu0
    %v10165 = vadd.f32 %v9794, %v10164
    %v10166 = vpop.f32.mrb[0].mxu0
    %v10167 = vpop.f32.mrb[0].mxu0
    %v10168 = vadd.f32 %v9797, %v10167
    %v10169 = vpop.f32.mrb[0].mxu0
    %10170 = vmatprep.mubr.bf16.mxu0 0
    %10171 = vmatmul.mubr.bf16.gmra.mrb[0].mxu0 %v9929
    %v10172 = vpop.f32.mrb[0].mxu0
    %v10173 = vadd.f32 %v9802, %v10172
    %v10174 = vpop.f32.mrb[0].mxu0
    %v10175 = vpop.f32.mrb[0].mxu0
    %v10176 = vadd.f32 %v9805, %v10175
    %v10177 = vpop.f32.mrb[0].mxu0
    %10178 = vmatprep.mubr.bf16.mxu0 0
    %10179 = vmatmul.mubr.bf16.gmra.mrb[0].mxu0 %v9978
    %v10180 = vpop.f32.mrb[0].mxu0
    %v10181 = vadd.f32 %v9810, %v10180
    %v10182 = vpop.f32.mrb[0].mxu0
    %v10183 = vpop.f32.mrb[0].mxu0
    %v10184 = vadd.f32 %v9813, %v10183
    %v10185 = vpop.f32.mrb[0].mxu0
    %10186 = vmatprep.mubr.bf16.mxu0 0
    %10187 = vmatmul.mubr.bf16.gmra.mrb[0].mxu0 %v10027
    %v10188 = vpop.f32.mrb[0].mxu0
    %v10189 = vadd.f32 %v9818, %v10188
    %v10190 = vpop.f32.mrb[0].mxu0
    %v10191 = vpop.f32.mrb[0].mxu0
    %v10192 = vadd.f32 %v9821, %v10191
    %v10193 = vpop.f32.mrb[0].mxu0
    %10194 = vmatprep.mubr.bf16.mxu0 0
    %10195 = vmatmul.mubr.bf16.gmra.mrb[0].mxu0 %v10076
    %v10196 = vpop.f32.mrb[0].mxu0
    %v10197 = vadd.f32 %v9826, %v10196
    %v10198 = vpop.f32.mrb[0].mxu0
    %v10199 = vpop.f32.mrb[0].mxu0
    %v10200 = vadd.f32 %v9829, %v10199
    %v10201 = vpop.f32.mrb[0].mxu0
    %10202 = vdwg.mxu0
    %v10213 = vcombine.high %v10165, %v10165
    %v10215 = vunpack.c.l.s4 1983009808
    %v10216 = vunpack.c.0.s8 %v10215
    %v10217 = vlaneseq
    %v10218 = vshrl.u32 %v10217, 7
    %v10219 = vsub.s32 %v10216, %v10218
    %v10220 = vrot.slane %v10165, %v10219
    %v10222 = vunpack.c.l.s4 1983009808
    %v10223 = vunpack.c.0.s8 %v10222
    %v10224 = vlaneseq
    %v10225 = vshrl.u32 %v10224, 7
    %v10226 = vsub.s32 %v10223, %v10225
    %v10227 = vrot.slane %v10213, %v10226
    %v10228 = vcombine.high %v10220, %v10220
    %v10229 = vcombine.high %v10227, %v10227
    %v10230 = vcombine.high %v10168, %v10168
    %v10232 = vunpack.c.l.s4 1983009808
    %v10233 = vunpack.c.0.s8 %v10232
    %v10234 = vlaneseq
    %v10235 = vshrl.u32 %v10234, 7
    %v10236 = vsub.s32 %v10233, %v10235
    %v10237 = vrot.slane %v10168, %v10236
    %v10239 = vunpack.c.l.s4 1983009808
    %v10240 = vunpack.c.0.s8 %v10239
    %v10241 = vlaneseq
    %v10242 = vshrl.u32 %v10241, 7
    %v10243 = vsub.s32 %v10240, %v10242
    %v10244 = vrot.slane %v10230, %v10243
    %v10245 = vcombine.high %v10237, %v10237
    %v10246 = vcombine.high %v10244, %v10244
    %v10247 = vcombine.high %v10173, %v10173
    %v10249 = vunpack.c.l.s4 1983009808
    %v10250 = vunpack.c.0.s8 %v10249
    %v10251 = vlaneseq
    %v10252 = vshrl.u32 %v10251, 7
    %v10253 = vsub.s32 %v10250, %v10252
    %v10254 = vrot.slane %v10173, %v10253
    %v10256 = vunpack.c.l.s4 1983009808
    %v10257 = vunpack.c.0.s8 %v10256
    %v10258 = vlaneseq
    %v10259 = vshrl.u32 %v10258, 7
    %v10260 = vsub.s32 %v10257, %v10259
    %v10261 = vrot.slane %v10247, %v10260
    %v10262 = vcombine.high %v10254, %v10254
    %v10263 = vcombine.high %v10261, %v10261
    %v10264 = vcombine.high %v10176, %v10176
    %v10266 = vunpack.c.l.s4 1983009808
    %v10267 = vunpack.c.0.s8 %v10266
    %v10268 = vlaneseq
    %v10269 = vshrl.u32 %v10268, 7
    %v10270 = vsub.s32 %v10267, %v10269
    %v10271 = vrot.slane %v10176, %v10270
    %v10273 = vunpack.c.l.s4 1983009808
    %v10274 = vunpack.c.0.s8 %v10273
    %v10275 = vlaneseq
    %v10276 = vshrl.u32 %v10275, 7
    %v10277 = vsub.s32 %v10274, %v10276
    %v10278 = vrot.slane %v10264, %v10277
    %v10279 = vcombine.high %v10271, %v10271
    %v10280 = vcombine.high %v10278, %v10278
    %v10281 = vcombine.high %v10181, %v10181
    %v10283 = vunpack.c.l.s4 1983009808
    %v10284 = vunpack.c.0.s8 %v10283
    %v10285 = vlaneseq
    %v10286 = vshrl.u32 %v10285, 7
    %v10287 = vsub.s32 %v10284, %v10286
    %v10288 = vrot.slane %v10181, %v10287
    %v10290 = vunpack.c.l.s4 1983009808
    %v10291 = vunpack.c.0.s8 %v10290
    %v10292 = vlaneseq
    %v10293 = vshrl.u32 %v10292, 7
    %v10294 = vsub.s32 %v10291, %v10293
    %v10295 = vrot.slane %v10281, %v10294
    %v10296 = vcombine.high %v10288, %v10288
    %v10297 = vcombine.high %v10295, %v10295
    %v10298 = vcombine.high %v10184, %v10184
    %v10300 = vunpack.c.l.s4 1983009808
    %v10301 = vunpack.c.0.s8 %v10300
    %v10302 = vlaneseq
    %v10303 = vshrl.u32 %v10302, 7
    %v10304 = vsub.s32 %v10301, %v10303
    %v10305 = vrot.slane %v10184, %v10304
    %v10307 = vunpack.c.l.s4 1983009808
    %v10308 = vunpack.c.0.s8 %v10307
    %v10309 = vlaneseq
    %v10310 = vshrl.u32 %v10309, 7
    %v10311 = vsub.s32 %v10308, %v10310
    %v10312 = vrot.slane %v10298, %v10311
    %v10313 = vcombine.high %v10305, %v10305
    %v10314 = vcombine.high %v10312, %v10312
    %v10315 = vcombine.high %v10189, %v10189
    %v10317 = vunpack.c.l.s4 1983009808
    %v10318 = vunpack.c.0.s8 %v10317
    %v10319 = vlaneseq
    %v10320 = vshrl.u32 %v10319, 7
    %v10321 = vsub.s32 %v10318, %v10320
    %v10322 = vrot.slane %v10189, %v10321
    %v10324 = vunpack.c.l.s4 1983009808
    %v10325 = vunpack.c.0.s8 %v10324
    %v10326 = vlaneseq
    %v10327 = vshrl.u32 %v10326, 7
    %v10328 = vsub.s32 %v10325, %v10327
    %v10329 = vrot.slane %v10315, %v10328
    %v10330 = vcombine.high %v10322, %v10322
    %v10331 = vcombine.high %v10329, %v10329
    %v10332 = vcombine.high %v10192, %v10192
    %v10334 = vunpack.c.l.s4 1983009808
    %v10335 = vunpack.c.0.s8 %v10334
    %v10336 = vlaneseq
    %v10337 = vshrl.u32 %v10336, 7
    %v10338 = vsub.s32 %v10335, %v10337
    %v10339 = vrot.slane %v10192, %v10338
    %v10341 = vunpack.c.l.s4 1983009808
    %v10342 = vunpack.c.0.s8 %v10341
    %v10343 = vlaneseq
    %v10344 = vshrl.u32 %v10343, 7
    %v10345 = vsub.s32 %v10342, %v10344
    %v10346 = vrot.slane %v10332, %v10345
    %v10347 = vcombine.high %v10339, %v10339
    %v10348 = vcombine.high %v10346, %v10346
    %v10349 = vcombine.high %v10197, %v10197
    %v10351 = vunpack.c.l.s4 1983009808
    %v10352 = vunpack.c.0.s8 %v10351
    %v10353 = vlaneseq
    %v10354 = vshrl.u32 %v10353, 7
    %v10355 = vsub.s32 %v10352, %v10354
    %v10356 = vrot.slane %v10197, %v10355
    %v10358 = vunpack.c.l.s4 1983009808
    %v10359 = vunpack.c.0.s8 %v10358
    %v10360 = vlaneseq
    %v10361 = vshrl.u32 %v10360, 7
    %v10362 = vsub.s32 %v10359, %v10361
    %v10363 = vrot.slane %v10349, %v10362
    %v10364 = vcombine.high %v10356, %v10356
    %v10365 = vcombine.high %v10363, %v10363
    %v10366 = vcombine.high %v10200, %v10200
    %v10368 = vunpack.c.l.s4 1983009808
    %v10369 = vunpack.c.0.s8 %v10368
    %v10370 = vlaneseq
    %v10371 = vshrl.u32 %v10370, 7
    %v10372 = vsub.s32 %v10369, %v10371
    %v10373 = vrot.slane %v10200, %v10372
    %v10375 = vunpack.c.l.s4 1983009808
    %v10376 = vunpack.c.0.s8 %v10375
    %v10377 = vlaneseq
    %v10378 = vshrl.u32 %v10377, 7
    %v10379 = vsub.s32 %v10376, %v10378
    %v10380 = vrot.slane %v10366, %v10379
    %v10381 = vcombine.high %v10373, %v10373
    %v10382 = vcombine.high %v10380, %v10380
    %s10423 = scalar_lea.vmem [#allocation5], 512
    %v10424 = vld [vmem:[%s10423] sm:$0xf]
    %v10425 = vld [vmem:[%s10423 + $0x4] sm:$0xf]
    %v10426 = vld [vmem:[%s10423 + $0x8] sm:$0xf]
    %v10427 = vld [vmem:[%s10423 + $0xc] sm:$0xf]
    %v10428 = vld [vmem:[%s10423 + $0x10] sm:$0xf]
    %v10429 = vld [vmem:[%s10423 + $0x14] sm:$0xf]
    %v10430 = vld [vmem:[%s10423 + $0x18] sm:$0xf]
    %v10431 = vld [vmem:[%s10423 + $0x1c] sm:$0xf]
    %v10432 = vld [vmem:[%s10423 + $0x20] sm:$0xf]
    %v10433 = vld [vmem:[%s10423 + $0x24] sm:$0xf]
    %v10434 = vld [vmem:[%s10423 + $0x28] sm:$0xf]
    %v10435 = vld [vmem:[%s10423 + $0x2c] sm:$0xf]
    %v10436 = vld [vmem:[%s10423 + $0x30] sm:$0xf]
    %v10437 = vld [vmem:[%s10423 + $0x34] sm:$0xf]
    %v10438 = vld [vmem:[%s10423 + $0x38] sm:$0xf]
    %v10439 = vld [vmem:[%s10423 + $0x3c] sm:$0xf]
    %v10440 = vcombine.low %v8794, %v8802
    %v10441 = vcombine.low %v8803, %v8787
    %v10442 = vcombine.low %v8801, %v8841
    %v10443 = vcombine.low %v8849, %v8850
    %v10445 = vunpack.c.l.s4 1966171168
    %v10446 = vunpack.c.0.s8 %v10445
    %v10447 = vlaneseq
    %v10448 = vshrl.u32 %v10447, 7
    %v10449 = vsub.s32 %v10446, %v10448
    %v10450 = vrot.slane %v10440, %v10449
    %v10452 = vunpack.c.l.s4 1966171168
    %v10453 = vunpack.c.0.s8 %v10452
    %v10454 = vlaneseq
    %v10455 = vshrl.u32 %v10454, 7
    %v10456 = vsub.s32 %v10453, %v10455
    %v10457 = vrot.slane %v10441, %v10456
    %v10459 = vunpack.c.l.s4 1966171168
    %v10460 = vunpack.c.0.s8 %v10459
    %v10461 = vlaneseq
    %v10462 = vshrl.u32 %v10461, 7
    %v10463 = vsub.s32 %v10460, %v10462
    %v10464 = vrot.slane %v10442, %v10463
    %v10466 = vunpack.c.l.s4 1966171168
    %v10467 = vunpack.c.0.s8 %v10466
    %v10468 = vlaneseq
    %v10469 = vshrl.u32 %v10468, 7
    %v10470 = vsub.s32 %v10467, %v10469
    %v10471 = vrot.slane %v10443, %v10470
    %v10472 = vcombine.low %v10450, %v10457
    %v10473 = vcombine.low %v10464, %v10471
    %v10475 = vunpack.c.l.s4 1966171168
    %v10476 = vunpack.c.0.s8 %v10475
    %v10477 = vlaneseq
    %v10478 = vshrl.u32 %v10477, 7
    %v10479 = vsub.s32 %v10476, %v10478
    %v10480 = vrot.slane %v10472, %v10479
    %v10482 = vunpack.c.l.s4 1966171168
    %v10483 = vunpack.c.0.s8 %v10482
    %v10484 = vlaneseq
    %v10485 = vshrl.u32 %v10484, 7
    %v10486 = vsub.s32 %v10483, %v10485
    %v10487 = vrot.slane %v10473, %v10486
    %v10488 = vcombine.low %v10480, %v10487
    %v10489 = vcombine.low %v8834, %v8848
    %v10490 = vcombine.low %v8888, %v8896
    %v10491 = vcombine.low %v8897, %v8881
    %v10492 = vcombine.low %v8895, %v8935
    %v10494 = vunpack.c.l.s4 1966171168
    %v10495 = vunpack.c.0.s8 %v10494
    %v10496 = vlaneseq
    %v10497 = vshrl.u32 %v10496, 7
    %v10498 = vsub.s32 %v10495, %v10497
    %v10499 = vrot.slane %v10489, %v10498
    %v10501 = vunpack.c.l.s4 1966171168
    %v10502 = vunpack.c.0.s8 %v10501
    %v10503 = vlaneseq
    %v10504 = vshrl.u32 %v10503, 7
    %v10505 = vsub.s32 %v10502, %v10504
    %v10506 = vrot.slane %v10490, %v10505
    %v10508 = vunpack.c.l.s4 1966171168
    %v10509 = vunpack.c.0.s8 %v10508
    %v10510 = vlaneseq
    %v10511 = vshrl.u32 %v10510, 7
    %v10512 = vsub.s32 %v10509, %v10511
    %v10513 = vrot.slane %v10491, %v10512
    %v10515 = vunpack.c.l.s4 1966171168
    %v10516 = vunpack.c.0.s8 %v10515
    %v10517 = vlaneseq
    %v10518 = vshrl.u32 %v10517, 7
    %v10519 = vsub.s32 %v10516, %v10518
    %v10520 = vrot.slane %v10492, %v10519
    %v10521 = vcombine.low %v10499, %v10506
    %v10522 = vcombine.low %v10513, %v10520
    %v10524 = vunpack.c.l.s4 1966171168
    %v10525 = vunpack.c.0.s8 %v10524
    %v10526 = vlaneseq
    %v10527 = vshrl.u32 %v10526, 7
    %v10528 = vsub.s32 %v10525, %v10527
    %v10529 = vrot.slane %v10521, %v10528
    %v10531 = vunpack.c.l.s4 1966171168
    %v10532 = vunpack.c.0.s8 %v10531
    %v10533 = vlaneseq
    %v10534 = vshrl.u32 %v10533, 7
    %v10535 = vsub.s32 %v10532, %v10534
    %v10536 = vrot.slane %v10522, %v10535
    %v10537 = vcombine.low %v10529, %v10536
    %v10538 = vcombine.low %v8943, %v8944
    %v10539 = vcombine.low %v8928, %v8942
    %v10540 = vcombine.low %v8982, %v8990
    %v10541 = vcombine.low %v8991, %v8975
    %v10543 = vunpack.c.l.s4 1966171168
    %v10544 = vunpack.c.0.s8 %v10543
    %v10545 = vlaneseq
    %v10546 = vshrl.u32 %v10545, 7
    %v10547 = vsub.s32 %v10544, %v10546
    %v10548 = vrot.slane %v10538, %v10547
    %v10550 = vunpack.c.l.s4 1966171168
    %v10551 = vunpack.c.0.s8 %v10550
    %v10552 = vlaneseq
    %v10553 = vshrl.u32 %v10552, 7
    %v10554 = vsub.s32 %v10551, %v10553
    %v10555 = vrot.slane %v10539, %v10554
    %v10557 = vunpack.c.l.s4 1966171168
    %v10558 = vunpack.c.0.s8 %v10557
    %v10559 = vlaneseq
    %v10560 = vshrl.u32 %v10559, 7
    %v10561 = vsub.s32 %v10558, %v10560
    %v10562 = vrot.slane %v10540, %v10561
    %v10564 = vunpack.c.l.s4 1966171168
    %v10565 = vunpack.c.0.s8 %v10564
    %v10566 = vlaneseq
    %v10567 = vshrl.u32 %v10566, 7
    %v10568 = vsub.s32 %v10565, %v10567
    %v10569 = vrot.slane %v10541, %v10568
    %v10570 = vcombine.low %v10548, %v10555
    %v10571 = vcombine.low %v10562, %v10569
    %v10573 = vunpack.c.l.s4 1966171168
    %v10574 = vunpack.c.0.s8 %v10573
    %v10575 = vlaneseq
    %v10576 = vshrl.u32 %v10575, 7
    %v10577 = vsub.s32 %v10574, %v10576
    %v10578 = vrot.slane %v10570, %v10577
    %v10580 = vunpack.c.l.s4 1966171168
    %v10581 = vunpack.c.0.s8 %v10580
    %v10582 = vlaneseq
    %v10583 = vshrl.u32 %v10582, 7
    %v10584 = vsub.s32 %v10581, %v10583
    %v10585 = vrot.slane %v10571, %v10584
    %v10586 = vcombine.low %v10578, %v10585
    %v10587 = vcombine.low %v8989, %v9029
    %v10588 = vcombine.low %v9037, %v9038
    %v10589 = vcombine.low %v9022, %v9036
    %v10590 = vcombine.low %v9076, %v9084
    %v10592 = vunpack.c.l.s4 1966171168
    %v10593 = vunpack.c.0.s8 %v10592
    %v10594 = vlaneseq
    %v10595 = vshrl.u32 %v10594, 7
    %v10596 = vsub.s32 %v10593, %v10595
    %v10597 = vrot.slane %v10587, %v10596
    %v10599 = vunpack.c.l.s4 1966171168
    %v10600 = vunpack.c.0.s8 %v10599
    %v10601 = vlaneseq
    %v10602 = vshrl.u32 %v10601, 7
    %v10603 = vsub.s32 %v10600, %v10602
    %v10604 = vrot.slane %v10588, %v10603
    %v10606 = vunpack.c.l.s4 1966171168
    %v10607 = vunpack.c.0.s8 %v10606
    %v10608 = vlaneseq
    %v10609 = vshrl.u32 %v10608, 7
    %v10610 = vsub.s32 %v10607, %v10609
    %v10611 = vrot.slane %v10589, %v10610
    %v10613 = vunpack.c.l.s4 1966171168
    %v10614 = vunpack.c.0.s8 %v10613
    %v10615 = vlaneseq
    %v10616 = vshrl.u32 %v10615, 7
    %v10617 = vsub.s32 %v10614, %v10616
    %v10618 = vrot.slane %v10590, %v10617
    %v10619 = vcombine.low %v10597, %v10604
    %v10620 = vcombine.low %v10611, %v10618
    %v10622 = vunpack.c.l.s4 1966171168
    %v10623 = vunpack.c.0.s8 %v10622
    %v10624 = vlaneseq
    %v10625 = vshrl.u32 %v10624, 7
    %v10626 = vsub.s32 %v10623, %v10625
    %v10627 = vrot.slane %v10619, %v10626
    %v10629 = vunpack.c.l.s4 1966171168
    %v10630 = vunpack.c.0.s8 %v10629
    %v10631 = vlaneseq
    %v10632 = vshrl.u32 %v10631, 7
    %v10633 = vsub.s32 %v10630, %v10632
    %v10634 = vrot.slane %v10620, %v10633
    %v10635 = vcombine.low %v10627, %v10634
    %v10636 = vcombine.low %v9085, %v9069
    %v10637 = vcombine.low %v9083, %v9123
    %v10638 = vcombine.low %v9131, %v9132
    %v10639 = vcombine.low %v9116, %v9130
    %v10641 = vunpack.c.l.s4 1966171168
    %v10642 = vunpack.c.0.s8 %v10641
    %v10643 = vlaneseq
    %v10644 = vshrl.u32 %v10643, 7
    %v10645 = vsub.s32 %v10642, %v10644
    %v10646 = vrot.slane %v10636, %v10645
    %v10648 = vunpack.c.l.s4 1966171168
    %v10649 = vunpack.c.0.s8 %v10648
    %v10650 = vlaneseq
    %v10651 = vshrl.u32 %v10650, 7
    %v10652 = vsub.s32 %v10649, %v10651
    %v10653 = vrot.slane %v10637, %v10652
    %v10655 = vunpack.c.l.s4 1966171168
    %v10656 = vunpack.c.0.s8 %v10655
    %v10657 = vlaneseq
    %v10658 = vshrl.u32 %v10657, 7
    %v10659 = vsub.s32 %v10656, %v10658
    %v10660 = vrot.slane %v10638, %v10659
    %v10662 = vunpack.c.l.s4 1966171168
    %v10663 = vunpack.c.0.s8 %v10662
    %v10664 = vlaneseq
    %v10665 = vshrl.u32 %v10664, 7
    %v10666 = vsub.s32 %v10663, %v10665
    %v10667 = vrot.slane %v10639, %v10666
    %v10668 = vcombine.low %v10646, %v10653
    %v10669 = vcombine.low %v10660, %v10667
    %v10671 = vunpack.c.l.s4 1966171168
    %v10672 = vunpack.c.0.s8 %v10671
    %v10673 = vlaneseq
    %v10674 = vshrl.u32 %v10673, 7
    %v10675 = vsub.s32 %v10672, %v10674
    %v10676 = vrot.slane %v10668, %v10675
    %v10678 = vunpack.c.l.s4 1966171168
    %v10679 = vunpack.c.0.s8 %v10678
    %v10680 = vlaneseq
    %v10681 = vshrl.u32 %v10680, 7
    %v10682 = vsub.s32 %v10679, %v10681
    %v10683 = vrot.slane %v10669, %v10682
    %v10684 = vcombine.low %v10676, %v10683
    %v10706 = vunpack.c.l.b16 %v10424
    %v10707 = vunpack.c.l.b16 %v10425
    %v10708 = vunpack.c.l.b16 %v10426
    %v10709 = vunpack.c.l.b16 %v10427
    %v10710 = vunpack.c.l.b16 %v10428
    %v10711 = vunpack.c.l.b16 %v10429
    %v10712 = vunpack.c.l.b16 %v10430
    %v10713 = vunpack.c.l.b16 %v10431
    %v10714 = vunpack.c.l.b16 %v10432
    %v10715 = vunpack.c.l.b16 %v10433
    %v10716 = vunpack.c.l.b16 %v10434
    %v10717 = vunpack.c.l.b16 %v10435
    %v10718 = vunpack.c.l.b16 %v10436
    %v10719 = vunpack.c.l.b16 %v10437
    %v10720 = vunpack.c.l.b16 %v10438
    %v10721 = vunpack.c.l.b16 %v10439
    %v10722 = vpack.c.b16 %v10707, %v10706
    %v10723 = vpack.c.b16 %v10709, %v10708
    %v10724 = vpack.c.b16 %v10711, %v10710
    %v10725 = vpack.c.b16 %v10713, %v10712
    %v10726 = vpack.c.b16 %v10715, %v10714
    %v10727 = vpack.c.b16 %v10717, %v10716
    %v10728 = vpack.c.b16 %v10719, %v10718
    %v10729 = vpack.c.b16 %v10721, %v10720
    %10738 = vmatprep.subr.bf16.mxu0 0
    %10739 = vmatpush1.bf16.msra.mxu0 %v10722
    %10740 = vmatprep.subr.bf16.mxu0 0
    %10741 = vmatpush1.bf16.msra.mxu0 %v10723
    %10742 = vmatprep.subr.bf16.mxu0 0
    %10743 = vmatpush1.bf16.msra.mxu0 %v10724
    %10744 = vmatprep.subr.bf16.mxu0 0
    %10745 = vmatpush1.bf16.msra.mxu0 %v10725
    %10746 = vmatprep.subr.bf16.mxu0 0
    %10747 = vmatpush1.bf16.msra.mxu0 %v10726
    %10748 = vmatprep.subr.bf16.mxu0 0
    %10749 = vmatpush1.bf16.msra.mxu0 %v10727
    %10750 = vmatprep.subr.bf16.mxu0 0
    %10751 = vmatpush1.bf16.msra.mxu0 %v10728
    %10752 = vmatprep.subr.bf16.mxu0 0
    %10753 = vmatpush1.bf16.msra.mxu0 %v10729
    %10754 = vmatprep.subr.bf16.mxu0 0
    %10755 = vmatpush1.bf16.msra.mxu0 0
    %10756 = vmatprep.subr.bf16.mxu0 0
    %10757 = vmatpush1.bf16.msra.mxu0 0
    %10758 = vmatprep.subr.bf16.mxu0 0
    %10759 = vmatpush1.bf16.msra.mxu0 0
    %10760 = vmatprep.subr.bf16.mxu0 0
    %10761 = vmatpush1.bf16.msra.mxu0 0
    %10762 = vmatprep.subr.bf16.mxu0 0
    %10763 = vmatpush1.bf16.msra.mxu0 0
    %10764 = vmatprep.subr.bf16.mxu0 0
    %10765 = vmatpush1.bf16.msra.mxu0 0
    %10766 = vmatprep.subr.bf16.mxu0 0
    %10767 = vmatpush1.bf16.msra.mxu0 0
    %10768 = vmatprep.subr.bf16.mxu0 0
    %10769 = vmatpush1.bf16.msra.mxu0 0
    %10770 = vmatprep.mubr.bf16.mxu0 0
    %10771 = vmatmul.mubr.bf16.gmra.mrb[0].mxu0 %v10488
    %v10772 = vpop.f32.mrb[0].mxu0
    %v10773 = vadd.f32 0.0, %v10772
    %v10774 = vpop.f32.mrb[0].mxu0
    %v10775 = vpop.f32.mrb[0].mxu0
    %v10776 = vadd.f32 0.0, %v10775
    %v10777 = vpop.f32.mrb[0].mxu0
    %10778 = vmatprep.mubr.bf16.mxu0 0
    %10779 = vmatmul.mubr.bf16.gmra.mrb[0].mxu0 %v10537
    %v10780 = vpop.f32.mrb[0].mxu0
    %v10781 = vadd.f32 0.0, %v10780
    %v10782 = vpop.f32.mrb[0].mxu0
    %v10783 = vpop.f32.mrb[0].mxu0
    %v10784 = vadd.f32 0.0, %v10783
    %v10785 = vpop.f32.mrb[0].mxu0
    %10786 = vmatprep.mubr.bf16.mxu0 0
    %10787 = vmatmul.mubr.bf16.gmra.mrb[0].mxu0 %v10586
    %v10788 = vpop.f32.mrb[0].mxu0
    %v10789 = vadd.f32 0.0, %v10788
    %v10790 = vpop.f32.mrb[0].mxu0
    %v10791 = vpop.f32.mrb[0].mxu0
    %v10792 = vadd.f32 0.0, %v10791
    %v10793 = vpop.f32.mrb[0].mxu0
    %10794 = vmatprep.mubr.bf16.mxu0 0
    %10795 = vmatmul.mubr.bf16.gmra.mrb[0].mxu0 %v10635
    %v10796 = vpop.f32.mrb[0].mxu0
    %v10797 = vadd.f32 0.0, %v10796
    %v10798 = vpop.f32.mrb[0].mxu0
    %v10799 = vpop.f32.mrb[0].mxu0
    %v10800 = vadd.f32 0.0, %v10799
    %v10801 = vpop.f32.mrb[0].mxu0
    %10802 = vmatprep.mubr.bf16.mxu0 0
    %10803 = vmatmul.mubr.bf16.gmra.mrb[0].mxu0 %v10684
    %v10804 = vpop.f32.mrb[0].mxu0
    %v10805 = vadd.f32 0.0, %v10804
    %v10806 = vpop.f32.mrb[0].mxu0
    %v10807 = vpop.f32.mrb[0].mxu0
    %v10808 = vadd.f32 0.0, %v10807
    %v10809 = vpop.f32.mrb[0].mxu0
    %10810 = vdwg.mxu0
    %v10821 = vcombine.high %v10773, %v10773
    %v10823 = vunpack.c.l.s4 1983009808
    %v10824 = vunpack.c.0.s8 %v10823
    %v10825 = vlaneseq
    %v10826 = vshrl.u32 %v10825, 7
    %v10827 = vsub.s32 %v10824, %v10826
    %v10828 = vrot.slane %v10773, %v10827
    %v10830 = vunpack.c.l.s4 1983009808
    %v10831 = vunpack.c.0.s8 %v10830
    %v10832 = vlaneseq
    %v10833 = vshrl.u32 %v10832, 7
    %v10834 = vsub.s32 %v10831, %v10833
    %v10835 = vrot.slane %v10821, %v10834
    %v10836 = vcombine.high %v10828, %v10828
    %v10837 = vcombine.high %v10835, %v10835
    %v10838 = vcombine.high %v10776, %v10776
    %v10840 = vunpack.c.l.s4 1983009808
    %v10841 = vunpack.c.0.s8 %v10840
    %v10842 = vlaneseq
    %v10843 = vshrl.u32 %v10842, 7
    %v10844 = vsub.s32 %v10841, %v10843
    %v10845 = vrot.slane %v10776, %v10844
    %v10847 = vunpack.c.l.s4 1983009808
    %v10848 = vunpack.c.0.s8 %v10847
    %v10849 = vlaneseq
    %v10850 = vshrl.u32 %v10849, 7
    %v10851 = vsub.s32 %v10848, %v10850
    %v10852 = vrot.slane %v10838, %v10851
    %v10853 = vcombine.high %v10845, %v10845
    %v10854 = vcombine.high %v10852, %v10852
    %v10855 = vcombine.high %v10781, %v10781
    %v10857 = vunpack.c.l.s4 1983009808
    %v10858 = vunpack.c.0.s8 %v10857
    %v10859 = vlaneseq
    %v10860 = vshrl.u32 %v10859, 7
    %v10861 = vsub.s32 %v10858, %v10860
    %v10862 = vrot.slane %v10781, %v10861
    %v10864 = vunpack.c.l.s4 1983009808
    %v10865 = vunpack.c.0.s8 %v10864
    %v10866 = vlaneseq
    %v10867 = vshrl.u32 %v10866, 7
    %v10868 = vsub.s32 %v10865, %v10867
    %v10869 = vrot.slane %v10855, %v10868
    %v10870 = vcombine.high %v10862, %v10862
    %v10871 = vcombine.high %v10869, %v10869
    %v10872 = vcombine.high %v10784, %v10784
    %v10874 = vunpack.c.l.s4 1983009808
    %v10875 = vunpack.c.0.s8 %v10874
    %v10876 = vlaneseq
    %v10877 = vshrl.u32 %v10876, 7
    %v10878 = vsub.s32 %v10875, %v10877
    %v10879 = vrot.slane %v10784, %v10878
    %v10881 = vunpack.c.l.s4 1983009808
    %v10882 = vunpack.c.0.s8 %v10881
    %v10883 = vlaneseq
    %v10884 = vshrl.u32 %v10883, 7
    %v10885 = vsub.s32 %v10882, %v10884
    %v10886 = vrot.slane %v10872, %v10885
    %v10887 = vcombine.high %v10879, %v10879
    %v10888 = vcombine.high %v10886, %v10886
    %v10889 = vcombine.high %v10789, %v10789
    %v10891 = vunpack.c.l.s4 1983009808
    %v10892 = vunpack.c.0.s8 %v10891
    %v10893 = vlaneseq
    %v10894 = vshrl.u32 %v10893, 7
    %v10895 = vsub.s32 %v10892, %v10894
    %v10896 = vrot.slane %v10789, %v10895
    %v10898 = vunpack.c.l.s4 1983009808
    %v10899 = vunpack.c.0.s8 %v10898
    %v10900 = vlaneseq
    %v10901 = vshrl.u32 %v10900, 7
    %v10902 = vsub.s32 %v10899, %v10901
    %v10903 = vrot.slane %v10889, %v10902
    %v10904 = vcombine.high %v10896, %v10896
    %v10905 = vcombine.high %v10903, %v10903
    %v10906 = vcombine.high %v10792, %v10792
    %v10908 = vunpack.c.l.s4 1983009808
    %v10909 = vunpack.c.0.s8 %v10908
    %v10910 = vlaneseq
    %v10911 = vshrl.u32 %v10910, 7
    %v10912 = vsub.s32 %v10909, %v10911
    %v10913 = vrot.slane %v10792, %v10912
    %v10915 = vunpack.c.l.s4 1983009808
    %v10916 = vunpack.c.0.s8 %v10915
    %v10917 = vlaneseq
    %v10918 = vshrl.u32 %v10917, 7
    %v10919 = vsub.s32 %v10916, %v10918
    %v10920 = vrot.slane %v10906, %v10919
    %v10921 = vcombine.high %v10913, %v10913
    %v10922 = vcombine.high %v10920, %v10920
    %v10923 = vcombine.high %v10797, %v10797
    %v10925 = vunpack.c.l.s4 1983009808
    %v10926 = vunpack.c.0.s8 %v10925
    %v10927 = vlaneseq
    %v10928 = vshrl.u32 %v10927, 7
    %v10929 = vsub.s32 %v10926, %v10928
    %v10930 = vrot.slane %v10797, %v10929
    %v10932 = vunpack.c.l.s4 1983009808
    %v10933 = vunpack.c.0.s8 %v10932
    %v10934 = vlaneseq
    %v10935 = vshrl.u32 %v10934, 7
    %v10936 = vsub.s32 %v10933, %v10935
    %v10937 = vrot.slane %v10923, %v10936
    %v10938 = vcombine.high %v10930, %v10930
    %v10939 = vcombine.high %v10937, %v10937
    %v10940 = vcombine.high %v10800, %v10800
    %v10942 = vunpack.c.l.s4 1983009808
    %v10943 = vunpack.c.0.s8 %v10942
    %v10944 = vlaneseq
    %v10945 = vshrl.u32 %v10944, 7
    %v10946 = vsub.s32 %v10943, %v10945
    %v10947 = vrot.slane %v10800, %v10946
    %v10949 = vunpack.c.l.s4 1983009808
    %v10950 = vunpack.c.0.s8 %v10949
    %v10951 = vlaneseq
    %v10952 = vshrl.u32 %v10951, 7
    %v10953 = vsub.s32 %v10950, %v10952
    %v10954 = vrot.slane %v10940, %v10953
    %v10955 = vcombine.high %v10947, %v10947
    %v10956 = vcombine.high %v10954, %v10954
    %v10957 = vcombine.high %v10805, %v10805
    %v10959 = vunpack.c.l.s4 1983009808
    %v10960 = vunpack.c.0.s8 %v10959
    %v10961 = vlaneseq
    %v10962 = vshrl.u32 %v10961, 7
    %v10963 = vsub.s32 %v10960, %v10962
    %v10964 = vrot.slane %v10805, %v10963
    %v10966 = vunpack.c.l.s4 1983009808
    %v10967 = vunpack.c.0.s8 %v10966
    %v10968 = vlaneseq
    %v10969 = vshrl.u32 %v10968, 7
    %v10970 = vsub.s32 %v10967, %v10969
    %v10971 = vrot.slane %v10957, %v10970
    %v10972 = vcombine.high %v10964, %v10964
    %v10973 = vcombine.high %v10971, %v10971
    %v10974 = vcombine.high %v10808, %v10808
    %v10976 = vunpack.c.l.s4 1983009808
    %v10977 = vunpack.c.0.s8 %v10976
    %v10978 = vlaneseq
    %v10979 = vshrl.u32 %v10978, 7
    %v10980 = vsub.s32 %v10977, %v10979
    %v10981 = vrot.slane %v10808, %v10980
    %v10983 = vunpack.c.l.s4 1983009808
    %v10984 = vunpack.c.0.s8 %v10983
    %v10985 = vlaneseq
    %v10986 = vshrl.u32 %v10985, 7
    %v10987 = vsub.s32 %v10984, %v10986
    %v10988 = vrot.slane %v10974, %v10987
    %v10989 = vcombine.high %v10981, %v10981
    %v10990 = vcombine.high %v10988, %v10988
    %v11031 = vadd.f32 %v10220, %v10828
    %v11032 = vadd.f32 %v10228, %v10836
    %v11033 = vadd.f32 %v10227, %v10835
    %v11034 = vadd.f32 %v10229, %v10837
    %v11035 = vadd.f32 %v10237, %v10845
    %v11036 = vadd.f32 %v10245, %v10853
    %v11037 = vadd.f32 %v10244, %v10852
    %v11038 = vadd.f32 %v10246, %v10854
    %v11039 = vadd.f32 %v10254, %v10862
    %v11040 = vadd.f32 %v10262, %v10870
    %v11041 = vadd.f32 %v10261, %v10869
    %v11042 = vadd.f32 %v10263, %v10871
    %v11043 = vadd.f32 %v10271, %v10879
    %v11044 = vadd.f32 %v10279, %v10887
    %v11045 = vadd.f32 %v10278, %v10886
    %v11046 = vadd.f32 %v10280, %v10888
    %v11047 = vadd.f32 %v10288, %v10896
    %v11048 = vadd.f32 %v10296, %v10904
    %v11049 = vadd.f32 %v10295, %v10903
    %v11050 = vadd.f32 %v10297, %v10905
    %v11051 = vadd.f32 %v10305, %v10913
    %v11052 = vadd.f32 %v10313, %v10921
    %v11053 = vadd.f32 %v10312, %v10920
    %v11054 = vadd.f32 %v10314, %v10922
    %v11055 = vadd.f32 %v10322, %v10930
    %v11056 = vadd.f32 %v10330, %v10938
    %v11057 = vadd.f32 %v10329, %v10937
    %v11058 = vadd.f32 %v10331, %v10939
    %v11059 = vadd.f32 %v10339, %v10947
    %v11060 = vadd.f32 %v10347, %v10955
    %v11061 = vadd.f32 %v10346, %v10954
    %v11062 = vadd.f32 %v10348, %v10956
    %v11063 = vadd.f32 %v10356, %v10964
    %v11064 = vadd.f32 %v10364, %v10972
    %v11065 = vadd.f32 %v10363, %v10971
    %v11066 = vadd.f32 %v10365, %v10973
    %v11067 = vadd.f32 %v10373, %v10981
    %v11068 = vadd.f32 %v10381, %v10989
    %v11069 = vadd.f32 %v10380, %v10988
    %v11070 = vadd.f32 %v10382, %v10990
    %s11071 = scalar_lea.vmem %s5, 2
    %v11072 = vld [vmem:[%s11071] sm:$0x1]
    %v11074 = vlaneseq
    %v11075 = vshrl.u32 %v11074, 7
    %v11076 = vsub.s32 0, %v11075
    %v11077 = vrot.slane %v11072, %v11076
    %v11078 = vcombine.high %v11077, %v11077
    %v11080 = vunpack.c.l.s4 1983009808
    %v11081 = vunpack.c.0.s8 %v11080
    %v11082 = vlaneseq
    %v11083 = vshrl.u32 %v11082, 7
    %v11084 = vsub.s32 %v11081, %v11083
    %v11085 = vrot.slane %v11077, %v11084
    %v11087 = vunpack.c.l.s4 1983009808
    %v11088 = vunpack.c.0.s8 %v11087
    %v11089 = vlaneseq
    %v11090 = vshrl.u32 %v11089, 7
    %v11091 = vsub.s32 %v11088, %v11090
    %v11092 = vrot.slane %v11078, %v11091
    %v11093 = vcombine.high %v11085, %v11085
    %v11094 = vcombine.high %v11092, %v11092
    %v11099 = vadd.f32 %v11031, %v11085
    %v11100 = vadd.f32 %v11032, %v11093
    %v11101 = vadd.f32 %v11033, %v11092
    %v11102 = vadd.f32 %v11034, %v11094
    %v11103 = vadd.f32 %v11035, %v11085
    %v11104 = vadd.f32 %v11036, %v11085
    %v11105 = vadd.f32 %v11037, %v11093
    %v11106 = vadd.f32 %v11038, %v11092
    %v11107 = vadd.f32 %v11039, %v11094
    %v11108 = vadd.f32 %v11040, %v11085
    %v11109 = vadd.f32 %v11041, %v11085
    %v11110 = vadd.f32 %v11042, %v11093
    %v11111 = vadd.f32 %v11043, %v11092
    %v11112 = vadd.f32 %v11044, %v11094
    %v11113 = vadd.f32 %v11045, %v11085
    %v11114 = vadd.f32 %v11046, %v11085
    %v11115 = vadd.f32 %v11047, %v11093
    %v11116 = vadd.f32 %v11048, %v11092
    %v11117 = vadd.f32 %v11049, %v11094
    %v11118 = vadd.f32 %v11050, %v11085
    %v11119 = vadd.f32 %v11051, %v11085
    %v11120 = vadd.f32 %v11052, %v11093
    %v11121 = vadd.f32 %v11053, %v11092
    %v11122 = vadd.f32 %v11054, %v11094
    %v11123 = vadd.f32 %v11055, %v11085
    %v11124 = vadd.f32 %v11056, %v11085
    %v11125 = vadd.f32 %v11057, %v11093
    %v11126 = vadd.f32 %v11058, %v11092
    %v11127 = vadd.f32 %v11059, %v11094
    %v11128 = vadd.f32 %v11060, %v11085
    %v11129 = vadd.f32 %v11061, %v11085
    %v11130 = vadd.f32 %v11062, %v11093
    %v11131 = vadd.f32 %v11063, %v11092
    %v11132 = vadd.f32 %v11064, %v11094
    %v11133 = vadd.f32 %v11065, %v11085
    %v11134 = vadd.f32 %v11066, %v11085
    %v11135 = vadd.f32 %v11067, %v11093
    %v11136 = vadd.f32 %v11068, %v11092
    %v11137 = vadd.f32 %v11069, %v11094
    %v11138 = vadd.f32 %v11070, %v11085
    %v11139 = vmax.f32 %v11099, 0.0
    %v11140 = vmax.f32 %v11100, 0.0
    %v11141 = vmax.f32 %v11101, 0.0
    %v11142 = vmax.f32 %v11102, 0.0
    %v11143 = vmax.f32 %v11103, 0.0
    %v11144 = vmax.f32 %v11104, 0.0
    %v11145 = vmax.f32 %v11105, 0.0
    %v11146 = vmax.f32 %v11106, 0.0
    %v11147 = vmax.f32 %v11107, 0.0
    %v11148 = vmax.f32 %v11108, 0.0
    %v11149 = vmax.f32 %v11109, 0.0
    %v11150 = vmax.f32 %v11110, 0.0
    %v11151 = vmax.f32 %v11111, 0.0
    %v11152 = vmax.f32 %v11112, 0.0
    %v11153 = vmax.f32 %v11113, 0.0
    %v11154 = vmax.f32 %v11114, 0.0
    %v11155 = vmax.f32 %v11115, 0.0
    %v11156 = vmax.f32 %v11116, 0.0
    %v11157 = vmax.f32 %v11117, 0.0
    %v11158 = vmax.f32 %v11118, 0.0
    %v11159 = vmax.f32 %v11119, 0.0
    %v11160 = vmax.f32 %v11120, 0.0
    %v11161 = vmax.f32 %v11121, 0.0
    %v11162 = vmax.f32 %v11122, 0.0
    %v11163 = vmax.f32 %v11123, 0.0
    %v11164 = vmax.f32 %v11124, 0.0
    %v11165 = vmax.f32 %v11125, 0.0
    %v11166 = vmax.f32 %v11126, 0.0
    %v11167 = vmax.f32 %v11127, 0.0
    %v11168 = vmax.f32 %v11128, 0.0
    %v11169 = vmax.f32 %v11129, 0.0
    %v11170 = vmax.f32 %v11130, 0.0
    %v11171 = vmax.f32 %v11131, 0.0
    %v11172 = vmax.f32 %v11132, 0.0
    %v11173 = vmax.f32 %v11133, 0.0
    %v11174 = vmax.f32 %v11134, 0.0
    %v11175 = vmax.f32 %v11135, 0.0
    %v11176 = vmax.f32 %v11136, 0.0
    %v11177 = vmax.f32 %v11137, 0.0
    %v11178 = vmax.f32 %v11138, 0.0
    %v11219 = vcombine.low %v11139, %v11140
    %v11220 = vcombine.low %v11141, %v11142
    %v11222 = vunpack.c.l.s4 1983009808
    %v11223 = vunpack.c.0.s8 %v11222
    %v11224 = vlaneseq
    %v11225 = vshrl.u32 %v11224, 7
    %v11226 = vsub.s32 %v11223, %v11225
    %v11227 = vrot.slane %v11219, %v11226
    %v11229 = vunpack.c.l.s4 1983009808
    %v11230 = vunpack.c.0.s8 %v11229
    %v11231 = vlaneseq
    %v11232 = vshrl.u32 %v11231, 7
    %v11233 = vsub.s32 %v11230, %v11232
    %v11234 = vrot.slane %v11220, %v11233
    %v11235 = vcombine.low %v11227, %v11234
    %v11237 = vunpack.c.l.s4 1983009808
    %v11238 = vunpack.c.0.s8 %v11237
    %v11239 = vlaneseq
    %v11240 = vshrl.u32 %v11239, 7
    %v11241 = vsub.s32 %v11238, %v11240
    %v11242 = vrot.slane %v11143, %v11241
    %v11243 = vcombine.low %v11144, %v11145
    %v11244 = vcombine.low %v11146, %v11147
    %v11246 = vunpack.c.l.s4 1983009808
    %v11247 = vunpack.c.0.s8 %v11246
    %v11248 = vlaneseq
    %v11249 = vshrl.u32 %v11248, 7
    %v11250 = vsub.s32 %v11247, %v11249
    %v11251 = vrot.slane %v11243, %v11250
    %v11253 = vunpack.c.l.s4 1983009808
    %v11254 = vunpack.c.0.s8 %v11253
    %v11255 = vlaneseq
    %v11256 = vshrl.u32 %v11255, 7
    %v11257 = vsub.s32 %v11254, %v11256
    %v11258 = vrot.slane %v11244, %v11257
    %v11259 = vcombine.low %v11251, %v11258
    %v11261 = vunpack.c.l.s4 1983009808
    %v11262 = vunpack.c.0.s8 %v11261
    %v11263 = vlaneseq
    %v11264 = vshrl.u32 %v11263, 7
    %v11265 = vsub.s32 %v11262, %v11264
    %v11266 = vrot.slane %v11148, %v11265
    %v11267 = vcombine.low %v11149, %v11150
    %v11268 = vcombine.low %v11151, %v11152
    %v11270 = vunpack.c.l.s4 1983009808
    %v11271 = vunpack.c.0.s8 %v11270
    %v11272 = vlaneseq
    %v11273 = vshrl.u32 %v11272, 7
    %v11274 = vsub.s32 %v11271, %v11273
    %v11275 = vrot.slane %v11267, %v11274
    %v11277 = vunpack.c.l.s4 1983009808
    %v11278 = vunpack.c.0.s8 %v11277
    %v11279 = vlaneseq
    %v11280 = vshrl.u32 %v11279, 7
    %v11281 = vsub.s32 %v11278, %v11280
    %v11282 = vrot.slane %v11268, %v11281
    %v11283 = vcombine.low %v11275, %v11282
    %v11285 = vunpack.c.l.s4 1983009808
    %v11286 = vunpack.c.0.s8 %v11285
    %v11287 = vlaneseq
    %v11288 = vshrl.u32 %v11287, 7
    %v11289 = vsub.s32 %v11286, %v11288
    %v11290 = vrot.slane %v11153, %v11289
    %v11291 = vcombine.low %v11154, %v11155
    %v11292 = vcombine.low %v11156, %v11157
    %v11294 = vunpack.c.l.s4 1983009808
    %v11295 = vunpack.c.0.s8 %v11294
    %v11296 = vlaneseq
    %v11297 = vshrl.u32 %v11296, 7
    %v11298 = vsub.s32 %v11295, %v11297
    %v11299 = vrot.slane %v11291, %v11298
    %v11301 = vunpack.c.l.s4 1983009808
    %v11302 = vunpack.c.0.s8 %v11301
    %v11303 = vlaneseq
    %v11304 = vshrl.u32 %v11303, 7
    %v11305 = vsub.s32 %v11302, %v11304
    %v11306 = vrot.slane %v11292, %v11305
    %v11307 = vcombine.low %v11299, %v11306
    %v11309 = vunpack.c.l.s4 1983009808
    %v11310 = vunpack.c.0.s8 %v11309
    %v11311 = vlaneseq
    %v11312 = vshrl.u32 %v11311, 7
    %v11313 = vsub.s32 %v11310, %v11312
    %v11314 = vrot.slane %v11158, %v11313
    %v11315 = vcombine.low %v11159, %v11160
    %v11316 = vcombine.low %v11161, %v11162
    %v11318 = vunpack.c.l.s4 1983009808
    %v11319 = vunpack.c.0.s8 %v11318
    %v11320 = vlaneseq
    %v11321 = vshrl.u32 %v11320, 7
    %v11322 = vsub.s32 %v11319, %v11321
    %v11323 = vrot.slane %v11315, %v11322
    %v11325 = vunpack.c.l.s4 1983009808
    %v11326 = vunpack.c.0.s8 %v11325
    %v11327 = vlaneseq
    %v11328 = vshrl.u32 %v11327, 7
    %v11329 = vsub.s32 %v11326, %v11328
    %v11330 = vrot.slane %v11316, %v11329
    %v11331 = vcombine.low %v11323, %v11330
    %v11333 = vunpack.c.l.s4 1983009808
    %v11334 = vunpack.c.0.s8 %v11333
    %v11335 = vlaneseq
    %v11336 = vshrl.u32 %v11335, 7
    %v11337 = vsub.s32 %v11334, %v11336
    %v11338 = vrot.slane %v11163, %v11337
    %v11339 = vcombine.low %v11164, %v11165
    %v11340 = vcombine.low %v11166, %v11167
    %v11342 = vunpack.c.l.s4 1983009808
    %v11343 = vunpack.c.0.s8 %v11342
    %v11344 = vlaneseq
    %v11345 = vshrl.u32 %v11344, 7
    %v11346 = vsub.s32 %v11343, %v11345
    %v11347 = vrot.slane %v11339, %v11346
    %v11349 = vunpack.c.l.s4 1983009808
    %v11350 = vunpack.c.0.s8 %v11349
    %v11351 = vlaneseq
    %v11352 = vshrl.u32 %v11351, 7
    %v11353 = vsub.s32 %v11350, %v11352
    %v11354 = vrot.slane %v11340, %v11353
    %v11355 = vcombine.low %v11347, %v11354
    %v11357 = vunpack.c.l.s4 1983009808
    %v11358 = vunpack.c.0.s8 %v11357
    %v11359 = vlaneseq
    %v11360 = vshrl.u32 %v11359, 7
    %v11361 = vsub.s32 %v11358, %v11360
    %v11362 = vrot.slane %v11168, %v11361
    %v11363 = vcombine.low %v11169, %v11170
    %v11364 = vcombine.low %v11171, %v11172
    %v11366 = vunpack.c.l.s4 1983009808
    %v11367 = vunpack.c.0.s8 %v11366
    %v11368 = vlaneseq
    %v11369 = vshrl.u32 %v11368, 7
    %v11370 = vsub.s32 %v11367, %v11369
    %v11371 = vrot.slane %v11363, %v11370
    %v11373 = vunpack.c.l.s4 1983009808
    %v11374 = vunpack.c.0.s8 %v11373
    %v11375 = vlaneseq
    %v11376 = vshrl.u32 %v11375, 7
    %v11377 = vsub.s32 %v11374, %v11376
    %v11378 = vrot.slane %v11364, %v11377
    %v11379 = vcombine.low %v11371, %v11378
    %v11381 = vunpack.c.l.s4 1983009808
    %v11382 = vunpack.c.0.s8 %v11381
    %v11383 = vlaneseq
    %v11384 = vshrl.u32 %v11383, 7
    %v11385 = vsub.s32 %v11382, %v11384
    %v11386 = vrot.slane %v11173, %v11385
    %v11387 = vcombine.low %v11174, %v11175
    %v11388 = vcombine.low %v11176, %v11177
    %v11390 = vunpack.c.l.s4 1983009808
    %v11391 = vunpack.c.0.s8 %v11390
    %v11392 = vlaneseq
    %v11393 = vshrl.u32 %v11392, 7
    %v11394 = vsub.s32 %v11391, %v11393
    %v11395 = vrot.slane %v11387, %v11394
    %v11397 = vunpack.c.l.s4 1983009808
    %v11398 = vunpack.c.0.s8 %v11397
    %v11399 = vlaneseq
    %v11400 = vshrl.u32 %v11399, 7
    %v11401 = vsub.s32 %v11398, %v11400
    %v11402 = vrot.slane %v11388, %v11401
    %v11403 = vcombine.low %v11395, %v11402
    %v11405 = vunpack.c.l.s4 1983009808
    %v11406 = vunpack.c.0.s8 %v11405
    %v11407 = vlaneseq
    %v11408 = vshrl.u32 %v11407, 7
    %v11409 = vsub.s32 %v11406, %v11408
    %v11410 = vrot.slane %v11178, %v11409
    %vm11427 = vcmask 1041408
    %v11428 = vsel %vm11427, %v11242, -inf
    %v11429 = vmax.f32 %v11235, %v11428
    %v11430 = vrot.slane %v11429, 4
    %v11431 = vmax.f32 %v11429, %v11430
    %v11432 = vrot.slane %v11431, 2
    %v11433 = vmax.f32 %v11431, %v11432
    %v11434 = vrot.slane %v11433, 1
    %v11435 = vmax.f32 %v11433, %v11434
    %v11436 = vsel %vm11427, %v11266, -inf
    %v11437 = vmax.f32 %v11259, %v11436
    %v11438 = vrot.slane %v11437, 4
    %v11439 = vmax.f32 %v11437, %v11438
    %v11440 = vrot.slane %v11439, 2
    %v11441 = vmax.f32 %v11439, %v11440
    %v11442 = vrot.slane %v11441, 1
    %v11443 = vmax.f32 %v11441, %v11442
    %v11444 = vsel %vm11427, %v11290, -inf
    %v11445 = vmax.f32 %v11283, %v11444
    %v11446 = vrot.slane %v11445, 4
    %v11447 = vmax.f32 %v11445, %v11446
    %v11448 = vrot.slane %v11447, 2
    %v11449 = vmax.f32 %v11447, %v11448
    %v11450 = vrot.slane %v11449, 1
    %v11451 = vmax.f32 %v11449, %v11450
    %v11452 = vsel %vm11427, %v11314, -inf
    %v11453 = vmax.f32 %v11307, %v11452
    %v11454 = vrot.slane %v11453, 4
    %v11455 = vmax.f32 %v11453, %v11454
    %v11456 = vrot.slane %v11455, 2
    %v11457 = vmax.f32 %v11455, %v11456
    %v11458 = vrot.slane %v11457, 1
    %v11459 = vmax.f32 %v11457, %v11458
    %v11460 = vsel %vm11427, %v11338, -inf
    %v11461 = vmax.f32 %v11331, %v11460
    %v11462 = vrot.slane %v11461, 4
    %v11463 = vmax.f32 %v11461, %v11462
    %v11464 = vrot.slane %v11463, 2
    %v11465 = vmax.f32 %v11463, %v11464
    %v11466 = vrot.slane %v11465, 1
    %v11467 = vmax.f32 %v11465, %v11466
    %v11468 = vsel %vm11427, %v11362, -inf
    %v11469 = vmax.f32 %v11355, %v11468
    %v11470 = vrot.slane %v11469, 4
    %v11471 = vmax.f32 %v11469, %v11470
    %v11472 = vrot.slane %v11471, 2
    %v11473 = vmax.f32 %v11471, %v11472
    %v11474 = vrot.slane %v11473, 1
    %v11475 = vmax.f32 %v11473, %v11474
    %v11476 = vsel %vm11427, %v11386, -inf
    %v11477 = vmax.f32 %v11379, %v11476
    %v11478 = vrot.slane %v11477, 4
    %v11479 = vmax.f32 %v11477, %v11478
    %v11480 = vrot.slane %v11479, 2
    %v11481 = vmax.f32 %v11479, %v11480
    %v11482 = vrot.slane %v11481, 1
    %v11483 = vmax.f32 %v11481, %v11482
    %v11484 = vsel %vm11427, %v11410, -inf
    %v11485 = vmax.f32 %v11403, %v11484
    %v11486 = vrot.slane %v11485, 4
    %v11487 = vmax.f32 %v11485, %v11486
    %v11488 = vrot.slane %v11487, 2
    %v11489 = vmax.f32 %v11487, %v11488
    %v11490 = vrot.slane %v11489, 1
    %v11491 = vmax.f32 %v11489, %v11490
    %v11492 = vpack.c.bf16 %v11435, %v11435
    %v11493 = vpack.c.bf16 %v11443, %v11443
    %v11494 = vpack.c.bf16 %v11451, %v11451
    %v11495 = vpack.c.bf16 %v11459, %v11459
    %v11496 = vpack.c.bf16 %v11467, %v11467
    %v11497 = vpack.c.bf16 %v11475, %v11475
    %v11498 = vpack.c.bf16 %v11483, %v11483
    %v11499 = vpack.c.bf16 %v11491, %v11491
    %s11500 = scalar_lea.vmem [#allocation7], 128
    %v11501 = vld [vmem:[%s11500] sm:$0xf]
    %v11502 = vld [vmem:[%s11500 + $0x4] sm:$0xf]
    %v11503 = vld [vmem:[%s11500 + $0x8] sm:$0xf]
    %v11504 = vld [vmem:[%s11500 + $0xc] sm:$0xf]
    %v11505 = vld [vmem:[%s11500 + $0x10] sm:$0xf]
    %v11506 = vld [vmem:[%s11500 + $0x14] sm:$0xf]
    %v11507 = vld [vmem:[%s11500 + $0x18] sm:$0xf]
    %v11508 = vld [vmem:[%s11500 + $0x1c] sm:$0xf]
    %v11509 = vld [vmem:[%s11500 + $0x20] sm:$0xf]
    %v11510 = vld [vmem:[%s11500 + $0x24] sm:$0xf]
    %v11511 = vld [vmem:[%s11500 + $0x28] sm:$0xf]
    %v11512 = vld [vmem:[%s11500 + $0x2c] sm:$0xf]
    %v11513 = vld [vmem:[%s11500 + $0x30] sm:$0xf]
    %v11514 = vld [vmem:[%s11500 + $0x34] sm:$0xf]
    %v11515 = vld [vmem:[%s11500 + $0x38] sm:$0xf]
    %v11516 = vld [vmem:[%s11500 + $0x3c] sm:$0xf]
    %v11525 = vunpack.c.l.b16 %v11492
    %v11526 = vunpack.c.l.b16 %v11493
    %v11527 = vunpack.c.l.b16 %v11494
    %v11528 = vunpack.c.l.b16 %v11495
    %v11529 = vunpack.c.l.b16 %v11496
    %v11530 = vunpack.c.l.b16 %v11497
    %v11531 = vunpack.c.l.b16 %v11498
    %v11532 = vunpack.c.l.b16 %v11499
    %v11533 = vsel %vm6750, %v11526, %v11525
    %v11534 = vsel %vm6752, %v11527, %v11533
    %v11535 = vsel %vm6754, %v11528, %v11534
    %v11536 = vsel %vm6756, %v11529, %v11535
    %v11537 = vsel %vm6758, %v11530, %v11536
    %v11538 = vsel %vm6760, %v11531, %v11537
    %v11539 = vsel %vm6762, %v11532, %v11538
    %v11540 = vpack.c.b16 %v11539, %v11539
    %v11558 = vunpack.c.l.b16 %v11501
    %v11559 = vunpack.c.l.b16 %v11502
    %v11560 = vunpack.c.l.b16 %v11503
    %v11561 = vunpack.c.l.b16 %v11504
    %v11562 = vunpack.c.l.b16 %v11505
    %v11563 = vunpack.c.l.b16 %v11506
    %v11564 = vunpack.c.l.b16 %v11507
    %v11565 = vunpack.c.l.b16 %v11508
    %v11566 = vunpack.c.l.b16 %v11509
    %v11567 = vunpack.c.l.b16 %v11510
    %v11568 = vunpack.c.l.b16 %v11511
    %v11569 = vunpack.c.l.b16 %v11512
    %v11570 = vunpack.c.l.b16 %v11513
    %v11571 = vunpack.c.l.b16 %v11514
    %v11572 = vunpack.c.l.b16 %v11515
    %v11573 = vunpack.c.l.b16 %v11516
    %v11574 = vpack.c.b16 %v11559, %v11558
    %v11575 = vpack.c.b16 %v11561, %v11560
    %v11576 = vpack.c.b16 %v11563, %v11562
    %v11577 = vpack.c.b16 %v11565, %v11564
    %v11578 = vpack.c.b16 %v11567, %v11566
    %v11579 = vpack.c.b16 %v11569, %v11568
    %v11580 = vpack.c.b16 %v11571, %v11570
    %v11581 = vpack.c.b16 %v11573, %v11572
    %11590 = vmatprep.subr.bf16.mxu0 0
    %11591 = vmatpush1.bf16.msra.mxu0 %v11574
    %11592 = vmatprep.subr.bf16.mxu0 0
    %11593 = vmatpush1.bf16.msra.mxu0 %v11575
    %11594 = vmatprep.subr.bf16.mxu0 0
    %11595 = vmatpush1.bf16.msra.mxu0 %v11576
    %11596 = vmatprep.subr.bf16.mxu0 0
    %11597 = vmatpush1.bf16.msra.mxu0 %v11577
    %11598 = vmatprep.subr.bf16.mxu0 0
    %11599 = vmatpush1.bf16.msra.mxu0 %v11578
    %11600 = vmatprep.subr.bf16.mxu0 0
    %11601 = vmatpush1.bf16.msra.mxu0 %v11579
    %11602 = vmatprep.subr.bf16.mxu0 0
    %11603 = vmatpush1.bf16.msra.mxu0 %v11580
    %11604 = vmatprep.subr.bf16.mxu0 0
    %11605 = vmatpush1.bf16.msra.mxu0 %v11581
    %11606 = vmatprep.subr.bf16.mxu0 0
    %11607 = vmatpush1.bf16.msra.mxu0 0
    %11608 = vmatprep.subr.bf16.mxu0 0
    %11609 = vmatpush1.bf16.msra.mxu0 0
    %11610 = vmatprep.subr.bf16.mxu0 0
    %11611 = vmatpush1.bf16.msra.mxu0 0
    %11612 = vmatprep.subr.bf16.mxu0 0
    %11613 = vmatpush1.bf16.msra.mxu0 0
    %11614 = vmatprep.subr.bf16.mxu0 0
    %11615 = vmatpush1.bf16.msra.mxu0 0
    %11616 = vmatprep.subr.bf16.mxu0 0
    %11617 = vmatpush1.bf16.msra.mxu0 0
    %11618 = vmatprep.subr.bf16.mxu0 0
    %11619 = vmatpush1.bf16.msra.mxu0 0
    %11620 = vmatprep.subr.bf16.mxu0 0
    %11621 = vmatpush1.bf16.msra.mxu0 0
    %11622 = vmatprep.mubr.bf16.mxu0 0
    %11623 = vmatmul.mubr.bf16.gmra.mrb[0].mxu0 %v11540
    %v11624 = vpop.f32.mrb[0].mxu0
    %v11625 = vadd.f32 0.0, %v11624
    %v11626 = vpop.f32.mrb[0].mxu0
    %v11627 = vpop.f32.mrb[0].mxu0
    %v11628 = vpop.f32.mrb[0].mxu0
    %11629 = vdwg.mxu0
    %v11630 = vadd.f32 %v6962, %v11625
    %v11631 = vld [vmem:[%s7] sm:$0x1]
    %v11633 = vlaneseq
    %v11634 = vshrl.u32 %v11633, 7
    %v11635 = vsub.s32 0, %v11634
    %v11636 = vrot.slane %v11631, %v11635
    %v11638 = vadd.f32 %v11630, %v11636
    %11639 = vst [vmem:[#allocation8] sm:$0xff] %v11638
    // Predicated region
    $region46: #{tpu_custom_call.1} parent=1 // pred_check
      _
    $region47: #{tpu_custom_call.1} parent=1 // pred_check_branch
      %11641 = sbr.rel (0) target = $region49
    $region48: #{tpu_custom_call.1} parent=1 // pred_region
      %s11643 = ssub.s32 128, 128
      %11644 = vsyncadd [#allocation4], %s11643
      %s11646 = sshll.u32 [#allocation8], 4
      %s11647 = int_to_ptr.vmem [resolvable:$true] %s11646
      %11649 = dma.vmem_to_hbm [thread:$0]  %s11647, 128, %s8, [#allocation4]
    $region49: #{tpu_custom_call.1} parent=1 // pred_fallthru
      _
    // Predicated region
    $region50: #{tpu_custom_call.1} parent=1 // pred_check
      _
    $region51: #{tpu_custom_call.1} parent=1 // pred_check_branch
      %11651 = sbr.rel (0) target = $region53
    $region52: #{tpu_custom_call.1} parent=1 // pred_region
      %11652 = dma.done [#allocation4], 128
    $region53: #{tpu_custom_call.1} parent=1 // pred_fallthru
      _
    %11653 = vsyncpa [#allocation3], 1
    %11654 = vsyncpa [#allocation6], 1
    %11655 = vsyncpa [#allocation4], 1

</llo_original>
